<compile_context>
chip_gen: v7x
topology: tpu7x:2x2x1
jax: 0.10.0
libtpu: 0.0.40
codegen_flags: <defaults>
</compile_context>

<pallas_src>
import functools

import jax
import jax.numpy as jnp
from jax.experimental import pallas as pl
from jax.experimental.pallas import tpu as pltpu


def _round_up(x, m):
    return (x + m - 1) // m * m


# ---------------------------------------------------------------------------
# Pallas kernel: tiled, K-accumulated fused matmul  y = maybe_relu((x@w)*s + b)
# x, w: bf16 (MXU inputs).  Accumulation: f32 VMEM scratch.  Output: bf16.
# ---------------------------------------------------------------------------
def _fused_matmul_kernel(x_ref, w_ref, s_ref, b_ref, o_ref, acc_ref, *, relu):
    k = pl.program_id(2)

    @pl.when(k == 0)
    def _():
        acc_ref[...] = jnp.zeros_like(acc_ref)

    acc_ref[...] += jnp.dot(
        x_ref[...], w_ref[...], preferred_element_type=jnp.float32
    )

    @pl.when(k == pl.num_programs(2) - 1)
    def _():
        y = acc_ref[...] * s_ref[...] + b_ref[...]
        if relu:
            y = jnp.maximum(y, 0.0)
        o_ref[...] = y.astype(o_ref.dtype)


def _pick_tk(kp):
    """Collapse K into as few steps as possible (single step up to 2048)."""
    if kp <= 2048:
        return kp
    for c in (2048, 1792, 1536, 1280, 1152, 1024, 768, 640, 512, 384, 256, 128):
        if kp % c == 0:
            return c
    return 128


def fused_matmul_packed(x, wp, sp, bp, n_valid, relu=False,
                        out_dtype=jnp.bfloat16):
    """x: [M, K] (any float; cast to bf16 here, fused with the pad).
    wp: [Kp, Np] bf16 (pre-padded at init). sp/bp: [1, Np] f32.
    Returns out_dtype [M, n_valid]."""
    x = x.astype(jnp.bfloat16)                    # bf16 activations: half the DMA
    M, K = x.shape
    Kp, Np = wp.shape

    if M <= 256:                                  # single M block, exact
        Mp = _round_up(M, 8)
        TM = Mp
    else:                                         # tile M at 256
        Mp = _round_up(M, 256)
        TM = 256
    if Kp != K or Mp != M:                        # zero-pad contracting dim / rows
        x = jnp.pad(x, ((0, Mp - M), (0, Kp - K)))

    m_tiles = Mp // TM
    # Prefer TN=256 (feeds the 2x256^2 MXU on v6e/v7x) but fall back to 128
    # when that would leave the grid without any parallel axis >= 2, so v7x
    # megacore sharding still engages on the tiny-M layers.
    if Np % 256 == 0 and (m_tiles >= 2 or Np > 256):
        TN = 256
    else:
        TN = 128
    TK = _pick_tk(Kp)
    grid = (m_tiles, Np // TN, Kp // TK)

    out = pl.pallas_call(
        functools.partial(_fused_matmul_kernel, relu=relu),
        out_shape=jax.ShapeDtypeStruct((Mp, Np), out_dtype),
        grid=grid,
        in_specs=[
            pl.BlockSpec((TM, TK), lambda i, j, k: (i, k)),
            pl.BlockSpec((TK, TN), lambda i, j, k: (k, j)),
            pl.BlockSpec((1, TN), lambda i, j, k: (0, j)),
            pl.BlockSpec((1, TN), lambda i, j, k: (0, j)),
        ],
        out_specs=pl.BlockSpec((TM, TN), lambda i, j, k: (i, j)),
        scratch_shapes=[pltpu.VMEM((TM, TN), jnp.float32)],
        compiler_params=pltpu.CompilerParams(
            dimension_semantics=("parallel", "parallel", "arbitrary"),
            vmem_limit_bytes=32 * 1024 * 1024,    # safe on v7x (64 MiB physical)
        ),
        cost_estimate=pl.CostEstimate(
            flops=2 * Mp * Np * Kp,
            transcendentals=0,
            bytes_accessed=Mp * Kp * 2 + Kp * Np * 2 + Mp * Np * 2,
        ),
    )(x, wp, sp, bp)
    return out[:M, :n_valid]


# ---------------------------------------------------------------------------
# Weight packing (hoisted to init) and conv wrapper (NHWC, lane-aligned)
# ---------------------------------------------------------------------------
def _pack_matmul(wm, scale, bias):
    """wm: [K, N] -> bf16 padded (Kp, Np); scale/bias: [N] -> f32 [1, Np]."""
    K, N = wm.shape
    Kp, Np = _round_up(K, 128), _round_up(N, 128)
    wp = jnp.zeros((Kp, Np), jnp.bfloat16).at[:K, :N].set(wm.astype(jnp.bfloat16))
    sp = jnp.zeros((1, Np), jnp.float32).at[0, :N].set(scale.astype(jnp.float32))
    bp = jnp.zeros((1, Np), jnp.float32).at[0, :N].set(bias.astype(jnp.float32))
    return {"w": wp, "s": sp, "b": bp, "n": N}


def _pack_conv(w_oihw, scale, bias, stride=1, dilation=1, padding=0):
    Cout, Cin, Kh, Kw = w_oihw.shape
    wm = jnp.transpose(w_oihw, (2, 3, 1, 0)).reshape(Kh * Kw * Cin, Cout)
    pk = _pack_matmul(wm, scale, bias)
    pk.update(kh=Kh, kw=Kw, stride=stride, dilation=dilation, padding=padding)
    return pk


def conv2d_fused(x, pk, relu=True):
    """x: [N, H, W, C] bf16 NHWC. Packed conv `pk`. Returns bf16 NHWC."""
    N, H, W, C = x.shape
    Kh, Kw = pk["kh"], pk["kw"]
    s, d, pad = pk["stride"], pk["dilation"], pk["padding"]
    if pad:
        x = jnp.pad(x, ((0, 0), (pad, pad), (pad, pad), (0, 0)))
    Hp, Wp = x.shape[1], x.shape[2]
    Ho = (Hp - d * (Kh - 1) - 1) // s + 1
    Wo = (Wp - d * (Kw - 1) - 1) // s + 1

    if Kh == 1 and Kw == 1 and s == 1:
        pat = x.reshape(N * Ho * Wo, C)                 # 1x1 conv: pure reshape
    else:
        # TODO(synk): patches are still materialized (in bf16, so half the old
        # traffic); implicit im2col via a (kh,kw) grid axis would avoid the
        # 9x HBM round-trip at realistic (non-16x16) input sizes.
        cols = []
        for kh in range(Kh):
            for kw in range(Kw):
                cols.append(x[:, kh * d: kh * d + s * (Ho - 1) + 1: s,
                                 kw * d: kw * d + s * (Wo - 1) + 1: s, :])
        pat = jnp.concatenate(cols, axis=-1).reshape(N * Ho * Wo, Kh * Kw * C)

    y = fused_matmul_packed(pat, pk["w"], pk["s"], pk["b"], pk["n"], relu=relu)
    return y.reshape(N, Ho, Wo, pk["n"])


# ---------------------------------------------------------------------------
# Parameter init (deterministic, synthetic) and BN folding
# ---------------------------------------------------------------------------
def _conv_w(key, cout, cin, kh, kw):
    fan_in = cin * kh * kw
    return jax.random.normal(key, (cout, cin, kh, kw), jnp.float32) * (1.0 / fan_in) ** 0.5


def _bn(key, c):
    k1, k2, k3, k4 = jax.random.split(key, 4)
    gamma = 1.0 + 0.1 * jax.random.normal(k1, (c,), jnp.float32)
    beta = 0.1 * jax.random.normal(k2, (c,), jnp.float32)
    mean = 0.1 * jax.random.normal(k3, (c,), jnp.float32)
    var = 1.0 + 0.1 * jnp.abs(jax.random.normal(k4, (c,), jnp.float32))
    return gamma, beta, mean, var


def _fold_bn(bn, conv_bias=None, eps=1e-5):
    gamma, beta, mean, var = bn
    scale = gamma / jnp.sqrt(var + eps)
    cb = jnp.zeros_like(mean) if conv_bias is None else conv_bias
    bias = (cb - mean) * scale + beta
    return scale, bias


def bilinear_matrix(out_size, in_size):
    """PyTorch F.interpolate(mode='bilinear', align_corners=False) weights."""
    scale = in_size / out_size
    i = jnp.arange(out_size, dtype=jnp.float32)
    src = jnp.maximum((i + 0.5) * scale - 0.5, 0.0)
    i0 = jnp.minimum(jnp.floor(src).astype(jnp.int32), in_size - 1)
    i1 = jnp.minimum(i0 + 1, in_size - 1)
    frac = src - i0.astype(jnp.float32)
    A = jnp.zeros((out_size, in_size), jnp.float32)
    A = A.at[jnp.arange(out_size), i0].add(1.0 - frac)
    A = A.at[jnp.arange(out_size), i1].add(frac)
    return A


def init_params(num_classes=3, feat_channels=128, atrous_rates=(1, 2, 3),
                input_hw=(16, 16)):
    keys = jax.random.split(jax.random.PRNGKey(0), 32)
    H, W = input_hw
    p = {}

    # backbone stub: 3 -> feat_channels, 4x4 conv stride 4 (+BN+ReLU).
    s, b = _fold_bn(_bn(keys[1], feat_channels))
    p["bb"] = _pack_conv(_conv_w(keys[0], feat_channels, 3, 4, 4), s, b, stride=4)
    Hf = (H - 4) // 4 + 1
    Wf = (W - 4) // 4 + 1

    # ASPP branch 0: 1x1 conv.
    s, b = _fold_bn(_bn(keys[3], 256))
    p["a0"] = _pack_conv(_conv_w(keys[2], 256, feat_channels, 1, 1), s, b)
    # ASPP dilated 3x3 branches.
    for i, r in enumerate(atrous_rates):
        s, b = _fold_bn(_bn(keys[5 + 2 * i], 256))
        p[f"a{i+1}"] = _pack_conv(_conv_w(keys[4 + 2 * i], 256, feat_channels, 3, 3),
                                  s, b, dilation=r, padding=r)
    # ASPP pooling branch 1x1 conv: applied to the [N, Cf] pooled vector in jnp
    # (M == batch is tiny; routing it through the MXU kernel wastes >90% of it).
    s, b = _fold_bn(_bn(keys[11], 256))
    p["ap_w"] = _conv_w(keys[10], 256, feat_channels, 1, 1).reshape(256, feat_channels).T
    p["ap_s"], p["ap_b"] = s, b
    # ASPP projection: 5*256 -> 256 (Kp=1280 -> single K step with raised cap).
    s, b = _fold_bn(_bn(keys[13], 256))
    p["proj"] = _pack_conv(_conv_w(keys[12], 256, 5 * 256, 1, 1), s, b)
    # Head: 3x3 conv + BN + ReLU (Pallas), then 1x1 -> num_classes (tiny N,
    # done in jnp: a 3-column matmul wastes >97% of a padded MXU tile).
    s, b = _fold_bn(_bn(keys[15], 256))
    p["h1"] = _pack_conv(_conv_w(keys[14], 256, 256, 3, 3), s, b, padding=1)
    p["h2_w"] = _conv_w(keys[16], num_classes, 256, 1, 1).reshape(num_classes, 256).T
    p["h2_b"] = 0.1 * jax.random.normal(keys[17], (num_classes,), jnp.float32)

    # Bilinear upsample (align_corners=False), applied per-axis in jnp.
    p["up_h"] = bilinear_matrix(H, Hf)      # [H, Hf]
    p["up_w"] = bilinear_matrix(W, Wf)      # [W, Wf]

    p["meta"] = dict(num_classes=num_classes, input_hw=(H, W),
                     n_aspp=len(atrous_rates))
    return p


# ---------------------------------------------------------------------------
# DeepLabV3 forward (bf16 NHWC internally; f32 NCHW at the module boundary)
# ---------------------------------------------------------------------------
def deeplabv3_forward(x_nchw, p):
    meta = p["meta"]
    N = x_nchw.shape[0]

    # NHWC + bf16 once at the input; every later layer reads/writes bf16.
    x = jnp.transpose(x_nchw, (0, 2, 3, 1)).astype(jnp.bfloat16)

    # ---- backbone stub (stand-in for timm features_only backbone) ----
    feats = conv2d_fused(x, p["bb"], relu=True)                     # [N, Hf, Wf, Cf]
    Hf, Wf = feats.shape[1], feats.shape[2]

    # ---- ASPP ----
    branches = [conv2d_fused(feats, p["a0"], relu=True)]
    for i in range(meta["n_aspp"]):
        branches.append(conv2d_fused(feats, p[f"a{i+1}"], relu=True))

    # pooling branch: global avg pool -> 1x1 conv -> BN -> ReLU -> broadcast.
    pooled = jnp.mean(feats.astype(jnp.float32), axis=(1, 2))       # [N, Cf]
    pooled = jnp.maximum(pooled @ p["ap_w"] * p["ap_s"] + p["ap_b"], 0.0)
    branches.append(jnp.broadcast_to(
        pooled.astype(jnp.bfloat16)[:, None, None, :], (N, Hf, Wf, 256)))

    # TODO(synk): concat is still materialized (bf16); at realistic sizes the
    # projection could instead accumulate per-branch partial matmuls.
    cat = jnp.concatenate(branches, axis=-1)                        # [N, Hf, Wf, 1280]
    aspp_out = conv2d_fused(cat, p["proj"], relu=True)              # [N, Hf, Wf, 256]
    # Dropout(0.5) is identity in eval mode.

    # ---- head ----
    h = conv2d_fused(aspp_out, p["h1"], relu=True)                  # [N, Hf, Wf, 256]
    logits = h.astype(jnp.float32) @ p["h2_w"] + p["h2_b"]          # [N, Hf, Wf, nc]

    # ---- bilinear upsample to input resolution (per-axis, tiny, jnp) ----
    up = jnp.einsum("Hh,nhwc->nHwc", p["up_h"], logits)
    up = jnp.einsum("Ww,nHwc->nHWc", p["up_w"], up)
    out = jnp.transpose(up, (0, 3, 1, 2))                           # NCHW, f32
    return {"out": out}


if __name__ == "__main__":
    num_classes = 3
    input_hw = (16, 16)
    params = init_params(num_classes=num_classes, feat_channels=128,
                         atrous_rates=(1, 2, 3), input_hw=input_hw)

    x = jax.random.normal(jax.random.PRNGKey(0), (2, 3, *input_hw), jnp.float32)

    fwd = jax.jit(lambda inp: deeplabv3_forward(inp, params))
    out = jax.block_until_ready(fwd(x)["out"])

    assert out.shape == (2, num_classes, *input_hw), out.shape
    assert bool(jnp.all(jnp.isfinite(out)))
    print("KERNEL_OK")
</pallas_src>

<mosaic_0001>
module attributes {stable_mosaic.version = 11 : i64} {
  func.func @_fused_matmul_kernel(%arg0: i32, %arg1: i32, %arg2: i32, %arg3: memref<32x128xbf16, #tpu.memory_space<vmem>>, %arg4: memref<128x128xbf16, #tpu.memory_space<vmem>>, %arg5: memref<1x128xf32, #tpu.memory_space<vmem>>, %arg6: memref<1x128xf32, #tpu.memory_space<vmem>>, %arg7: memref<32x128xbf16, #tpu.memory_space<vmem>>, %arg8: memref<32x128xf32, #tpu.memory_space<vmem>>) attributes {dimension_semantics = [#tpu.dimension_semantics<parallel>, #tpu.dimension_semantics<parallel>, #tpu.dimension_semantics<arbitrary>], iteration_bounds = array<i64: 1, 1, 1>, scalar_prefetch = 0 : i64, scratch_operands = 1 : i64, tpu.core_type = #tpu.core_type<tc>, window_params = [{transform_indices = @transform_0, window_bounds = array<i64: 32, 128>}, {transform_indices = @transform_1, window_bounds = array<i64: 128, 128>}, {transform_indices = @transform_2, window_bounds = array<i64: 1, 128>}, {transform_indices = @transform_3, window_bounds = array<i64: 1, 128>}, {transform_indices = @transform_4, window_bounds = array<i64: 32, 128>}]} {
    %c0_i32 = arith.constant 0 : i32
    %0 = arith.cmpi eq, %arg2, %c0_i32 : i32
    %1 = arith.extui %0 : i1 to i32
    %c0_i32_0 = arith.constant 0 : i32
    %2 = arith.cmpi ne, %1, %c0_i32_0 : i32
    scf.if %2 {
      %cst_10 = arith.constant 0.000000e+00 : f32
      %12 = vector.broadcast %cst_10 : f32 to vector<32x128xf32>
      %c0_11 = arith.constant 0 : index
      %c0_12 = arith.constant 0 : index
      %13 = vector.load %arg8[%c0_11, %c0_12] : memref<32x128xf32, #tpu.memory_space<vmem>>, vector<32x128xf32>
      tpu.vector_store %arg8[%c0_11, %c0_12], %12 {strides = array<i32>} : memref<32x128xf32, #tpu.memory_space<vmem>>, vector<32x128xf32>,
    } else {
    }
    %c0 = arith.constant 0 : index
    %c0_1 = arith.constant 0 : index
    %3 = vector.load %arg8[%c0, %c0_1] : memref<32x128xf32, #tpu.memory_space<vmem>>, vector<32x128xf32>
    %c0_2 = arith.constant 0 : index
    %c0_3 = arith.constant 0 : index
    %4 = vector.load %arg3[%c0_2, %c0_3] : memref<32x128xbf16, #tpu.memory_space<vmem>>, vector<32x128xbf16>
    %c0_4 = arith.constant 0 : index
    %c0_5 = arith.constant 0 : index
    %5 = vector.load %arg4[%c0_4, %c0_5] : memref<128x128xbf16, #tpu.memory_space<vmem>>, vector<128x128xbf16>
    %cst = arith.constant dense<0.000000e+00> : vector<32x128xf32>
    %6 = tpu.matmul %4, %5, %cst {dimension_numbers = #tpu.dot_dimension_numbers<[1], [0], [0], [1], [0, 0, 1, 1], [], []>} : vector<32x128xbf16>, vector<128x128xbf16>, vector<32x128xf32> -> vector<32x128xf32>
    %7 = arith.addf %3, %6 : vector<32x128xf32>
    %c0_6 = arith.constant 0 : index
    %c0_7 = arith.constant 0 : index
    %8 = vector.load %arg8[%c0_6, %c0_7] : memref<32x128xf32, #tpu.memory_space<vmem>>, vector<32x128xf32>
    tpu.vector_store %arg8[%c0_6, %c0_7], %7 {strides = array<i32>} : memref<32x128xf32, #tpu.memory_space<vmem>>, vector<32x128xf32>,
    %c0_i32_8 = arith.constant 0 : i32
    %9 = arith.cmpi eq, %arg2, %c0_i32_8 : i32
    %10 = arith.extui %9 : i1 to i32
    %c0_i32_9 = arith.constant 0 : i32
    %11 = arith.cmpi ne, %10, %c0_i32_9 : i32
    scf.if %11 {
      %c0_10 = arith.constant 0 : index
      %c0_11 = arith.constant 0 : index
      %12 = vector.load %arg8[%c0_10, %c0_11] : memref<32x128xf32, #tpu.memory_space<vmem>>, vector<32x128xf32>
      %c0_12 = arith.constant 0 : index
      %c0_13 = arith.constant 0 : index
      %13 = vector.load %arg5[%c0_12, %c0_13] : memref<1x128xf32, #tpu.memory_space<vmem>>, vector<1x128xf32>
      %14 = vector.broadcast %13 : vector<1x128xf32> to vector<32x128xf32>
      %15 = arith.mulf %12, %14 : vector<32x128xf32>
      %c0_14 = arith.constant 0 : index
      %c0_15 = arith.constant 0 : index
      %16 = vector.load %arg6[%c0_14, %c0_15] : memref<1x128xf32, #tpu.memory_space<vmem>>, vector<1x128xf32>
      %17 = vector.broadcast %16 : vector<1x128xf32> to vector<32x128xf32>
      %18 = arith.addf %15, %17 : vector<32x128xf32>
      %cst_16 = arith.constant 0.000000e+00 : f32
      %19 = vector.broadcast %cst_16 : f32 to vector<32x128xf32>
      %20 = arith.maximumf %18, %19 : vector<32x128xf32>
      %21 = arith.truncf %20 : vector<32x128xf32> to vector<32x128xbf16>
      %c0_17 = arith.constant 0 : index
      %c0_18 = arith.constant 0 : index
      %22 = vector.load %arg7[%c0_17, %c0_18] : memref<32x128xbf16, #tpu.memory_space<vmem>>, vector<32x128xbf16>
      tpu.vector_store %arg7[%c0_17, %c0_18], %21 {strides = array<i32>} : memref<32x128xbf16, #tpu.memory_space<vmem>>, vector<32x128xbf16>,
    } else {
    }
    return
  }
  func.func @transform_0(%arg0: i32, %arg1: i32, %arg2: i32) -> (i32, i32) {
    %c0_i32 = arith.constant 0 : i32
    return %arg0, %arg2 : i32, i32
  }
  func.func @transform_1(%arg0: i32, %arg1: i32, %arg2: i32) -> (i32, i32) {
    %c0_i32 = arith.constant 0 : i32
    return %arg2, %arg1 : i32, i32
  }
  func.func @transform_2(%arg0: i32, %arg1: i32, %arg2: i32) -> (i32, i32) {
    %c0_i32 = arith.constant 0 : i32
    %c0_i32_0 = arith.constant 0 : i32
    return %c0_i32, %arg1 : i32, i32
  }
  func.func @transform_3(%arg0: i32, %arg1: i32, %arg2: i32) -> (i32, i32) {
    %c0_i32 = arith.constant 0 : i32
    %c0_i32_0 = arith.constant 0 : i32
    return %c0_i32, %arg1 : i32, i32
  }
  func.func @transform_4(%arg0: i32, %arg1: i32, %arg2: i32) -> (i32, i32) {
    %c0_i32 = arith.constant 0 : i32
    return %arg0, %arg1 : i32, i32
  }
}

module attributes {stable_mosaic.version = 11 : i64} {
  func.func @_fused_matmul_kernel(%arg0: i32, %arg1: i32, %arg2: i32, %arg3: memref<32x128xbf16, #tpu.memory_space<vmem>>, %arg4: memref<128x128xbf16, #tpu.memory_space<vmem>>, %arg5: memref<1x128xf32, #tpu.memory_space<vmem>>, %arg6: memref<1x128xf32, #tpu.memory_space<vmem>>, %arg7: memref<32x128xbf16, #tpu.memory_space<vmem>>, %arg8: memref<32x128xf32, #tpu.memory_space<vmem>>) attributes {dimension_semantics = [#tpu.dimension_semantics<parallel>, #tpu.dimension_semantics<parallel>, #tpu.dimension_semantics<arbitrary>], iteration_bounds = array<i64: 1, 2, 1>, scalar_prefetch = 0 : i64, scratch_operands = 1 : i64, tpu.core_type = #tpu.core_type<tc>, window_params = [{transform_indices = @transform_0, window_bounds = array<i64: 32, 128>}, {transform_indices = @transform_1, window_bounds = array<i64: 128, 128>}, {transform_indices = @transform_2, window_bounds = array<i64: 1, 128>}, {transform_indices = @transform_3, window_bounds = array<i64: 1, 128>}, {transform_indices = @transform_4, window_bounds = array<i64: 32, 128>}]} {
    %c0_i32 = arith.constant 0 : i32
    %0 = arith.cmpi eq, %arg2, %c0_i32 : i32
    %1 = arith.extui %0 : i1 to i32
    %c0_i32_0 = arith.constant 0 : i32
    %2 = arith.cmpi ne, %1, %c0_i32_0 : i32
    scf.if %2 {
      %cst_10 = arith.constant 0.000000e+00 : f32
      %12 = vector.broadcast %cst_10 : f32 to vector<32x128xf32>
      %c0_11 = arith.constant 0 : index
      %c0_12 = arith.constant 0 : index
      %13 = vector.load %arg8[%c0_11, %c0_12] : memref<32x128xf32, #tpu.memory_space<vmem>>, vector<32x128xf32>
      tpu.vector_store %arg8[%c0_11, %c0_12], %12 {strides = array<i32>} : memref<32x128xf32, #tpu.memory_space<vmem>>, vector<32x128xf32>,
    } else {
    }
    %c0 = arith.constant 0 : index
    %c0_1 = arith.constant 0 : index
    %3 = vector.load %arg8[%c0, %c0_1] : memref<32x128xf32, #tpu.memory_space<vmem>>, vector<32x128xf32>
    %c0_2 = arith.constant 0 : index
    %c0_3 = arith.constant 0 : index
    %4 = vector.load %arg3[%c0_2, %c0_3] : memref<32x128xbf16, #tpu.memory_space<vmem>>, vector<32x128xbf16>
    %c0_4 = arith.constant 0 : index
    %c0_5 = arith.constant 0 : index
    %5 = vector.load %arg4[%c0_4, %c0_5] : memref<128x128xbf16, #tpu.memory_space<vmem>>, vector<128x128xbf16>
    %cst = arith.constant dense<0.000000e+00> : vector<32x128xf32>
    %6 = tpu.matmul %4, %5, %cst {dimension_numbers = #tpu.dot_dimension_numbers<[1], [0], [0], [1], [0, 0, 1, 1], [], []>} : vector<32x128xbf16>, vector<128x128xbf16>, vector<32x128xf32> -> vector<32x128xf32>
    %7 = arith.addf %3, %6 : vector<32x128xf32>
    %c0_6 = arith.constant 0 : index
    %c0_7 = arith.constant 0 : index
    %8 = vector.load %arg8[%c0_6, %c0_7] : memref<32x128xf32, #tpu.memory_space<vmem>>, vector<32x128xf32>
    tpu.vector_store %arg8[%c0_6, %c0_7], %7 {strides = array<i32>} : memref<32x128xf32, #tpu.memory_space<vmem>>, vector<32x128xf32>,
    %c0_i32_8 = arith.constant 0 : i32
    %9 = arith.cmpi eq, %arg2, %c0_i32_8 : i32
    %10 = arith.extui %9 : i1 to i32
    %c0_i32_9 = arith.constant 0 : i32
    %11 = arith.cmpi ne, %10, %c0_i32_9 : i32
    scf.if %11 {
      %c0_10 = arith.constant 0 : index
      %c0_11 = arith.constant 0 : index
      %12 = vector.load %arg8[%c0_10, %c0_11] : memref<32x128xf32, #tpu.memory_space<vmem>>, vector<32x128xf32>
      %c0_12 = arith.constant 0 : index
      %c0_13 = arith.constant 0 : index
      %13 = vector.load %arg5[%c0_12, %c0_13] : memref<1x128xf32, #tpu.memory_space<vmem>>, vector<1x128xf32>
      %14 = vector.broadcast %13 : vector<1x128xf32> to vector<32x128xf32>
      %15 = arith.mulf %12, %14 : vector<32x128xf32>
      %c0_14 = arith.constant 0 : index
      %c0_15 = arith.constant 0 : index
      %16 = vector.load %arg6[%c0_14, %c0_15] : memref<1x128xf32, #tpu.memory_space<vmem>>, vector<1x128xf32>
      %17 = vector.broadcast %16 : vector<1x128xf32> to vector<32x128xf32>
      %18 = arith.addf %15, %17 : vector<32x128xf32>
      %cst_16 = arith.constant 0.000000e+00 : f32
      %19 = vector.broadcast %cst_16 : f32 to vector<32x128xf32>
      %20 = arith.maximumf %18, %19 : vector<32x128xf32>
      %21 = arith.truncf %20 : vector<32x128xf32> to vector<32x128xbf16>
      %c0_17 = arith.constant 0 : index
      %c0_18 = arith.constant 0 : index
      %22 = vector.load %arg7[%c0_17, %c0_18] : memref<32x128xbf16, #tpu.memory_space<vmem>>, vector<32x128xbf16>
      tpu.vector_store %arg7[%c0_17, %c0_18], %21 {strides = array<i32>} : memref<32x128xbf16, #tpu.memory_space<vmem>>, vector<32x128xbf16>,
    } else {
    }
    return
  }
  func.func @transform_0(%arg0: i32, %arg1: i32, %arg2: i32) -> (i32, i32) {
    %c0_i32 = arith.constant 0 : i32
    return %arg0, %arg2 : i32, i32
  }
  func.func @transform_1(%arg0: i32, %arg1: i32, %arg2: i32) -> (i32, i32) {
    %c0_i32 = arith.constant 0 : i32
    return %arg2, %arg1 : i32, i32
  }
  func.func @transform_2(%arg0: i32, %arg1: i32, %arg2: i32) -> (i32, i32) {
    %c0_i32 = arith.constant 0 : i32
    %c0_i32_0 = arith.constant 0 : i32
    return %c0_i32, %arg1 : i32, i32
  }
  func.func @transform_3(%arg0: i32, %arg1: i32, %arg2: i32) -> (i32, i32) {
    %c0_i32 = arith.constant 0 : i32
    %c0_i32_0 = arith.constant 0 : i32
    return %c0_i32, %arg1 : i32, i32
  }
  func.func @transform_4(%arg0: i32, %arg1: i32, %arg2: i32) -> (i32, i32) {
    %c0_i32 = arith.constant 0 : i32
    return %arg0, %arg1 : i32, i32
  }
}

module attributes {stable_mosaic.version = 11 : i64} {
  func.func @_fused_matmul_kernel(%arg0: i32, %arg1: i32, %arg2: i32, %arg3: memref<32x1152xbf16, #tpu.memory_space<vmem>>, %arg4: memref<1152x128xbf16, #tpu.memory_space<vmem>>, %arg5: memref<1x128xf32, #tpu.memory_space<vmem>>, %arg6: memref<1x128xf32, #tpu.memory_space<vmem>>, %arg7: memref<32x128xbf16, #tpu.memory_space<vmem>>, %arg8: memref<32x128xf32, #tpu.memory_space<vmem>>) attributes {dimension_semantics = [#tpu.dimension_semantics<parallel>, #tpu.dimension_semantics<parallel>, #tpu.dimension_semantics<arbitrary>], iteration_bounds = array<i64: 1, 2, 1>, scalar_prefetch = 0 : i64, scratch_operands = 1 : i64, tpu.core_type = #tpu.core_type<tc>, window_params = [{transform_indices = @transform_0, window_bounds = array<i64: 32, 1152>}, {transform_indices = @transform_1, window_bounds = array<i64: 1152, 128>}, {transform_indices = @transform_2, window_bounds = array<i64: 1, 128>}, {transform_indices = @transform_3, window_bounds = array<i64: 1, 128>}, {transform_indices = @transform_4, window_bounds = array<i64: 32, 128>}]} {
    %c0_i32 = arith.constant 0 : i32
    %0 = arith.cmpi eq, %arg2, %c0_i32 : i32
    %1 = arith.extui %0 : i1 to i32
    %c0_i32_0 = arith.constant 0 : i32
    %2 = arith.cmpi ne, %1, %c0_i32_0 : i32
    scf.if %2 {
      %cst_10 = arith.constant 0.000000e+00 : f32
      %12 = vector.broadcast %cst_10 : f32 to vector<32x128xf32>
      %c0_11 = arith.constant 0 : index
      %c0_12 = arith.constant 0 : index
      %13 = vector.load %arg8[%c0_11, %c0_12] : memref<32x128xf32, #tpu.memory_space<vmem>>, vector<32x128xf32>
      tpu.vector_store %arg8[%c0_11, %c0_12], %12 {strides = array<i32>} : memref<32x128xf32, #tpu.memory_space<vmem>>, vector<32x128xf32>,
    } else {
    }
    %c0 = arith.constant 0 : index
    %c0_1 = arith.constant 0 : index
    %3 = vector.load %arg8[%c0, %c0_1] : memref<32x128xf32, #tpu.memory_space<vmem>>, vector<32x128xf32>
    %c0_2 = arith.constant 0 : index
    %c0_3 = arith.constant 0 : index
    %4 = vector.load %arg3[%c0_2, %c0_3] : memref<32x1152xbf16, #tpu.memory_space<vmem>>, vector<32x1152xbf16>
    %c0_4 = arith.constant 0 : index
    %c0_5 = arith.constant 0 : index
    %5 = vector.load %arg4[%c0_4, %c0_5] : memref<1152x128xbf16, #tpu.memory_space<vmem>>, vector<1152x128xbf16>
    %cst = arith.constant dense<0.000000e+00> : vector<32x128xf32>
    %6 = tpu.matmul %4, %5, %cst {dimension_numbers = #tpu.dot_dimension_numbers<[1], [0], [0], [1], [0, 0, 1, 1], [], []>} : vector<32x1152xbf16>, vector<1152x128xbf16>, vector<32x128xf32> -> vector<32x128xf32>
    %7 = arith.addf %3, %6 : vector<32x128xf32>
    %c0_6 = arith.constant 0 : index
    %c0_7 = arith.constant 0 : index
    %8 = vector.load %arg8[%c0_6, %c0_7] : memref<32x128xf32, #tpu.memory_space<vmem>>, vector<32x128xf32>
    tpu.vector_store %arg8[%c0_6, %c0_7], %7 {strides = array<i32>} : memref<32x128xf32, #tpu.memory_space<vmem>>, vector<32x128xf32>,
    %c0_i32_8 = arith.constant 0 : i32
    %9 = arith.cmpi eq, %arg2, %c0_i32_8 : i32
    %10 = arith.extui %9 : i1 to i32
    %c0_i32_9 = arith.constant 0 : i32
    %11 = arith.cmpi ne, %10, %c0_i32_9 : i32
    scf.if %11 {
      %c0_10 = arith.constant 0 : index
      %c0_11 = arith.constant 0 : index
      %12 = vector.load %arg8[%c0_10, %c0_11] : memref<32x128xf32, #tpu.memory_space<vmem>>, vector<32x128xf32>
      %c0_12 = arith.constant 0 : index
      %c0_13 = arith.constant 0 : index
      %13 = vector.load %arg5[%c0_12, %c0_13] : memref<1x128xf32, #tpu.memory_space<vmem>>, vector<1x128xf32>
      %14 = vector.broadcast %13 : vector<1x128xf32> to vector<32x128xf32>
      %15 = arith.mulf %12, %14 : vector<32x128xf32>
      %c0_14 = arith.constant 0 : index
      %c0_15 = arith.constant 0 : index
      %16 = vector.load %arg6[%c0_14, %c0_15] : memref<1x128xf32, #tpu.memory_space<vmem>>, vector<1x128xf32>
      %17 = vector.broadcast %16 : vector<1x128xf32> to vector<32x128xf32>
      %18 = arith.addf %15, %17 : vector<32x128xf32>
      %cst_16 = arith.constant 0.000000e+00 : f32
      %19 = vector.broadcast %cst_16 : f32 to vector<32x128xf32>
      %20 = arith.maximumf %18, %19 : vector<32x128xf32>
      %21 = arith.truncf %20 : vector<32x128xf32> to vector<32x128xbf16>
      %c0_17 = arith.constant 0 : index
      %c0_18 = arith.constant 0 : index
      %22 = vector.load %arg7[%c0_17, %c0_18] : memref<32x128xbf16, #tpu.memory_space<vmem>>, vector<32x128xbf16>
      tpu.vector_store %arg7[%c0_17, %c0_18], %21 {strides = array<i32>} : memref<32x128xbf16, #tpu.memory_space<vmem>>, vector<32x128xbf16>,
    } else {
    }
    return
  }
  func.func @transform_0(%arg0: i32, %arg1: i32, %arg2: i32) -> (i32, i32) {
    %c0_i32 = arith.constant 0 : i32
    return %arg0, %arg2 : i32, i32
  }
  func.func @transform_1(%arg0: i32, %arg1: i32, %arg2: i32) -> (i32, i32) {
    %c0_i32 = arith.constant 0 : i32
    return %arg2, %arg1 : i32, i32
  }
  func.func @transform_2(%arg0: i32, %arg1: i32, %arg2: i32) -> (i32, i32) {
    %c0_i32 = arith.constant 0 : i32
    %c0_i32_0 = arith.constant 0 : i32
    return %c0_i32, %arg1 : i32, i32
  }
  func.func @transform_3(%arg0: i32, %arg1: i32, %arg2: i32) -> (i32, i32) {
    %c0_i32 = arith.constant 0 : i32
    %c0_i32_0 = arith.constant 0 : i32
    return %c0_i32, %arg1 : i32, i32
  }
  func.func @transform_4(%arg0: i32, %arg1: i32, %arg2: i32) -> (i32, i32) {
    %c0_i32 = arith.constant 0 : i32
    return %arg0, %arg1 : i32, i32
  }
}

module attributes {stable_mosaic.version = 11 : i64} {
  func.func @_fused_matmul_kernel(%arg0: i32, %arg1: i32, %arg2: i32, %arg3: memref<32x1280xbf16, #tpu.memory_space<vmem>>, %arg4: memref<1280x128xbf16, #tpu.memory_space<vmem>>, %arg5: memref<1x128xf32, #tpu.memory_space<vmem>>, %arg6: memref<1x128xf32, #tpu.memory_space<vmem>>, %arg7: memref<32x128xbf16, #tpu.memory_space<vmem>>, %arg8: memref<32x128xf32, #tpu.memory_space<vmem>>) attributes {dimension_semantics = [#tpu.dimension_semantics<parallel>, #tpu.dimension_semantics<parallel>, #tpu.dimension_semantics<arbitrary>], iteration_bounds = array<i64: 1, 2, 1>, scalar_prefetch = 0 : i64, scratch_operands = 1 : i64, tpu.core_type = #tpu.core_type<tc>, window_params = [{transform_indices = @transform_0, window_bounds = array<i64: 32, 1280>}, {transform_indices = @transform_1, window_bounds = array<i64: 1280, 128>}, {transform_indices = @transform_2, window_bounds = array<i64: 1, 128>}, {transform_indices = @transform_3, window_bounds = array<i64: 1, 128>}, {transform_indices = @transform_4, window_bounds = array<i64: 32, 128>}]} {
    %c0_i32 = arith.constant 0 : i32
    %0 = arith.cmpi eq, %arg2, %c0_i32 : i32
    %1 = arith.extui %0 : i1 to i32
    %c0_i32_0 = arith.constant 0 : i32
    %2 = arith.cmpi ne, %1, %c0_i32_0 : i32
    scf.if %2 {
      %cst_10 = arith.constant 0.000000e+00 : f32
      %12 = vector.broadcast %cst_10 : f32 to vector<32x128xf32>
      %c0_11 = arith.constant 0 : index
      %c0_12 = arith.constant 0 : index
      %13 = vector.load %arg8[%c0_11, %c0_12] : memref<32x128xf32, #tpu.memory_space<vmem>>, vector<32x128xf32>
      tpu.vector_store %arg8[%c0_11, %c0_12], %12 {strides = array<i32>} : memref<32x128xf32, #tpu.memory_space<vmem>>, vector<32x128xf32>,
    } else {
    }
    %c0 = arith.constant 0 : index
    %c0_1 = arith.constant 0 : index
    %3 = vector.load %arg8[%c0, %c0_1] : memref<32x128xf32, #tpu.memory_space<vmem>>, vector<32x128xf32>
    %c0_2 = arith.constant 0 : index
    %c0_3 = arith.constant 0 : index
    %4 = vector.load %arg3[%c0_2, %c0_3] : memref<32x1280xbf16, #tpu.memory_space<vmem>>, vector<32x1280xbf16>
    %c0_4 = arith.constant 0 : index
    %c0_5 = arith.constant 0 : index
    %5 = vector.load %arg4[%c0_4, %c0_5] : memref<1280x128xbf16, #tpu.memory_space<vmem>>, vector<1280x128xbf16>
    %cst = arith.constant dense<0.000000e+00> : vector<32x128xf32>
    %6 = tpu.matmul %4, %5, %cst {dimension_numbers = #tpu.dot_dimension_numbers<[1], [0], [0], [1], [0, 0, 1, 1], [], []>} : vector<32x1280xbf16>, vector<1280x128xbf16>, vector<32x128xf32> -> vector<32x128xf32>
    %7 = arith.addf %3, %6 : vector<32x128xf32>
    %c0_6 = arith.constant 0 : index
    %c0_7 = arith.constant 0 : index
    %8 = vector.load %arg8[%c0_6, %c0_7] : memref<32x128xf32, #tpu.memory_space<vmem>>, vector<32x128xf32>
    tpu.vector_store %arg8[%c0_6, %c0_7], %7 {strides = array<i32>} : memref<32x128xf32, #tpu.memory_space<vmem>>, vector<32x128xf32>,
    %c0_i32_8 = arith.constant 0 : i32
    %9 = arith.cmpi eq, %arg2, %c0_i32_8 : i32
    %10 = arith.extui %9 : i1 to i32
    %c0_i32_9 = arith.constant 0 : i32
    %11 = arith.cmpi ne, %10, %c0_i32_9 : i32
    scf.if %11 {
      %c0_10 = arith.constant 0 : index
      %c0_11 = arith.constant 0 : index
      %12 = vector.load %arg8[%c0_10, %c0_11] : memref<32x128xf32, #tpu.memory_space<vmem>>, vector<32x128xf32>
      %c0_12 = arith.constant 0 : index
      %c0_13 = arith.constant 0 : index
      %13 = vector.load %arg5[%c0_12, %c0_13] : memref<1x128xf32, #tpu.memory_space<vmem>>, vector<1x128xf32>
      %14 = vector.broadcast %13 : vector<1x128xf32> to vector<32x128xf32>
      %15 = arith.mulf %12, %14 : vector<32x128xf32>
      %c0_14 = arith.constant 0 : index
      %c0_15 = arith.constant 0 : index
      %16 = vector.load %arg6[%c0_14, %c0_15] : memref<1x128xf32, #tpu.memory_space<vmem>>, vector<1x128xf32>
      %17 = vector.broadcast %16 : vector<1x128xf32> to vector<32x128xf32>
      %18 = arith.addf %15, %17 : vector<32x128xf32>
      %cst_16 = arith.constant 0.000000e+00 : f32
      %19 = vector.broadcast %cst_16 : f32 to vector<32x128xf32>
      %20 = arith.maximumf %18, %19 : vector<32x128xf32>
      %21 = arith.truncf %20 : vector<32x128xf32> to vector<32x128xbf16>
      %c0_17 = arith.constant 0 : index
      %c0_18 = arith.constant 0 : index
      %22 = vector.load %arg7[%c0_17, %c0_18] : memref<32x128xbf16, #tpu.memory_space<vmem>>, vector<32x128xbf16>
      tpu.vector_store %arg7[%c0_17, %c0_18], %21 {strides = array<i32>} : memref<32x128xbf16, #tpu.memory_space<vmem>>, vector<32x128xbf16>,
    } else {
    }
    return
  }
  func.func @transform_0(%arg0: i32, %arg1: i32, %arg2: i32) -> (i32, i32) {
    %c0_i32 = arith.constant 0 : i32
    return %arg0, %arg2 : i32, i32
  }
  func.func @transform_1(%arg0: i32, %arg1: i32, %arg2: i32) -> (i32, i32) {
    %c0_i32 = arith.constant 0 : i32
    return %arg2, %arg1 : i32, i32
  }
  func.func @transform_2(%arg0: i32, %arg1: i32, %arg2: i32) -> (i32, i32) {
    %c0_i32 = arith.constant 0 : i32
    %c0_i32_0 = arith.constant 0 : i32
    return %c0_i32, %arg1 : i32, i32
  }
  func.func @transform_3(%arg0: i32, %arg1: i32, %arg2: i32) -> (i32, i32) {
    %c0_i32 = arith.constant 0 : i32
    %c0_i32_0 = arith.constant 0 : i32
    return %c0_i32, %arg1 : i32, i32
  }
  func.func @transform_4(%arg0: i32, %arg1: i32, %arg2: i32) -> (i32, i32) {
    %c0_i32 = arith.constant 0 : i32
    return %arg0, %arg1 : i32, i32
  }
}

module attributes {stable_mosaic.version = 11 : i64} {
  func.func @_fused_matmul_kernel(%arg0: i32, %arg1: i32, %arg2: i32, %arg3: memref<32x1152xbf16, #tpu.memory_space<vmem>>, %arg4: memref<1152x128xbf16, #tpu.memory_space<vmem>>, %arg5: memref<1x128xf32, #tpu.memory_space<vmem>>, %arg6: memref<1x128xf32, #tpu.memory_space<vmem>>, %arg7: memref<32x128xbf16, #tpu.memory_space<vmem>>, %arg8: memref<32x128xf32, #tpu.memory_space<vmem>>) attributes {dimension_semantics = [#tpu.dimension_semantics<parallel>, #tpu.dimension_semantics<parallel>, #tpu.dimension_semantics<arbitrary>], iteration_bounds = array<i64: 1, 2, 2>, scalar_prefetch = 0 : i64, scratch_operands = 1 : i64, tpu.core_type = #tpu.core_type<tc>, window_params = [{transform_indices = @transform_0, window_bounds = array<i64: 32, 1152>}, {transform_indices = @transform_1, window_bounds = array<i64: 1152, 128>}, {transform_indices = @transform_2, window_bounds = array<i64: 1, 128>}, {transform_indices = @transform_3, window_bounds = array<i64: 1, 128>}, {transform_indices = @transform_4, window_bounds = array<i64: 32, 128>}]} {
    %c0_i32 = arith.constant 0 : i32
    %0 = arith.cmpi eq, %arg2, %c0_i32 : i32
    %1 = arith.extui %0 : i1 to i32
    %c0_i32_0 = arith.constant 0 : i32
    %2 = arith.cmpi ne, %1, %c0_i32_0 : i32
    scf.if %2 {
      %cst_9 = arith.constant 0.000000e+00 : f32
      %12 = vector.broadcast %cst_9 : f32 to vector<32x128xf32>
      %c0_10 = arith.constant 0 : index
      %c0_11 = arith.constant 0 : index
      %13 = vector.load %arg8[%c0_10, %c0_11] : memref<32x128xf32, #tpu.memory_space<vmem>>, vector<32x128xf32>
      tpu.vector_store %arg8[%c0_10, %c0_11], %12 {strides = array<i32>} : memref<32x128xf32, #tpu.memory_space<vmem>>, vector<32x128xf32>,
    } else {
    }
    %c0 = arith.constant 0 : index
    %c0_1 = arith.constant 0 : index
    %3 = vector.load %arg8[%c0, %c0_1] : memref<32x128xf32, #tpu.memory_space<vmem>>, vector<32x128xf32>
    %c0_2 = arith.constant 0 : index
    %c0_3 = arith.constant 0 : index
    %4 = vector.load %arg3[%c0_2, %c0_3] : memref<32x1152xbf16, #tpu.memory_space<vmem>>, vector<32x1152xbf16>
    %c0_4 = arith.constant 0 : index
    %c0_5 = arith.constant 0 : index
    %5 = vector.load %arg4[%c0_4, %c0_5] : memref<1152x128xbf16, #tpu.memory_space<vmem>>, vector<1152x128xbf16>
    %cst = arith.constant dense<0.000000e+00> : vector<32x128xf32>
    %6 = tpu.matmul %4, %5, %cst {dimension_numbers = #tpu.dot_dimension_numbers<[1], [0], [0], [1], [0, 0, 1, 1], [], []>} : vector<32x1152xbf16>, vector<1152x128xbf16>, vector<32x128xf32> -> vector<32x128xf32>
    %7 = arith.addf %3, %6 : vector<32x128xf32>
    %c0_6 = arith.constant 0 : index
    %c0_7 = arith.constant 0 : index
    %8 = vector.load %arg8[%c0_6, %c0_7] : memref<32x128xf32, #tpu.memory_space<vmem>>, vector<32x128xf32>
    tpu.vector_store %arg8[%c0_6, %c0_7], %7 {strides = array<i32>} : memref<32x128xf32, #tpu.memory_space<vmem>>, vector<32x128xf32>,
    %c1_i32 = arith.constant 1 : i32
    %9 = arith.cmpi eq, %arg2, %c1_i32 : i32
    %10 = arith.extui %9 : i1 to i32
    %c0_i32_8 = arith.constant 0 : i32
    %11 = arith.cmpi ne, %10, %c0_i32_8 : i32
    scf.if %11 {
      %c0_9 = arith.constant 0 : index
      %c0_10 = arith.constant 0 : index
      %12 = vector.load %arg8[%c0_9, %c0_10] : memref<32x128xf32, #tpu.memory_space<vmem>>, vector<32x128xf32>
      %c0_11 = arith.constant 0 : index
      %c0_12 = arith.constant 0 : index
      %13 = vector.load %arg5[%c0_11, %c0_12] : memref<1x128xf32, #tpu.memory_space<vmem>>, vector<1x128xf32>
      %14 = vector.broadcast %13 : vector<1x128xf32> to vector<32x128xf32>
      %15 = arith.mulf %12, %14 : vector<32x128xf32>
      %c0_13 = arith.constant 0 : index
      %c0_14 = arith.constant 0 : index
      %16 = vector.load %arg6[%c0_13, %c0_14] : memref<1x128xf32, #tpu.memory_space<vmem>>, vector<1x128xf32>
      %17 = vector.broadcast %16 : vector<1x128xf32> to vector<32x128xf32>
      %18 = arith.addf %15, %17 : vector<32x128xf32>
      %cst_15 = arith.constant 0.000000e+00 : f32
      %19 = vector.broadcast %cst_15 : f32 to vector<32x128xf32>
      %20 = arith.maximumf %18, %19 : vector<32x128xf32>
      %21 = arith.truncf %20 : vector<32x128xf32> to vector<32x128xbf16>
      %c0_16 = arith.constant 0 : index
      %c0_17 = arith.constant 0 : index
      %22 = vector.load %arg7[%c0_16, %c0_17] : memref<32x128xbf16, #tpu.memory_space<vmem>>, vector<32x128xbf16>
      tpu.vector_store %arg7[%c0_16, %c0_17], %21 {strides = array<i32>} : memref<32x128xbf16, #tpu.memory_space<vmem>>, vector<32x128xbf16>,
    } else {
    }
    return
  }
  func.func @transform_0(%arg0: i32, %arg1: i32, %arg2: i32) -> (i32, i32) {
    %c0_i32 = arith.constant 0 : i32
    return %arg0, %arg2 : i32, i32
  }
  func.func @transform_1(%arg0: i32, %arg1: i32, %arg2: i32) -> (i32, i32) {
    %c0_i32 = arith.constant 0 : i32
    return %arg2, %arg1 : i32, i32
  }
  func.func @transform_2(%arg0: i32, %arg1: i32, %arg2: i32) -> (i32, i32) {
    %c0_i32 = arith.constant 0 : i32
    %c0_i32_0 = arith.constant 0 : i32
    return %c0_i32, %arg1 : i32, i32
  }
  func.func @transform_3(%arg0: i32, %arg1: i32, %arg2: i32) -> (i32, i32) {
    %c0_i32 = arith.constant 0 : i32
    %c0_i32_0 = arith.constant 0 : i32
    return %c0_i32, %arg1 : i32, i32
  }
  func.func @transform_4(%arg0: i32, %arg1: i32, %arg2: i32) -> (i32, i32) {
    %c0_i32 = arith.constant 0 : i32
    return %arg0, %arg1 : i32, i32
  }
}

</mosaic_0001>

<llo_original>
// kernel: _lambda_.7
$region0: #{_lambda_.7}
  #allocation0 [shape = 'u32[]', space=smem, size = 0x4, offset = 0x4, fixed_abs, tag = 'smem constant byte address 0x4 - core index']
  #allocation1 [shape = 'u32[144,128]{1,0:T(1,128)}', space=vmem, size = 0x12000, scoped, tag = 'internal scratch']
  #allocation2 [shape = 'f32[32,128]{1,0:T(8,128)}', space=vmem, size = 0x4000, scoped, tag = 'scratch operand']
  %s0 = inlined_call_operand.vmem [shape: bf16[32,128], index: 0, kind: input, shape index: {}]
  %s1 = inlined_call_operand.hbm [shape: bf16[128,128], index: 1, kind: input, shape index: {}]
  %s2 = inlined_call_operand.hbm [shape: f32[1,128], index: 2, kind: input, shape index: {}]
  %s3 = inlined_call_operand.hbm [shape: f32[1,128], index: 3, kind: input, shape index: {}]
  %s4 = inlined_call_operand.vmem [shape: bf16[32,128], index: 4, kind: output, shape index: {}]
  %s5 = sld [smem:[#allocation0]]
  $region46: #{_lambda_.7} parent=0
    _
  %s7 = ssub.s32 1, %s5
  %s8 = scalar_select 0, %s7, %s5
  $region1: #{_lambda_.7} parent=0
    #allocation3 [shape = 'u8[32768]{0}', space=vmem, size = 0x8000, scoped, tag = 'input window, operand 1, single buffered']
    #allocation4 [shape = 's32[1]{0}', space=sflag, size = 0x4, scoped, tag = 'scoped memory for _lambda_.7']
    #allocation5 [shape = 'u8[512]{0}', space=vmem, size = 0x400, scoped, tag = 'input window, operand 2, single buffered']
    #allocation6 [shape = 's32[1]{0}', space=sflag, size = 0x4, scoped, tag = 'scoped memory for _lambda_.7']
    #allocation7 [shape = 'u8[512]{0}', space=vmem, size = 0x400, scoped, tag = 'input window, operand 3, single buffered']
    %9 = vsyncpa [#allocation4], 0
    %10 = vsyncpa [#allocation6], 0
    // Predicated region
    $region2: #{_lambda_.7} parent=1 // pred_check
      _
    $region3: #{_lambda_.7} parent=1 // pred_check_branch
      %12 = sbr.rel (0) target = $region5
    $region4: #{_lambda_.7} parent=1 // pred_region
      _
    $region5: #{_lambda_.7} parent=1 // pred_fallthru
      _
    // Predicated region
    $region6: #{_lambda_.7} parent=1 // pred_check
      _
    $region7: #{_lambda_.7} parent=1 // pred_check_branch
      %14 = sbr.rel (0) target = $region9
    $region8: #{_lambda_.7} parent=1 // pred_region
      %s16 = ssub.s32 1024, 1024
      %17 = vsyncadd [#allocation4], %s16
      %s18 = sshll.u32 [#allocation3], 4
      %s19 = int_to_ptr.vmem [resolvable:$true] %s18
      %24 = dma.hbm_to_vmem [thread:$0]  %s1, 1024, %s19, [#allocation4], 64, 64, 4
    $region9: #{_lambda_.7} parent=1 // pred_fallthru
      _
    // Predicated region
    $region10: #{_lambda_.7} parent=1 // pred_check
      _
    $region11: #{_lambda_.7} parent=1 // pred_check_branch
      %26 = sbr.rel (0) target = $region13
    $region12: #{_lambda_.7} parent=1 // pred_region
      %s28 = ssub.s32 16, 16
      %29 = vsyncadd [#allocation6], %s28
      %s31 = sshll.u32 [#allocation5], 4
      %s32 = int_to_ptr.vmem [resolvable:$true] %s31
      %34 = dma.hbm_to_vmem [thread:$0]  %s2, 16, %s32, [#allocation6]
    $region13: #{_lambda_.7} parent=1 // pred_fallthru
      _
    // Predicated region
    $region14: #{_lambda_.7} parent=1 // pred_check
      _
    $region15: #{_lambda_.7} parent=1 // pred_check_branch
      %36 = sbr.rel (0) target = $region17
    $region16: #{_lambda_.7} parent=1 // pred_region
      %s38 = ssub.s32 16, 16
      %39 = vsyncadd [#allocation6], %s38
      %s41 = sshll.u32 [#allocation7], 4
      %s42 = int_to_ptr.vmem [resolvable:$true] %s41
      %44 = dma.hbm_to_vmem [thread:$0]  %s3, 16, %s42, [#allocation6]
    $region17: #{_lambda_.7} parent=1 // pred_fallthru
      _
    // Predicated region
    $region18: #{_lambda_.7} parent=1 // pred_check
      _
    $region19: #{_lambda_.7} parent=1 // pred_check_branch
      %46 = sbr.rel (0) target = $region21
    $region20: #{_lambda_.7} parent=1 // pred_region
      %47 = dma.done [#allocation4], 1024
    $region21: #{_lambda_.7} parent=1 // pred_fallthru
      _
    // Predicated region
    $region22: #{_lambda_.7} parent=1 // pred_check
      _
    $region23: #{_lambda_.7} parent=1 // pred_check_branch
      %49 = sbr.rel (0) target = $region25
    $region24: #{_lambda_.7} parent=1 // pred_region
      %50 = dma.done [#allocation6], 16
    $region25: #{_lambda_.7} parent=1 // pred_fallthru
      _
    // Predicated region
    $region26: #{_lambda_.7} parent=1 // pred_check
      _
    $region27: #{_lambda_.7} parent=1 // pred_check_branch
      %52 = sbr.rel (0) target = $region29
    $region28: #{_lambda_.7} parent=1 // pred_region
      %53 = dma.done [#allocation6], 16
    $region29: #{_lambda_.7} parent=1 // pred_fallthru
      _
    %p55 = scmp.eq.s32.totalorder 0, 0
    // Predicated region
    $region30: #{_lambda_.7} parent=1 // pred_check
      %p56 = pneg %p55
    $region31: #{_lambda_.7} parent=1 // pred_check_branch
      %58 = sbr.rel (%p56) target = $region33
    $region32: #{_lambda_.7} parent=1 // pred_region
      %59 = vst [vmem:[#allocation2] sm:$0xff] 0.0
      %60 = vst [vmem:[#allocation2 + $0x8] sm:$0xff] 0.0
      %61 = vst [vmem:[#allocation2 + $0x10] sm:$0xff] 0.0
      %62 = vst [vmem:[#allocation2 + $0x18] sm:$0xff] 0.0
    $region33: #{_lambda_.7} parent=1 // pred_fallthru
      _
    %v63 = vld [vmem:[#allocation2] sm:$0xff]
    %v64 = vld [vmem:[#allocation2 + $0x8] sm:$0xff]
    %v65 = vld [vmem:[#allocation2 + $0x10] sm:$0xff]
    %v66 = vld [vmem:[#allocation2 + $0x18] sm:$0xff]
    %v67 = vld [vmem:[%s0] sm:$0xf]
    %v68 = vld [vmem:[%s0 + $0x4] sm:$0xf]
    %v69 = vld [vmem:[%s0 + $0x8] sm:$0xf]
    %v70 = vld [vmem:[%s0 + $0xc] sm:$0xf]
    %v71 = vld [vmem:[#allocation3] sm:$0xf]
    %v72 = vld [vmem:[#allocation3 + $0x4] sm:$0xf]
    %v73 = vld [vmem:[#allocation3 + $0x8] sm:$0xf]
    %v74 = vld [vmem:[#allocation3 + $0xc] sm:$0xf]
    %v75 = vld [vmem:[#allocation3 + $0x10] sm:$0xf]
    %v76 = vld [vmem:[#allocation3 + $0x14] sm:$0xf]
    %v77 = vld [vmem:[#allocation3 + $0x18] sm:$0xf]
    %v78 = vld [vmem:[#allocation3 + $0x1c] sm:$0xf]
    %v79 = vld [vmem:[#allocation3 + $0x20] sm:$0xf]
    %v80 = vld [vmem:[#allocation3 + $0x24] sm:$0xf]
    %v81 = vld [vmem:[#allocation3 + $0x28] sm:$0xf]
    %v82 = vld [vmem:[#allocation3 + $0x2c] sm:$0xf]
    %v83 = vld [vmem:[#allocation3 + $0x30] sm:$0xf]
    %v84 = vld [vmem:[#allocation3 + $0x34] sm:$0xf]
    %v85 = vld [vmem:[#allocation3 + $0x38] sm:$0xf]
    %v86 = vld [vmem:[#allocation3 + $0x3c] sm:$0xf]
    %v91 = vunpack.c.l.b16 %v67
    %v92 = vunpack.c.l.b16 %v68
    %v93 = vunpack.c.l.b16 %v69
    %v94 = vunpack.c.l.b16 %v70
    %v95 = vpack.c.b16 %v92, %v91
    %v96 = vpack.c.b16 %v94, %v93
    %v115 = vunpack.c.l.b16 %v71
    %v116 = vunpack.c.l.b16 %v72
    %v117 = vunpack.c.l.b16 %v73
    %v118 = vunpack.c.l.b16 %v74
    %v119 = vunpack.c.l.b16 %v75
    %v120 = vunpack.c.l.b16 %v76
    %v121 = vunpack.c.l.b16 %v77
    %v122 = vunpack.c.l.b16 %v78
    %v123 = vunpack.c.l.b16 %v79
    %v124 = vunpack.c.l.b16 %v80
    %v125 = vunpack.c.l.b16 %v81
    %v126 = vunpack.c.l.b16 %v82
    %v127 = vunpack.c.l.b16 %v83
    %v128 = vunpack.c.l.b16 %v84
    %v129 = vunpack.c.l.b16 %v85
    %v130 = vunpack.c.l.b16 %v86
    %v131 = vpack.c.b16 %v116, %v115
    %v132 = vpack.c.b16 %v118, %v117
    %v133 = vpack.c.b16 %v120, %v119
    %v134 = vpack.c.b16 %v122, %v121
    %v135 = vpack.c.b16 %v124, %v123
    %v136 = vpack.c.b16 %v126, %v125
    %v137 = vpack.c.b16 %v128, %v127
    %v138 = vpack.c.b16 %v130, %v129
    %147 = vmatprep.subr.bf16.mxu0 0
    %148 = vmatpush1.bf16.msra.mxu0 %v131
    %149 = vmatprep.subr.bf16.mxu0 0
    %150 = vmatpush1.bf16.msra.mxu0 %v132
    %151 = vmatprep.subr.bf16.mxu0 0
    %152 = vmatpush1.bf16.msra.mxu0 %v133
    %153 = vmatprep.subr.bf16.mxu0 0
    %154 = vmatpush1.bf16.msra.mxu0 %v134
    %155 = vmatprep.subr.bf16.mxu0 0
    %156 = vmatpush1.bf16.msra.mxu0 %v135
    %157 = vmatprep.subr.bf16.mxu0 0
    %158 = vmatpush1.bf16.msra.mxu0 %v136
    %159 = vmatprep.subr.bf16.mxu0 0
    %160 = vmatpush1.bf16.msra.mxu0 %v137
    %161 = vmatprep.subr.bf16.mxu0 0
    %162 = vmatpush1.bf16.msra.mxu0 %v138
    %163 = vmatprep.subr.bf16.mxu0 0
    %164 = vmatpush1.bf16.msra.mxu0 0
    %165 = vmatprep.subr.bf16.mxu0 0
    %166 = vmatpush1.bf16.msra.mxu0 0
    %167 = vmatprep.subr.bf16.mxu0 0
    %168 = vmatpush1.bf16.msra.mxu0 0
    %169 = vmatprep.subr.bf16.mxu0 0
    %170 = vmatpush1.bf16.msra.mxu0 0
    %171 = vmatprep.subr.bf16.mxu0 0
    %172 = vmatpush1.bf16.msra.mxu0 0
    %173 = vmatprep.subr.bf16.mxu0 0
    %174 = vmatpush1.bf16.msra.mxu0 0
    %175 = vmatprep.subr.bf16.mxu0 0
    %176 = vmatpush1.bf16.msra.mxu0 0
    %177 = vmatprep.subr.bf16.mxu0 0
    %178 = vmatpush1.bf16.msra.mxu0 0
    %179 = vmatprep.mubr.bf16.mxu0 0
    %180 = vmatmul.mubr.bf16.gmra.mrb[0].mxu0 %v95
    %v181 = vpop.f32.mrb[0].mxu0
    %v182 = vadd.f32 0.0, %v181
    %v183 = vpop.f32.mrb[0].mxu0
    %v184 = vpop.f32.mrb[0].mxu0
    %v185 = vadd.f32 0.0, %v184
    %v186 = vpop.f32.mrb[0].mxu0
    %187 = vmatprep.mubr.bf16.mxu0 0
    %188 = vmatmul.mubr.bf16.gmra.mrb[0].mxu0 %v96
    %v189 = vpop.f32.mrb[0].mxu0
    %v190 = vadd.f32 0.0, %v189
    %v191 = vpop.f32.mrb[0].mxu0
    %v192 = vpop.f32.mrb[0].mxu0
    %v193 = vadd.f32 0.0, %v192
    %v194 = vpop.f32.mrb[0].mxu0
    %195 = vdwg.mxu0
    %v196 = vadd.f32 %v63, %v182
    %v197 = vadd.f32 %v64, %v185
    %v198 = vadd.f32 %v65, %v190
    %v199 = vadd.f32 %v66, %v193
    %200 = vst [vmem:[#allocation2] sm:$0xff] %v196
    %201 = vst [vmem:[#allocation2 + $0x8] sm:$0xff] %v197
    %202 = vst [vmem:[#allocation2 + $0x10] sm:$0xff] %v198
    %203 = vst [vmem:[#allocation2 + $0x18] sm:$0xff] %v199
    // Predicated region
    $region34: #{_lambda_.7} parent=1 // pred_check
      %p204 = pneg %p55
    $region35: #{_lambda_.7} parent=1 // pred_check_branch
      %206 = sbr.rel (%p204) target = $region37
    $region36: #{_lambda_.7} parent=1 // pred_region
      %v207 = vld [vmem:[#allocation2] sm:$0xff]
      %v208 = vld [vmem:[#allocation2 + $0x8] sm:$0xff]
      %v209 = vld [vmem:[#allocation2 + $0x10] sm:$0xff]
      %v210 = vld [vmem:[#allocation2 + $0x18] sm:$0xff]
      %v211 = vld [vmem:[#allocation5] sm:$0x1]
      %v213 = vlaneseq
      %v214 = vshrl.u32 %v213, 7
      %v215 = vsub.s32 0, %v214
      %v216 = vrot.slane %v211, %v215
      %v218 = vmul.f32 %v207, %v216
      %v219 = vmul.f32 %v208, %v216
      %v220 = vmul.f32 %v209, %v216
      %v221 = vmul.f32 %v210, %v216
      %v222 = vld [vmem:[#allocation7] sm:$0x1]
      %v224 = vlaneseq
      %v225 = vshrl.u32 %v224, 7
      %v226 = vsub.s32 0, %v225
      %v227 = vrot.slane %v222, %v226
      %v229 = vadd.f32 %v218, %v227
      %v230 = vadd.f32 %v219, %v227
      %v231 = vadd.f32 %v220, %v227
      %v232 = vadd.f32 %v221, %v227
      %v233 = vmax.f32 %v229, 0.0
      %v234 = vmax.f32 %v230, 0.0
      %v235 = vmax.f32 %v231, 0.0
      %v236 = vmax.f32 %v232, 0.0
      %v237 = vpack.c.bf16 %v234, %v233
      %v238 = vpack.c.bf16 %v236, %v235
      %v241 = vunpack.c.l.b16 %v237
      %v242 = vunpack.c.h.b16 %v237
      %v243 = vunpack.c.l.b16 %v238
      %v244 = vunpack.c.h.b16 %v238
      %v245 = vpack.c.b16 %v241, %v241
      %v246 = vpack.c.b16 %v242, %v242
      %v247 = vpack.c.b16 %v243, %v243
      %v248 = vpack.c.b16 %v244, %v244
      %253 = vst [vmem:[%s4] sm:$0xf] %v245
      %254 = vst [vmem:[%s4 + $0x4] sm:$0xf] %v246
      %255 = vst [vmem:[%s4 + $0x8] sm:$0xf] %v247
      %256 = vst [vmem:[%s4 + $0xc] sm:$0xf] %v248
    $region37: #{_lambda_.7} parent=1 // pred_fallthru
      _
    // Predicated region
    $region38: #{_lambda_.7} parent=1 // pred_check
      _
    $region39: #{_lambda_.7} parent=1 // pred_check_branch
      %258 = sbr.rel (0) target = $region41
    $region40: #{_lambda_.7} parent=1 // pred_region
      _
    $region41: #{_lambda_.7} parent=1 // pred_fallthru
      _
    // Predicated region
    $region42: #{_lambda_.7} parent=1 // pred_check
      _
    $region43: #{_lambda_.7} parent=1 // pred_check_branch
      %260 = sbr.rel (0) target = $region45
    $region44: #{_lambda_.7} parent=1 // pred_region
      _
    $region45: #{_lambda_.7} parent=1 // pred_fallthru
      _
    %261 = vsyncpa [#allocation4], 1
    %262 = vsyncpa [#allocation6], 1

// kernel: _lambda_.8
$region0: #{_lambda_.8}
  #allocation0 [shape = 'u32[]', space=smem, size = 0x4, offset = 0x4, fixed_abs, tag = 'smem constant byte address 0x4 - core index']
  #allocation1 [shape = 'u32[144,128]{1,0:T(1,128)}', space=vmem, size = 0x12000, scoped, tag = 'internal scratch']
  #allocation2 [shape = 'f32[32,128]{1,0:T(8,128)}', space=vmem, size = 0x4000, scoped, tag = 'scratch operand']
  %s0 = inlined_call_operand.vmem [shape: bf16[32,128], index: 0, kind: input, shape index: {}]
  %s1 = inlined_call_operand.vmem [shape: bf16[128,256], index: 1, kind: input, shape index: {}]
  %s2 = inlined_call_operand.hbm [shape: f32[1,256], index: 2, kind: input, shape index: {}]
  %s3 = inlined_call_operand.hbm [shape: f32[1,256], index: 3, kind: input, shape index: {}]
  %s4 = inlined_call_operand.vmem [shape: bf16[32,256], index: 4, kind: output, shape index: {}]
  %s5 = sld [smem:[#allocation0]]
  $region143: #{_lambda_.8} parent=0
    _
  %s7 = ssub.s32 1, %s5
  %s8 = scalar_select 0, %s7, %s5
  $region1: #{_lambda_.8} parent=0
    #allocation3 [shape = 'u8[65536]{0}', space=vmem, size = 0x10000, scoped, tag = 'input window, operand 1']
    #allocation4 [shape = 'u8[1024]{0}', space=vmem, size = 0x400, scoped, tag = 'input window, operand 2']
    #allocation5 [shape = 's32[2]{0}', space=sflag, size = 0x8, scoped, tag = 'scoped memory for _lambda_.8']
    #allocation6 [shape = 'u8[1024]{0}', space=vmem, size = 0x400, scoped, tag = 'input window, operand 3']
    #allocation7 [shape = 's32[2]{0}', space=sflag, size = 0x8, scoped, tag = 'scoped memory for _lambda_.8']
    #allocation8 [shape = 'u8[16384]{0}', space=vmem, size = 0x4000, scoped, tag = 'output window, operand 0']
    %9 = vsyncpa [#allocation5], 0
    %s10 = scalar_lea.sflag [#allocation5], 1
    %11 = vsyncpa %s10, 0
    %12 = vsyncpa [#allocation7], 0
    %s13 = scalar_lea.sflag [#allocation7], 1
    %14 = vsyncpa %s13, 0
    loop: start=0, step=1, limit=4
    $region2: #{_lambda_.8} parent=1 // loop_pre_header
      _
    $region3: #{_lambda_.8} parent=1 // loop_header
      %s16 = sphi 0, %s20
      %p17 = scmp.ge.s32.totalorder %s16, 4
      %s23 = sphi 0, %s42
      %s24 = sphi 0, %s38
      %s25 = sphi 0, %s34
      %s26 = sphi 0, %s23
      %s27 = sphi 0, %s24
      %s28 = sphi 0, %s25
      %s29 = sphi 0, %s26
      %s30 = sphi 0, %s27
      %s31 = sphi 0, %s28
      %s47 = sphi 0, %s49
      %s50 = sphi 0, %s47
      %s51 = sphi 0, %s50
      %s67 = sphi 0, %s51
      %s75 = sphi 0, %s77
      %s78 = sphi 0, %s75
      %s79 = sphi 0, %s78
      %s95 = sphi 0, %s79
      %s101 = sphi 0, %s103
      %s104 = sphi 0, %s101
      %s105 = sphi 0, %s104
      %s121 = sphi 0, %s105
      %s127 = sphi 0, %s129
      %s130 = sphi 0, %s127
      %s131 = sphi 0, %s130
      %s147 = sphi 0, %s131
      %s155 = sphi 0, %s157
      %s158 = sphi 0, %s155
      %s159 = sphi 0, %s158
      %s175 = sphi 0, %s159
    $region4: #{_lambda_.8} parent=1 // loop_header_branch
      %19 = sbr.rel (%p17) target = $region8
    $region5: #{_lambda_.8} parent=1 // loop_body
      %s21 = ssub.s32 %s16, 1
      %s22 = ssub.s32 %s16, 2
      %s32 = sadd.s32 1, %s25
      %p33 = scmp.ge.s32.totalorder %s32, 1
      %s34 = scalar_select %p33, 0, %s32
      %s35 = sadd.s32 1, %s24
      %s36 = scalar_select %p33, %s35, %s24
      %p37 = scmp.ge.s32.totalorder %s36, 2
      %s38 = scalar_select %p37, 0, %s36
      %s39 = sadd.s32 1, %s23
      %s40 = scalar_select %p37, %s39, %s23
      %p41 = scmp.ge.s32.totalorder %s40, 1
      %s42 = scalar_select %p41, 0, %s40
      %s43 = ssub.s32 %s23, %s42
      %s44 = ssub.s32 %s25, %s34
      %s45 = sor.u32 %s43, %s44
      %p46 = scmp.eq.s32.totalorder %s45, 0
      %s48 = sadd.s32 %s47, 1
      %s49 = scalar_select %p46, %s47, %s48
      %p52 = pneg %p46
      %p53 = scmp.eq.s32.totalorder %s16, 1
      %p54 = por %p52, %p53
      %p55 = scmp.ne.s32.totalorder %s47, %s50
      %p56 = scmp.eq.s32.totalorder %s16, 0
      %p57 = por %p55, %p56
      %p58 = scmp.ne.s32.totalorder %s47, %s50
      %p59 = scmp.eq.s32.totalorder %s21, 1
      %p60 = por %p58, %p59
      %p61 = scmp.ne.s32.totalorder %s50, %s51
      %p62 = scmp.eq.s32.totalorder %s21, 0
      %p63 = por %p61, %p62
      %p64 = scmp.ne.s32.totalorder %s50, %s51
      %p65 = scmp.eq.s32.totalorder %s22, 1
      %p66 = por %p64, %p65
      %p68 = scmp.ne.s32.totalorder %s51, %s67
      %p69 = scmp.eq.s32.totalorder %s22, 0
      %p70 = por %p68, %p69
      %s71 = ssub.s32 %s25, %s34
      %s72 = ssub.s32 %s24, %s38
      %s73 = sor.u32 %s71, %s72
      %p74 = scmp.eq.s32.totalorder %s73, 0
      %s76 = sadd.s32 %s75, 1
      %s77 = scalar_select %p74, %s75, %s76
      %p80 = pneg %p74
      %p81 = scmp.eq.s32.totalorder %s16, 1
      %p82 = por %p80, %p81
      %p83 = scmp.ne.s32.totalorder %s75, %s78
      %p84 = scmp.eq.s32.totalorder %s16, 0
      %p85 = por %p83, %p84
      %p86 = scmp.ne.s32.totalorder %s75, %s78
      %p87 = scmp.eq.s32.totalorder %s21, 1
      %p88 = por %p86, %p87
      %p89 = scmp.ne.s32.totalorder %s78, %s79
      %p90 = scmp.eq.s32.totalorder %s21, 0
      %p91 = por %p89, %p90
      %p92 = scmp.ne.s32.totalorder %s78, %s79
      %p93 = scmp.eq.s32.totalorder %s22, 1
      %p94 = por %p92, %p93
      %p96 = scmp.ne.s32.totalorder %s79, %s95
      %p97 = scmp.eq.s32.totalorder %s22, 0
      %p98 = por %p96, %p97
      %s99 = ssub.s32 %s24, %s38
      %p100 = scmp.eq.s32.totalorder %s99, 0
      %s102 = sadd.s32 %s101, 1
      %s103 = scalar_select %p100, %s101, %s102
      %p106 = pneg %p100
      %p107 = scmp.eq.s32.totalorder %s16, 1
      %p108 = por %p106, %p107
      %p109 = scmp.ne.s32.totalorder %s101, %s104
      %p110 = scmp.eq.s32.totalorder %s16, 0
      %p111 = por %p109, %p110
      %p112 = scmp.ne.s32.totalorder %s101, %s104
      %p113 = scmp.eq.s32.totalorder %s21, 1
      %p114 = por %p112, %p113
      %p115 = scmp.ne.s32.totalorder %s104, %s105
      %p116 = scmp.eq.s32.totalorder %s21, 0
      %p117 = por %p115, %p116
      %p118 = scmp.ne.s32.totalorder %s104, %s105
      %p119 = scmp.eq.s32.totalorder %s22, 1
      %p120 = por %p118, %p119
      %p122 = scmp.ne.s32.totalorder %s105, %s121
      %p123 = scmp.eq.s32.totalorder %s22, 0
      %p124 = por %p122, %p123
      %s125 = ssub.s32 %s24, %s38
      %p126 = scmp.eq.s32.totalorder %s125, 0
      %s128 = sadd.s32 %s127, 1
      %s129 = scalar_select %p126, %s127, %s128
      %p132 = pneg %p126
      %p133 = scmp.eq.s32.totalorder %s16, 1
      %p134 = por %p132, %p133
      %p135 = scmp.ne.s32.totalorder %s127, %s130
      %p136 = scmp.eq.s32.totalorder %s16, 0
      %p137 = por %p135, %p136
      %p138 = scmp.ne.s32.totalorder %s127, %s130
      %p139 = scmp.eq.s32.totalorder %s21, 1
      %p140 = por %p138, %p139
      %p141 = scmp.ne.s32.totalorder %s130, %s131
      %p142 = scmp.eq.s32.totalorder %s21, 0
      %p143 = por %p141, %p142
      %p144 = scmp.ne.s32.totalorder %s130, %s131
      %p145 = scmp.eq.s32.totalorder %s22, 1
      %p146 = por %p144, %p145
      %p148 = scmp.ne.s32.totalorder %s131, %s147
      %p149 = scmp.eq.s32.totalorder %s22, 0
      %p150 = por %p148, %p149
      %s151 = ssub.s32 %s23, %s42
      %s152 = ssub.s32 %s24, %s38
      %s153 = sor.u32 %s151, %s152
      %p154 = scmp.eq.s32.totalorder %s153, 0
      %s156 = sadd.s32 %s155, 1
      %s157 = scalar_select %p154, %s155, %s156
      %p160 = pneg %p154
      %p161 = scmp.eq.s32.totalorder %s16, 1
      %p162 = por %p160, %p161
      %p163 = scmp.ne.s32.totalorder %s155, %s158
      %p164 = scmp.eq.s32.totalorder %s16, 0
      %p165 = por %p163, %p164
      %p166 = scmp.ne.s32.totalorder %s155, %s158
      %p167 = scmp.eq.s32.totalorder %s21, 1
      %p168 = por %p166, %p167
      %p169 = scmp.ne.s32.totalorder %s158, %s159
      %p170 = scmp.eq.s32.totalorder %s21, 0
      %p171 = por %p169, %p170
      %p172 = scmp.ne.s32.totalorder %s158, %s159
      %p173 = scmp.eq.s32.totalorder %s22, 1
      %p174 = por %p172, %p173
      %p176 = scmp.ne.s32.totalorder %s159, %s175
      %p177 = scmp.eq.s32.totalorder %s22, 0
      %p178 = por %p176, %p177
      %p179 = scmp.le.s32.totalorder 1, %s16
      %p180 = scmp.lt.s32.totalorder %s16, 3
      %p181 = pnand %p179, %p180
      %p182 = pneg %p181
      // Predicated region
      $region9: #{_lambda_.8} parent=5 // pred_check
        _
      $region10: #{_lambda_.8} parent=5 // pred_check_branch
        %184 = sbr.rel (%p181) target = $region12
      $region11: #{_lambda_.8} parent=5 // pred_region
        %s185 = ssub.s32 %s16, 1
        // Predicated region
        $region13: #{_lambda_.8} parent=11 // pred_check
          %p186 = pneg %p63
        $region14: #{_lambda_.8} parent=11 // pred_check_branch
          %188 = sbr.rel (%p186) target = $region16
        $region15: #{_lambda_.8} parent=11 // pred_region
          %s189 = smul.u32 4, %s26
          %p190 = scmp.lt.s32.totalorder %s189, 3
          %s191 = scalar_select %p190, %s189, 3
          %p192 = scmp.lt.s32.totalorder %s28, 0
          %s193 = scalar_select %p192, %s28, 0
          %s194 = sadd.s32 %s193, %s191
          %s195 = smul.addr %s194, 4
          %s196 = scalar_lea.vmem %s0, %s195
          %s197 = smul.u32 4, %s26
        $region16: #{_lambda_.8} parent=11 // pred_fallthru
          _
      $region12: #{_lambda_.8} parent=5 // pred_fallthru
        _
      %p198 = scmp.lt.s32.totalorder %s16, 2
      // Predicated region
      $region17: #{_lambda_.8} parent=5 // pred_check
        %p199 = pneg %p198
      $region18: #{_lambda_.8} parent=5 // pred_check_branch
        %201 = sbr.rel (%p199) target = $region20
      $region19: #{_lambda_.8} parent=5 // pred_region
        // Predicated region
        $region21: #{_lambda_.8} parent=19 // pred_check
          %p202 = pneg %p85
        $region22: #{_lambda_.8} parent=19 // pred_check_branch
          %204 = sbr.rel (%p202) target = $region24
        $region23: #{_lambda_.8} parent=19 // pred_region
          %s205 = sand.u32 %s75, 1
          %s206 = sand.u32 %s75, 1
          %s207 = smul.addr %s206, 64
          %s208 = scalar_lea.vmem [#allocation3], %s207
          %s209 = smul.u32 16, %s25
          %s210 = smul.addr %s209, 2
          %s211 = sadd.s32 %s24, %s210
          %s212 = smul.addr %s211, 4
          %s213 = scalar_lea.vmem %s1, %s212
          // Predicated region
          $region25: #{_lambda_.8} parent=23 // pred_check
            _
          $region26: #{_lambda_.8} parent=23 // pred_check_branch
            %215 = sbr.rel (0) target = $region28
          $region27: #{_lambda_.8} parent=23 // pred_region
            // Predicated region
            $region29: #{_lambda_.8} parent=27 // pred_check
              _
            $region30: #{_lambda_.8} parent=27 // pred_check_branch
              %217 = sbr.rel target = $region32
            $region31: #{_lambda_.8} parent=27 // pred_region
              // Predicated region
              $region44: #{_lambda_.8} parent=31 // pred_check
                _
              $region45: #{_lambda_.8} parent=31 // pred_check_branch
                %262 = sbr.rel (0) target = $region47
              $region46: #{_lambda_.8} parent=31 // pred_region
                loop: start=0, step=1, limit=1
                $region48: #{_lambda_.8} parent=46 // loop_pre_header
                  _
                $region49: #{_lambda_.8} parent=46 // loop_header
                  %s264 = sphi 0, %s268
                  %p265 = scmp.ge.s32.totalorder %s264, 1
                  %s269 = sphi %s213, %s213
                  %s270 = sphi %s208, %s208
                $region50: #{_lambda_.8} parent=46 // loop_header_branch
                  %267 = sbr.rel (%p265) target = $region54
                $region51: #{_lambda_.8} parent=46 // loop_body
                  _
                $region52: #{_lambda_.8} parent=46 // loop_footer
                  %s268 = sadd.s32 1, %s264
                $region53: #{_lambda_.8} parent=46 // loop_footer_branch
                  %263 = sbr.rel target = $region49
                $region54: #{_lambda_.8} parent=46 // loop_exit
                  _
                loop: start=0, step=1, limit=1
                $region55: #{_lambda_.8} parent=46 // loop_pre_header
                  _
                $region56: #{_lambda_.8} parent=46 // loop_header
                  %s273 = sphi 0, %s277
                  %p274 = scmp.ge.s32.totalorder %s273, 1
                  %s278 = sphi %s213, %s213
                  %s279 = sphi %s208, %s208
                $region57: #{_lambda_.8} parent=46 // loop_header_branch
                  %276 = sbr.rel (%p274) target = $region61
                $region58: #{_lambda_.8} parent=46 // loop_body
                  %v280 = vld [vmem:[%s278] sm:$0xf]
                  %281 = vst [vmem:[%s279] sm:$0xf] %v280
                  %v282 = vld [vmem:[%s278 + $0x8] sm:$0xf]
                  %283 = vst [vmem:[%s279 + $0x4] sm:$0xf] %v282
                  %v284 = vld [vmem:[%s278 + $0x10] sm:$0xf]
                  %285 = vst [vmem:[%s279 + $0x8] sm:$0xf] %v284
                  %v286 = vld [vmem:[%s278 + $0x18] sm:$0xf]
                  %287 = vst [vmem:[%s279 + $0xc] sm:$0xf] %v286
                  %v288 = vld [vmem:[%s278 + $0x20] sm:$0xf]
                  %289 = vst [vmem:[%s279 + $0x10] sm:$0xf] %v288
                  %v290 = vld [vmem:[%s278 + $0x28] sm:$0xf]
                  %291 = vst [vmem:[%s279 + $0x14] sm:$0xf] %v290
                  %v292 = vld [vmem:[%s278 + $0x30] sm:$0xf]
                  %293 = vst [vmem:[%s279 + $0x18] sm:$0xf] %v292
                  %v294 = vld [vmem:[%s278 + $0x38] sm:$0xf]
                  %295 = vst [vmem:[%s279 + $0x1c] sm:$0xf] %v294
                  %v296 = vld [vmem:[%s278 + $0x40] sm:$0xf]
                  %297 = vst [vmem:[%s279 + $0x20] sm:$0xf] %v296
                  %v298 = vld [vmem:[%s278 + $0x48] sm:$0xf]
                  %299 = vst [vmem:[%s279 + $0x24] sm:$0xf] %v298
                  %v300 = vld [vmem:[%s278 + $0x50] sm:$0xf]
                  %301 = vst [vmem:[%s279 + $0x28] sm:$0xf] %v300
                  %v302 = vld [vmem:[%s278 + $0x58] sm:$0xf]
                  %303 = vst [vmem:[%s279 + $0x2c] sm:$0xf] %v302
                  %v304 = vld [vmem:[%s278 + $0x60] sm:$0xf]
                  %305 = vst [vmem:[%s279 + $0x30] sm:$0xf] %v304
                  %v306 = vld [vmem:[%s278 + $0x68] sm:$0xf]
                  %307 = vst [vmem:[%s279 + $0x34] sm:$0xf] %v306
                  %v308 = vld [vmem:[%s278 + $0x70] sm:$0xf]
                  %309 = vst [vmem:[%s279 + $0x38] sm:$0xf] %v308
                  %v310 = vld [vmem:[%s278 + $0x78] sm:$0xf]
                  %311 = vst [vmem:[%s279 + $0x3c] sm:$0xf] %v310
                $region59: #{_lambda_.8} parent=46 // loop_footer
                  %s277 = sadd.s32 1, %s273
                $region60: #{_lambda_.8} parent=46 // loop_footer_branch
                  %272 = sbr.rel target = $region56
                $region61: #{_lambda_.8} parent=46 // loop_exit
                  _
              $region47: #{_lambda_.8} parent=31 // pred_fallthru
                _
            $region32: #{_lambda_.8} parent=27 // pred_fallthru
              _
            // Predicated region
            $region33: #{_lambda_.8} parent=27 // pred_check
              _
            $region34: #{_lambda_.8} parent=27 // pred_check_branch
              %219 = sbr.rel (0) target = $region36
            $region35: #{_lambda_.8} parent=27 // pred_region
              loop: start=0, step=1, limit=1
              $region37: #{_lambda_.8} parent=35 // loop_pre_header
                _
              $region38: #{_lambda_.8} parent=35 // loop_header
                %s222 = sphi 0, %s226
                %p223 = scmp.ge.s32.totalorder %s222, 1
                %s227 = sphi %s213, %s213
                %s228 = sphi %s208, %s208
              $region39: #{_lambda_.8} parent=35 // loop_header_branch
                %225 = sbr.rel (%p223) target = $region43
              $region40: #{_lambda_.8} parent=35 // loop_body
                %v229 = vld [vmem:[%s227] sm:$0xf]
                %230 = vst [vmem:[%s228] sm:$0xf] %v229
                %v231 = vld [vmem:[%s227 + $0x8] sm:$0xf]
                %232 = vst [vmem:[%s228 + $0x4] sm:$0xf] %v231
                %v233 = vld [vmem:[%s227 + $0x10] sm:$0xf]
                %234 = vst [vmem:[%s228 + $0x8] sm:$0xf] %v233
                %v235 = vld [vmem:[%s227 + $0x18] sm:$0xf]
                %236 = vst [vmem:[%s228 + $0xc] sm:$0xf] %v235
                %v237 = vld [vmem:[%s227 + $0x20] sm:$0xf]
                %238 = vst [vmem:[%s228 + $0x10] sm:$0xf] %v237
                %v239 = vld [vmem:[%s227 + $0x28] sm:$0xf]
                %240 = vst [vmem:[%s228 + $0x14] sm:$0xf] %v239
                %v241 = vld [vmem:[%s227 + $0x30] sm:$0xf]
                %242 = vst [vmem:[%s228 + $0x18] sm:$0xf] %v241
                %v243 = vld [vmem:[%s227 + $0x38] sm:$0xf]
                %244 = vst [vmem:[%s228 + $0x1c] sm:$0xf] %v243
                %v245 = vld [vmem:[%s227 + $0x40] sm:$0xf]
                %246 = vst [vmem:[%s228 + $0x20] sm:$0xf] %v245
                %v247 = vld [vmem:[%s227 + $0x48] sm:$0xf]
                %248 = vst [vmem:[%s228 + $0x24] sm:$0xf] %v247
                %v249 = vld [vmem:[%s227 + $0x50] sm:$0xf]
                %250 = vst [vmem:[%s228 + $0x28] sm:$0xf] %v249
                %v251 = vld [vmem:[%s227 + $0x58] sm:$0xf]
                %252 = vst [vmem:[%s228 + $0x2c] sm:$0xf] %v251
                %v253 = vld [vmem:[%s227 + $0x60] sm:$0xf]
                %254 = vst [vmem:[%s228 + $0x30] sm:$0xf] %v253
                %v255 = vld [vmem:[%s227 + $0x68] sm:$0xf]
                %256 = vst [vmem:[%s228 + $0x34] sm:$0xf] %v255
                %v257 = vld [vmem:[%s227 + $0x70] sm:$0xf]
                %258 = vst [vmem:[%s228 + $0x38] sm:$0xf] %v257
                %v259 = vld [vmem:[%s227 + $0x78] sm:$0xf]
                %260 = vst [vmem:[%s228 + $0x3c] sm:$0xf] %v259
              $region41: #{_lambda_.8} parent=35 // loop_footer
                %s226 = sadd.s32 1, %s222
              $region42: #{_lambda_.8} parent=35 // loop_footer_branch
                %221 = sbr.rel target = $region38
              $region43: #{_lambda_.8} parent=35 // loop_exit
                _
            $region36: #{_lambda_.8} parent=27 // pred_fallthru
              _
          $region28: #{_lambda_.8} parent=23 // pred_fallthru
            _
          %312 = vnop
        $region24: #{_lambda_.8} parent=19 // pred_fallthru
          _
        // Predicated region
        $region62: #{_lambda_.8} parent=19 // pred_check
          %p313 = pneg %p111
        $region63: #{_lambda_.8} parent=19 // pred_check_branch
          %315 = sbr.rel (%p313) target = $region65
        $region64: #{_lambda_.8} parent=19 // pred_region
          %s316 = sand.u32 %s101, 1
          %s317 = scalar_lea.sflag [#allocation5], %s316
          %s318 = sand.u32 %s101, 1
          %s319 = scalar_lea.vmem [#allocation4], %s318
          %s321 = ssub.s32 16, 16
          %322 = vsyncadd %s317, %s321
          %s323 = smul.addr %s24, 16
          %s324 = scalar_lea.hbm %s2, %s323
          %s326 = sshll.u32 %s319, 4
          %s327 = int_to_ptr.vmem [resolvable:$true] %s326
          %329 = dma.hbm_to_vmem [thread:$0]  %s324, 16, %s327, %s317
        $region65: #{_lambda_.8} parent=19 // pred_fallthru
          _
        // Predicated region
        $region66: #{_lambda_.8} parent=19 // pred_check
          %p330 = pneg %p137
        $region67: #{_lambda_.8} parent=19 // pred_check_branch
          %332 = sbr.rel (%p330) target = $region69
        $region68: #{_lambda_.8} parent=19 // pred_region
          %s333 = sand.u32 %s127, 1
          %s334 = scalar_lea.sflag [#allocation7], %s333
          %s335 = sand.u32 %s127, 1
          %s336 = scalar_lea.vmem [#allocation6], %s335
          %s338 = ssub.s32 16, 16
          %339 = vsyncadd %s334, %s338
          %s340 = smul.addr %s24, 16
          %s341 = scalar_lea.hbm %s3, %s340
          %s343 = sshll.u32 %s336, 4
          %s344 = int_to_ptr.vmem [resolvable:$true] %s343
          %346 = dma.hbm_to_vmem [thread:$0]  %s341, 16, %s344, %s334
        $region69: #{_lambda_.8} parent=19 // pred_fallthru
          _
      $region20: #{_lambda_.8} parent=5 // pred_fallthru
        _
      %p347 = scmp.le.s32.totalorder 1, %s16
      %p348 = scmp.lt.s32.totalorder %s16, 3
      %p349 = pnand %p347, %p348
      %p350 = pneg %p349
      // Predicated region
      $region70: #{_lambda_.8} parent=5 // pred_check
        _
      $region71: #{_lambda_.8} parent=5 // pred_check_branch
        %352 = sbr.rel (%p349) target = $region73
      $region72: #{_lambda_.8} parent=5 // pred_region
        %s353 = ssub.s32 %s16, 1
        %s354 = sand.u32 %s78, 1
        %s355 = sand.u32 %s78, 1
        %s356 = smul.addr %s355, 64
        %s357 = scalar_lea.vmem [#allocation3], %s356
        // Predicated region
        $region74: #{_lambda_.8} parent=72 // pred_check
          %p358 = pneg %p91
        $region75: #{_lambda_.8} parent=72 // pred_check_branch
          %360 = sbr.rel (%p358) target = $region77
        $region76: #{_lambda_.8} parent=72 // pred_region
          _
        $region77: #{_lambda_.8} parent=72 // pred_fallthru
          _
        %s361 = sand.u32 %s104, 1
        %s362 = scalar_lea.sflag [#allocation5], %s361
        %s363 = sand.u32 %s104, 1
        %s364 = scalar_lea.vmem [#allocation4], %s363
        // Predicated region
        $region78: #{_lambda_.8} parent=72 // pred_check
          %p365 = pneg %p117
        $region79: #{_lambda_.8} parent=72 // pred_check_branch
          %367 = sbr.rel (%p365) target = $region81
        $region80: #{_lambda_.8} parent=72 // pred_region
          %368 = dma.done %s362, 16
        $region81: #{_lambda_.8} parent=72 // pred_fallthru
          _
        %s369 = sand.u32 %s130, 1
        %s370 = scalar_lea.sflag [#allocation7], %s369
        %s371 = sand.u32 %s130, 1
        %s372 = scalar_lea.vmem [#allocation6], %s371
        // Predicated region
        $region82: #{_lambda_.8} parent=72 // pred_check
          %p373 = pneg %p143
        $region83: #{_lambda_.8} parent=72 // pred_check_branch
          %375 = sbr.rel (%p373) target = $region85
        $region84: #{_lambda_.8} parent=72 // pred_region
          %376 = dma.done %s370, 16
        $region85: #{_lambda_.8} parent=72 // pred_fallthru
          _
        %s377 = smul.u32 4, %s26
        %p378 = scmp.lt.s32.totalorder %s377, 3
        %s379 = scalar_select %p378, %s377, 3
        %p380 = scmp.lt.s32.totalorder %s28, 0
        %s381 = scalar_select %p380, %s28, 0
        %s382 = sadd.s32 %s381, %s379
        %s383 = smul.addr %s382, 4
        %s384 = scalar_lea.vmem %s0, %s383
        %p385 = pneg %p63
        %p386 = pneg %p60
        %s387 = sand.u32 %s78, 1
        %s388 = sand.u32 %s78, 1
        %s389 = smul.addr %s388, 64
        %s390 = scalar_lea.vmem [#allocation3], %s389
        %p391 = pneg %p91
        %p392 = pneg %p88
        %s393 = sand.u32 %s104, 1
        %s394 = scalar_lea.sflag [#allocation5], %s393
        %s395 = sand.u32 %s104, 1
        %s396 = scalar_lea.vmem [#allocation4], %s395
        %p397 = pneg %p117
        %p398 = pneg %p114
        %s399 = sand.u32 %s130, 1
        %s400 = scalar_lea.sflag [#allocation7], %s399
        %s401 = sand.u32 %s130, 1
        %s402 = scalar_lea.vmem [#allocation6], %s401
        %p403 = pneg %p143
        %p404 = pneg %p140
        %p405 = pneg %p171
        %p406 = pneg %p168
        %s407 = sand.u32 %s158, 1
        %s408 = sand.u32 %s158, 1
        %s409 = smul.addr %s408, 16
        %s410 = scalar_lea.vmem [#allocation8], %s409
        %s411 = smul.u32 4, %s26
        %p412 = scmp.lt.s32.totalorder %s411, 3
        %s413 = scalar_select %p412, %s411, 3
        %p414 = scmp.lt.s32.totalorder %s28, 0
        %s415 = scalar_select %p414, %s28, 0
        %s416 = sadd.s32 %s415, %s413
        %s417 = smul.addr %s416, 4
        %s418 = scalar_lea.vmem %s0, %s417
        %s419 = smul.u32 4, %s26
        %s420 = smul.u32 16, %s28
        %s421 = smul.u32 4, %s26
        %p423 = scmp.eq.s32.totalorder %s28, 0
        // Predicated region
        $region86: #{_lambda_.8} parent=72 // pred_check
          %p424 = pneg %p423
        $region87: #{_lambda_.8} parent=72 // pred_check_branch
          %426 = sbr.rel (%p424) target = $region89
        $region88: #{_lambda_.8} parent=72 // pred_region
          %427 = vst [vmem:[#allocation2] sm:$0xff] 0.0
          %428 = vst [vmem:[#allocation2 + $0x8] sm:$0xff] 0.0
          %429 = vst [vmem:[#allocation2 + $0x10] sm:$0xff] 0.0
          %430 = vst [vmem:[#allocation2 + $0x18] sm:$0xff] 0.0
        $region89: #{_lambda_.8} parent=72 // pred_fallthru
          _
        %v431 = vld [vmem:[#allocation2] sm:$0xff]
        %v432 = vld [vmem:[#allocation2 + $0x8] sm:$0xff]
        %v433 = vld [vmem:[#allocation2 + $0x10] sm:$0xff]
        %v434 = vld [vmem:[#allocation2 + $0x18] sm:$0xff]
        %v435 = vld [vmem:[%s418] sm:$0xf]
        %v436 = vld [vmem:[%s418 + $0x4] sm:$0xf]
        %v437 = vld [vmem:[%s418 + $0x8] sm:$0xf]
        %v438 = vld [vmem:[%s418 + $0xc] sm:$0xf]
        %v439 = vld [vmem:[%s357] sm:$0xf]
        %v440 = vld [vmem:[%s357 + $0x4] sm:$0xf]
        %v441 = vld [vmem:[%s357 + $0x8] sm:$0xf]
        %v442 = vld [vmem:[%s357 + $0xc] sm:$0xf]
        %v443 = vld [vmem:[%s357 + $0x10] sm:$0xf]
        %v444 = vld [vmem:[%s357 + $0x14] sm:$0xf]
        %v445 = vld [vmem:[%s357 + $0x18] sm:$0xf]
        %v446 = vld [vmem:[%s357 + $0x1c] sm:$0xf]
        %v447 = vld [vmem:[%s357 + $0x20] sm:$0xf]
        %v448 = vld [vmem:[%s357 + $0x24] sm:$0xf]
        %v449 = vld [vmem:[%s357 + $0x28] sm:$0xf]
        %v450 = vld [vmem:[%s357 + $0x2c] sm:$0xf]
        %v451 = vld [vmem:[%s357 + $0x30] sm:$0xf]
        %v452 = vld [vmem:[%s357 + $0x34] sm:$0xf]
        %v453 = vld [vmem:[%s357 + $0x38] sm:$0xf]
        %v454 = vld [vmem:[%s357 + $0x3c] sm:$0xf]
        %v459 = vunpack.c.l.b16 %v435
        %v460 = vunpack.c.l.b16 %v436
        %v461 = vunpack.c.l.b16 %v437
        %v462 = vunpack.c.l.b16 %v438
        %v463 = vpack.c.b16 %v460, %v459
        %v464 = vpack.c.b16 %v462, %v461
        %v483 = vunpack.c.l.b16 %v439
        %v484 = vunpack.c.l.b16 %v440
        %v485 = vunpack.c.l.b16 %v441
        %v486 = vunpack.c.l.b16 %v442
        %v487 = vunpack.c.l.b16 %v443
        %v488 = vunpack.c.l.b16 %v444
        %v489 = vunpack.c.l.b16 %v445
        %v490 = vunpack.c.l.b16 %v446
        %v491 = vunpack.c.l.b16 %v447
        %v492 = vunpack.c.l.b16 %v448
        %v493 = vunpack.c.l.b16 %v449
        %v494 = vunpack.c.l.b16 %v450
        %v495 = vunpack.c.l.b16 %v451
        %v496 = vunpack.c.l.b16 %v452
        %v497 = vunpack.c.l.b16 %v453
        %v498 = vunpack.c.l.b16 %v454
        %v499 = vpack.c.b16 %v484, %v483
        %v500 = vpack.c.b16 %v486, %v485
        %v501 = vpack.c.b16 %v488, %v487
        %v502 = vpack.c.b16 %v490, %v489
        %v503 = vpack.c.b16 %v492, %v491
        %v504 = vpack.c.b16 %v494, %v493
        %v505 = vpack.c.b16 %v496, %v495
        %v506 = vpack.c.b16 %v498, %v497
        %515 = vmatprep.subr.bf16.mxu0 0
        %516 = vmatpush1.bf16.msra.mxu0 %v499
        %517 = vmatprep.subr.bf16.mxu0 0
        %518 = vmatpush1.bf16.msra.mxu0 %v500
        %519 = vmatprep.subr.bf16.mxu0 0
        %520 = vmatpush1.bf16.msra.mxu0 %v501
        %521 = vmatprep.subr.bf16.mxu0 0
        %522 = vmatpush1.bf16.msra.mxu0 %v502
        %523 = vmatprep.subr.bf16.mxu0 0
        %524 = vmatpush1.bf16.msra.mxu0 %v503
        %525 = vmatprep.subr.bf16.mxu0 0
        %526 = vmatpush1.bf16.msra.mxu0 %v504
        %527 = vmatprep.subr.bf16.mxu0 0
        %528 = vmatpush1.bf16.msra.mxu0 %v505
        %529 = vmatprep.subr.bf16.mxu0 0
        %530 = vmatpush1.bf16.msra.mxu0 %v506
        %531 = vmatprep.subr.bf16.mxu0 0
        %532 = vmatpush1.bf16.msra.mxu0 0
        %533 = vmatprep.subr.bf16.mxu0 0
        %534 = vmatpush1.bf16.msra.mxu0 0
        %535 = vmatprep.subr.bf16.mxu0 0
        %536 = vmatpush1.bf16.msra.mxu0 0
        %537 = vmatprep.subr.bf16.mxu0 0
        %538 = vmatpush1.bf16.msra.mxu0 0
        %539 = vmatprep.subr.bf16.mxu0 0
        %540 = vmatpush1.bf16.msra.mxu0 0
        %541 = vmatprep.subr.bf16.mxu0 0
        %542 = vmatpush1.bf16.msra.mxu0 0
        %543 = vmatprep.subr.bf16.mxu0 0
        %544 = vmatpush1.bf16.msra.mxu0 0
        %545 = vmatprep.subr.bf16.mxu0 0
        %546 = vmatpush1.bf16.msra.mxu0 0
        %547 = vmatprep.mubr.bf16.mxu0 0
        %548 = vmatmul.mubr.bf16.gmra.mrb[0].mxu0 %v463
        %v549 = vpop.f32.mrb[0].mxu0
        %v550 = vadd.f32 0.0, %v549
        %v551 = vpop.f32.mrb[0].mxu0
        %v552 = vpop.f32.mrb[0].mxu0
        %v553 = vadd.f32 0.0, %v552
        %v554 = vpop.f32.mrb[0].mxu0
        %555 = vmatprep.mubr.bf16.mxu0 0
        %556 = vmatmul.mubr.bf16.gmra.mrb[0].mxu0 %v464
        %v557 = vpop.f32.mrb[0].mxu0
        %v558 = vadd.f32 0.0, %v557
        %v559 = vpop.f32.mrb[0].mxu0
        %v560 = vpop.f32.mrb[0].mxu0
        %v561 = vadd.f32 0.0, %v560
        %v562 = vpop.f32.mrb[0].mxu0
        %563 = vdwg.mxu0
        %v564 = vadd.f32 %v431, %v550
        %v565 = vadd.f32 %v432, %v553
        %v566 = vadd.f32 %v433, %v558
        %v567 = vadd.f32 %v434, %v561
        %568 = vst [vmem:[#allocation2] sm:$0xff] %v564
        %569 = vst [vmem:[#allocation2 + $0x8] sm:$0xff] %v565
        %570 = vst [vmem:[#allocation2 + $0x10] sm:$0xff] %v566
        %571 = vst [vmem:[#allocation2 + $0x18] sm:$0xff] %v567
        // Predicated region
        $region90: #{_lambda_.8} parent=72 // pred_check
          %p572 = pneg %p423
        $region91: #{_lambda_.8} parent=72 // pred_check_branch
          %574 = sbr.rel (%p572) target = $region93
        $region92: #{_lambda_.8} parent=72 // pred_region
          %v575 = vld [vmem:[#allocation2] sm:$0xff]
          %v576 = vld [vmem:[#allocation2 + $0x8] sm:$0xff]
          %v577 = vld [vmem:[#allocation2 + $0x10] sm:$0xff]
          %v578 = vld [vmem:[#allocation2 + $0x18] sm:$0xff]
          %v579 = vld [vmem:[%s364] sm:$0x1]
          %v581 = vlaneseq
          %v582 = vshrl.u32 %v581, 7
          %v583 = vsub.s32 0, %v582
          %v584 = vrot.slane %v579, %v583
          %v586 = vmul.f32 %v575, %v584
          %v587 = vmul.f32 %v576, %v584
          %v588 = vmul.f32 %v577, %v584
          %v589 = vmul.f32 %v578, %v584
          %v590 = vld [vmem:[%s372] sm:$0x1]
          %v592 = vlaneseq
          %v593 = vshrl.u32 %v592, 7
          %v594 = vsub.s32 0, %v593
          %v595 = vrot.slane %v590, %v594
          %v597 = vadd.f32 %v586, %v595
          %v598 = vadd.f32 %v587, %v595
          %v599 = vadd.f32 %v588, %v595
          %v600 = vadd.f32 %v589, %v595
          %v601 = vmax.f32 %v597, 0.0
          %v602 = vmax.f32 %v598, 0.0
          %v603 = vmax.f32 %v599, 0.0
          %v604 = vmax.f32 %v600, 0.0
          %v605 = vpack.c.bf16 %v602, %v601
          %v606 = vpack.c.bf16 %v604, %v603
          %v609 = vunpack.c.l.b16 %v605
          %v610 = vunpack.c.h.b16 %v605
          %v611 = vunpack.c.l.b16 %v606
          %v612 = vunpack.c.h.b16 %v606
          %v613 = vpack.c.b16 %v609, %v609
          %v614 = vpack.c.b16 %v610, %v610
          %v615 = vpack.c.b16 %v611, %v611
          %v616 = vpack.c.b16 %v612, %v612
          %621 = vst [vmem:[%s410] sm:$0xf] %v613
          %622 = vst [vmem:[%s410 + $0x4] sm:$0xf] %v614
          %623 = vst [vmem:[%s410 + $0x8] sm:$0xf] %v615
          %624 = vst [vmem:[%s410 + $0xc] sm:$0xf] %v616
        $region93: #{_lambda_.8} parent=72 // pred_fallthru
          _
        %s625 = sand.u32 %s158, 1
        %s626 = sand.u32 %s158, 1
        %s627 = smul.addr %s626, 16
        %s628 = scalar_lea.vmem [#allocation8], %s627
        // Predicated region
        $region94: #{_lambda_.8} parent=72 // pred_check
          %p629 = pneg %p168
        $region95: #{_lambda_.8} parent=72 // pred_check_branch
          %631 = sbr.rel (%p629) target = $region97
        $region96: #{_lambda_.8} parent=72 // pred_region
          %s632 = smul.u32 4, %s26
          %s633 = smul.addr %s632, 2
          %s634 = sadd.s32 %s27, %s633
          %s635 = smul.addr %s634, 4
          %s636 = scalar_lea.vmem %s4, %s635
          // Predicated region
          $region98: #{_lambda_.8} parent=96 // pred_check
            _
          $region99: #{_lambda_.8} parent=96 // pred_check_branch
            %638 = sbr.rel (0) target = $region101
          $region100: #{_lambda_.8} parent=96 // pred_region
            // Predicated region
            $region102: #{_lambda_.8} parent=100 // pred_check
              _
            $region103: #{_lambda_.8} parent=100 // pred_check_branch
              %640 = sbr.rel target = $region105
            $region104: #{_lambda_.8} parent=100 // pred_region
              // Predicated region
              $region117: #{_lambda_.8} parent=104 // pred_check
                _
              $region118: #{_lambda_.8} parent=104 // pred_check_branch
                %661 = sbr.rel (0) target = $region120
              $region119: #{_lambda_.8} parent=104 // pred_region
                loop: start=0, step=1, limit=1
                $region121: #{_lambda_.8} parent=119 // loop_pre_header
                  _
                $region122: #{_lambda_.8} parent=119 // loop_header
                  %s663 = sphi 0, %s667
                  %p664 = scmp.ge.s32.totalorder %s663, 1
                  %s668 = sphi %s628, %s628
                  %s669 = sphi %s636, %s636
                $region123: #{_lambda_.8} parent=119 // loop_header_branch
                  %666 = sbr.rel (%p664) target = $region127
                $region124: #{_lambda_.8} parent=119 // loop_body
                  _
                $region125: #{_lambda_.8} parent=119 // loop_footer
                  %s667 = sadd.s32 1, %s663
                $region126: #{_lambda_.8} parent=119 // loop_footer_branch
                  %662 = sbr.rel target = $region122
                $region127: #{_lambda_.8} parent=119 // loop_exit
                  _
                loop: start=0, step=1, limit=1
                $region128: #{_lambda_.8} parent=119 // loop_pre_header
                  _
                $region129: #{_lambda_.8} parent=119 // loop_header
                  %s672 = sphi 0, %s676
                  %p673 = scmp.ge.s32.totalorder %s672, 1
                  %s677 = sphi %s628, %s628
                  %s678 = sphi %s636, %s636
                $region130: #{_lambda_.8} parent=119 // loop_header_branch
                  %675 = sbr.rel (%p673) target = $region134
                $region131: #{_lambda_.8} parent=119 // loop_body
                  %v679 = vld [vmem:[%s677] sm:$0xf]
                  %680 = vst [vmem:[%s678] sm:$0xf] %v679
                  %v681 = vld [vmem:[%s677 + $0x4] sm:$0xf]
                  %682 = vst [vmem:[%s678 + $0x8] sm:$0xf] %v681
                  %v683 = vld [vmem:[%s677 + $0x8] sm:$0xf]
                  %684 = vst [vmem:[%s678 + $0x10] sm:$0xf] %v683
                  %v685 = vld [vmem:[%s677 + $0xc] sm:$0xf]
                  %686 = vst [vmem:[%s678 + $0x18] sm:$0xf] %v685
                $region132: #{_lambda_.8} parent=119 // loop_footer
                  %s676 = sadd.s32 1, %s672
                $region133: #{_lambda_.8} parent=119 // loop_footer_branch
                  %671 = sbr.rel target = $region129
                $region134: #{_lambda_.8} parent=119 // loop_exit
                  _
              $region120: #{_lambda_.8} parent=104 // pred_fallthru
                _
            $region105: #{_lambda_.8} parent=100 // pred_fallthru
              _
            // Predicated region
            $region106: #{_lambda_.8} parent=100 // pred_check
              _
            $region107: #{_lambda_.8} parent=100 // pred_check_branch
              %642 = sbr.rel (0) target = $region109
            $region108: #{_lambda_.8} parent=100 // pred_region
              loop: start=0, step=1, limit=1
              $region110: #{_lambda_.8} parent=108 // loop_pre_header
                _
              $region111: #{_lambda_.8} parent=108 // loop_header
                %s645 = sphi 0, %s649
                %p646 = scmp.ge.s32.totalorder %s645, 1
                %s650 = sphi %s628, %s628
                %s651 = sphi %s636, %s636
              $region112: #{_lambda_.8} parent=108 // loop_header_branch
                %648 = sbr.rel (%p646) target = $region116
              $region113: #{_lambda_.8} parent=108 // loop_body
                %v652 = vld [vmem:[%s650] sm:$0xf]
                %653 = vst [vmem:[%s651] sm:$0xf] %v652
                %v654 = vld [vmem:[%s650 + $0x4] sm:$0xf]
                %655 = vst [vmem:[%s651 + $0x8] sm:$0xf] %v654
                %v656 = vld [vmem:[%s650 + $0x8] sm:$0xf]
                %657 = vst [vmem:[%s651 + $0x10] sm:$0xf] %v656
                %v658 = vld [vmem:[%s650 + $0xc] sm:$0xf]
                %659 = vst [vmem:[%s651 + $0x18] sm:$0xf] %v658
              $region114: #{_lambda_.8} parent=108 // loop_footer
                %s649 = sadd.s32 1, %s645
              $region115: #{_lambda_.8} parent=108 // loop_footer_branch
                %644 = sbr.rel target = $region111
              $region116: #{_lambda_.8} parent=108 // loop_exit
                _
            $region109: #{_lambda_.8} parent=100 // pred_fallthru
              _
          $region101: #{_lambda_.8} parent=96 // pred_fallthru
            _
          %687 = vnop
        $region97: #{_lambda_.8} parent=72 // pred_fallthru
          _
      $region73: #{_lambda_.8} parent=5 // pred_fallthru
        _
      %p688 = scmp.le.s32.totalorder 2, %s16
      // Predicated region
      $region135: #{_lambda_.8} parent=5 // pred_check
        %p689 = pneg %p688
      $region136: #{_lambda_.8} parent=5 // pred_check_branch
        %691 = sbr.rel (%p689) target = $region138
      $region137: #{_lambda_.8} parent=5 // pred_region
        %s692 = ssub.s32 %s16, 2
        // Predicated region
        $region139: #{_lambda_.8} parent=137 // pred_check
          %p693 = pneg %p174
        $region140: #{_lambda_.8} parent=137 // pred_check_branch
          %695 = sbr.rel (%p693) target = $region142
        $region141: #{_lambda_.8} parent=137 // pred_region
          %s696 = sand.u32 %s159, 1
          %s697 = sand.u32 %s159, 1
          %s698 = smul.addr %s697, 16
          %s699 = scalar_lea.vmem [#allocation8], %s698
        $region142: #{_lambda_.8} parent=137 // pred_fallthru
          _
      $region138: #{_lambda_.8} parent=5 // pred_fallthru
        _
    $region6: #{_lambda_.8} parent=1 // loop_footer
      %s20 = sadd.s32 1, %s16
    $region7: #{_lambda_.8} parent=1 // loop_footer_branch
      %15 = sbr.rel target = $region3
    $region8: #{_lambda_.8} parent=1 // loop_exit
      _
    %700 = vsyncpa [#allocation5], 1
    %s701 = scalar_lea.sflag [#allocation5], 1
    %702 = vsyncpa %s701, 1
    %703 = vsyncpa [#allocation7], 1
    %s704 = scalar_lea.sflag [#allocation7], 1
    %705 = vsyncpa %s704, 1

// kernel: _lambda_.9
$region0: #{_lambda_.9}
  #allocation0 [shape = 'u32[]', space=smem, size = 0x4, offset = 0x4, fixed_abs, tag = 'smem constant byte address 0x4 - core index']
  #allocation1 [shape = 'u32[144,128]{1,0:T(1,128)}', space=vmem, size = 0x12000, scoped, tag = 'internal scratch']
  #allocation2 [shape = 'f32[32,128]{1,0:T(8,128)}', space=vmem, size = 0x4000, scoped, tag = 'scratch operand']
  %s0 = inlined_call_operand.vmem [shape: bf16[32,1152], index: 0, kind: input, shape index: {}]
  %s1 = inlined_call_operand.vmem [shape: bf16[1152,256], index: 1, kind: input, shape index: {}]
  %s2 = inlined_call_operand.vmem [shape: f32[1,256], index: 2, kind: input, shape index: {}]
  %s3 = inlined_call_operand.vmem [shape: f32[1,256], index: 3, kind: input, shape index: {}]
  %s4 = inlined_call_operand.vmem [shape: bf16[32,256], index: 4, kind: output, shape index: {}]
  %s5 = sld [smem:[#allocation0]]
  $region135: #{_lambda_.9} parent=0
    _
  %s7 = ssub.s32 1, %s5
  %s8 = scalar_select 0, %s7, %s5
  $region1: #{_lambda_.9} parent=0
    #allocation3 [shape = 'u8[589824]{0}', space=vmem, size = 0x90000, scoped, tag = 'input window, operand 1']
    #allocation4 [shape = 'u8[16384]{0}', space=vmem, size = 0x4000, scoped, tag = 'output window, operand 0']
    loop: start=0, step=1, limit=4
    $region2: #{_lambda_.9} parent=1 // loop_pre_header
      _
    $region3: #{_lambda_.9} parent=1 // loop_header
      %s10 = sphi 0, %s14
      %p11 = scmp.ge.s32.totalorder %s10, 4
      %s17 = sphi 0, %s36
      %s18 = sphi 0, %s32
      %s19 = sphi 0, %s28
      %s20 = sphi 0, %s17
      %s21 = sphi 0, %s18
      %s22 = sphi 0, %s19
      %s23 = sphi 0, %s20
      %s24 = sphi 0, %s21
      %s25 = sphi 0, %s22
      %s41 = sphi 0, %s43
      %s44 = sphi 0, %s41
      %s45 = sphi 0, %s44
      %s61 = sphi 0, %s45
      %s69 = sphi 0, %s71
      %s72 = sphi 0, %s69
      %s73 = sphi 0, %s72
      %s89 = sphi 0, %s73
      %s95 = sphi 0, %s97
      %s98 = sphi 0, %s95
      %s99 = sphi 0, %s98
      %s115 = sphi 0, %s99
      %s121 = sphi 0, %s123
      %s124 = sphi 0, %s121
      %s125 = sphi 0, %s124
      %s141 = sphi 0, %s125
      %s149 = sphi 0, %s151
      %s152 = sphi 0, %s149
      %s153 = sphi 0, %s152
      %s169 = sphi 0, %s153
    $region4: #{_lambda_.9} parent=1 // loop_header_branch
      %13 = sbr.rel (%p11) target = $region8
    $region5: #{_lambda_.9} parent=1 // loop_body
      %s15 = ssub.s32 %s10, 1
      %s16 = ssub.s32 %s10, 2
      %s26 = sadd.s32 1, %s19
      %p27 = scmp.ge.s32.totalorder %s26, 1
      %s28 = scalar_select %p27, 0, %s26
      %s29 = sadd.s32 1, %s18
      %s30 = scalar_select %p27, %s29, %s18
      %p31 = scmp.ge.s32.totalorder %s30, 2
      %s32 = scalar_select %p31, 0, %s30
      %s33 = sadd.s32 1, %s17
      %s34 = scalar_select %p31, %s33, %s17
      %p35 = scmp.ge.s32.totalorder %s34, 1
      %s36 = scalar_select %p35, 0, %s34
      %s37 = ssub.s32 %s17, %s36
      %s38 = ssub.s32 %s19, %s28
      %s39 = sor.u32 %s37, %s38
      %p40 = scmp.eq.s32.totalorder %s39, 0
      %s42 = sadd.s32 %s41, 1
      %s43 = scalar_select %p40, %s41, %s42
      %p46 = pneg %p40
      %p47 = scmp.eq.s32.totalorder %s10, 1
      %p48 = por %p46, %p47
      %p49 = scmp.ne.s32.totalorder %s41, %s44
      %p50 = scmp.eq.s32.totalorder %s10, 0
      %p51 = por %p49, %p50
      %p52 = scmp.ne.s32.totalorder %s41, %s44
      %p53 = scmp.eq.s32.totalorder %s15, 1
      %p54 = por %p52, %p53
      %p55 = scmp.ne.s32.totalorder %s44, %s45
      %p56 = scmp.eq.s32.totalorder %s15, 0
      %p57 = por %p55, %p56
      %p58 = scmp.ne.s32.totalorder %s44, %s45
      %p59 = scmp.eq.s32.totalorder %s16, 1
      %p60 = por %p58, %p59
      %p62 = scmp.ne.s32.totalorder %s45, %s61
      %p63 = scmp.eq.s32.totalorder %s16, 0
      %p64 = por %p62, %p63
      %s65 = ssub.s32 %s19, %s28
      %s66 = ssub.s32 %s18, %s32
      %s67 = sor.u32 %s65, %s66
      %p68 = scmp.eq.s32.totalorder %s67, 0
      %s70 = sadd.s32 %s69, 1
      %s71 = scalar_select %p68, %s69, %s70
      %p74 = pneg %p68
      %p75 = scmp.eq.s32.totalorder %s10, 1
      %p76 = por %p74, %p75
      %p77 = scmp.ne.s32.totalorder %s69, %s72
      %p78 = scmp.eq.s32.totalorder %s10, 0
      %p79 = por %p77, %p78
      %p80 = scmp.ne.s32.totalorder %s69, %s72
      %p81 = scmp.eq.s32.totalorder %s15, 1
      %p82 = por %p80, %p81
      %p83 = scmp.ne.s32.totalorder %s72, %s73
      %p84 = scmp.eq.s32.totalorder %s15, 0
      %p85 = por %p83, %p84
      %p86 = scmp.ne.s32.totalorder %s72, %s73
      %p87 = scmp.eq.s32.totalorder %s16, 1
      %p88 = por %p86, %p87
      %p90 = scmp.ne.s32.totalorder %s73, %s89
      %p91 = scmp.eq.s32.totalorder %s16, 0
      %p92 = por %p90, %p91
      %s93 = ssub.s32 %s18, %s32
      %p94 = scmp.eq.s32.totalorder %s93, 0
      %s96 = sadd.s32 %s95, 1
      %s97 = scalar_select %p94, %s95, %s96
      %p100 = pneg %p94
      %p101 = scmp.eq.s32.totalorder %s10, 1
      %p102 = por %p100, %p101
      %p103 = scmp.ne.s32.totalorder %s95, %s98
      %p104 = scmp.eq.s32.totalorder %s10, 0
      %p105 = por %p103, %p104
      %p106 = scmp.ne.s32.totalorder %s95, %s98
      %p107 = scmp.eq.s32.totalorder %s15, 1
      %p108 = por %p106, %p107
      %p109 = scmp.ne.s32.totalorder %s98, %s99
      %p110 = scmp.eq.s32.totalorder %s15, 0
      %p111 = por %p109, %p110
      %p112 = scmp.ne.s32.totalorder %s98, %s99
      %p113 = scmp.eq.s32.totalorder %s16, 1
      %p114 = por %p112, %p113
      %p116 = scmp.ne.s32.totalorder %s99, %s115
      %p117 = scmp.eq.s32.totalorder %s16, 0
      %p118 = por %p116, %p117
      %s119 = ssub.s32 %s18, %s32
      %p120 = scmp.eq.s32.totalorder %s119, 0
      %s122 = sadd.s32 %s121, 1
      %s123 = scalar_select %p120, %s121, %s122
      %p126 = pneg %p120
      %p127 = scmp.eq.s32.totalorder %s10, 1
      %p128 = por %p126, %p127
      %p129 = scmp.ne.s32.totalorder %s121, %s124
      %p130 = scmp.eq.s32.totalorder %s10, 0
      %p131 = por %p129, %p130
      %p132 = scmp.ne.s32.totalorder %s121, %s124
      %p133 = scmp.eq.s32.totalorder %s15, 1
      %p134 = por %p132, %p133
      %p135 = scmp.ne.s32.totalorder %s124, %s125
      %p136 = scmp.eq.s32.totalorder %s15, 0
      %p137 = por %p135, %p136
      %p138 = scmp.ne.s32.totalorder %s124, %s125
      %p139 = scmp.eq.s32.totalorder %s16, 1
      %p140 = por %p138, %p139
      %p142 = scmp.ne.s32.totalorder %s125, %s141
      %p143 = scmp.eq.s32.totalorder %s16, 0
      %p144 = por %p142, %p143
      %s145 = ssub.s32 %s17, %s36
      %s146 = ssub.s32 %s18, %s32
      %s147 = sor.u32 %s145, %s146
      %p148 = scmp.eq.s32.totalorder %s147, 0
      %s150 = sadd.s32 %s149, 1
      %s151 = scalar_select %p148, %s149, %s150
      %p154 = pneg %p148
      %p155 = scmp.eq.s32.totalorder %s10, 1
      %p156 = por %p154, %p155
      %p157 = scmp.ne.s32.totalorder %s149, %s152
      %p158 = scmp.eq.s32.totalorder %s10, 0
      %p159 = por %p157, %p158
      %p160 = scmp.ne.s32.totalorder %s149, %s152
      %p161 = scmp.eq.s32.totalorder %s15, 1
      %p162 = por %p160, %p161
      %p163 = scmp.ne.s32.totalorder %s152, %s153
      %p164 = scmp.eq.s32.totalorder %s15, 0
      %p165 = por %p163, %p164
      %p166 = scmp.ne.s32.totalorder %s152, %s153
      %p167 = scmp.eq.s32.totalorder %s16, 1
      %p168 = por %p166, %p167
      %p170 = scmp.ne.s32.totalorder %s153, %s169
      %p171 = scmp.eq.s32.totalorder %s16, 0
      %p172 = por %p170, %p171
      %p173 = scmp.le.s32.totalorder 1, %s10
      %p174 = scmp.lt.s32.totalorder %s10, 3
      %p175 = pnand %p173, %p174
      %p176 = pneg %p175
      // Predicated region
      $region9: #{_lambda_.9} parent=5 // pred_check
        _
      $region10: #{_lambda_.9} parent=5 // pred_check_branch
        %178 = sbr.rel (%p175) target = $region12
      $region11: #{_lambda_.9} parent=5 // pred_region
        %s179 = ssub.s32 %s10, 1
        // Predicated region
        $region13: #{_lambda_.9} parent=11 // pred_check
          %p180 = pneg %p57
        $region14: #{_lambda_.9} parent=11 // pred_check_branch
          %182 = sbr.rel (%p180) target = $region16
        $region15: #{_lambda_.9} parent=11 // pred_region
          %s183 = smul.u32 4, %s20
          %s184 = smul.u32 9, %s22
          %p185 = scmp.lt.s32.totalorder %s183, 3
          %s186 = scalar_select %p185, %s183, 3
          %p187 = scmp.lt.s32.totalorder %s184, 8
          %s188 = scalar_select %p187, %s184, 8
          %s189 = smul.addr %s186, 9
          %s190 = sadd.s32 %s188, %s189
          %s191 = smul.addr %s190, 4
          %s192 = scalar_lea.vmem %s0, %s191
          %s193 = smul.u32 4, %s20
          %s194 = smul.u32 9, %s22
        $region16: #{_lambda_.9} parent=11 // pred_fallthru
          _
      $region12: #{_lambda_.9} parent=5 // pred_fallthru
        _
      %p195 = scmp.lt.s32.totalorder %s10, 2
      // Predicated region
      $region17: #{_lambda_.9} parent=5 // pred_check
        %p196 = pneg %p195
      $region18: #{_lambda_.9} parent=5 // pred_check_branch
        %198 = sbr.rel (%p196) target = $region20
      $region19: #{_lambda_.9} parent=5 // pred_region
        // Predicated region
        $region21: #{_lambda_.9} parent=19 // pred_check
          %p199 = pneg %p79
        $region22: #{_lambda_.9} parent=19 // pred_check_branch
          %201 = sbr.rel (%p199) target = $region24
        $region23: #{_lambda_.9} parent=19 // pred_region
          %s202 = sand.u32 %s69, 1
          %s203 = sand.u32 %s69, 1
          %s204 = smul.addr %s203, 576
          %s205 = scalar_lea.vmem [#allocation3], %s204
          %s206 = smul.u32 144, %s19
          %s207 = smul.addr %s206, 2
          %s208 = sadd.s32 %s18, %s207
          %s209 = smul.addr %s208, 4
          %s210 = scalar_lea.vmem %s1, %s209
          // Predicated region
          $region25: #{_lambda_.9} parent=23 // pred_check
            _
          $region26: #{_lambda_.9} parent=23 // pred_check_branch
            %212 = sbr.rel (0) target = $region28
          $region27: #{_lambda_.9} parent=23 // pred_region
            // Predicated region
            $region29: #{_lambda_.9} parent=27 // pred_check
              _
            $region30: #{_lambda_.9} parent=27 // pred_check_branch
              %214 = sbr.rel target = $region32
            $region31: #{_lambda_.9} parent=27 // pred_region
              // Predicated region
              $region44: #{_lambda_.9} parent=31 // pred_check
                _
              $region45: #{_lambda_.9} parent=31 // pred_check_branch
                %515 = sbr.rel (0) target = $region47
              $region46: #{_lambda_.9} parent=31 // pred_region
                loop: start=0, step=1, limit=1
                $region48: #{_lambda_.9} parent=46 // loop_pre_header
                  _
                $region49: #{_lambda_.9} parent=46 // loop_header
                  %s517 = sphi 0, %s521
                  %p518 = scmp.ge.s32.totalorder %s517, 1
                  %s522 = sphi %s210, %s210
                  %s523 = sphi %s205, %s205
                $region50: #{_lambda_.9} parent=46 // loop_header_branch
                  %520 = sbr.rel (%p518) target = $region54
                $region51: #{_lambda_.9} parent=46 // loop_body
                  _
                $region52: #{_lambda_.9} parent=46 // loop_footer
                  %s521 = sadd.s32 1, %s517
                $region53: #{_lambda_.9} parent=46 // loop_footer_branch
                  %516 = sbr.rel target = $region49
                $region54: #{_lambda_.9} parent=46 // loop_exit
                  _
                loop: start=0, step=1, limit=1
                $region55: #{_lambda_.9} parent=46 // loop_pre_header
                  _
                $region56: #{_lambda_.9} parent=46 // loop_header
                  %s526 = sphi 0, %s530
                  %p527 = scmp.ge.s32.totalorder %s526, 1
                  %s531 = sphi %s210, %s210
                  %s532 = sphi %s205, %s205
                $region57: #{_lambda_.9} parent=46 // loop_header_branch
                  %529 = sbr.rel (%p527) target = $region61
                $region58: #{_lambda_.9} parent=46 // loop_body
                  %v533 = vld [vmem:[%s531] sm:$0xf]
                  %534 = vst [vmem:[%s532] sm:$0xf] %v533
                  %v535 = vld [vmem:[%s531 + $0x8] sm:$0xf]
                  %536 = vst [vmem:[%s532 + $0x4] sm:$0xf] %v535
                  %v537 = vld [vmem:[%s531 + $0x10] sm:$0xf]
                  %538 = vst [vmem:[%s532 + $0x8] sm:$0xf] %v537
                  %v539 = vld [vmem:[%s531 + $0x18] sm:$0xf]
                  %540 = vst [vmem:[%s532 + $0xc] sm:$0xf] %v539
                  %v541 = vld [vmem:[%s531 + $0x20] sm:$0xf]
                  %542 = vst [vmem:[%s532 + $0x10] sm:$0xf] %v541
                  %v543 = vld [vmem:[%s531 + $0x28] sm:$0xf]
                  %544 = vst [vmem:[%s532 + $0x14] sm:$0xf] %v543
                  %v545 = vld [vmem:[%s531 + $0x30] sm:$0xf]
                  %546 = vst [vmem:[%s532 + $0x18] sm:$0xf] %v545
                  %v547 = vld [vmem:[%s531 + $0x38] sm:$0xf]
                  %548 = vst [vmem:[%s532 + $0x1c] sm:$0xf] %v547
                  %v549 = vld [vmem:[%s531 + $0x40] sm:$0xf]
                  %550 = vst [vmem:[%s532 + $0x20] sm:$0xf] %v549
                  %v551 = vld [vmem:[%s531 + $0x48] sm:$0xf]
                  %552 = vst [vmem:[%s532 + $0x24] sm:$0xf] %v551
                  %v553 = vld [vmem:[%s531 + $0x50] sm:$0xf]
                  %554 = vst [vmem:[%s532 + $0x28] sm:$0xf] %v553
                  %v555 = vld [vmem:[%s531 + $0x58] sm:$0xf]
                  %556 = vst [vmem:[%s532 + $0x2c] sm:$0xf] %v555
                  %v557 = vld [vmem:[%s531 + $0x60] sm:$0xf]
                  %558 = vst [vmem:[%s532 + $0x30] sm:$0xf] %v557
                  %v559 = vld [vmem:[%s531 + $0x68] sm:$0xf]
                  %560 = vst [vmem:[%s532 + $0x34] sm:$0xf] %v559
                  %v561 = vld [vmem:[%s531 + $0x70] sm:$0xf]
                  %562 = vst [vmem:[%s532 + $0x38] sm:$0xf] %v561
                  %v563 = vld [vmem:[%s531 + $0x78] sm:$0xf]
                  %564 = vst [vmem:[%s532 + $0x3c] sm:$0xf] %v563
                  %v565 = vld [vmem:[%s531 + $0x80] sm:$0xf]
                  %566 = vst [vmem:[%s532 + $0x40] sm:$0xf] %v565
                  %v567 = vld [vmem:[%s531 + $0x88] sm:$0xf]
                  %568 = vst [vmem:[%s532 + $0x44] sm:$0xf] %v567
                  %v569 = vld [vmem:[%s531 + $0x90] sm:$0xf]
                  %570 = vst [vmem:[%s532 + $0x48] sm:$0xf] %v569
                  %v571 = vld [vmem:[%s531 + $0x98] sm:$0xf]
                  %572 = vst [vmem:[%s532 + $0x4c] sm:$0xf] %v571
                  %v573 = vld [vmem:[%s531 + $0xa0] sm:$0xf]
                  %574 = vst [vmem:[%s532 + $0x50] sm:$0xf] %v573
                  %v575 = vld [vmem:[%s531 + $0xa8] sm:$0xf]
                  %576 = vst [vmem:[%s532 + $0x54] sm:$0xf] %v575
                  %v577 = vld [vmem:[%s531 + $0xb0] sm:$0xf]
                  %578 = vst [vmem:[%s532 + $0x58] sm:$0xf] %v577
                  %v579 = vld [vmem:[%s531 + $0xb8] sm:$0xf]
                  %580 = vst [vmem:[%s532 + $0x5c] sm:$0xf] %v579
                  %v581 = vld [vmem:[%s531 + $0xc0] sm:$0xf]
                  %582 = vst [vmem:[%s532 + $0x60] sm:$0xf] %v581
                  %v583 = vld [vmem:[%s531 + $0xc8] sm:$0xf]
                  %584 = vst [vmem:[%s532 + $0x64] sm:$0xf] %v583
                  %v585 = vld [vmem:[%s531 + $0xd0] sm:$0xf]
                  %586 = vst [vmem:[%s532 + $0x68] sm:$0xf] %v585
                  %v587 = vld [vmem:[%s531 + $0xd8] sm:$0xf]
                  %588 = vst [vmem:[%s532 + $0x6c] sm:$0xf] %v587
                  %v589 = vld [vmem:[%s531 + $0xe0] sm:$0xf]
                  %590 = vst [vmem:[%s532 + $0x70] sm:$0xf] %v589
                  %v591 = vld [vmem:[%s531 + $0xe8] sm:$0xf]
                  %592 = vst [vmem:[%s532 + $0x74] sm:$0xf] %v591
                  %v593 = vld [vmem:[%s531 + $0xf0] sm:$0xf]
                  %594 = vst [vmem:[%s532 + $0x78] sm:$0xf] %v593
                  %v595 = vld [vmem:[%s531 + $0xf8] sm:$0xf]
                  %596 = vst [vmem:[%s532 + $0x7c] sm:$0xf] %v595
                  %v597 = vld [vmem:[%s531 + $0x100] sm:$0xf]
                  %598 = vst [vmem:[%s532 + $0x80] sm:$0xf] %v597
                  %v599 = vld [vmem:[%s531 + $0x108] sm:$0xf]
                  %600 = vst [vmem:[%s532 + $0x84] sm:$0xf] %v599
                  %v601 = vld [vmem:[%s531 + $0x110] sm:$0xf]
                  %602 = vst [vmem:[%s532 + $0x88] sm:$0xf] %v601
                  %v603 = vld [vmem:[%s531 + $0x118] sm:$0xf]
                  %604 = vst [vmem:[%s532 + $0x8c] sm:$0xf] %v603
                  %v605 = vld [vmem:[%s531 + $0x120] sm:$0xf]
                  %606 = vst [vmem:[%s532 + $0x90] sm:$0xf] %v605
                  %v607 = vld [vmem:[%s531 + $0x128] sm:$0xf]
                  %608 = vst [vmem:[%s532 + $0x94] sm:$0xf] %v607
                  %v609 = vld [vmem:[%s531 + $0x130] sm:$0xf]
                  %610 = vst [vmem:[%s532 + $0x98] sm:$0xf] %v609
                  %v611 = vld [vmem:[%s531 + $0x138] sm:$0xf]
                  %612 = vst [vmem:[%s532 + $0x9c] sm:$0xf] %v611
                  %v613 = vld [vmem:[%s531 + $0x140] sm:$0xf]
                  %614 = vst [vmem:[%s532 + $0xa0] sm:$0xf] %v613
                  %v615 = vld [vmem:[%s531 + $0x148] sm:$0xf]
                  %616 = vst [vmem:[%s532 + $0xa4] sm:$0xf] %v615
                  %v617 = vld [vmem:[%s531 + $0x150] sm:$0xf]
                  %618 = vst [vmem:[%s532 + $0xa8] sm:$0xf] %v617
                  %v619 = vld [vmem:[%s531 + $0x158] sm:$0xf]
                  %620 = vst [vmem:[%s532 + $0xac] sm:$0xf] %v619
                  %v621 = vld [vmem:[%s531 + $0x160] sm:$0xf]
                  %622 = vst [vmem:[%s532 + $0xb0] sm:$0xf] %v621
                  %v623 = vld [vmem:[%s531 + $0x168] sm:$0xf]
                  %624 = vst [vmem:[%s532 + $0xb4] sm:$0xf] %v623
                  %v625 = vld [vmem:[%s531 + $0x170] sm:$0xf]
                  %626 = vst [vmem:[%s532 + $0xb8] sm:$0xf] %v625
                  %v627 = vld [vmem:[%s531 + $0x178] sm:$0xf]
                  %628 = vst [vmem:[%s532 + $0xbc] sm:$0xf] %v627
                  %v629 = vld [vmem:[%s531 + $0x180] sm:$0xf]
                  %630 = vst [vmem:[%s532 + $0xc0] sm:$0xf] %v629
                  %v631 = vld [vmem:[%s531 + $0x188] sm:$0xf]
                  %632 = vst [vmem:[%s532 + $0xc4] sm:$0xf] %v631
                  %v633 = vld [vmem:[%s531 + $0x190] sm:$0xf]
                  %634 = vst [vmem:[%s532 + $0xc8] sm:$0xf] %v633
                  %v635 = vld [vmem:[%s531 + $0x198] sm:$0xf]
                  %636 = vst [vmem:[%s532 + $0xcc] sm:$0xf] %v635
                  %v637 = vld [vmem:[%s531 + $0x1a0] sm:$0xf]
                  %638 = vst [vmem:[%s532 + $0xd0] sm:$0xf] %v637
                  %v639 = vld [vmem:[%s531 + $0x1a8] sm:$0xf]
                  %640 = vst [vmem:[%s532 + $0xd4] sm:$0xf] %v639
                  %v641 = vld [vmem:[%s531 + $0x1b0] sm:$0xf]
                  %642 = vst [vmem:[%s532 + $0xd8] sm:$0xf] %v641
                  %v643 = vld [vmem:[%s531 + $0x1b8] sm:$0xf]
                  %644 = vst [vmem:[%s532 + $0xdc] sm:$0xf] %v643
                  %v645 = vld [vmem:[%s531 + $0x1c0] sm:$0xf]
                  %646 = vst [vmem:[%s532 + $0xe0] sm:$0xf] %v645
                  %v647 = vld [vmem:[%s531 + $0x1c8] sm:$0xf]
                  %648 = vst [vmem:[%s532 + $0xe4] sm:$0xf] %v647
                  %v649 = vld [vmem:[%s531 + $0x1d0] sm:$0xf]
                  %650 = vst [vmem:[%s532 + $0xe8] sm:$0xf] %v649
                  %v651 = vld [vmem:[%s531 + $0x1d8] sm:$0xf]
                  %652 = vst [vmem:[%s532 + $0xec] sm:$0xf] %v651
                  %v653 = vld [vmem:[%s531 + $0x1e0] sm:$0xf]
                  %654 = vst [vmem:[%s532 + $0xf0] sm:$0xf] %v653
                  %v655 = vld [vmem:[%s531 + $0x1e8] sm:$0xf]
                  %656 = vst [vmem:[%s532 + $0xf4] sm:$0xf] %v655
                  %v657 = vld [vmem:[%s531 + $0x1f0] sm:$0xf]
                  %658 = vst [vmem:[%s532 + $0xf8] sm:$0xf] %v657
                  %v659 = vld [vmem:[%s531 + $0x1f8] sm:$0xf]
                  %660 = vst [vmem:[%s532 + $0xfc] sm:$0xf] %v659
                  %v661 = vld [vmem:[%s531 + $0x200] sm:$0xf]
                  %662 = vst [vmem:[%s532 + $0x100] sm:$0xf] %v661
                  %v663 = vld [vmem:[%s531 + $0x208] sm:$0xf]
                  %664 = vst [vmem:[%s532 + $0x104] sm:$0xf] %v663
                  %v665 = vld [vmem:[%s531 + $0x210] sm:$0xf]
                  %666 = vst [vmem:[%s532 + $0x108] sm:$0xf] %v665
                  %v667 = vld [vmem:[%s531 + $0x218] sm:$0xf]
                  %668 = vst [vmem:[%s532 + $0x10c] sm:$0xf] %v667
                  %v669 = vld [vmem:[%s531 + $0x220] sm:$0xf]
                  %670 = vst [vmem:[%s532 + $0x110] sm:$0xf] %v669
                  %v671 = vld [vmem:[%s531 + $0x228] sm:$0xf]
                  %672 = vst [vmem:[%s532 + $0x114] sm:$0xf] %v671
                  %v673 = vld [vmem:[%s531 + $0x230] sm:$0xf]
                  %674 = vst [vmem:[%s532 + $0x118] sm:$0xf] %v673
                  %v675 = vld [vmem:[%s531 + $0x238] sm:$0xf]
                  %676 = vst [vmem:[%s532 + $0x11c] sm:$0xf] %v675
                  %v677 = vld [vmem:[%s531 + $0x240] sm:$0xf]
                  %678 = vst [vmem:[%s532 + $0x120] sm:$0xf] %v677
                  %v679 = vld [vmem:[%s531 + $0x248] sm:$0xf]
                  %680 = vst [vmem:[%s532 + $0x124] sm:$0xf] %v679
                  %v681 = vld [vmem:[%s531 + $0x250] sm:$0xf]
                  %682 = vst [vmem:[%s532 + $0x128] sm:$0xf] %v681
                  %v683 = vld [vmem:[%s531 + $0x258] sm:$0xf]
                  %684 = vst [vmem:[%s532 + $0x12c] sm:$0xf] %v683
                  %v685 = vld [vmem:[%s531 + $0x260] sm:$0xf]
                  %686 = vst [vmem:[%s532 + $0x130] sm:$0xf] %v685
                  %v687 = vld [vmem:[%s531 + $0x268] sm:$0xf]
                  %688 = vst [vmem:[%s532 + $0x134] sm:$0xf] %v687
                  %v689 = vld [vmem:[%s531 + $0x270] sm:$0xf]
                  %690 = vst [vmem:[%s532 + $0x138] sm:$0xf] %v689
                  %v691 = vld [vmem:[%s531 + $0x278] sm:$0xf]
                  %692 = vst [vmem:[%s532 + $0x13c] sm:$0xf] %v691
                  %v693 = vld [vmem:[%s531 + $0x280] sm:$0xf]
                  %694 = vst [vmem:[%s532 + $0x140] sm:$0xf] %v693
                  %v695 = vld [vmem:[%s531 + $0x288] sm:$0xf]
                  %696 = vst [vmem:[%s532 + $0x144] sm:$0xf] %v695
                  %v697 = vld [vmem:[%s531 + $0x290] sm:$0xf]
                  %698 = vst [vmem:[%s532 + $0x148] sm:$0xf] %v697
                  %v699 = vld [vmem:[%s531 + $0x298] sm:$0xf]
                  %700 = vst [vmem:[%s532 + $0x14c] sm:$0xf] %v699
                  %v701 = vld [vmem:[%s531 + $0x2a0] sm:$0xf]
                  %702 = vst [vmem:[%s532 + $0x150] sm:$0xf] %v701
                  %v703 = vld [vmem:[%s531 + $0x2a8] sm:$0xf]
                  %704 = vst [vmem:[%s532 + $0x154] sm:$0xf] %v703
                  %v705 = vld [vmem:[%s531 + $0x2b0] sm:$0xf]
                  %706 = vst [vmem:[%s532 + $0x158] sm:$0xf] %v705
                  %v707 = vld [vmem:[%s531 + $0x2b8] sm:$0xf]
                  %708 = vst [vmem:[%s532 + $0x15c] sm:$0xf] %v707
                  %v709 = vld [vmem:[%s531 + $0x2c0] sm:$0xf]
                  %710 = vst [vmem:[%s532 + $0x160] sm:$0xf] %v709
                  %v711 = vld [vmem:[%s531 + $0x2c8] sm:$0xf]
                  %712 = vst [vmem:[%s532 + $0x164] sm:$0xf] %v711
                  %v713 = vld [vmem:[%s531 + $0x2d0] sm:$0xf]
                  %714 = vst [vmem:[%s532 + $0x168] sm:$0xf] %v713
                  %v715 = vld [vmem:[%s531 + $0x2d8] sm:$0xf]
                  %716 = vst [vmem:[%s532 + $0x16c] sm:$0xf] %v715
                  %v717 = vld [vmem:[%s531 + $0x2e0] sm:$0xf]
                  %718 = vst [vmem:[%s532 + $0x170] sm:$0xf] %v717
                  %v719 = vld [vmem:[%s531 + $0x2e8] sm:$0xf]
                  %720 = vst [vmem:[%s532 + $0x174] sm:$0xf] %v719
                  %v721 = vld [vmem:[%s531 + $0x2f0] sm:$0xf]
                  %722 = vst [vmem:[%s532 + $0x178] sm:$0xf] %v721
                  %v723 = vld [vmem:[%s531 + $0x2f8] sm:$0xf]
                  %724 = vst [vmem:[%s532 + $0x17c] sm:$0xf] %v723
                  %v725 = vld [vmem:[%s531 + $0x300] sm:$0xf]
                  %726 = vst [vmem:[%s532 + $0x180] sm:$0xf] %v725
                  %v727 = vld [vmem:[%s531 + $0x308] sm:$0xf]
                  %728 = vst [vmem:[%s532 + $0x184] sm:$0xf] %v727
                  %v729 = vld [vmem:[%s531 + $0x310] sm:$0xf]
                  %730 = vst [vmem:[%s532 + $0x188] sm:$0xf] %v729
                  %v731 = vld [vmem:[%s531 + $0x318] sm:$0xf]
                  %732 = vst [vmem:[%s532 + $0x18c] sm:$0xf] %v731
                  %v733 = vld [vmem:[%s531 + $0x320] sm:$0xf]
                  %734 = vst [vmem:[%s532 + $0x190] sm:$0xf] %v733
                  %v735 = vld [vmem:[%s531 + $0x328] sm:$0xf]
                  %736 = vst [vmem:[%s532 + $0x194] sm:$0xf] %v735
                  %v737 = vld [vmem:[%s531 + $0x330] sm:$0xf]
                  %738 = vst [vmem:[%s532 + $0x198] sm:$0xf] %v737
                  %v739 = vld [vmem:[%s531 + $0x338] sm:$0xf]
                  %740 = vst [vmem:[%s532 + $0x19c] sm:$0xf] %v739
                  %v741 = vld [vmem:[%s531 + $0x340] sm:$0xf]
                  %742 = vst [vmem:[%s532 + $0x1a0] sm:$0xf] %v741
                  %v743 = vld [vmem:[%s531 + $0x348] sm:$0xf]
                  %744 = vst [vmem:[%s532 + $0x1a4] sm:$0xf] %v743
                  %v745 = vld [vmem:[%s531 + $0x350] sm:$0xf]
                  %746 = vst [vmem:[%s532 + $0x1a8] sm:$0xf] %v745
                  %v747 = vld [vmem:[%s531 + $0x358] sm:$0xf]
                  %748 = vst [vmem:[%s532 + $0x1ac] sm:$0xf] %v747
                  %v749 = vld [vmem:[%s531 + $0x360] sm:$0xf]
                  %750 = vst [vmem:[%s532 + $0x1b0] sm:$0xf] %v749
                  %v751 = vld [vmem:[%s531 + $0x368] sm:$0xf]
                  %752 = vst [vmem:[%s532 + $0x1b4] sm:$0xf] %v751
                  %v753 = vld [vmem:[%s531 + $0x370] sm:$0xf]
                  %754 = vst [vmem:[%s532 + $0x1b8] sm:$0xf] %v753
                  %v755 = vld [vmem:[%s531 + $0x378] sm:$0xf]
                  %756 = vst [vmem:[%s532 + $0x1bc] sm:$0xf] %v755
                  %v757 = vld [vmem:[%s531 + $0x380] sm:$0xf]
                  %758 = vst [vmem:[%s532 + $0x1c0] sm:$0xf] %v757
                  %v759 = vld [vmem:[%s531 + $0x388] sm:$0xf]
                  %760 = vst [vmem:[%s532 + $0x1c4] sm:$0xf] %v759
                  %v761 = vld [vmem:[%s531 + $0x390] sm:$0xf]
                  %762 = vst [vmem:[%s532 + $0x1c8] sm:$0xf] %v761
                  %v763 = vld [vmem:[%s531 + $0x398] sm:$0xf]
                  %764 = vst [vmem:[%s532 + $0x1cc] sm:$0xf] %v763
                  %v765 = vld [vmem:[%s531 + $0x3a0] sm:$0xf]
                  %766 = vst [vmem:[%s532 + $0x1d0] sm:$0xf] %v765
                  %v767 = vld [vmem:[%s531 + $0x3a8] sm:$0xf]
                  %768 = vst [vmem:[%s532 + $0x1d4] sm:$0xf] %v767
                  %v769 = vld [vmem:[%s531 + $0x3b0] sm:$0xf]
                  %770 = vst [vmem:[%s532 + $0x1d8] sm:$0xf] %v769
                  %v771 = vld [vmem:[%s531 + $0x3b8] sm:$0xf]
                  %772 = vst [vmem:[%s532 + $0x1dc] sm:$0xf] %v771
                  %v773 = vld [vmem:[%s531 + $0x3c0] sm:$0xf]
                  %774 = vst [vmem:[%s532 + $0x1e0] sm:$0xf] %v773
                  %v775 = vld [vmem:[%s531 + $0x3c8] sm:$0xf]
                  %776 = vst [vmem:[%s532 + $0x1e4] sm:$0xf] %v775
                  %v777 = vld [vmem:[%s531 + $0x3d0] sm:$0xf]
                  %778 = vst [vmem:[%s532 + $0x1e8] sm:$0xf] %v777
                  %v779 = vld [vmem:[%s531 + $0x3d8] sm:$0xf]
                  %780 = vst [vmem:[%s532 + $0x1ec] sm:$0xf] %v779
                  %v781 = vld [vmem:[%s531 + $0x3e0] sm:$0xf]
                  %782 = vst [vmem:[%s532 + $0x1f0] sm:$0xf] %v781
                  %v783 = vld [vmem:[%s531 + $0x3e8] sm:$0xf]
                  %784 = vst [vmem:[%s532 + $0x1f4] sm:$0xf] %v783
                  %v785 = vld [vmem:[%s531 + $0x3f0] sm:$0xf]
                  %786 = vst [vmem:[%s532 + $0x1f8] sm:$0xf] %v785
                  %v787 = vld [vmem:[%s531 + $0x3f8] sm:$0xf]
                  %788 = vst [vmem:[%s532 + $0x1fc] sm:$0xf] %v787
                  %v789 = vld [vmem:[%s531 + $0x400] sm:$0xf]
                  %790 = vst [vmem:[%s532 + $0x200] sm:$0xf] %v789
                  %v791 = vld [vmem:[%s531 + $0x408] sm:$0xf]
                  %792 = vst [vmem:[%s532 + $0x204] sm:$0xf] %v791
                  %v793 = vld [vmem:[%s531 + $0x410] sm:$0xf]
                  %794 = vst [vmem:[%s532 + $0x208] sm:$0xf] %v793
                  %v795 = vld [vmem:[%s531 + $0x418] sm:$0xf]
                  %796 = vst [vmem:[%s532 + $0x20c] sm:$0xf] %v795
                  %v797 = vld [vmem:[%s531 + $0x420] sm:$0xf]
                  %798 = vst [vmem:[%s532 + $0x210] sm:$0xf] %v797
                  %v799 = vld [vmem:[%s531 + $0x428] sm:$0xf]
                  %800 = vst [vmem:[%s532 + $0x214] sm:$0xf] %v799
                  %v801 = vld [vmem:[%s531 + $0x430] sm:$0xf]
                  %802 = vst [vmem:[%s532 + $0x218] sm:$0xf] %v801
                  %v803 = vld [vmem:[%s531 + $0x438] sm:$0xf]
                  %804 = vst [vmem:[%s532 + $0x21c] sm:$0xf] %v803
                  %v805 = vld [vmem:[%s531 + $0x440] sm:$0xf]
                  %806 = vst [vmem:[%s532 + $0x220] sm:$0xf] %v805
                  %v807 = vld [vmem:[%s531 + $0x448] sm:$0xf]
                  %808 = vst [vmem:[%s532 + $0x224] sm:$0xf] %v807
                  %v809 = vld [vmem:[%s531 + $0x450] sm:$0xf]
                  %810 = vst [vmem:[%s532 + $0x228] sm:$0xf] %v809
                  %v811 = vld [vmem:[%s531 + $0x458] sm:$0xf]
                  %812 = vst [vmem:[%s532 + $0x22c] sm:$0xf] %v811
                  %v813 = vld [vmem:[%s531 + $0x460] sm:$0xf]
                  %814 = vst [vmem:[%s532 + $0x230] sm:$0xf] %v813
                  %v815 = vld [vmem:[%s531 + $0x468] sm:$0xf]
                  %816 = vst [vmem:[%s532 + $0x234] sm:$0xf] %v815
                  %v817 = vld [vmem:[%s531 + $0x470] sm:$0xf]
                  %818 = vst [vmem:[%s532 + $0x238] sm:$0xf] %v817
                  %v819 = vld [vmem:[%s531 + $0x478] sm:$0xf]
                  %820 = vst [vmem:[%s532 + $0x23c] sm:$0xf] %v819
                $region59: #{_lambda_.9} parent=46 // loop_footer
                  %s530 = sadd.s32 1, %s526
                $region60: #{_lambda_.9} parent=46 // loop_footer_branch
                  %525 = sbr.rel target = $region56
                $region61: #{_lambda_.9} parent=46 // loop_exit
                  _
              $region47: #{_lambda_.9} parent=31 // pred_fallthru
                _
            $region32: #{_lambda_.9} parent=27 // pred_fallthru
              _
            // Predicated region
            $region33: #{_lambda_.9} parent=27 // pred_check
              _
            $region34: #{_lambda_.9} parent=27 // pred_check_branch
              %216 = sbr.rel (0) target = $region36
            $region35: #{_lambda_.9} parent=27 // pred_region
              loop: start=0, step=1, limit=1
              $region37: #{_lambda_.9} parent=35 // loop_pre_header
                _
              $region38: #{_lambda_.9} parent=35 // loop_header
                %s219 = sphi 0, %s223
                %p220 = scmp.ge.s32.totalorder %s219, 1
                %s224 = sphi %s210, %s210
                %s225 = sphi %s205, %s205
              $region39: #{_lambda_.9} parent=35 // loop_header_branch
                %222 = sbr.rel (%p220) target = $region43
              $region40: #{_lambda_.9} parent=35 // loop_body
                %v226 = vld [vmem:[%s224] sm:$0xf]
                %227 = vst [vmem:[%s225] sm:$0xf] %v226
                %v228 = vld [vmem:[%s224 + $0x8] sm:$0xf]
                %229 = vst [vmem:[%s225 + $0x4] sm:$0xf] %v228
                %v230 = vld [vmem:[%s224 + $0x10] sm:$0xf]
                %231 = vst [vmem:[%s225 + $0x8] sm:$0xf] %v230
                %v232 = vld [vmem:[%s224 + $0x18] sm:$0xf]
                %233 = vst [vmem:[%s225 + $0xc] sm:$0xf] %v232
                %v234 = vld [vmem:[%s224 + $0x20] sm:$0xf]
                %235 = vst [vmem:[%s225 + $0x10] sm:$0xf] %v234
                %v236 = vld [vmem:[%s224 + $0x28] sm:$0xf]
                %237 = vst [vmem:[%s225 + $0x14] sm:$0xf] %v236
                %v238 = vld [vmem:[%s224 + $0x30] sm:$0xf]
                %239 = vst [vmem:[%s225 + $0x18] sm:$0xf] %v238
                %v240 = vld [vmem:[%s224 + $0x38] sm:$0xf]
                %241 = vst [vmem:[%s225 + $0x1c] sm:$0xf] %v240
                %v242 = vld [vmem:[%s224 + $0x40] sm:$0xf]
                %243 = vst [vmem:[%s225 + $0x20] sm:$0xf] %v242
                %v244 = vld [vmem:[%s224 + $0x48] sm:$0xf]
                %245 = vst [vmem:[%s225 + $0x24] sm:$0xf] %v244
                %v246 = vld [vmem:[%s224 + $0x50] sm:$0xf]
                %247 = vst [vmem:[%s225 + $0x28] sm:$0xf] %v246
                %v248 = vld [vmem:[%s224 + $0x58] sm:$0xf]
                %249 = vst [vmem:[%s225 + $0x2c] sm:$0xf] %v248
                %v250 = vld [vmem:[%s224 + $0x60] sm:$0xf]
                %251 = vst [vmem:[%s225 + $0x30] sm:$0xf] %v250
                %v252 = vld [vmem:[%s224 + $0x68] sm:$0xf]
                %253 = vst [vmem:[%s225 + $0x34] sm:$0xf] %v252
                %v254 = vld [vmem:[%s224 + $0x70] sm:$0xf]
                %255 = vst [vmem:[%s225 + $0x38] sm:$0xf] %v254
                %v256 = vld [vmem:[%s224 + $0x78] sm:$0xf]
                %257 = vst [vmem:[%s225 + $0x3c] sm:$0xf] %v256
                %v258 = vld [vmem:[%s224 + $0x80] sm:$0xf]
                %259 = vst [vmem:[%s225 + $0x40] sm:$0xf] %v258
                %v260 = vld [vmem:[%s224 + $0x88] sm:$0xf]
                %261 = vst [vmem:[%s225 + $0x44] sm:$0xf] %v260
                %v262 = vld [vmem:[%s224 + $0x90] sm:$0xf]
                %263 = vst [vmem:[%s225 + $0x48] sm:$0xf] %v262
                %v264 = vld [vmem:[%s224 + $0x98] sm:$0xf]
                %265 = vst [vmem:[%s225 + $0x4c] sm:$0xf] %v264
                %v266 = vld [vmem:[%s224 + $0xa0] sm:$0xf]
                %267 = vst [vmem:[%s225 + $0x50] sm:$0xf] %v266
                %v268 = vld [vmem:[%s224 + $0xa8] sm:$0xf]
                %269 = vst [vmem:[%s225 + $0x54] sm:$0xf] %v268
                %v270 = vld [vmem:[%s224 + $0xb0] sm:$0xf]
                %271 = vst [vmem:[%s225 + $0x58] sm:$0xf] %v270
                %v272 = vld [vmem:[%s224 + $0xb8] sm:$0xf]
                %273 = vst [vmem:[%s225 + $0x5c] sm:$0xf] %v272
                %v274 = vld [vmem:[%s224 + $0xc0] sm:$0xf]
                %275 = vst [vmem:[%s225 + $0x60] sm:$0xf] %v274
                %v276 = vld [vmem:[%s224 + $0xc8] sm:$0xf]
                %277 = vst [vmem:[%s225 + $0x64] sm:$0xf] %v276
                %v278 = vld [vmem:[%s224 + $0xd0] sm:$0xf]
                %279 = vst [vmem:[%s225 + $0x68] sm:$0xf] %v278
                %v280 = vld [vmem:[%s224 + $0xd8] sm:$0xf]
                %281 = vst [vmem:[%s225 + $0x6c] sm:$0xf] %v280
                %v282 = vld [vmem:[%s224 + $0xe0] sm:$0xf]
                %283 = vst [vmem:[%s225 + $0x70] sm:$0xf] %v282
                %v284 = vld [vmem:[%s224 + $0xe8] sm:$0xf]
                %285 = vst [vmem:[%s225 + $0x74] sm:$0xf] %v284
                %v286 = vld [vmem:[%s224 + $0xf0] sm:$0xf]
                %287 = vst [vmem:[%s225 + $0x78] sm:$0xf] %v286
                %v288 = vld [vmem:[%s224 + $0xf8] sm:$0xf]
                %289 = vst [vmem:[%s225 + $0x7c] sm:$0xf] %v288
                %v290 = vld [vmem:[%s224 + $0x100] sm:$0xf]
                %291 = vst [vmem:[%s225 + $0x80] sm:$0xf] %v290
                %v292 = vld [vmem:[%s224 + $0x108] sm:$0xf]
                %293 = vst [vmem:[%s225 + $0x84] sm:$0xf] %v292
                %v294 = vld [vmem:[%s224 + $0x110] sm:$0xf]
                %295 = vst [vmem:[%s225 + $0x88] sm:$0xf] %v294
                %v296 = vld [vmem:[%s224 + $0x118] sm:$0xf]
                %297 = vst [vmem:[%s225 + $0x8c] sm:$0xf] %v296
                %v298 = vld [vmem:[%s224 + $0x120] sm:$0xf]
                %299 = vst [vmem:[%s225 + $0x90] sm:$0xf] %v298
                %v300 = vld [vmem:[%s224 + $0x128] sm:$0xf]
                %301 = vst [vmem:[%s225 + $0x94] sm:$0xf] %v300
                %v302 = vld [vmem:[%s224 + $0x130] sm:$0xf]
                %303 = vst [vmem:[%s225 + $0x98] sm:$0xf] %v302
                %v304 = vld [vmem:[%s224 + $0x138] sm:$0xf]
                %305 = vst [vmem:[%s225 + $0x9c] sm:$0xf] %v304
                %v306 = vld [vmem:[%s224 + $0x140] sm:$0xf]
                %307 = vst [vmem:[%s225 + $0xa0] sm:$0xf] %v306
                %v308 = vld [vmem:[%s224 + $0x148] sm:$0xf]
                %309 = vst [vmem:[%s225 + $0xa4] sm:$0xf] %v308
                %v310 = vld [vmem:[%s224 + $0x150] sm:$0xf]
                %311 = vst [vmem:[%s225 + $0xa8] sm:$0xf] %v310
                %v312 = vld [vmem:[%s224 + $0x158] sm:$0xf]
                %313 = vst [vmem:[%s225 + $0xac] sm:$0xf] %v312
                %v314 = vld [vmem:[%s224 + $0x160] sm:$0xf]
                %315 = vst [vmem:[%s225 + $0xb0] sm:$0xf] %v314
                %v316 = vld [vmem:[%s224 + $0x168] sm:$0xf]
                %317 = vst [vmem:[%s225 + $0xb4] sm:$0xf] %v316
                %v318 = vld [vmem:[%s224 + $0x170] sm:$0xf]
                %319 = vst [vmem:[%s225 + $0xb8] sm:$0xf] %v318
                %v320 = vld [vmem:[%s224 + $0x178] sm:$0xf]
                %321 = vst [vmem:[%s225 + $0xbc] sm:$0xf] %v320
                %v322 = vld [vmem:[%s224 + $0x180] sm:$0xf]
                %323 = vst [vmem:[%s225 + $0xc0] sm:$0xf] %v322
                %v324 = vld [vmem:[%s224 + $0x188] sm:$0xf]
                %325 = vst [vmem:[%s225 + $0xc4] sm:$0xf] %v324
                %v326 = vld [vmem:[%s224 + $0x190] sm:$0xf]
                %327 = vst [vmem:[%s225 + $0xc8] sm:$0xf] %v326
                %v328 = vld [vmem:[%s224 + $0x198] sm:$0xf]
                %329 = vst [vmem:[%s225 + $0xcc] sm:$0xf] %v328
                %v330 = vld [vmem:[%s224 + $0x1a0] sm:$0xf]
                %331 = vst [vmem:[%s225 + $0xd0] sm:$0xf] %v330
                %v332 = vld [vmem:[%s224 + $0x1a8] sm:$0xf]
                %333 = vst [vmem:[%s225 + $0xd4] sm:$0xf] %v332
                %v334 = vld [vmem:[%s224 + $0x1b0] sm:$0xf]
                %335 = vst [vmem:[%s225 + $0xd8] sm:$0xf] %v334
                %v336 = vld [vmem:[%s224 + $0x1b8] sm:$0xf]
                %337 = vst [vmem:[%s225 + $0xdc] sm:$0xf] %v336
                %v338 = vld [vmem:[%s224 + $0x1c0] sm:$0xf]
                %339 = vst [vmem:[%s225 + $0xe0] sm:$0xf] %v338
                %v340 = vld [vmem:[%s224 + $0x1c8] sm:$0xf]
                %341 = vst [vmem:[%s225 + $0xe4] sm:$0xf] %v340
                %v342 = vld [vmem:[%s224 + $0x1d0] sm:$0xf]
                %343 = vst [vmem:[%s225 + $0xe8] sm:$0xf] %v342
                %v344 = vld [vmem:[%s224 + $0x1d8] sm:$0xf]
                %345 = vst [vmem:[%s225 + $0xec] sm:$0xf] %v344
                %v346 = vld [vmem:[%s224 + $0x1e0] sm:$0xf]
                %347 = vst [vmem:[%s225 + $0xf0] sm:$0xf] %v346
                %v348 = vld [vmem:[%s224 + $0x1e8] sm:$0xf]
                %349 = vst [vmem:[%s225 + $0xf4] sm:$0xf] %v348
                %v350 = vld [vmem:[%s224 + $0x1f0] sm:$0xf]
                %351 = vst [vmem:[%s225 + $0xf8] sm:$0xf] %v350
                %v352 = vld [vmem:[%s224 + $0x1f8] sm:$0xf]
                %353 = vst [vmem:[%s225 + $0xfc] sm:$0xf] %v352
                %v354 = vld [vmem:[%s224 + $0x200] sm:$0xf]
                %355 = vst [vmem:[%s225 + $0x100] sm:$0xf] %v354
                %v356 = vld [vmem:[%s224 + $0x208] sm:$0xf]
                %357 = vst [vmem:[%s225 + $0x104] sm:$0xf] %v356
                %v358 = vld [vmem:[%s224 + $0x210] sm:$0xf]
                %359 = vst [vmem:[%s225 + $0x108] sm:$0xf] %v358
                %v360 = vld [vmem:[%s224 + $0x218] sm:$0xf]
                %361 = vst [vmem:[%s225 + $0x10c] sm:$0xf] %v360
                %v362 = vld [vmem:[%s224 + $0x220] sm:$0xf]
                %363 = vst [vmem:[%s225 + $0x110] sm:$0xf] %v362
                %v364 = vld [vmem:[%s224 + $0x228] sm:$0xf]
                %365 = vst [vmem:[%s225 + $0x114] sm:$0xf] %v364
                %v366 = vld [vmem:[%s224 + $0x230] sm:$0xf]
                %367 = vst [vmem:[%s225 + $0x118] sm:$0xf] %v366
                %v368 = vld [vmem:[%s224 + $0x238] sm:$0xf]
                %369 = vst [vmem:[%s225 + $0x11c] sm:$0xf] %v368
                %v370 = vld [vmem:[%s224 + $0x240] sm:$0xf]
                %371 = vst [vmem:[%s225 + $0x120] sm:$0xf] %v370
                %v372 = vld [vmem:[%s224 + $0x248] sm:$0xf]
                %373 = vst [vmem:[%s225 + $0x124] sm:$0xf] %v372
                %v374 = vld [vmem:[%s224 + $0x250] sm:$0xf]
                %375 = vst [vmem:[%s225 + $0x128] sm:$0xf] %v374
                %v376 = vld [vmem:[%s224 + $0x258] sm:$0xf]
                %377 = vst [vmem:[%s225 + $0x12c] sm:$0xf] %v376
                %v378 = vld [vmem:[%s224 + $0x260] sm:$0xf]
                %379 = vst [vmem:[%s225 + $0x130] sm:$0xf] %v378
                %v380 = vld [vmem:[%s224 + $0x268] sm:$0xf]
                %381 = vst [vmem:[%s225 + $0x134] sm:$0xf] %v380
                %v382 = vld [vmem:[%s224 + $0x270] sm:$0xf]
                %383 = vst [vmem:[%s225 + $0x138] sm:$0xf] %v382
                %v384 = vld [vmem:[%s224 + $0x278] sm:$0xf]
                %385 = vst [vmem:[%s225 + $0x13c] sm:$0xf] %v384
                %v386 = vld [vmem:[%s224 + $0x280] sm:$0xf]
                %387 = vst [vmem:[%s225 + $0x140] sm:$0xf] %v386
                %v388 = vld [vmem:[%s224 + $0x288] sm:$0xf]
                %389 = vst [vmem:[%s225 + $0x144] sm:$0xf] %v388
                %v390 = vld [vmem:[%s224 + $0x290] sm:$0xf]
                %391 = vst [vmem:[%s225 + $0x148] sm:$0xf] %v390
                %v392 = vld [vmem:[%s224 + $0x298] sm:$0xf]
                %393 = vst [vmem:[%s225 + $0x14c] sm:$0xf] %v392
                %v394 = vld [vmem:[%s224 + $0x2a0] sm:$0xf]
                %395 = vst [vmem:[%s225 + $0x150] sm:$0xf] %v394
                %v396 = vld [vmem:[%s224 + $0x2a8] sm:$0xf]
                %397 = vst [vmem:[%s225 + $0x154] sm:$0xf] %v396
                %v398 = vld [vmem:[%s224 + $0x2b0] sm:$0xf]
                %399 = vst [vmem:[%s225 + $0x158] sm:$0xf] %v398
                %v400 = vld [vmem:[%s224 + $0x2b8] sm:$0xf]
                %401 = vst [vmem:[%s225 + $0x15c] sm:$0xf] %v400
                %v402 = vld [vmem:[%s224 + $0x2c0] sm:$0xf]
                %403 = vst [vmem:[%s225 + $0x160] sm:$0xf] %v402
                %v404 = vld [vmem:[%s224 + $0x2c8] sm:$0xf]
                %405 = vst [vmem:[%s225 + $0x164] sm:$0xf] %v404
                %v406 = vld [vmem:[%s224 + $0x2d0] sm:$0xf]
                %407 = vst [vmem:[%s225 + $0x168] sm:$0xf] %v406
                %v408 = vld [vmem:[%s224 + $0x2d8] sm:$0xf]
                %409 = vst [vmem:[%s225 + $0x16c] sm:$0xf] %v408
                %v410 = vld [vmem:[%s224 + $0x2e0] sm:$0xf]
                %411 = vst [vmem:[%s225 + $0x170] sm:$0xf] %v410
                %v412 = vld [vmem:[%s224 + $0x2e8] sm:$0xf]
                %413 = vst [vmem:[%s225 + $0x174] sm:$0xf] %v412
                %v414 = vld [vmem:[%s224 + $0x2f0] sm:$0xf]
                %415 = vst [vmem:[%s225 + $0x178] sm:$0xf] %v414
                %v416 = vld [vmem:[%s224 + $0x2f8] sm:$0xf]
                %417 = vst [vmem:[%s225 + $0x17c] sm:$0xf] %v416
                %v418 = vld [vmem:[%s224 + $0x300] sm:$0xf]
                %419 = vst [vmem:[%s225 + $0x180] sm:$0xf] %v418
                %v420 = vld [vmem:[%s224 + $0x308] sm:$0xf]
                %421 = vst [vmem:[%s225 + $0x184] sm:$0xf] %v420
                %v422 = vld [vmem:[%s224 + $0x310] sm:$0xf]
                %423 = vst [vmem:[%s225 + $0x188] sm:$0xf] %v422
                %v424 = vld [vmem:[%s224 + $0x318] sm:$0xf]
                %425 = vst [vmem:[%s225 + $0x18c] sm:$0xf] %v424
                %v426 = vld [vmem:[%s224 + $0x320] sm:$0xf]
                %427 = vst [vmem:[%s225 + $0x190] sm:$0xf] %v426
                %v428 = vld [vmem:[%s224 + $0x328] sm:$0xf]
                %429 = vst [vmem:[%s225 + $0x194] sm:$0xf] %v428
                %v430 = vld [vmem:[%s224 + $0x330] sm:$0xf]
                %431 = vst [vmem:[%s225 + $0x198] sm:$0xf] %v430
                %v432 = vld [vmem:[%s224 + $0x338] sm:$0xf]
                %433 = vst [vmem:[%s225 + $0x19c] sm:$0xf] %v432
                %v434 = vld [vmem:[%s224 + $0x340] sm:$0xf]
                %435 = vst [vmem:[%s225 + $0x1a0] sm:$0xf] %v434
                %v436 = vld [vmem:[%s224 + $0x348] sm:$0xf]
                %437 = vst [vmem:[%s225 + $0x1a4] sm:$0xf] %v436
                %v438 = vld [vmem:[%s224 + $0x350] sm:$0xf]
                %439 = vst [vmem:[%s225 + $0x1a8] sm:$0xf] %v438
                %v440 = vld [vmem:[%s224 + $0x358] sm:$0xf]
                %441 = vst [vmem:[%s225 + $0x1ac] sm:$0xf] %v440
                %v442 = vld [vmem:[%s224 + $0x360] sm:$0xf]
                %443 = vst [vmem:[%s225 + $0x1b0] sm:$0xf] %v442
                %v444 = vld [vmem:[%s224 + $0x368] sm:$0xf]
                %445 = vst [vmem:[%s225 + $0x1b4] sm:$0xf] %v444
                %v446 = vld [vmem:[%s224 + $0x370] sm:$0xf]
                %447 = vst [vmem:[%s225 + $0x1b8] sm:$0xf] %v446
                %v448 = vld [vmem:[%s224 + $0x378] sm:$0xf]
                %449 = vst [vmem:[%s225 + $0x1bc] sm:$0xf] %v448
                %v450 = vld [vmem:[%s224 + $0x380] sm:$0xf]
                %451 = vst [vmem:[%s225 + $0x1c0] sm:$0xf] %v450
                %v452 = vld [vmem:[%s224 + $0x388] sm:$0xf]
                %453 = vst [vmem:[%s225 + $0x1c4] sm:$0xf] %v452
                %v454 = vld [vmem:[%s224 + $0x390] sm:$0xf]
                %455 = vst [vmem:[%s225 + $0x1c8] sm:$0xf] %v454
                %v456 = vld [vmem:[%s224 + $0x398] sm:$0xf]
                %457 = vst [vmem:[%s225 + $0x1cc] sm:$0xf] %v456
                %v458 = vld [vmem:[%s224 + $0x3a0] sm:$0xf]
                %459 = vst [vmem:[%s225 + $0x1d0] sm:$0xf] %v458
                %v460 = vld [vmem:[%s224 + $0x3a8] sm:$0xf]
                %461 = vst [vmem:[%s225 + $0x1d4] sm:$0xf] %v460
                %v462 = vld [vmem:[%s224 + $0x3b0] sm:$0xf]
                %463 = vst [vmem:[%s225 + $0x1d8] sm:$0xf] %v462
                %v464 = vld [vmem:[%s224 + $0x3b8] sm:$0xf]
                %465 = vst [vmem:[%s225 + $0x1dc] sm:$0xf] %v464
                %v466 = vld [vmem:[%s224 + $0x3c0] sm:$0xf]
                %467 = vst [vmem:[%s225 + $0x1e0] sm:$0xf] %v466
                %v468 = vld [vmem:[%s224 + $0x3c8] sm:$0xf]
                %469 = vst [vmem:[%s225 + $0x1e4] sm:$0xf] %v468
                %v470 = vld [vmem:[%s224 + $0x3d0] sm:$0xf]
                %471 = vst [vmem:[%s225 + $0x1e8] sm:$0xf] %v470
                %v472 = vld [vmem:[%s224 + $0x3d8] sm:$0xf]
                %473 = vst [vmem:[%s225 + $0x1ec] sm:$0xf] %v472
                %v474 = vld [vmem:[%s224 + $0x3e0] sm:$0xf]
                %475 = vst [vmem:[%s225 + $0x1f0] sm:$0xf] %v474
                %v476 = vld [vmem:[%s224 + $0x3e8] sm:$0xf]
                %477 = vst [vmem:[%s225 + $0x1f4] sm:$0xf] %v476
                %v478 = vld [vmem:[%s224 + $0x3f0] sm:$0xf]
                %479 = vst [vmem:[%s225 + $0x1f8] sm:$0xf] %v478
                %v480 = vld [vmem:[%s224 + $0x3f8] sm:$0xf]
                %481 = vst [vmem:[%s225 + $0x1fc] sm:$0xf] %v480
                %v482 = vld [vmem:[%s224 + $0x400] sm:$0xf]
                %483 = vst [vmem:[%s225 + $0x200] sm:$0xf] %v482
                %v484 = vld [vmem:[%s224 + $0x408] sm:$0xf]
                %485 = vst [vmem:[%s225 + $0x204] sm:$0xf] %v484
                %v486 = vld [vmem:[%s224 + $0x410] sm:$0xf]
                %487 = vst [vmem:[%s225 + $0x208] sm:$0xf] %v486
                %v488 = vld [vmem:[%s224 + $0x418] sm:$0xf]
                %489 = vst [vmem:[%s225 + $0x20c] sm:$0xf] %v488
                %v490 = vld [vmem:[%s224 + $0x420] sm:$0xf]
                %491 = vst [vmem:[%s225 + $0x210] sm:$0xf] %v490
                %v492 = vld [vmem:[%s224 + $0x428] sm:$0xf]
                %493 = vst [vmem:[%s225 + $0x214] sm:$0xf] %v492
                %v494 = vld [vmem:[%s224 + $0x430] sm:$0xf]
                %495 = vst [vmem:[%s225 + $0x218] sm:$0xf] %v494
                %v496 = vld [vmem:[%s224 + $0x438] sm:$0xf]
                %497 = vst [vmem:[%s225 + $0x21c] sm:$0xf] %v496
                %v498 = vld [vmem:[%s224 + $0x440] sm:$0xf]
                %499 = vst [vmem:[%s225 + $0x220] sm:$0xf] %v498
                %v500 = vld [vmem:[%s224 + $0x448] sm:$0xf]
                %501 = vst [vmem:[%s225 + $0x224] sm:$0xf] %v500
                %v502 = vld [vmem:[%s224 + $0x450] sm:$0xf]
                %503 = vst [vmem:[%s225 + $0x228] sm:$0xf] %v502
                %v504 = vld [vmem:[%s224 + $0x458] sm:$0xf]
                %505 = vst [vmem:[%s225 + $0x22c] sm:$0xf] %v504
                %v506 = vld [vmem:[%s224 + $0x460] sm:$0xf]
                %507 = vst [vmem:[%s225 + $0x230] sm:$0xf] %v506
                %v508 = vld [vmem:[%s224 + $0x468] sm:$0xf]
                %509 = vst [vmem:[%s225 + $0x234] sm:$0xf] %v508
                %v510 = vld [vmem:[%s224 + $0x470] sm:$0xf]
                %511 = vst [vmem:[%s225 + $0x238] sm:$0xf] %v510
                %v512 = vld [vmem:[%s224 + $0x478] sm:$0xf]
                %513 = vst [vmem:[%s225 + $0x23c] sm:$0xf] %v512
              $region41: #{_lambda_.9} parent=35 // loop_footer
                %s223 = sadd.s32 1, %s219
              $region42: #{_lambda_.9} parent=35 // loop_footer_branch
                %218 = sbr.rel target = $region38
              $region43: #{_lambda_.9} parent=35 // loop_exit
                _
            $region36: #{_lambda_.9} parent=27 // pred_fallthru
              _
          $region28: #{_lambda_.9} parent=23 // pred_fallthru
            _
          %821 = vnop
        $region24: #{_lambda_.9} parent=19 // pred_fallthru
          _
        // Predicated region
        $region62: #{_lambda_.9} parent=19 // pred_check
          %p822 = pneg %p105
        $region63: #{_lambda_.9} parent=19 // pred_check_branch
          %824 = sbr.rel (%p822) target = $region65
        $region64: #{_lambda_.9} parent=19 // pred_region
          %p825 = scmp.lt.s32.totalorder %s18, 1
          %s826 = scalar_select %p825, %s18, 1
          %s827 = scalar_lea.vmem %s2, %s826
        $region65: #{_lambda_.9} parent=19 // pred_fallthru
          _
        // Predicated region
        $region66: #{_lambda_.9} parent=19 // pred_check
          %p828 = pneg %p131
        $region67: #{_lambda_.9} parent=19 // pred_check_branch
          %830 = sbr.rel (%p828) target = $region69
        $region68: #{_lambda_.9} parent=19 // pred_region
          %p831 = scmp.lt.s32.totalorder %s18, 1
          %s832 = scalar_select %p831, %s18, 1
          %s833 = scalar_lea.vmem %s3, %s832
        $region69: #{_lambda_.9} parent=19 // pred_fallthru
          _
      $region20: #{_lambda_.9} parent=5 // pred_fallthru
        _
      %p834 = scmp.le.s32.totalorder 1, %s10
      %p835 = scmp.lt.s32.totalorder %s10, 3
      %p836 = pnand %p834, %p835
      %p837 = pneg %p836
      // Predicated region
      $region70: #{_lambda_.9} parent=5 // pred_check
        _
      $region71: #{_lambda_.9} parent=5 // pred_check_branch
        %839 = sbr.rel (%p836) target = $region73
      $region72: #{_lambda_.9} parent=5 // pred_region
        %s840 = ssub.s32 %s10, 1
        %s841 = sand.u32 %s72, 1
        %s842 = sand.u32 %s72, 1
        %s843 = smul.addr %s842, 576
        %s844 = scalar_lea.vmem [#allocation3], %s843
        // Predicated region
        $region74: #{_lambda_.9} parent=72 // pred_check
          %p845 = pneg %p85
        $region75: #{_lambda_.9} parent=72 // pred_check_branch
          %847 = sbr.rel (%p845) target = $region77
        $region76: #{_lambda_.9} parent=72 // pred_region
          _
        $region77: #{_lambda_.9} parent=72 // pred_fallthru
          _
        %s848 = smul.u32 4, %s20
        %s849 = smul.u32 9, %s22
        %p850 = scmp.lt.s32.totalorder %s848, 3
        %s851 = scalar_select %p850, %s848, 3
        %p852 = scmp.lt.s32.totalorder %s849, 8
        %s853 = scalar_select %p852, %s849, 8
        %s854 = smul.addr %s851, 9
        %s855 = sadd.s32 %s853, %s854
        %s856 = smul.addr %s855, 4
        %s857 = scalar_lea.vmem %s0, %s856
        %p858 = pneg %p57
        %p859 = pneg %p54
        %s860 = sand.u32 %s72, 1
        %s861 = sand.u32 %s72, 1
        %s862 = smul.addr %s861, 576
        %s863 = scalar_lea.vmem [#allocation3], %s862
        %p864 = pneg %p85
        %p865 = pneg %p82
        %p866 = scmp.lt.s32.totalorder %s21, 1
        %s867 = scalar_select %p866, %s21, 1
        %s868 = scalar_lea.vmem %s2, %s867
        %p869 = pneg %p111
        %p870 = pneg %p108
        %p871 = scmp.lt.s32.totalorder %s21, 1
        %s872 = scalar_select %p871, %s21, 1
        %s873 = scalar_lea.vmem %s3, %s872
        %p874 = pneg %p137
        %p875 = pneg %p134
        %p876 = pneg %p165
        %p877 = pneg %p162
        %s878 = sand.u32 %s152, 1
        %s879 = sand.u32 %s152, 1
        %s880 = smul.addr %s879, 16
        %s881 = scalar_lea.vmem [#allocation4], %s880
        %s882 = smul.u32 4, %s20
        %s883 = smul.u32 9, %s22
        %p884 = scmp.lt.s32.totalorder %s882, 3
        %s885 = scalar_select %p884, %s882, 3
        %p886 = scmp.lt.s32.totalorder %s883, 8
        %s887 = scalar_select %p886, %s883, 8
        %s888 = smul.addr %s885, 9
        %s889 = sadd.s32 %s887, %s888
        %s890 = smul.addr %s889, 4
        %s891 = scalar_lea.vmem %s0, %s890
        %s892 = smul.u32 4, %s20
        %s893 = smul.u32 9, %s22
        %s894 = smul.u32 144, %s22
        %p895 = scmp.lt.s32.totalorder %s21, 1
        %s896 = scalar_select %p895, %s21, 1
        %s897 = scalar_lea.vmem %s2, %s896
        %p898 = scmp.lt.s32.totalorder %s21, 1
        %s899 = scalar_select %p898, %s21, 1
        %s900 = scalar_lea.vmem %s3, %s899
        %s901 = smul.u32 4, %s20
        %p903 = scmp.eq.s32.totalorder %s22, 0
        // Predicated region
        $region78: #{_lambda_.9} parent=72 // pred_check
          %p904 = pneg %p903
        $region79: #{_lambda_.9} parent=72 // pred_check_branch
          %906 = sbr.rel (%p904) target = $region81
        $region80: #{_lambda_.9} parent=72 // pred_region
          %907 = vst [vmem:[#allocation2] sm:$0xff] 0.0
          %908 = vst [vmem:[#allocation2 + $0x8] sm:$0xff] 0.0
          %909 = vst [vmem:[#allocation2 + $0x10] sm:$0xff] 0.0
          %910 = vst [vmem:[#allocation2 + $0x18] sm:$0xff] 0.0
        $region81: #{_lambda_.9} parent=72 // pred_fallthru
          _
        %v911 = vld [vmem:[#allocation2] sm:$0xff]
        %v912 = vld [vmem:[#allocation2 + $0x8] sm:$0xff]
        %v913 = vld [vmem:[#allocation2 + $0x10] sm:$0xff]
        %v914 = vld [vmem:[#allocation2 + $0x18] sm:$0xff]
        %v915 = vld [vmem:[%s891] sm:$0xff]
        %v916 = vld [vmem:[%s891 + $0x8] sm:$0xff]
        %v917 = vld [vmem:[%s891 + $0x10] sm:$0xff]
        %v918 = vld [vmem:[%s891 + $0x18] sm:$0xff]
        %v919 = vld [vmem:[%s891 + $0x20] sm:$0xf]
        %v920 = vld [vmem:[%s891 + $0x24] sm:$0xff]
        %v921 = vld [vmem:[%s891 + $0x2c] sm:$0xff]
        %v922 = vld [vmem:[%s891 + $0x34] sm:$0xff]
        %v923 = vld [vmem:[%s891 + $0x3c] sm:$0xff]
        %v924 = vld [vmem:[%s891 + $0x44] sm:$0xf]
        %v925 = vld [vmem:[%s891 + $0x48] sm:$0xff]
        %v926 = vld [vmem:[%s891 + $0x50] sm:$0xff]
        %v927 = vld [vmem:[%s891 + $0x58] sm:$0xff]
        %v928 = vld [vmem:[%s891 + $0x60] sm:$0xff]
        %v929 = vld [vmem:[%s891 + $0x68] sm:$0xf]
        %v930 = vld [vmem:[%s891 + $0x6c] sm:$0xff]
        %v931 = vld [vmem:[%s891 + $0x74] sm:$0xff]
        %v932 = vld [vmem:[%s891 + $0x7c] sm:$0xff]
        %v933 = vld [vmem:[%s891 + $0x84] sm:$0xff]
        %v934 = vld [vmem:[%s891 + $0x8c] sm:$0xf]
        %v935 = vld [vmem:[%s844] sm:$0xf]
        %v936 = vld [vmem:[%s844 + $0x4] sm:$0xf]
        %v937 = vld [vmem:[%s844 + $0x8] sm:$0xf]
        %v938 = vld [vmem:[%s844 + $0xc] sm:$0xf]
        %v939 = vld [vmem:[%s844 + $0x10] sm:$0xf]
        %v940 = vld [vmem:[%s844 + $0x14] sm:$0xf]
        %v941 = vld [vmem:[%s844 + $0x18] sm:$0xf]
        %v942 = vld [vmem:[%s844 + $0x1c] sm:$0xf]
        %v943 = vld [vmem:[%s844 + $0x20] sm:$0xf]
        %v944 = vld [vmem:[%s844 + $0x24] sm:$0xf]
        %v945 = vld [vmem:[%s844 + $0x28] sm:$0xf]
        %v946 = vld [vmem:[%s844 + $0x2c] sm:$0xf]
        %v947 = vld [vmem:[%s844 + $0x30] sm:$0xf]
        %v948 = vld [vmem:[%s844 + $0x34] sm:$0xf]
        %v949 = vld [vmem:[%s844 + $0x38] sm:$0xf]
        %v950 = vld [vmem:[%s844 + $0x3c] sm:$0xf]
        %v951 = vld [vmem:[%s844 + $0x40] sm:$0xf]
        %v952 = vld [vmem:[%s844 + $0x44] sm:$0xf]
        %v953 = vld [vmem:[%s844 + $0x48] sm:$0xf]
        %v954 = vld [vmem:[%s844 + $0x4c] sm:$0xf]
        %v955 = vld [vmem:[%s844 + $0x50] sm:$0xf]
        %v956 = vld [vmem:[%s844 + $0x54] sm:$0xf]
        %v957 = vld [vmem:[%s844 + $0x58] sm:$0xf]
        %v958 = vld [vmem:[%s844 + $0x5c] sm:$0xf]
        %v959 = vld [vmem:[%s844 + $0x60] sm:$0xf]
        %v960 = vld [vmem:[%s844 + $0x64] sm:$0xf]
        %v961 = vld [vmem:[%s844 + $0x68] sm:$0xf]
        %v962 = vld [vmem:[%s844 + $0x6c] sm:$0xf]
        %v963 = vld [vmem:[%s844 + $0x70] sm:$0xf]
        %v964 = vld [vmem:[%s844 + $0x74] sm:$0xf]
        %v965 = vld [vmem:[%s844 + $0x78] sm:$0xf]
        %v966 = vld [vmem:[%s844 + $0x7c] sm:$0xf]
        %v967 = vld [vmem:[%s844 + $0x80] sm:$0xf]
        %v968 = vld [vmem:[%s844 + $0x84] sm:$0xf]
        %v969 = vld [vmem:[%s844 + $0x88] sm:$0xf]
        %v970 = vld [vmem:[%s844 + $0x8c] sm:$0xf]
        %v971 = vld [vmem:[%s844 + $0x90] sm:$0xf]
        %v972 = vld [vmem:[%s844 + $0x94] sm:$0xf]
        %v973 = vld [vmem:[%s844 + $0x98] sm:$0xf]
        %v974 = vld [vmem:[%s844 + $0x9c] sm:$0xf]
        %v975 = vld [vmem:[%s844 + $0xa0] sm:$0xf]
        %v976 = vld [vmem:[%s844 + $0xa4] sm:$0xf]
        %v977 = vld [vmem:[%s844 + $0xa8] sm:$0xf]
        %v978 = vld [vmem:[%s844 + $0xac] sm:$0xf]
        %v979 = vld [vmem:[%s844 + $0xb0] sm:$0xf]
        %v980 = vld [vmem:[%s844 + $0xb4] sm:$0xf]
        %v981 = vld [vmem:[%s844 + $0xb8] sm:$0xf]
        %v982 = vld [vmem:[%s844 + $0xbc] sm:$0xf]
        %v983 = vld [vmem:[%s844 + $0xc0] sm:$0xf]
        %v984 = vld [vmem:[%s844 + $0xc4] sm:$0xf]
        %v985 = vld [vmem:[%s844 + $0xc8] sm:$0xf]
        %v986 = vld [vmem:[%s844 + $0xcc] sm:$0xf]
        %v987 = vld [vmem:[%s844 + $0xd0] sm:$0xf]
        %v988 = vld [vmem:[%s844 + $0xd4] sm:$0xf]
        %v989 = vld [vmem:[%s844 + $0xd8] sm:$0xf]
        %v990 = vld [vmem:[%s844 + $0xdc] sm:$0xf]
        %v991 = vld [vmem:[%s844 + $0xe0] sm:$0xf]
        %v992 = vld [vmem:[%s844 + $0xe4] sm:$0xf]
        %v993 = vld [vmem:[%s844 + $0xe8] sm:$0xf]
        %v994 = vld [vmem:[%s844 + $0xec] sm:$0xf]
        %v995 = vld [vmem:[%s844 + $0xf0] sm:$0xf]
        %v996 = vld [vmem:[%s844 + $0xf4] sm:$0xf]
        %v997 = vld [vmem:[%s844 + $0xf8] sm:$0xf]
        %v998 = vld [vmem:[%s844 + $0xfc] sm:$0xf]
        %v999 = vld [vmem:[%s844 + $0x100] sm:$0xf]
        %v1000 = vld [vmem:[%s844 + $0x104] sm:$0xf]
        %v1001 = vld [vmem:[%s844 + $0x108] sm:$0xf]
        %v1002 = vld [vmem:[%s844 + $0x10c] sm:$0xf]
        %v1003 = vld [vmem:[%s844 + $0x110] sm:$0xf]
        %v1004 = vld [vmem:[%s844 + $0x114] sm:$0xf]
        %v1005 = vld [vmem:[%s844 + $0x118] sm:$0xf]
        %v1006 = vld [vmem:[%s844 + $0x11c] sm:$0xf]
        %v1007 = vld [vmem:[%s844 + $0x120] sm:$0xf]
        %v1008 = vld [vmem:[%s844 + $0x124] sm:$0xf]
        %v1009 = vld [vmem:[%s844 + $0x128] sm:$0xf]
        %v1010 = vld [vmem:[%s844 + $0x12c] sm:$0xf]
        %v1011 = vld [vmem:[%s844 + $0x130] sm:$0xf]
        %v1012 = vld [vmem:[%s844 + $0x134] sm:$0xf]
        %v1013 = vld [vmem:[%s844 + $0x138] sm:$0xf]
        %v1014 = vld [vmem:[%s844 + $0x13c] sm:$0xf]
        %v1015 = vld [vmem:[%s844 + $0x140] sm:$0xf]
        %v1016 = vld [vmem:[%s844 + $0x144] sm:$0xf]
        %v1017 = vld [vmem:[%s844 + $0x148] sm:$0xf]
        %v1018 = vld [vmem:[%s844 + $0x14c] sm:$0xf]
        %v1019 = vld [vmem:[%s844 + $0x150] sm:$0xf]
        %v1020 = vld [vmem:[%s844 + $0x154] sm:$0xf]
        %v1021 = vld [vmem:[%s844 + $0x158] sm:$0xf]
        %v1022 = vld [vmem:[%s844 + $0x15c] sm:$0xf]
        %v1023 = vld [vmem:[%s844 + $0x160] sm:$0xf]
        %v1024 = vld [vmem:[%s844 + $0x164] sm:$0xf]
        %v1025 = vld [vmem:[%s844 + $0x168] sm:$0xf]
        %v1026 = vld [vmem:[%s844 + $0x16c] sm:$0xf]
        %v1027 = vld [vmem:[%s844 + $0x170] sm:$0xf]
        %v1028 = vld [vmem:[%s844 + $0x174] sm:$0xf]
        %v1029 = vld [vmem:[%s844 + $0x178] sm:$0xf]
        %v1030 = vld [vmem:[%s844 + $0x17c] sm:$0xf]
        %v1031 = vld [vmem:[%s844 + $0x180] sm:$0xf]
        %v1032 = vld [vmem:[%s844 + $0x184] sm:$0xf]
        %v1033 = vld [vmem:[%s844 + $0x188] sm:$0xf]
        %v1034 = vld [vmem:[%s844 + $0x18c] sm:$0xf]
        %v1035 = vld [vmem:[%s844 + $0x190] sm:$0xf]
        %v1036 = vld [vmem:[%s844 + $0x194] sm:$0xf]
        %v1037 = vld [vmem:[%s844 + $0x198] sm:$0xf]
        %v1038 = vld [vmem:[%s844 + $0x19c] sm:$0xf]
        %v1039 = vld [vmem:[%s844 + $0x1a0] sm:$0xf]
        %v1040 = vld [vmem:[%s844 + $0x1a4] sm:$0xf]
        %v1041 = vld [vmem:[%s844 + $0x1a8] sm:$0xf]
        %v1042 = vld [vmem:[%s844 + $0x1ac] sm:$0xf]
        %v1043 = vld [vmem:[%s844 + $0x1b0] sm:$0xf]
        %v1044 = vld [vmem:[%s844 + $0x1b4] sm:$0xf]
        %v1045 = vld [vmem:[%s844 + $0x1b8] sm:$0xf]
        %v1046 = vld [vmem:[%s844 + $0x1bc] sm:$0xf]
        %v1047 = vld [vmem:[%s844 + $0x1c0] sm:$0xf]
        %v1048 = vld [vmem:[%s844 + $0x1c4] sm:$0xf]
        %v1049 = vld [vmem:[%s844 + $0x1c8] sm:$0xf]
        %v1050 = vld [vmem:[%s844 + $0x1cc] sm:$0xf]
        %v1051 = vld [vmem:[%s844 + $0x1d0] sm:$0xf]
        %v1052 = vld [vmem:[%s844 + $0x1d4] sm:$0xf]
        %v1053 = vld [vmem:[%s844 + $0x1d8] sm:$0xf]
        %v1054 = vld [vmem:[%s844 + $0x1dc] sm:$0xf]
        %v1055 = vld [vmem:[%s844 + $0x1e0] sm:$0xf]
        %v1056 = vld [vmem:[%s844 + $0x1e4] sm:$0xf]
        %v1057 = vld [vmem:[%s844 + $0x1e8] sm:$0xf]
        %v1058 = vld [vmem:[%s844 + $0x1ec] sm:$0xf]
        %v1059 = vld [vmem:[%s844 + $0x1f0] sm:$0xf]
        %v1060 = vld [vmem:[%s844 + $0x1f4] sm:$0xf]
        %v1061 = vld [vmem:[%s844 + $0x1f8] sm:$0xf]
        %v1062 = vld [vmem:[%s844 + $0x1fc] sm:$0xf]
        %v1063 = vld [vmem:[%s844 + $0x200] sm:$0xf]
        %v1064 = vld [vmem:[%s844 + $0x204] sm:$0xf]
        %v1065 = vld [vmem:[%s844 + $0x208] sm:$0xf]
        %v1066 = vld [vmem:[%s844 + $0x20c] sm:$0xf]
        %v1067 = vld [vmem:[%s844 + $0x210] sm:$0xf]
        %v1068 = vld [vmem:[%s844 + $0x214] sm:$0xf]
        %v1069 = vld [vmem:[%s844 + $0x218] sm:$0xf]
        %v1070 = vld [vmem:[%s844 + $0x21c] sm:$0xf]
        %v1071 = vld [vmem:[%s844 + $0x220] sm:$0xf]
        %v1072 = vld [vmem:[%s844 + $0x224] sm:$0xf]
        %v1073 = vld [vmem:[%s844 + $0x228] sm:$0xf]
        %v1074 = vld [vmem:[%s844 + $0x22c] sm:$0xf]
        %v1075 = vld [vmem:[%s844 + $0x230] sm:$0xf]
        %v1076 = vld [vmem:[%s844 + $0x234] sm:$0xf]
        %v1077 = vld [vmem:[%s844 + $0x238] sm:$0xf]
        %v1078 = vld [vmem:[%s844 + $0x23c] sm:$0xf]
        %v1099 = vunpack.c.l.b16 %v915
        %v1100 = vunpack.c.h.b16 %v915
        %v1101 = vunpack.c.l.b16 %v916
        %v1102 = vunpack.c.h.b16 %v916
        %v1103 = vunpack.c.l.b16 %v917
        %v1104 = vunpack.c.h.b16 %v917
        %v1105 = vunpack.c.l.b16 %v918
        %v1106 = vunpack.c.h.b16 %v918
        %v1107 = vunpack.c.l.b16 %v919
        %v1108 = vunpack.c.l.b16 %v920
        %v1109 = vunpack.c.h.b16 %v920
        %v1110 = vunpack.c.l.b16 %v921
        %v1111 = vunpack.c.h.b16 %v921
        %v1112 = vunpack.c.l.b16 %v922
        %v1113 = vunpack.c.h.b16 %v922
        %v1114 = vunpack.c.l.b16 %v923
        %v1115 = vunpack.c.h.b16 %v923
        %v1116 = vunpack.c.l.b16 %v924
        %v1117 = vunpack.c.l.b16 %v925
        %v1118 = vunpack.c.h.b16 %v925
        %v1119 = vunpack.c.l.b16 %v926
        %v1120 = vunpack.c.h.b16 %v926
        %v1121 = vunpack.c.l.b16 %v927
        %v1122 = vunpack.c.h.b16 %v927
        %v1123 = vunpack.c.l.b16 %v928
        %v1124 = vunpack.c.h.b16 %v928
        %v1125 = vunpack.c.l.b16 %v929
        %v1126 = vunpack.c.l.b16 %v930
        %v1127 = vunpack.c.h.b16 %v930
        %v1128 = vunpack.c.l.b16 %v931
        %v1129 = vunpack.c.h.b16 %v931
        %v1130 = vunpack.c.l.b16 %v932
        %v1131 = vunpack.c.h.b16 %v932
        %v1132 = vunpack.c.l.b16 %v933
        %v1133 = vunpack.c.h.b16 %v933
        %v1134 = vunpack.c.l.b16 %v934
        %v1135 = vpack.c.b16 %v1108, %v1099
        %v1136 = vpack.c.b16 %v1109, %v1100
        %v1137 = vpack.c.b16 %v1110, %v1101
        %v1138 = vpack.c.b16 %v1111, %v1102
        %v1139 = vpack.c.b16 %v1112, %v1103
        %v1140 = vpack.c.b16 %v1113, %v1104
        %v1141 = vpack.c.b16 %v1114, %v1105
        %v1142 = vpack.c.b16 %v1115, %v1106
        %v1143 = vpack.c.b16 %v1116, %v1107
        %v1144 = vpack.c.b16 %v1126, %v1117
        %v1145 = vpack.c.b16 %v1127, %v1118
        %v1146 = vpack.c.b16 %v1128, %v1119
        %v1147 = vpack.c.b16 %v1129, %v1120
        %v1148 = vpack.c.b16 %v1130, %v1121
        %v1149 = vpack.c.b16 %v1131, %v1122
        %v1150 = vpack.c.b16 %v1132, %v1123
        %v1151 = vpack.c.b16 %v1133, %v1124
        %v1152 = vpack.c.b16 %v1134, %v1125
        %v1315 = vunpack.c.l.b16 %v935
        %v1316 = vunpack.c.l.b16 %v936
        %v1317 = vunpack.c.l.b16 %v937
        %v1318 = vunpack.c.l.b16 %v938
        %v1319 = vunpack.c.l.b16 %v939
        %v1320 = vunpack.c.l.b16 %v940
        %v1321 = vunpack.c.l.b16 %v941
        %v1322 = vunpack.c.l.b16 %v942
        %v1323 = vunpack.c.l.b16 %v943
        %v1324 = vunpack.c.l.b16 %v944
        %v1325 = vunpack.c.l.b16 %v945
        %v1326 = vunpack.c.l.b16 %v946
        %v1327 = vunpack.c.l.b16 %v947
        %v1328 = vunpack.c.l.b16 %v948
        %v1329 = vunpack.c.l.b16 %v949
        %v1330 = vunpack.c.l.b16 %v950
        %v1331 = vunpack.c.l.b16 %v951
        %v1332 = vunpack.c.l.b16 %v952
        %v1333 = vunpack.c.l.b16 %v953
        %v1334 = vunpack.c.l.b16 %v954
        %v1335 = vunpack.c.l.b16 %v955
        %v1336 = vunpack.c.l.b16 %v956
        %v1337 = vunpack.c.l.b16 %v957
        %v1338 = vunpack.c.l.b16 %v958
        %v1339 = vunpack.c.l.b16 %v959
        %v1340 = vunpack.c.l.b16 %v960
        %v1341 = vunpack.c.l.b16 %v961
        %v1342 = vunpack.c.l.b16 %v962
        %v1343 = vunpack.c.l.b16 %v963
        %v1344 = vunpack.c.l.b16 %v964
        %v1345 = vunpack.c.l.b16 %v965
        %v1346 = vunpack.c.l.b16 %v966
        %v1347 = vunpack.c.l.b16 %v967
        %v1348 = vunpack.c.l.b16 %v968
        %v1349 = vunpack.c.l.b16 %v969
        %v1350 = vunpack.c.l.b16 %v970
        %v1351 = vunpack.c.l.b16 %v971
        %v1352 = vunpack.c.l.b16 %v972
        %v1353 = vunpack.c.l.b16 %v973
        %v1354 = vunpack.c.l.b16 %v974
        %v1355 = vunpack.c.l.b16 %v975
        %v1356 = vunpack.c.l.b16 %v976
        %v1357 = vunpack.c.l.b16 %v977
        %v1358 = vunpack.c.l.b16 %v978
        %v1359 = vunpack.c.l.b16 %v979
        %v1360 = vunpack.c.l.b16 %v980
        %v1361 = vunpack.c.l.b16 %v981
        %v1362 = vunpack.c.l.b16 %v982
        %v1363 = vunpack.c.l.b16 %v983
        %v1364 = vunpack.c.l.b16 %v984
        %v1365 = vunpack.c.l.b16 %v985
        %v1366 = vunpack.c.l.b16 %v986
        %v1367 = vunpack.c.l.b16 %v987
        %v1368 = vunpack.c.l.b16 %v988
        %v1369 = vunpack.c.l.b16 %v989
        %v1370 = vunpack.c.l.b16 %v990
        %v1371 = vunpack.c.l.b16 %v991
        %v1372 = vunpack.c.l.b16 %v992
        %v1373 = vunpack.c.l.b16 %v993
        %v1374 = vunpack.c.l.b16 %v994
        %v1375 = vunpack.c.l.b16 %v995
        %v1376 = vunpack.c.l.b16 %v996
        %v1377 = vunpack.c.l.b16 %v997
        %v1378 = vunpack.c.l.b16 %v998
        %v1379 = vunpack.c.l.b16 %v999
        %v1380 = vunpack.c.l.b16 %v1000
        %v1381 = vunpack.c.l.b16 %v1001
        %v1382 = vunpack.c.l.b16 %v1002
        %v1383 = vunpack.c.l.b16 %v1003
        %v1384 = vunpack.c.l.b16 %v1004
        %v1385 = vunpack.c.l.b16 %v1005
        %v1386 = vunpack.c.l.b16 %v1006
        %v1387 = vunpack.c.l.b16 %v1007
        %v1388 = vunpack.c.l.b16 %v1008
        %v1389 = vunpack.c.l.b16 %v1009
        %v1390 = vunpack.c.l.b16 %v1010
        %v1391 = vunpack.c.l.b16 %v1011
        %v1392 = vunpack.c.l.b16 %v1012
        %v1393 = vunpack.c.l.b16 %v1013
        %v1394 = vunpack.c.l.b16 %v1014
        %v1395 = vunpack.c.l.b16 %v1015
        %v1396 = vunpack.c.l.b16 %v1016
        %v1397 = vunpack.c.l.b16 %v1017
        %v1398 = vunpack.c.l.b16 %v1018
        %v1399 = vunpack.c.l.b16 %v1019
        %v1400 = vunpack.c.l.b16 %v1020
        %v1401 = vunpack.c.l.b16 %v1021
        %v1402 = vunpack.c.l.b16 %v1022
        %v1403 = vunpack.c.l.b16 %v1023
        %v1404 = vunpack.c.l.b16 %v1024
        %v1405 = vunpack.c.l.b16 %v1025
        %v1406 = vunpack.c.l.b16 %v1026
        %v1407 = vunpack.c.l.b16 %v1027
        %v1408 = vunpack.c.l.b16 %v1028
        %v1409 = vunpack.c.l.b16 %v1029
        %v1410 = vunpack.c.l.b16 %v1030
        %v1411 = vunpack.c.l.b16 %v1031
        %v1412 = vunpack.c.l.b16 %v1032
        %v1413 = vunpack.c.l.b16 %v1033
        %v1414 = vunpack.c.l.b16 %v1034
        %v1415 = vunpack.c.l.b16 %v1035
        %v1416 = vunpack.c.l.b16 %v1036
        %v1417 = vunpack.c.l.b16 %v1037
        %v1418 = vunpack.c.l.b16 %v1038
        %v1419 = vunpack.c.l.b16 %v1039
        %v1420 = vunpack.c.l.b16 %v1040
        %v1421 = vunpack.c.l.b16 %v1041
        %v1422 = vunpack.c.l.b16 %v1042
        %v1423 = vunpack.c.l.b16 %v1043
        %v1424 = vunpack.c.l.b16 %v1044
        %v1425 = vunpack.c.l.b16 %v1045
        %v1426 = vunpack.c.l.b16 %v1046
        %v1427 = vunpack.c.l.b16 %v1047
        %v1428 = vunpack.c.l.b16 %v1048
        %v1429 = vunpack.c.l.b16 %v1049
        %v1430 = vunpack.c.l.b16 %v1050
        %v1431 = vunpack.c.l.b16 %v1051
        %v1432 = vunpack.c.l.b16 %v1052
        %v1433 = vunpack.c.l.b16 %v1053
        %v1434 = vunpack.c.l.b16 %v1054
        %v1435 = vunpack.c.l.b16 %v1055
        %v1436 = vunpack.c.l.b16 %v1056
        %v1437 = vunpack.c.l.b16 %v1057
        %v1438 = vunpack.c.l.b16 %v1058
        %v1439 = vunpack.c.l.b16 %v1059
        %v1440 = vunpack.c.l.b16 %v1060
        %v1441 = vunpack.c.l.b16 %v1061
        %v1442 = vunpack.c.l.b16 %v1062
        %v1443 = vunpack.c.l.b16 %v1063
        %v1444 = vunpack.c.l.b16 %v1064
        %v1445 = vunpack.c.l.b16 %v1065
        %v1446 = vunpack.c.l.b16 %v1066
        %v1447 = vunpack.c.l.b16 %v1067
        %v1448 = vunpack.c.l.b16 %v1068
        %v1449 = vunpack.c.l.b16 %v1069
        %v1450 = vunpack.c.l.b16 %v1070
        %v1451 = vunpack.c.l.b16 %v1071
        %v1452 = vunpack.c.l.b16 %v1072
        %v1453 = vunpack.c.l.b16 %v1073
        %v1454 = vunpack.c.l.b16 %v1074
        %v1455 = vunpack.c.l.b16 %v1075
        %v1456 = vunpack.c.l.b16 %v1076
        %v1457 = vunpack.c.l.b16 %v1077
        %v1458 = vunpack.c.l.b16 %v1078
        %v1459 = vpack.c.b16 %v1316, %v1315
        %v1460 = vpack.c.b16 %v1318, %v1317
        %v1461 = vpack.c.b16 %v1320, %v1319
        %v1462 = vpack.c.b16 %v1322, %v1321
        %v1463 = vpack.c.b16 %v1324, %v1323
        %v1464 = vpack.c.b16 %v1326, %v1325
        %v1465 = vpack.c.b16 %v1328, %v1327
        %v1466 = vpack.c.b16 %v1330, %v1329
        %v1467 = vpack.c.b16 %v1332, %v1331
        %v1468 = vpack.c.b16 %v1334, %v1333
        %v1469 = vpack.c.b16 %v1336, %v1335
        %v1470 = vpack.c.b16 %v1338, %v1337
        %v1471 = vpack.c.b16 %v1340, %v1339
        %v1472 = vpack.c.b16 %v1342, %v1341
        %v1473 = vpack.c.b16 %v1344, %v1343
        %v1474 = vpack.c.b16 %v1346, %v1345
        %v1475 = vpack.c.b16 %v1348, %v1347
        %v1476 = vpack.c.b16 %v1350, %v1349
        %v1477 = vpack.c.b16 %v1352, %v1351
        %v1478 = vpack.c.b16 %v1354, %v1353
        %v1479 = vpack.c.b16 %v1356, %v1355
        %v1480 = vpack.c.b16 %v1358, %v1357
        %v1481 = vpack.c.b16 %v1360, %v1359
        %v1482 = vpack.c.b16 %v1362, %v1361
        %v1483 = vpack.c.b16 %v1364, %v1363
        %v1484 = vpack.c.b16 %v1366, %v1365
        %v1485 = vpack.c.b16 %v1368, %v1367
        %v1486 = vpack.c.b16 %v1370, %v1369
        %v1487 = vpack.c.b16 %v1372, %v1371
        %v1488 = vpack.c.b16 %v1374, %v1373
        %v1489 = vpack.c.b16 %v1376, %v1375
        %v1490 = vpack.c.b16 %v1378, %v1377
        %v1491 = vpack.c.b16 %v1380, %v1379
        %v1492 = vpack.c.b16 %v1382, %v1381
        %v1493 = vpack.c.b16 %v1384, %v1383
        %v1494 = vpack.c.b16 %v1386, %v1385
        %v1495 = vpack.c.b16 %v1388, %v1387
        %v1496 = vpack.c.b16 %v1390, %v1389
        %v1497 = vpack.c.b16 %v1392, %v1391
        %v1498 = vpack.c.b16 %v1394, %v1393
        %v1499 = vpack.c.b16 %v1396, %v1395
        %v1500 = vpack.c.b16 %v1398, %v1397
        %v1501 = vpack.c.b16 %v1400, %v1399
        %v1502 = vpack.c.b16 %v1402, %v1401
        %v1503 = vpack.c.b16 %v1404, %v1403
        %v1504 = vpack.c.b16 %v1406, %v1405
        %v1505 = vpack.c.b16 %v1408, %v1407
        %v1506 = vpack.c.b16 %v1410, %v1409
        %v1507 = vpack.c.b16 %v1412, %v1411
        %v1508 = vpack.c.b16 %v1414, %v1413
        %v1509 = vpack.c.b16 %v1416, %v1415
        %v1510 = vpack.c.b16 %v1418, %v1417
        %v1511 = vpack.c.b16 %v1420, %v1419
        %v1512 = vpack.c.b16 %v1422, %v1421
        %v1513 = vpack.c.b16 %v1424, %v1423
        %v1514 = vpack.c.b16 %v1426, %v1425
        %v1515 = vpack.c.b16 %v1428, %v1427
        %v1516 = vpack.c.b16 %v1430, %v1429
        %v1517 = vpack.c.b16 %v1432, %v1431
        %v1518 = vpack.c.b16 %v1434, %v1433
        %v1519 = vpack.c.b16 %v1436, %v1435
        %v1520 = vpack.c.b16 %v1438, %v1437
        %v1521 = vpack.c.b16 %v1440, %v1439
        %v1522 = vpack.c.b16 %v1442, %v1441
        %v1523 = vpack.c.b16 %v1444, %v1443
        %v1524 = vpack.c.b16 %v1446, %v1445
        %v1525 = vpack.c.b16 %v1448, %v1447
        %v1526 = vpack.c.b16 %v1450, %v1449
        %v1527 = vpack.c.b16 %v1452, %v1451
        %v1528 = vpack.c.b16 %v1454, %v1453
        %v1529 = vpack.c.b16 %v1456, %v1455
        %v1530 = vpack.c.b16 %v1458, %v1457
        %1603 = vmatprep.subr.bf16.mxu0 0
        %1604 = vmatpush1.bf16.msra.mxu0 %v1459
        %1605 = vmatprep.subr.bf16.mxu0 0
        %1606 = vmatpush1.bf16.msra.mxu0 %v1460
        %1607 = vmatprep.subr.bf16.mxu0 0
        %1608 = vmatpush1.bf16.msra.mxu0 %v1461
        %1609 = vmatprep.subr.bf16.mxu0 0
        %1610 = vmatpush1.bf16.msra.mxu0 %v1462
        %1611 = vmatprep.subr.bf16.mxu0 0
        %1612 = vmatpush1.bf16.msra.mxu0 %v1463
        %1613 = vmatprep.subr.bf16.mxu0 0
        %1614 = vmatpush1.bf16.msra.mxu0 %v1464
        %1615 = vmatprep.subr.bf16.mxu0 0
        %1616 = vmatpush1.bf16.msra.mxu0 %v1465
        %1617 = vmatprep.subr.bf16.mxu0 0
        %1618 = vmatpush1.bf16.msra.mxu0 %v1466
        %1619 = vmatprep.subr.bf16.mxu0 0
        %1620 = vmatpush1.bf16.msra.mxu0 %v1467
        %1621 = vmatprep.subr.bf16.mxu0 0
        %1622 = vmatpush1.bf16.msra.mxu0 %v1468
        %1623 = vmatprep.subr.bf16.mxu0 0
        %1624 = vmatpush1.bf16.msra.mxu0 %v1469
        %1625 = vmatprep.subr.bf16.mxu0 0
        %1626 = vmatpush1.bf16.msra.mxu0 %v1470
        %1627 = vmatprep.subr.bf16.mxu0 0
        %1628 = vmatpush1.bf16.msra.mxu0 %v1471
        %1629 = vmatprep.subr.bf16.mxu0 0
        %1630 = vmatpush1.bf16.msra.mxu0 %v1472
        %1631 = vmatprep.subr.bf16.mxu0 0
        %1632 = vmatpush1.bf16.msra.mxu0 %v1473
        %1633 = vmatprep.subr.bf16.mxu0 0
        %1634 = vmatpush1.bf16.msra.mxu0 %v1474
        %1635 = vmatprep.mubr.bf16.mxu0 %v1136
        %1636 = vmatmul.mubr.bf16.gmra.mrb[0].mxu0 %v1135
        %v1637 = vpop.f32.mrb[0].mxu0
        %v1638 = vadd.f32 0.0, %v1637
        %v1639 = vpop.f32.mrb[0].mxu0
        %v1640 = vpop.f32.mrb[0].mxu0
        %v1641 = vadd.f32 0.0, %v1640
        %v1642 = vpop.f32.mrb[0].mxu0
        %1643 = vmatprep.mubr.bf16.mxu0 %v1145
        %1644 = vmatmul.mubr.bf16.gmra.mrb[0].mxu0 %v1144
        %v1645 = vpop.f32.mrb[0].mxu0
        %v1646 = vadd.f32 0.0, %v1645
        %v1647 = vpop.f32.mrb[0].mxu0
        %v1648 = vpop.f32.mrb[0].mxu0
        %v1649 = vadd.f32 0.0, %v1648
        %v1650 = vpop.f32.mrb[0].mxu0
        %1651 = vdwg.mxu0
        %1652 = vmatprep.subr.bf16.mxu0 0
        %1653 = vmatpush1.bf16.msra.mxu0 %v1475
        %1654 = vmatprep.subr.bf16.mxu0 0
        %1655 = vmatpush1.bf16.msra.mxu0 %v1476
        %1656 = vmatprep.subr.bf16.mxu0 0
        %1657 = vmatpush1.bf16.msra.mxu0 %v1477
        %1658 = vmatprep.subr.bf16.mxu0 0
        %1659 = vmatpush1.bf16.msra.mxu0 %v1478
        %1660 = vmatprep.subr.bf16.mxu0 0
        %1661 = vmatpush1.bf16.msra.mxu0 %v1479
        %1662 = vmatprep.subr.bf16.mxu0 0
        %1663 = vmatpush1.bf16.msra.mxu0 %v1480
        %1664 = vmatprep.subr.bf16.mxu0 0
        %1665 = vmatpush1.bf16.msra.mxu0 %v1481
        %1666 = vmatprep.subr.bf16.mxu0 0
        %1667 = vmatpush1.bf16.msra.mxu0 %v1482
        %1668 = vmatprep.subr.bf16.mxu0 0
        %1669 = vmatpush1.bf16.msra.mxu0 %v1483
        %1670 = vmatprep.subr.bf16.mxu0 0
        %1671 = vmatpush1.bf16.msra.mxu0 %v1484
        %1672 = vmatprep.subr.bf16.mxu0 0
        %1673 = vmatpush1.bf16.msra.mxu0 %v1485
        %1674 = vmatprep.subr.bf16.mxu0 0
        %1675 = vmatpush1.bf16.msra.mxu0 %v1486
        %1676 = vmatprep.subr.bf16.mxu0 0
        %1677 = vmatpush1.bf16.msra.mxu0 %v1487
        %1678 = vmatprep.subr.bf16.mxu0 0
        %1679 = vmatpush1.bf16.msra.mxu0 %v1488
        %1680 = vmatprep.subr.bf16.mxu0 0
        %1681 = vmatpush1.bf16.msra.mxu0 %v1489
        %1682 = vmatprep.subr.bf16.mxu0 0
        %1683 = vmatpush1.bf16.msra.mxu0 %v1490
        %1684 = vmatprep.mubr.bf16.mxu0 %v1138
        %1685 = vmatmul.mubr.bf16.gmra.mrb[0].mxu0 %v1137
        %v1686 = vpop.f32.mrb[0].mxu0
        %v1687 = vadd.f32 %v1638, %v1686
        %v1688 = vpop.f32.mrb[0].mxu0
        %v1689 = vpop.f32.mrb[0].mxu0
        %v1690 = vadd.f32 %v1641, %v1689
        %v1691 = vpop.f32.mrb[0].mxu0
        %1692 = vmatprep.mubr.bf16.mxu0 %v1147
        %1693 = vmatmul.mubr.bf16.gmra.mrb[0].mxu0 %v1146
        %v1694 = vpop.f32.mrb[0].mxu0
        %v1695 = vadd.f32 %v1646, %v1694
        %v1696 = vpop.f32.mrb[0].mxu0
        %v1697 = vpop.f32.mrb[0].mxu0
        %v1698 = vadd.f32 %v1649, %v1697
        %v1699 = vpop.f32.mrb[0].mxu0
        %1700 = vdwg.mxu0
        %1701 = vmatprep.subr.bf16.mxu0 0
        %1702 = vmatpush1.bf16.msra.mxu0 %v1491
        %1703 = vmatprep.subr.bf16.mxu0 0
        %1704 = vmatpush1.bf16.msra.mxu0 %v1492
        %1705 = vmatprep.subr.bf16.mxu0 0
        %1706 = vmatpush1.bf16.msra.mxu0 %v1493
        %1707 = vmatprep.subr.bf16.mxu0 0
        %1708 = vmatpush1.bf16.msra.mxu0 %v1494
        %1709 = vmatprep.subr.bf16.mxu0 0
        %1710 = vmatpush1.bf16.msra.mxu0 %v1495
        %1711 = vmatprep.subr.bf16.mxu0 0
        %1712 = vmatpush1.bf16.msra.mxu0 %v1496
        %1713 = vmatprep.subr.bf16.mxu0 0
        %1714 = vmatpush1.bf16.msra.mxu0 %v1497
        %1715 = vmatprep.subr.bf16.mxu0 0
        %1716 = vmatpush1.bf16.msra.mxu0 %v1498
        %1717 = vmatprep.subr.bf16.mxu0 0
        %1718 = vmatpush1.bf16.msra.mxu0 %v1499
        %1719 = vmatprep.subr.bf16.mxu0 0
        %1720 = vmatpush1.bf16.msra.mxu0 %v1500
        %1721 = vmatprep.subr.bf16.mxu0 0
        %1722 = vmatpush1.bf16.msra.mxu0 %v1501
        %1723 = vmatprep.subr.bf16.mxu0 0
        %1724 = vmatpush1.bf16.msra.mxu0 %v1502
        %1725 = vmatprep.subr.bf16.mxu0 0
        %1726 = vmatpush1.bf16.msra.mxu0 %v1503
        %1727 = vmatprep.subr.bf16.mxu0 0
        %1728 = vmatpush1.bf16.msra.mxu0 %v1504
        %1729 = vmatprep.subr.bf16.mxu0 0
        %1730 = vmatpush1.bf16.msra.mxu0 %v1505
        %1731 = vmatprep.subr.bf16.mxu0 0
        %1732 = vmatpush1.bf16.msra.mxu0 %v1506
        %1733 = vmatprep.mubr.bf16.mxu0 %v1140
        %1734 = vmatmul.mubr.bf16.gmra.mrb[0].mxu0 %v1139
        %v1735 = vpop.f32.mrb[0].mxu0
        %v1736 = vadd.f32 %v1687, %v1735
        %v1737 = vpop.f32.mrb[0].mxu0
        %v1738 = vpop.f32.mrb[0].mxu0
        %v1739 = vadd.f32 %v1690, %v1738
        %v1740 = vpop.f32.mrb[0].mxu0
        %1741 = vmatprep.mubr.bf16.mxu0 %v1149
        %1742 = vmatmul.mubr.bf16.gmra.mrb[0].mxu0 %v1148
        %v1743 = vpop.f32.mrb[0].mxu0
        %v1744 = vadd.f32 %v1695, %v1743
        %v1745 = vpop.f32.mrb[0].mxu0
        %v1746 = vpop.f32.mrb[0].mxu0
        %v1747 = vadd.f32 %v1698, %v1746
        %v1748 = vpop.f32.mrb[0].mxu0
        %1749 = vdwg.mxu0
        %1750 = vmatprep.subr.bf16.mxu0 0
        %1751 = vmatpush1.bf16.msra.mxu0 %v1507
        %1752 = vmatprep.subr.bf16.mxu0 0
        %1753 = vmatpush1.bf16.msra.mxu0 %v1508
        %1754 = vmatprep.subr.bf16.mxu0 0
        %1755 = vmatpush1.bf16.msra.mxu0 %v1509
        %1756 = vmatprep.subr.bf16.mxu0 0
        %1757 = vmatpush1.bf16.msra.mxu0 %v1510
        %1758 = vmatprep.subr.bf16.mxu0 0
        %1759 = vmatpush1.bf16.msra.mxu0 %v1511
        %1760 = vmatprep.subr.bf16.mxu0 0
        %1761 = vmatpush1.bf16.msra.mxu0 %v1512
        %1762 = vmatprep.subr.bf16.mxu0 0
        %1763 = vmatpush1.bf16.msra.mxu0 %v1513
        %1764 = vmatprep.subr.bf16.mxu0 0
        %1765 = vmatpush1.bf16.msra.mxu0 %v1514
        %1766 = vmatprep.subr.bf16.mxu0 0
        %1767 = vmatpush1.bf16.msra.mxu0 %v1515
        %1768 = vmatprep.subr.bf16.mxu0 0
        %1769 = vmatpush1.bf16.msra.mxu0 %v1516
        %1770 = vmatprep.subr.bf16.mxu0 0
        %1771 = vmatpush1.bf16.msra.mxu0 %v1517
        %1772 = vmatprep.subr.bf16.mxu0 0
        %1773 = vmatpush1.bf16.msra.mxu0 %v1518
        %1774 = vmatprep.subr.bf16.mxu0 0
        %1775 = vmatpush1.bf16.msra.mxu0 %v1519
        %1776 = vmatprep.subr.bf16.mxu0 0
        %1777 = vmatpush1.bf16.msra.mxu0 %v1520
        %1778 = vmatprep.subr.bf16.mxu0 0
        %1779 = vmatpush1.bf16.msra.mxu0 %v1521
        %1780 = vmatprep.subr.bf16.mxu0 0
        %1781 = vmatpush1.bf16.msra.mxu0 %v1522
        %1782 = vmatprep.mubr.bf16.mxu0 %v1142
        %1783 = vmatmul.mubr.bf16.gmra.mrb[0].mxu0 %v1141
        %v1784 = vpop.f32.mrb[0].mxu0
        %v1785 = vadd.f32 %v1736, %v1784
        %v1786 = vpop.f32.mrb[0].mxu0
        %v1787 = vpop.f32.mrb[0].mxu0
        %v1788 = vadd.f32 %v1739, %v1787
        %v1789 = vpop.f32.mrb[0].mxu0
        %1790 = vmatprep.mubr.bf16.mxu0 %v1151
        %1791 = vmatmul.mubr.bf16.gmra.mrb[0].mxu0 %v1150
        %v1792 = vpop.f32.mrb[0].mxu0
        %v1793 = vadd.f32 %v1744, %v1792
        %v1794 = vpop.f32.mrb[0].mxu0
        %v1795 = vpop.f32.mrb[0].mxu0
        %v1796 = vadd.f32 %v1747, %v1795
        %v1797 = vpop.f32.mrb[0].mxu0
        %1798 = vdwg.mxu0
        %1799 = vmatprep.subr.bf16.mxu0 0
        %1800 = vmatpush1.bf16.msra.mxu0 %v1523
        %1801 = vmatprep.subr.bf16.mxu0 0
        %1802 = vmatpush1.bf16.msra.mxu0 %v1524
        %1803 = vmatprep.subr.bf16.mxu0 0
        %1804 = vmatpush1.bf16.msra.mxu0 %v1525
        %1805 = vmatprep.subr.bf16.mxu0 0
        %1806 = vmatpush1.bf16.msra.mxu0 %v1526
        %1807 = vmatprep.subr.bf16.mxu0 0
        %1808 = vmatpush1.bf16.msra.mxu0 %v1527
        %1809 = vmatprep.subr.bf16.mxu0 0
        %1810 = vmatpush1.bf16.msra.mxu0 %v1528
        %1811 = vmatprep.subr.bf16.mxu0 0
        %1812 = vmatpush1.bf16.msra.mxu0 %v1529
        %1813 = vmatprep.subr.bf16.mxu0 0
        %1814 = vmatpush1.bf16.msra.mxu0 %v1530
        %1815 = vmatprep.subr.bf16.mxu0 0
        %1816 = vmatpush1.bf16.msra.mxu0 0
        %1817 = vmatprep.subr.bf16.mxu0 0
        %1818 = vmatpush1.bf16.msra.mxu0 0
        %1819 = vmatprep.subr.bf16.mxu0 0
        %1820 = vmatpush1.bf16.msra.mxu0 0
        %1821 = vmatprep.subr.bf16.mxu0 0
        %1822 = vmatpush1.bf16.msra.mxu0 0
        %1823 = vmatprep.subr.bf16.mxu0 0
        %1824 = vmatpush1.bf16.msra.mxu0 0
        %1825 = vmatprep.subr.bf16.mxu0 0
        %1826 = vmatpush1.bf16.msra.mxu0 0
        %1827 = vmatprep.subr.bf16.mxu0 0
        %1828 = vmatpush1.bf16.msra.mxu0 0
        %1829 = vmatprep.subr.bf16.mxu0 0
        %1830 = vmatpush1.bf16.msra.mxu0 0
        %1831 = vmatprep.mubr.bf16.mxu0 0
        %1832 = vmatmul.mubr.bf16.gmra.mrb[0].mxu0 %v1143
        %v1833 = vpop.f32.mrb[0].mxu0
        %v1834 = vadd.f32 %v1785, %v1833
        %v1835 = vpop.f32.mrb[0].mxu0
        %v1836 = vpop.f32.mrb[0].mxu0
        %v1837 = vadd.f32 %v1788, %v1836
        %v1838 = vpop.f32.mrb[0].mxu0
        %1839 = vmatprep.mubr.bf16.mxu0 0
        %1840 = vmatmul.mubr.bf16.gmra.mrb[0].mxu0 %v1152
        %v1841 = vpop.f32.mrb[0].mxu0
        %v1842 = vadd.f32 %v1793, %v1841
        %v1843 = vpop.f32.mrb[0].mxu0
        %v1844 = vpop.f32.mrb[0].mxu0
        %v1845 = vadd.f32 %v1796, %v1844
        %v1846 = vpop.f32.mrb[0].mxu0
        %1847 = vdwg.mxu0
        %v1848 = vadd.f32 %v911, %v1834
        %v1849 = vadd.f32 %v912, %v1837
        %v1850 = vadd.f32 %v913, %v1842
        %v1851 = vadd.f32 %v914, %v1845
        %1852 = vst [vmem:[#allocation2] sm:$0xff] %v1848
        %1853 = vst [vmem:[#allocation2 + $0x8] sm:$0xff] %v1849
        %1854 = vst [vmem:[#allocation2 + $0x10] sm:$0xff] %v1850
        %1855 = vst [vmem:[#allocation2 + $0x18] sm:$0xff] %v1851
        // Predicated region
        $region82: #{_lambda_.9} parent=72 // pred_check
          %p1856 = pneg %p903
        $region83: #{_lambda_.9} parent=72 // pred_check_branch
          %1858 = sbr.rel (%p1856) target = $region85
        $region84: #{_lambda_.9} parent=72 // pred_region
          %v1859 = vld [vmem:[#allocation2] sm:$0xff]
          %v1860 = vld [vmem:[#allocation2 + $0x8] sm:$0xff]
          %v1861 = vld [vmem:[#allocation2 + $0x10] sm:$0xff]
          %v1862 = vld [vmem:[#allocation2 + $0x18] sm:$0xff]
          %v1863 = vld [vmem:[%s897] sm:$0x1]
          %v1865 = vlaneseq
          %v1866 = vshrl.u32 %v1865, 7
          %v1867 = vsub.s32 0, %v1866
          %v1868 = vrot.slane %v1863, %v1867
          %v1870 = vmul.f32 %v1859, %v1868
          %v1871 = vmul.f32 %v1860, %v1868
          %v1872 = vmul.f32 %v1861, %v1868
          %v1873 = vmul.f32 %v1862, %v1868
          %v1874 = vld [vmem:[%s900] sm:$0x1]
          %v1876 = vlaneseq
          %v1877 = vshrl.u32 %v1876, 7
          %v1878 = vsub.s32 0, %v1877
          %v1879 = vrot.slane %v1874, %v1878
          %v1881 = vadd.f32 %v1870, %v1879
          %v1882 = vadd.f32 %v1871, %v1879
          %v1883 = vadd.f32 %v1872, %v1879
          %v1884 = vadd.f32 %v1873, %v1879
          %v1885 = vmax.f32 %v1881, 0.0
          %v1886 = vmax.f32 %v1882, 0.0
          %v1887 = vmax.f32 %v1883, 0.0
          %v1888 = vmax.f32 %v1884, 0.0
          %v1889 = vpack.c.bf16 %v1886, %v1885
          %v1890 = vpack.c.bf16 %v1888, %v1887
          %v1893 = vunpack.c.l.b16 %v1889
          %v1894 = vunpack.c.h.b16 %v1889
          %v1895 = vunpack.c.l.b16 %v1890
          %v1896 = vunpack.c.h.b16 %v1890
          %v1897 = vpack.c.b16 %v1893, %v1893
          %v1898 = vpack.c.b16 %v1894, %v1894
          %v1899 = vpack.c.b16 %v1895, %v1895
          %v1900 = vpack.c.b16 %v1896, %v1896
          %1905 = vst [vmem:[%s881] sm:$0xf] %v1897
          %1906 = vst [vmem:[%s881 + $0x4] sm:$0xf] %v1898
          %1907 = vst [vmem:[%s881 + $0x8] sm:$0xf] %v1899
          %1908 = vst [vmem:[%s881 + $0xc] sm:$0xf] %v1900
        $region85: #{_lambda_.9} parent=72 // pred_fallthru
          _
        %s1909 = sand.u32 %s152, 1
        %s1910 = sand.u32 %s152, 1
        %s1911 = smul.addr %s1910, 16
        %s1912 = scalar_lea.vmem [#allocation4], %s1911
        // Predicated region
        $region86: #{_lambda_.9} parent=72 // pred_check
          %p1913 = pneg %p162
        $region87: #{_lambda_.9} parent=72 // pred_check_branch
          %1915 = sbr.rel (%p1913) target = $region89
        $region88: #{_lambda_.9} parent=72 // pred_region
          %s1916 = smul.u32 4, %s20
          %s1917 = smul.addr %s1916, 2
          %s1918 = sadd.s32 %s21, %s1917
          %s1919 = smul.addr %s1918, 4
          %s1920 = scalar_lea.vmem %s4, %s1919
          // Predicated region
          $region90: #{_lambda_.9} parent=88 // pred_check
            _
          $region91: #{_lambda_.9} parent=88 // pred_check_branch
            %1922 = sbr.rel (0) target = $region93
          $region92: #{_lambda_.9} parent=88 // pred_region
            // Predicated region
            $region94: #{_lambda_.9} parent=92 // pred_check
              _
            $region95: #{_lambda_.9} parent=92 // pred_check_branch
              %1924 = sbr.rel target = $region97
            $region96: #{_lambda_.9} parent=92 // pred_region
              // Predicated region
              $region109: #{_lambda_.9} parent=96 // pred_check
                _
              $region110: #{_lambda_.9} parent=96 // pred_check_branch
                %1945 = sbr.rel (0) target = $region112
              $region111: #{_lambda_.9} parent=96 // pred_region
                loop: start=0, step=1, limit=1
                $region113: #{_lambda_.9} parent=111 // loop_pre_header
                  _
                $region114: #{_lambda_.9} parent=111 // loop_header
                  %s1947 = sphi 0, %s1951
                  %p1948 = scmp.ge.s32.totalorder %s1947, 1
                  %s1952 = sphi %s1912, %s1912
                  %s1953 = sphi %s1920, %s1920
                $region115: #{_lambda_.9} parent=111 // loop_header_branch
                  %1950 = sbr.rel (%p1948) target = $region119
                $region116: #{_lambda_.9} parent=111 // loop_body
                  _
                $region117: #{_lambda_.9} parent=111 // loop_footer
                  %s1951 = sadd.s32 1, %s1947
                $region118: #{_lambda_.9} parent=111 // loop_footer_branch
                  %1946 = sbr.rel target = $region114
                $region119: #{_lambda_.9} parent=111 // loop_exit
                  _
                loop: start=0, step=1, limit=1
                $region120: #{_lambda_.9} parent=111 // loop_pre_header
                  _
                $region121: #{_lambda_.9} parent=111 // loop_header
                  %s1956 = sphi 0, %s1960
                  %p1957 = scmp.ge.s32.totalorder %s1956, 1
                  %s1961 = sphi %s1912, %s1912
                  %s1962 = sphi %s1920, %s1920
                $region122: #{_lambda_.9} parent=111 // loop_header_branch
                  %1959 = sbr.rel (%p1957) target = $region126
                $region123: #{_lambda_.9} parent=111 // loop_body
                  %v1963 = vld [vmem:[%s1961] sm:$0xf]
                  %1964 = vst [vmem:[%s1962] sm:$0xf] %v1963
                  %v1965 = vld [vmem:[%s1961 + $0x4] sm:$0xf]
                  %1966 = vst [vmem:[%s1962 + $0x8] sm:$0xf] %v1965
                  %v1967 = vld [vmem:[%s1961 + $0x8] sm:$0xf]
                  %1968 = vst [vmem:[%s1962 + $0x10] sm:$0xf] %v1967
                  %v1969 = vld [vmem:[%s1961 + $0xc] sm:$0xf]
                  %1970 = vst [vmem:[%s1962 + $0x18] sm:$0xf] %v1969
                $region124: #{_lambda_.9} parent=111 // loop_footer
                  %s1960 = sadd.s32 1, %s1956
                $region125: #{_lambda_.9} parent=111 // loop_footer_branch
                  %1955 = sbr.rel target = $region121
                $region126: #{_lambda_.9} parent=111 // loop_exit
                  _
              $region112: #{_lambda_.9} parent=96 // pred_fallthru
                _
            $region97: #{_lambda_.9} parent=92 // pred_fallthru
              _
            // Predicated region
            $region98: #{_lambda_.9} parent=92 // pred_check
              _
            $region99: #{_lambda_.9} parent=92 // pred_check_branch
              %1926 = sbr.rel (0) target = $region101
            $region100: #{_lambda_.9} parent=92 // pred_region
              loop: start=0, step=1, limit=1
              $region102: #{_lambda_.9} parent=100 // loop_pre_header
                _
              $region103: #{_lambda_.9} parent=100 // loop_header
                %s1929 = sphi 0, %s1933
                %p1930 = scmp.ge.s32.totalorder %s1929, 1
                %s1934 = sphi %s1912, %s1912
                %s1935 = sphi %s1920, %s1920
              $region104: #{_lambda_.9} parent=100 // loop_header_branch
                %1932 = sbr.rel (%p1930) target = $region108
              $region105: #{_lambda_.9} parent=100 // loop_body
                %v1936 = vld [vmem:[%s1934] sm:$0xf]
                %1937 = vst [vmem:[%s1935] sm:$0xf] %v1936
                %v1938 = vld [vmem:[%s1934 + $0x4] sm:$0xf]
                %1939 = vst [vmem:[%s1935 + $0x8] sm:$0xf] %v1938
                %v1940 = vld [vmem:[%s1934 + $0x8] sm:$0xf]
                %1941 = vst [vmem:[%s1935 + $0x10] sm:$0xf] %v1940
                %v1942 = vld [vmem:[%s1934 + $0xc] sm:$0xf]
                %1943 = vst [vmem:[%s1935 + $0x18] sm:$0xf] %v1942
              $region106: #{_lambda_.9} parent=100 // loop_footer
                %s1933 = sadd.s32 1, %s1929
              $region107: #{_lambda_.9} parent=100 // loop_footer_branch
                %1928 = sbr.rel target = $region103
              $region108: #{_lambda_.9} parent=100 // loop_exit
                _
            $region101: #{_lambda_.9} parent=92 // pred_fallthru
              _
          $region93: #{_lambda_.9} parent=88 // pred_fallthru
            _
          %1971 = vnop
        $region89: #{_lambda_.9} parent=72 // pred_fallthru
          _
      $region73: #{_lambda_.9} parent=5 // pred_fallthru
        _
      %p1972 = scmp.le.s32.totalorder 2, %s10
      // Predicated region
      $region127: #{_lambda_.9} parent=5 // pred_check
        %p1973 = pneg %p1972
      $region128: #{_lambda_.9} parent=5 // pred_check_branch
        %1975 = sbr.rel (%p1973) target = $region130
      $region129: #{_lambda_.9} parent=5 // pred_region
        %s1976 = ssub.s32 %s10, 2
        // Predicated region
        $region131: #{_lambda_.9} parent=129 // pred_check
          %p1977 = pneg %p168
        $region132: #{_lambda_.9} parent=129 // pred_check_branch
          %1979 = sbr.rel (%p1977) target = $region134
        $region133: #{_lambda_.9} parent=129 // pred_region
          %s1980 = sand.u32 %s153, 1
          %s1981 = sand.u32 %s153, 1
          %s1982 = smul.addr %s1981, 16
          %s1983 = scalar_lea.vmem [#allocation4], %s1982
        $region134: #{_lambda_.9} parent=129 // pred_fallthru
          _
      $region130: #{_lambda_.9} parent=5 // pred_fallthru
        _
    $region6: #{_lambda_.9} parent=1 // loop_footer
      %s14 = sadd.s32 1, %s10
    $region7: #{_lambda_.9} parent=1 // loop_footer_branch
      %9 = sbr.rel target = $region3
    $region8: #{_lambda_.9} parent=1 // loop_exit
      _

// kernel: _lambda_.12
$region0: #{_lambda_.12}
  #allocation0 [shape = 'u32[]', space=smem, size = 0x4, offset = 0x4, fixed_abs, tag = 'smem constant byte address 0x4 - core index']
  #allocation1 [shape = 'u32[144,128]{1,0:T(1,128)}', space=vmem, size = 0x12000, scoped, tag = 'internal scratch']
  #allocation2 [shape = 'f32[32,128]{1,0:T(8,128)}', space=vmem, size = 0x4000, scoped, tag = 'scratch operand']
  %s0 = inlined_call_operand.vmem [shape: bf16[32,1280], index: 0, kind: input, shape index: {}]
  %s1 = inlined_call_operand.vmem [shape: bf16[1280,256], index: 1, kind: input, shape index: {}]
  %s2 = inlined_call_operand.vmem [shape: f32[1,256], index: 2, kind: input, shape index: {}]
  %s3 = inlined_call_operand.vmem [shape: f32[1,256], index: 3, kind: input, shape index: {}]
  %s4 = inlined_call_operand.vmem [shape: bf16[32,256], index: 4, kind: output, shape index: {}]
  %s5 = sld [smem:[#allocation0]]
  $region135: #{_lambda_.12} parent=0
    _
  %s7 = ssub.s32 1, %s5
  %s8 = scalar_select 0, %s7, %s5
  $region1: #{_lambda_.12} parent=0
    #allocation3 [shape = 'u8[655360]{0}', space=vmem, size = 0xa0000, scoped, tag = 'input window, operand 1']
    #allocation4 [shape = 'u8[16384]{0}', space=vmem, size = 0x4000, scoped, tag = 'output window, operand 0']
    loop: start=0, step=1, limit=4
    $region2: #{_lambda_.12} parent=1 // loop_pre_header
      _
    $region3: #{_lambda_.12} parent=1 // loop_header
      %s10 = sphi 0, %s14
      %p11 = scmp.ge.s32.totalorder %s10, 4
      %s17 = sphi 0, %s36
      %s18 = sphi 0, %s32
      %s19 = sphi 0, %s28
      %s20 = sphi 0, %s17
      %s21 = sphi 0, %s18
      %s22 = sphi 0, %s19
      %s23 = sphi 0, %s20
      %s24 = sphi 0, %s21
      %s25 = sphi 0, %s22
      %s41 = sphi 0, %s43
      %s44 = sphi 0, %s41
      %s45 = sphi 0, %s44
      %s61 = sphi 0, %s45
      %s69 = sphi 0, %s71
      %s72 = sphi 0, %s69
      %s73 = sphi 0, %s72
      %s89 = sphi 0, %s73
      %s95 = sphi 0, %s97
      %s98 = sphi 0, %s95
      %s99 = sphi 0, %s98
      %s115 = sphi 0, %s99
      %s121 = sphi 0, %s123
      %s124 = sphi 0, %s121
      %s125 = sphi 0, %s124
      %s141 = sphi 0, %s125
      %s149 = sphi 0, %s151
      %s152 = sphi 0, %s149
      %s153 = sphi 0, %s152
      %s169 = sphi 0, %s153
    $region4: #{_lambda_.12} parent=1 // loop_header_branch
      %13 = sbr.rel (%p11) target = $region8
    $region5: #{_lambda_.12} parent=1 // loop_body
      %s15 = ssub.s32 %s10, 1
      %s16 = ssub.s32 %s10, 2
      %s26 = sadd.s32 1, %s19
      %p27 = scmp.ge.s32.totalorder %s26, 1
      %s28 = scalar_select %p27, 0, %s26
      %s29 = sadd.s32 1, %s18
      %s30 = scalar_select %p27, %s29, %s18
      %p31 = scmp.ge.s32.totalorder %s30, 2
      %s32 = scalar_select %p31, 0, %s30
      %s33 = sadd.s32 1, %s17
      %s34 = scalar_select %p31, %s33, %s17
      %p35 = scmp.ge.s32.totalorder %s34, 1
      %s36 = scalar_select %p35, 0, %s34
      %s37 = ssub.s32 %s17, %s36
      %s38 = ssub.s32 %s19, %s28
      %s39 = sor.u32 %s37, %s38
      %p40 = scmp.eq.s32.totalorder %s39, 0
      %s42 = sadd.s32 %s41, 1
      %s43 = scalar_select %p40, %s41, %s42
      %p46 = pneg %p40
      %p47 = scmp.eq.s32.totalorder %s10, 1
      %p48 = por %p46, %p47
      %p49 = scmp.ne.s32.totalorder %s41, %s44
      %p50 = scmp.eq.s32.totalorder %s10, 0
      %p51 = por %p49, %p50
      %p52 = scmp.ne.s32.totalorder %s41, %s44
      %p53 = scmp.eq.s32.totalorder %s15, 1
      %p54 = por %p52, %p53
      %p55 = scmp.ne.s32.totalorder %s44, %s45
      %p56 = scmp.eq.s32.totalorder %s15, 0
      %p57 = por %p55, %p56
      %p58 = scmp.ne.s32.totalorder %s44, %s45
      %p59 = scmp.eq.s32.totalorder %s16, 1
      %p60 = por %p58, %p59
      %p62 = scmp.ne.s32.totalorder %s45, %s61
      %p63 = scmp.eq.s32.totalorder %s16, 0
      %p64 = por %p62, %p63
      %s65 = ssub.s32 %s19, %s28
      %s66 = ssub.s32 %s18, %s32
      %s67 = sor.u32 %s65, %s66
      %p68 = scmp.eq.s32.totalorder %s67, 0
      %s70 = sadd.s32 %s69, 1
      %s71 = scalar_select %p68, %s69, %s70
      %p74 = pneg %p68
      %p75 = scmp.eq.s32.totalorder %s10, 1
      %p76 = por %p74, %p75
      %p77 = scmp.ne.s32.totalorder %s69, %s72
      %p78 = scmp.eq.s32.totalorder %s10, 0
      %p79 = por %p77, %p78
      %p80 = scmp.ne.s32.totalorder %s69, %s72
      %p81 = scmp.eq.s32.totalorder %s15, 1
      %p82 = por %p80, %p81
      %p83 = scmp.ne.s32.totalorder %s72, %s73
      %p84 = scmp.eq.s32.totalorder %s15, 0
      %p85 = por %p83, %p84
      %p86 = scmp.ne.s32.totalorder %s72, %s73
      %p87 = scmp.eq.s32.totalorder %s16, 1
      %p88 = por %p86, %p87
      %p90 = scmp.ne.s32.totalorder %s73, %s89
      %p91 = scmp.eq.s32.totalorder %s16, 0
      %p92 = por %p90, %p91
      %s93 = ssub.s32 %s18, %s32
      %p94 = scmp.eq.s32.totalorder %s93, 0
      %s96 = sadd.s32 %s95, 1
      %s97 = scalar_select %p94, %s95, %s96
      %p100 = pneg %p94
      %p101 = scmp.eq.s32.totalorder %s10, 1
      %p102 = por %p100, %p101
      %p103 = scmp.ne.s32.totalorder %s95, %s98
      %p104 = scmp.eq.s32.totalorder %s10, 0
      %p105 = por %p103, %p104
      %p106 = scmp.ne.s32.totalorder %s95, %s98
      %p107 = scmp.eq.s32.totalorder %s15, 1
      %p108 = por %p106, %p107
      %p109 = scmp.ne.s32.totalorder %s98, %s99
      %p110 = scmp.eq.s32.totalorder %s15, 0
      %p111 = por %p109, %p110
      %p112 = scmp.ne.s32.totalorder %s98, %s99
      %p113 = scmp.eq.s32.totalorder %s16, 1
      %p114 = por %p112, %p113
      %p116 = scmp.ne.s32.totalorder %s99, %s115
      %p117 = scmp.eq.s32.totalorder %s16, 0
      %p118 = por %p116, %p117
      %s119 = ssub.s32 %s18, %s32
      %p120 = scmp.eq.s32.totalorder %s119, 0
      %s122 = sadd.s32 %s121, 1
      %s123 = scalar_select %p120, %s121, %s122
      %p126 = pneg %p120
      %p127 = scmp.eq.s32.totalorder %s10, 1
      %p128 = por %p126, %p127
      %p129 = scmp.ne.s32.totalorder %s121, %s124
      %p130 = scmp.eq.s32.totalorder %s10, 0
      %p131 = por %p129, %p130
      %p132 = scmp.ne.s32.totalorder %s121, %s124
      %p133 = scmp.eq.s32.totalorder %s15, 1
      %p134 = por %p132, %p133
      %p135 = scmp.ne.s32.totalorder %s124, %s125
      %p136 = scmp.eq.s32.totalorder %s15, 0
      %p137 = por %p135, %p136
      %p138 = scmp.ne.s32.totalorder %s124, %s125
      %p139 = scmp.eq.s32.totalorder %s16, 1
      %p140 = por %p138, %p139
      %p142 = scmp.ne.s32.totalorder %s125, %s141
      %p143 = scmp.eq.s32.totalorder %s16, 0
      %p144 = por %p142, %p143
      %s145 = ssub.s32 %s17, %s36
      %s146 = ssub.s32 %s18, %s32
      %s147 = sor.u32 %s145, %s146
      %p148 = scmp.eq.s32.totalorder %s147, 0
      %s150 = sadd.s32 %s149, 1
      %s151 = scalar_select %p148, %s149, %s150
      %p154 = pneg %p148
      %p155 = scmp.eq.s32.totalorder %s10, 1
      %p156 = por %p154, %p155
      %p157 = scmp.ne.s32.totalorder %s149, %s152
      %p158 = scmp.eq.s32.totalorder %s10, 0
      %p159 = por %p157, %p158
      %p160 = scmp.ne.s32.totalorder %s149, %s152
      %p161 = scmp.eq.s32.totalorder %s15, 1
      %p162 = por %p160, %p161
      %p163 = scmp.ne.s32.totalorder %s152, %s153
      %p164 = scmp.eq.s32.totalorder %s15, 0
      %p165 = por %p163, %p164
      %p166 = scmp.ne.s32.totalorder %s152, %s153
      %p167 = scmp.eq.s32.totalorder %s16, 1
      %p168 = por %p166, %p167
      %p170 = scmp.ne.s32.totalorder %s153, %s169
      %p171 = scmp.eq.s32.totalorder %s16, 0
      %p172 = por %p170, %p171
      %p173 = scmp.le.s32.totalorder 1, %s10
      %p174 = scmp.lt.s32.totalorder %s10, 3
      %p175 = pnand %p173, %p174
      %p176 = pneg %p175
      // Predicated region
      $region9: #{_lambda_.12} parent=5 // pred_check
        _
      $region10: #{_lambda_.12} parent=5 // pred_check_branch
        %178 = sbr.rel (%p175) target = $region12
      $region11: #{_lambda_.12} parent=5 // pred_region
        %s179 = ssub.s32 %s10, 1
        // Predicated region
        $region13: #{_lambda_.12} parent=11 // pred_check
          %p180 = pneg %p57
        $region14: #{_lambda_.12} parent=11 // pred_check_branch
          %182 = sbr.rel (%p180) target = $region16
        $region15: #{_lambda_.12} parent=11 // pred_region
          %s183 = smul.u32 4, %s20
          %s184 = smul.u32 10, %s22
          %p185 = scmp.lt.s32.totalorder %s183, 3
          %s186 = scalar_select %p185, %s183, 3
          %p187 = scmp.lt.s32.totalorder %s184, 9
          %s188 = scalar_select %p187, %s184, 9
          %s189 = smul.addr %s186, 10
          %s190 = sadd.s32 %s188, %s189
          %s191 = smul.addr %s190, 4
          %s192 = scalar_lea.vmem %s0, %s191
          %s193 = smul.u32 4, %s20
          %s194 = smul.u32 10, %s22
        $region16: #{_lambda_.12} parent=11 // pred_fallthru
          _
      $region12: #{_lambda_.12} parent=5 // pred_fallthru
        _
      %p195 = scmp.lt.s32.totalorder %s10, 2
      // Predicated region
      $region17: #{_lambda_.12} parent=5 // pred_check
        %p196 = pneg %p195
      $region18: #{_lambda_.12} parent=5 // pred_check_branch
        %198 = sbr.rel (%p196) target = $region20
      $region19: #{_lambda_.12} parent=5 // pred_region
        // Predicated region
        $region21: #{_lambda_.12} parent=19 // pred_check
          %p199 = pneg %p79
        $region22: #{_lambda_.12} parent=19 // pred_check_branch
          %201 = sbr.rel (%p199) target = $region24
        $region23: #{_lambda_.12} parent=19 // pred_region
          %s202 = sand.u32 %s69, 1
          %s203 = sand.u32 %s69, 1
          %s204 = smul.addr %s203, 640
          %s205 = scalar_lea.vmem [#allocation3], %s204
          %s206 = smul.u32 160, %s19
          %s207 = smul.addr %s206, 2
          %s208 = sadd.s32 %s18, %s207
          %s209 = smul.addr %s208, 4
          %s210 = scalar_lea.vmem %s1, %s209
          // Predicated region
          $region25: #{_lambda_.12} parent=23 // pred_check
            _
          $region26: #{_lambda_.12} parent=23 // pred_check_branch
            %212 = sbr.rel (0) target = $region28
          $region27: #{_lambda_.12} parent=23 // pred_region
            // Predicated region
            $region29: #{_lambda_.12} parent=27 // pred_check
              _
            $region30: #{_lambda_.12} parent=27 // pred_check_branch
              %214 = sbr.rel target = $region32
            $region31: #{_lambda_.12} parent=27 // pred_region
              // Predicated region
              $region44: #{_lambda_.12} parent=31 // pred_check
                _
              $region45: #{_lambda_.12} parent=31 // pred_check_branch
                %547 = sbr.rel (0) target = $region47
              $region46: #{_lambda_.12} parent=31 // pred_region
                loop: start=0, step=1, limit=1
                $region48: #{_lambda_.12} parent=46 // loop_pre_header
                  _
                $region49: #{_lambda_.12} parent=46 // loop_header
                  %s549 = sphi 0, %s553
                  %p550 = scmp.ge.s32.totalorder %s549, 1
                  %s554 = sphi %s210, %s210
                  %s555 = sphi %s205, %s205
                $region50: #{_lambda_.12} parent=46 // loop_header_branch
                  %552 = sbr.rel (%p550) target = $region54
                $region51: #{_lambda_.12} parent=46 // loop_body
                  _
                $region52: #{_lambda_.12} parent=46 // loop_footer
                  %s553 = sadd.s32 1, %s549
                $region53: #{_lambda_.12} parent=46 // loop_footer_branch
                  %548 = sbr.rel target = $region49
                $region54: #{_lambda_.12} parent=46 // loop_exit
                  _
                loop: start=0, step=1, limit=1
                $region55: #{_lambda_.12} parent=46 // loop_pre_header
                  _
                $region56: #{_lambda_.12} parent=46 // loop_header
                  %s558 = sphi 0, %s562
                  %p559 = scmp.ge.s32.totalorder %s558, 1
                  %s563 = sphi %s210, %s210
                  %s564 = sphi %s205, %s205
                $region57: #{_lambda_.12} parent=46 // loop_header_branch
                  %561 = sbr.rel (%p559) target = $region61
                $region58: #{_lambda_.12} parent=46 // loop_body
                  %v565 = vld [vmem:[%s563] sm:$0xf]
                  %566 = vst [vmem:[%s564] sm:$0xf] %v565
                  %v567 = vld [vmem:[%s563 + $0x8] sm:$0xf]
                  %568 = vst [vmem:[%s564 + $0x4] sm:$0xf] %v567
                  %v569 = vld [vmem:[%s563 + $0x10] sm:$0xf]
                  %570 = vst [vmem:[%s564 + $0x8] sm:$0xf] %v569
                  %v571 = vld [vmem:[%s563 + $0x18] sm:$0xf]
                  %572 = vst [vmem:[%s564 + $0xc] sm:$0xf] %v571
                  %v573 = vld [vmem:[%s563 + $0x20] sm:$0xf]
                  %574 = vst [vmem:[%s564 + $0x10] sm:$0xf] %v573
                  %v575 = vld [vmem:[%s563 + $0x28] sm:$0xf]
                  %576 = vst [vmem:[%s564 + $0x14] sm:$0xf] %v575
                  %v577 = vld [vmem:[%s563 + $0x30] sm:$0xf]
                  %578 = vst [vmem:[%s564 + $0x18] sm:$0xf] %v577
                  %v579 = vld [vmem:[%s563 + $0x38] sm:$0xf]
                  %580 = vst [vmem:[%s564 + $0x1c] sm:$0xf] %v579
                  %v581 = vld [vmem:[%s563 + $0x40] sm:$0xf]
                  %582 = vst [vmem:[%s564 + $0x20] sm:$0xf] %v581
                  %v583 = vld [vmem:[%s563 + $0x48] sm:$0xf]
                  %584 = vst [vmem:[%s564 + $0x24] sm:$0xf] %v583
                  %v585 = vld [vmem:[%s563 + $0x50] sm:$0xf]
                  %586 = vst [vmem:[%s564 + $0x28] sm:$0xf] %v585
                  %v587 = vld [vmem:[%s563 + $0x58] sm:$0xf]
                  %588 = vst [vmem:[%s564 + $0x2c] sm:$0xf] %v587
                  %v589 = vld [vmem:[%s563 + $0x60] sm:$0xf]
                  %590 = vst [vmem:[%s564 + $0x30] sm:$0xf] %v589
                  %v591 = vld [vmem:[%s563 + $0x68] sm:$0xf]
                  %592 = vst [vmem:[%s564 + $0x34] sm:$0xf] %v591
                  %v593 = vld [vmem:[%s563 + $0x70] sm:$0xf]
                  %594 = vst [vmem:[%s564 + $0x38] sm:$0xf] %v593
                  %v595 = vld [vmem:[%s563 + $0x78] sm:$0xf]
                  %596 = vst [vmem:[%s564 + $0x3c] sm:$0xf] %v595
                  %v597 = vld [vmem:[%s563 + $0x80] sm:$0xf]
                  %598 = vst [vmem:[%s564 + $0x40] sm:$0xf] %v597
                  %v599 = vld [vmem:[%s563 + $0x88] sm:$0xf]
                  %600 = vst [vmem:[%s564 + $0x44] sm:$0xf] %v599
                  %v601 = vld [vmem:[%s563 + $0x90] sm:$0xf]
                  %602 = vst [vmem:[%s564 + $0x48] sm:$0xf] %v601
                  %v603 = vld [vmem:[%s563 + $0x98] sm:$0xf]
                  %604 = vst [vmem:[%s564 + $0x4c] sm:$0xf] %v603
                  %v605 = vld [vmem:[%s563 + $0xa0] sm:$0xf]
                  %606 = vst [vmem:[%s564 + $0x50] sm:$0xf] %v605
                  %v607 = vld [vmem:[%s563 + $0xa8] sm:$0xf]
                  %608 = vst [vmem:[%s564 + $0x54] sm:$0xf] %v607
                  %v609 = vld [vmem:[%s563 + $0xb0] sm:$0xf]
                  %610 = vst [vmem:[%s564 + $0x58] sm:$0xf] %v609
                  %v611 = vld [vmem:[%s563 + $0xb8] sm:$0xf]
                  %612 = vst [vmem:[%s564 + $0x5c] sm:$0xf] %v611
                  %v613 = vld [vmem:[%s563 + $0xc0] sm:$0xf]
                  %614 = vst [vmem:[%s564 + $0x60] sm:$0xf] %v613
                  %v615 = vld [vmem:[%s563 + $0xc8] sm:$0xf]
                  %616 = vst [vmem:[%s564 + $0x64] sm:$0xf] %v615
                  %v617 = vld [vmem:[%s563 + $0xd0] sm:$0xf]
                  %618 = vst [vmem:[%s564 + $0x68] sm:$0xf] %v617
                  %v619 = vld [vmem:[%s563 + $0xd8] sm:$0xf]
                  %620 = vst [vmem:[%s564 + $0x6c] sm:$0xf] %v619
                  %v621 = vld [vmem:[%s563 + $0xe0] sm:$0xf]
                  %622 = vst [vmem:[%s564 + $0x70] sm:$0xf] %v621
                  %v623 = vld [vmem:[%s563 + $0xe8] sm:$0xf]
                  %624 = vst [vmem:[%s564 + $0x74] sm:$0xf] %v623
                  %v625 = vld [vmem:[%s563 + $0xf0] sm:$0xf]
                  %626 = vst [vmem:[%s564 + $0x78] sm:$0xf] %v625
                  %v627 = vld [vmem:[%s563 + $0xf8] sm:$0xf]
                  %628 = vst [vmem:[%s564 + $0x7c] sm:$0xf] %v627
                  %v629 = vld [vmem:[%s563 + $0x100] sm:$0xf]
                  %630 = vst [vmem:[%s564 + $0x80] sm:$0xf] %v629
                  %v631 = vld [vmem:[%s563 + $0x108] sm:$0xf]
                  %632 = vst [vmem:[%s564 + $0x84] sm:$0xf] %v631
                  %v633 = vld [vmem:[%s563 + $0x110] sm:$0xf]
                  %634 = vst [vmem:[%s564 + $0x88] sm:$0xf] %v633
                  %v635 = vld [vmem:[%s563 + $0x118] sm:$0xf]
                  %636 = vst [vmem:[%s564 + $0x8c] sm:$0xf] %v635
                  %v637 = vld [vmem:[%s563 + $0x120] sm:$0xf]
                  %638 = vst [vmem:[%s564 + $0x90] sm:$0xf] %v637
                  %v639 = vld [vmem:[%s563 + $0x128] sm:$0xf]
                  %640 = vst [vmem:[%s564 + $0x94] sm:$0xf] %v639
                  %v641 = vld [vmem:[%s563 + $0x130] sm:$0xf]
                  %642 = vst [vmem:[%s564 + $0x98] sm:$0xf] %v641
                  %v643 = vld [vmem:[%s563 + $0x138] sm:$0xf]
                  %644 = vst [vmem:[%s564 + $0x9c] sm:$0xf] %v643
                  %v645 = vld [vmem:[%s563 + $0x140] sm:$0xf]
                  %646 = vst [vmem:[%s564 + $0xa0] sm:$0xf] %v645
                  %v647 = vld [vmem:[%s563 + $0x148] sm:$0xf]
                  %648 = vst [vmem:[%s564 + $0xa4] sm:$0xf] %v647
                  %v649 = vld [vmem:[%s563 + $0x150] sm:$0xf]
                  %650 = vst [vmem:[%s564 + $0xa8] sm:$0xf] %v649
                  %v651 = vld [vmem:[%s563 + $0x158] sm:$0xf]
                  %652 = vst [vmem:[%s564 + $0xac] sm:$0xf] %v651
                  %v653 = vld [vmem:[%s563 + $0x160] sm:$0xf]
                  %654 = vst [vmem:[%s564 + $0xb0] sm:$0xf] %v653
                  %v655 = vld [vmem:[%s563 + $0x168] sm:$0xf]
                  %656 = vst [vmem:[%s564 + $0xb4] sm:$0xf] %v655
                  %v657 = vld [vmem:[%s563 + $0x170] sm:$0xf]
                  %658 = vst [vmem:[%s564 + $0xb8] sm:$0xf] %v657
                  %v659 = vld [vmem:[%s563 + $0x178] sm:$0xf]
                  %660 = vst [vmem:[%s564 + $0xbc] sm:$0xf] %v659
                  %v661 = vld [vmem:[%s563 + $0x180] sm:$0xf]
                  %662 = vst [vmem:[%s564 + $0xc0] sm:$0xf] %v661
                  %v663 = vld [vmem:[%s563 + $0x188] sm:$0xf]
                  %664 = vst [vmem:[%s564 + $0xc4] sm:$0xf] %v663
                  %v665 = vld [vmem:[%s563 + $0x190] sm:$0xf]
                  %666 = vst [vmem:[%s564 + $0xc8] sm:$0xf] %v665
                  %v667 = vld [vmem:[%s563 + $0x198] sm:$0xf]
                  %668 = vst [vmem:[%s564 + $0xcc] sm:$0xf] %v667
                  %v669 = vld [vmem:[%s563 + $0x1a0] sm:$0xf]
                  %670 = vst [vmem:[%s564 + $0xd0] sm:$0xf] %v669
                  %v671 = vld [vmem:[%s563 + $0x1a8] sm:$0xf]
                  %672 = vst [vmem:[%s564 + $0xd4] sm:$0xf] %v671
                  %v673 = vld [vmem:[%s563 + $0x1b0] sm:$0xf]
                  %674 = vst [vmem:[%s564 + $0xd8] sm:$0xf] %v673
                  %v675 = vld [vmem:[%s563 + $0x1b8] sm:$0xf]
                  %676 = vst [vmem:[%s564 + $0xdc] sm:$0xf] %v675
                  %v677 = vld [vmem:[%s563 + $0x1c0] sm:$0xf]
                  %678 = vst [vmem:[%s564 + $0xe0] sm:$0xf] %v677
                  %v679 = vld [vmem:[%s563 + $0x1c8] sm:$0xf]
                  %680 = vst [vmem:[%s564 + $0xe4] sm:$0xf] %v679
                  %v681 = vld [vmem:[%s563 + $0x1d0] sm:$0xf]
                  %682 = vst [vmem:[%s564 + $0xe8] sm:$0xf] %v681
                  %v683 = vld [vmem:[%s563 + $0x1d8] sm:$0xf]
                  %684 = vst [vmem:[%s564 + $0xec] sm:$0xf] %v683
                  %v685 = vld [vmem:[%s563 + $0x1e0] sm:$0xf]
                  %686 = vst [vmem:[%s564 + $0xf0] sm:$0xf] %v685
                  %v687 = vld [vmem:[%s563 + $0x1e8] sm:$0xf]
                  %688 = vst [vmem:[%s564 + $0xf4] sm:$0xf] %v687
                  %v689 = vld [vmem:[%s563 + $0x1f0] sm:$0xf]
                  %690 = vst [vmem:[%s564 + $0xf8] sm:$0xf] %v689
                  %v691 = vld [vmem:[%s563 + $0x1f8] sm:$0xf]
                  %692 = vst [vmem:[%s564 + $0xfc] sm:$0xf] %v691
                  %v693 = vld [vmem:[%s563 + $0x200] sm:$0xf]
                  %694 = vst [vmem:[%s564 + $0x100] sm:$0xf] %v693
                  %v695 = vld [vmem:[%s563 + $0x208] sm:$0xf]
                  %696 = vst [vmem:[%s564 + $0x104] sm:$0xf] %v695
                  %v697 = vld [vmem:[%s563 + $0x210] sm:$0xf]
                  %698 = vst [vmem:[%s564 + $0x108] sm:$0xf] %v697
                  %v699 = vld [vmem:[%s563 + $0x218] sm:$0xf]
                  %700 = vst [vmem:[%s564 + $0x10c] sm:$0xf] %v699
                  %v701 = vld [vmem:[%s563 + $0x220] sm:$0xf]
                  %702 = vst [vmem:[%s564 + $0x110] sm:$0xf] %v701
                  %v703 = vld [vmem:[%s563 + $0x228] sm:$0xf]
                  %704 = vst [vmem:[%s564 + $0x114] sm:$0xf] %v703
                  %v705 = vld [vmem:[%s563 + $0x230] sm:$0xf]
                  %706 = vst [vmem:[%s564 + $0x118] sm:$0xf] %v705
                  %v707 = vld [vmem:[%s563 + $0x238] sm:$0xf]
                  %708 = vst [vmem:[%s564 + $0x11c] sm:$0xf] %v707
                  %v709 = vld [vmem:[%s563 + $0x240] sm:$0xf]
                  %710 = vst [vmem:[%s564 + $0x120] sm:$0xf] %v709
                  %v711 = vld [vmem:[%s563 + $0x248] sm:$0xf]
                  %712 = vst [vmem:[%s564 + $0x124] sm:$0xf] %v711
                  %v713 = vld [vmem:[%s563 + $0x250] sm:$0xf]
                  %714 = vst [vmem:[%s564 + $0x128] sm:$0xf] %v713
                  %v715 = vld [vmem:[%s563 + $0x258] sm:$0xf]
                  %716 = vst [vmem:[%s564 + $0x12c] sm:$0xf] %v715
                  %v717 = vld [vmem:[%s563 + $0x260] sm:$0xf]
                  %718 = vst [vmem:[%s564 + $0x130] sm:$0xf] %v717
                  %v719 = vld [vmem:[%s563 + $0x268] sm:$0xf]
                  %720 = vst [vmem:[%s564 + $0x134] sm:$0xf] %v719
                  %v721 = vld [vmem:[%s563 + $0x270] sm:$0xf]
                  %722 = vst [vmem:[%s564 + $0x138] sm:$0xf] %v721
                  %v723 = vld [vmem:[%s563 + $0x278] sm:$0xf]
                  %724 = vst [vmem:[%s564 + $0x13c] sm:$0xf] %v723
                  %v725 = vld [vmem:[%s563 + $0x280] sm:$0xf]
                  %726 = vst [vmem:[%s564 + $0x140] sm:$0xf] %v725
                  %v727 = vld [vmem:[%s563 + $0x288] sm:$0xf]
                  %728 = vst [vmem:[%s564 + $0x144] sm:$0xf] %v727
                  %v729 = vld [vmem:[%s563 + $0x290] sm:$0xf]
                  %730 = vst [vmem:[%s564 + $0x148] sm:$0xf] %v729
                  %v731 = vld [vmem:[%s563 + $0x298] sm:$0xf]
                  %732 = vst [vmem:[%s564 + $0x14c] sm:$0xf] %v731
                  %v733 = vld [vmem:[%s563 + $0x2a0] sm:$0xf]
                  %734 = vst [vmem:[%s564 + $0x150] sm:$0xf] %v733
                  %v735 = vld [vmem:[%s563 + $0x2a8] sm:$0xf]
                  %736 = vst [vmem:[%s564 + $0x154] sm:$0xf] %v735
                  %v737 = vld [vmem:[%s563 + $0x2b0] sm:$0xf]
                  %738 = vst [vmem:[%s564 + $0x158] sm:$0xf] %v737
                  %v739 = vld [vmem:[%s563 + $0x2b8] sm:$0xf]
                  %740 = vst [vmem:[%s564 + $0x15c] sm:$0xf] %v739
                  %v741 = vld [vmem:[%s563 + $0x2c0] sm:$0xf]
                  %742 = vst [vmem:[%s564 + $0x160] sm:$0xf] %v741
                  %v743 = vld [vmem:[%s563 + $0x2c8] sm:$0xf]
                  %744 = vst [vmem:[%s564 + $0x164] sm:$0xf] %v743
                  %v745 = vld [vmem:[%s563 + $0x2d0] sm:$0xf]
                  %746 = vst [vmem:[%s564 + $0x168] sm:$0xf] %v745
                  %v747 = vld [vmem:[%s563 + $0x2d8] sm:$0xf]
                  %748 = vst [vmem:[%s564 + $0x16c] sm:$0xf] %v747
                  %v749 = vld [vmem:[%s563 + $0x2e0] sm:$0xf]
                  %750 = vst [vmem:[%s564 + $0x170] sm:$0xf] %v749
                  %v751 = vld [vmem:[%s563 + $0x2e8] sm:$0xf]
                  %752 = vst [vmem:[%s564 + $0x174] sm:$0xf] %v751
                  %v753 = vld [vmem:[%s563 + $0x2f0] sm:$0xf]
                  %754 = vst [vmem:[%s564 + $0x178] sm:$0xf] %v753
                  %v755 = vld [vmem:[%s563 + $0x2f8] sm:$0xf]
                  %756 = vst [vmem:[%s564 + $0x17c] sm:$0xf] %v755
                  %v757 = vld [vmem:[%s563 + $0x300] sm:$0xf]
                  %758 = vst [vmem:[%s564 + $0x180] sm:$0xf] %v757
                  %v759 = vld [vmem:[%s563 + $0x308] sm:$0xf]
                  %760 = vst [vmem:[%s564 + $0x184] sm:$0xf] %v759
                  %v761 = vld [vmem:[%s563 + $0x310] sm:$0xf]
                  %762 = vst [vmem:[%s564 + $0x188] sm:$0xf] %v761
                  %v763 = vld [vmem:[%s563 + $0x318] sm:$0xf]
                  %764 = vst [vmem:[%s564 + $0x18c] sm:$0xf] %v763
                  %v765 = vld [vmem:[%s563 + $0x320] sm:$0xf]
                  %766 = vst [vmem:[%s564 + $0x190] sm:$0xf] %v765
                  %v767 = vld [vmem:[%s563 + $0x328] sm:$0xf]
                  %768 = vst [vmem:[%s564 + $0x194] sm:$0xf] %v767
                  %v769 = vld [vmem:[%s563 + $0x330] sm:$0xf]
                  %770 = vst [vmem:[%s564 + $0x198] sm:$0xf] %v769
                  %v771 = vld [vmem:[%s563 + $0x338] sm:$0xf]
                  %772 = vst [vmem:[%s564 + $0x19c] sm:$0xf] %v771
                  %v773 = vld [vmem:[%s563 + $0x340] sm:$0xf]
                  %774 = vst [vmem:[%s564 + $0x1a0] sm:$0xf] %v773
                  %v775 = vld [vmem:[%s563 + $0x348] sm:$0xf]
                  %776 = vst [vmem:[%s564 + $0x1a4] sm:$0xf] %v775
                  %v777 = vld [vmem:[%s563 + $0x350] sm:$0xf]
                  %778 = vst [vmem:[%s564 + $0x1a8] sm:$0xf] %v777
                  %v779 = vld [vmem:[%s563 + $0x358] sm:$0xf]
                  %780 = vst [vmem:[%s564 + $0x1ac] sm:$0xf] %v779
                  %v781 = vld [vmem:[%s563 + $0x360] sm:$0xf]
                  %782 = vst [vmem:[%s564 + $0x1b0] sm:$0xf] %v781
                  %v783 = vld [vmem:[%s563 + $0x368] sm:$0xf]
                  %784 = vst [vmem:[%s564 + $0x1b4] sm:$0xf] %v783
                  %v785 = vld [vmem:[%s563 + $0x370] sm:$0xf]
                  %786 = vst [vmem:[%s564 + $0x1b8] sm:$0xf] %v785
                  %v787 = vld [vmem:[%s563 + $0x378] sm:$0xf]
                  %788 = vst [vmem:[%s564 + $0x1bc] sm:$0xf] %v787
                  %v789 = vld [vmem:[%s563 + $0x380] sm:$0xf]
                  %790 = vst [vmem:[%s564 + $0x1c0] sm:$0xf] %v789
                  %v791 = vld [vmem:[%s563 + $0x388] sm:$0xf]
                  %792 = vst [vmem:[%s564 + $0x1c4] sm:$0xf] %v791
                  %v793 = vld [vmem:[%s563 + $0x390] sm:$0xf]
                  %794 = vst [vmem:[%s564 + $0x1c8] sm:$0xf] %v793
                  %v795 = vld [vmem:[%s563 + $0x398] sm:$0xf]
                  %796 = vst [vmem:[%s564 + $0x1cc] sm:$0xf] %v795
                  %v797 = vld [vmem:[%s563 + $0x3a0] sm:$0xf]
                  %798 = vst [vmem:[%s564 + $0x1d0] sm:$0xf] %v797
                  %v799 = vld [vmem:[%s563 + $0x3a8] sm:$0xf]
                  %800 = vst [vmem:[%s564 + $0x1d4] sm:$0xf] %v799
                  %v801 = vld [vmem:[%s563 + $0x3b0] sm:$0xf]
                  %802 = vst [vmem:[%s564 + $0x1d8] sm:$0xf] %v801
                  %v803 = vld [vmem:[%s563 + $0x3b8] sm:$0xf]
                  %804 = vst [vmem:[%s564 + $0x1dc] sm:$0xf] %v803
                  %v805 = vld [vmem:[%s563 + $0x3c0] sm:$0xf]
                  %806 = vst [vmem:[%s564 + $0x1e0] sm:$0xf] %v805
                  %v807 = vld [vmem:[%s563 + $0x3c8] sm:$0xf]
                  %808 = vst [vmem:[%s564 + $0x1e4] sm:$0xf] %v807
                  %v809 = vld [vmem:[%s563 + $0x3d0] sm:$0xf]
                  %810 = vst [vmem:[%s564 + $0x1e8] sm:$0xf] %v809
                  %v811 = vld [vmem:[%s563 + $0x3d8] sm:$0xf]
                  %812 = vst [vmem:[%s564 + $0x1ec] sm:$0xf] %v811
                  %v813 = vld [vmem:[%s563 + $0x3e0] sm:$0xf]
                  %814 = vst [vmem:[%s564 + $0x1f0] sm:$0xf] %v813
                  %v815 = vld [vmem:[%s563 + $0x3e8] sm:$0xf]
                  %816 = vst [vmem:[%s564 + $0x1f4] sm:$0xf] %v815
                  %v817 = vld [vmem:[%s563 + $0x3f0] sm:$0xf]
                  %818 = vst [vmem:[%s564 + $0x1f8] sm:$0xf] %v817
                  %v819 = vld [vmem:[%s563 + $0x3f8] sm:$0xf]
                  %820 = vst [vmem:[%s564 + $0x1fc] sm:$0xf] %v819
                  %v821 = vld [vmem:[%s563 + $0x400] sm:$0xf]
                  %822 = vst [vmem:[%s564 + $0x200] sm:$0xf] %v821
                  %v823 = vld [vmem:[%s563 + $0x408] sm:$0xf]
                  %824 = vst [vmem:[%s564 + $0x204] sm:$0xf] %v823
                  %v825 = vld [vmem:[%s563 + $0x410] sm:$0xf]
                  %826 = vst [vmem:[%s564 + $0x208] sm:$0xf] %v825
                  %v827 = vld [vmem:[%s563 + $0x418] sm:$0xf]
                  %828 = vst [vmem:[%s564 + $0x20c] sm:$0xf] %v827
                  %v829 = vld [vmem:[%s563 + $0x420] sm:$0xf]
                  %830 = vst [vmem:[%s564 + $0x210] sm:$0xf] %v829
                  %v831 = vld [vmem:[%s563 + $0x428] sm:$0xf]
                  %832 = vst [vmem:[%s564 + $0x214] sm:$0xf] %v831
                  %v833 = vld [vmem:[%s563 + $0x430] sm:$0xf]
                  %834 = vst [vmem:[%s564 + $0x218] sm:$0xf] %v833
                  %v835 = vld [vmem:[%s563 + $0x438] sm:$0xf]
                  %836 = vst [vmem:[%s564 + $0x21c] sm:$0xf] %v835
                  %v837 = vld [vmem:[%s563 + $0x440] sm:$0xf]
                  %838 = vst [vmem:[%s564 + $0x220] sm:$0xf] %v837
                  %v839 = vld [vmem:[%s563 + $0x448] sm:$0xf]
                  %840 = vst [vmem:[%s564 + $0x224] sm:$0xf] %v839
                  %v841 = vld [vmem:[%s563 + $0x450] sm:$0xf]
                  %842 = vst [vmem:[%s564 + $0x228] sm:$0xf] %v841
                  %v843 = vld [vmem:[%s563 + $0x458] sm:$0xf]
                  %844 = vst [vmem:[%s564 + $0x22c] sm:$0xf] %v843
                  %v845 = vld [vmem:[%s563 + $0x460] sm:$0xf]
                  %846 = vst [vmem:[%s564 + $0x230] sm:$0xf] %v845
                  %v847 = vld [vmem:[%s563 + $0x468] sm:$0xf]
                  %848 = vst [vmem:[%s564 + $0x234] sm:$0xf] %v847
                  %v849 = vld [vmem:[%s563 + $0x470] sm:$0xf]
                  %850 = vst [vmem:[%s564 + $0x238] sm:$0xf] %v849
                  %v851 = vld [vmem:[%s563 + $0x478] sm:$0xf]
                  %852 = vst [vmem:[%s564 + $0x23c] sm:$0xf] %v851
                  %v853 = vld [vmem:[%s563 + $0x480] sm:$0xf]
                  %854 = vst [vmem:[%s564 + $0x240] sm:$0xf] %v853
                  %v855 = vld [vmem:[%s563 + $0x488] sm:$0xf]
                  %856 = vst [vmem:[%s564 + $0x244] sm:$0xf] %v855
                  %v857 = vld [vmem:[%s563 + $0x490] sm:$0xf]
                  %858 = vst [vmem:[%s564 + $0x248] sm:$0xf] %v857
                  %v859 = vld [vmem:[%s563 + $0x498] sm:$0xf]
                  %860 = vst [vmem:[%s564 + $0x24c] sm:$0xf] %v859
                  %v861 = vld [vmem:[%s563 + $0x4a0] sm:$0xf]
                  %862 = vst [vmem:[%s564 + $0x250] sm:$0xf] %v861
                  %v863 = vld [vmem:[%s563 + $0x4a8] sm:$0xf]
                  %864 = vst [vmem:[%s564 + $0x254] sm:$0xf] %v863
                  %v865 = vld [vmem:[%s563 + $0x4b0] sm:$0xf]
                  %866 = vst [vmem:[%s564 + $0x258] sm:$0xf] %v865
                  %v867 = vld [vmem:[%s563 + $0x4b8] sm:$0xf]
                  %868 = vst [vmem:[%s564 + $0x25c] sm:$0xf] %v867
                  %v869 = vld [vmem:[%s563 + $0x4c0] sm:$0xf]
                  %870 = vst [vmem:[%s564 + $0x260] sm:$0xf] %v869
                  %v871 = vld [vmem:[%s563 + $0x4c8] sm:$0xf]
                  %872 = vst [vmem:[%s564 + $0x264] sm:$0xf] %v871
                  %v873 = vld [vmem:[%s563 + $0x4d0] sm:$0xf]
                  %874 = vst [vmem:[%s564 + $0x268] sm:$0xf] %v873
                  %v875 = vld [vmem:[%s563 + $0x4d8] sm:$0xf]
                  %876 = vst [vmem:[%s564 + $0x26c] sm:$0xf] %v875
                  %v877 = vld [vmem:[%s563 + $0x4e0] sm:$0xf]
                  %878 = vst [vmem:[%s564 + $0x270] sm:$0xf] %v877
                  %v879 = vld [vmem:[%s563 + $0x4e8] sm:$0xf]
                  %880 = vst [vmem:[%s564 + $0x274] sm:$0xf] %v879
                  %v881 = vld [vmem:[%s563 + $0x4f0] sm:$0xf]
                  %882 = vst [vmem:[%s564 + $0x278] sm:$0xf] %v881
                  %v883 = vld [vmem:[%s563 + $0x4f8] sm:$0xf]
                  %884 = vst [vmem:[%s564 + $0x27c] sm:$0xf] %v883
                $region59: #{_lambda_.12} parent=46 // loop_footer
                  %s562 = sadd.s32 1, %s558
                $region60: #{_lambda_.12} parent=46 // loop_footer_branch
                  %557 = sbr.rel target = $region56
                $region61: #{_lambda_.12} parent=46 // loop_exit
                  _
              $region47: #{_lambda_.12} parent=31 // pred_fallthru
                _
            $region32: #{_lambda_.12} parent=27 // pred_fallthru
              _
            // Predicated region
            $region33: #{_lambda_.12} parent=27 // pred_check
              _
            $region34: #{_lambda_.12} parent=27 // pred_check_branch
              %216 = sbr.rel (0) target = $region36
            $region35: #{_lambda_.12} parent=27 // pred_region
              loop: start=0, step=1, limit=1
              $region37: #{_lambda_.12} parent=35 // loop_pre_header
                _
              $region38: #{_lambda_.12} parent=35 // loop_header
                %s219 = sphi 0, %s223
                %p220 = scmp.ge.s32.totalorder %s219, 1
                %s224 = sphi %s210, %s210
                %s225 = sphi %s205, %s205
              $region39: #{_lambda_.12} parent=35 // loop_header_branch
                %222 = sbr.rel (%p220) target = $region43
              $region40: #{_lambda_.12} parent=35 // loop_body
                %v226 = vld [vmem:[%s224] sm:$0xf]
                %227 = vst [vmem:[%s225] sm:$0xf] %v226
                %v228 = vld [vmem:[%s224 + $0x8] sm:$0xf]
                %229 = vst [vmem:[%s225 + $0x4] sm:$0xf] %v228
                %v230 = vld [vmem:[%s224 + $0x10] sm:$0xf]
                %231 = vst [vmem:[%s225 + $0x8] sm:$0xf] %v230
                %v232 = vld [vmem:[%s224 + $0x18] sm:$0xf]
                %233 = vst [vmem:[%s225 + $0xc] sm:$0xf] %v232
                %v234 = vld [vmem:[%s224 + $0x20] sm:$0xf]
                %235 = vst [vmem:[%s225 + $0x10] sm:$0xf] %v234
                %v236 = vld [vmem:[%s224 + $0x28] sm:$0xf]
                %237 = vst [vmem:[%s225 + $0x14] sm:$0xf] %v236
                %v238 = vld [vmem:[%s224 + $0x30] sm:$0xf]
                %239 = vst [vmem:[%s225 + $0x18] sm:$0xf] %v238
                %v240 = vld [vmem:[%s224 + $0x38] sm:$0xf]
                %241 = vst [vmem:[%s225 + $0x1c] sm:$0xf] %v240
                %v242 = vld [vmem:[%s224 + $0x40] sm:$0xf]
                %243 = vst [vmem:[%s225 + $0x20] sm:$0xf] %v242
                %v244 = vld [vmem:[%s224 + $0x48] sm:$0xf]
                %245 = vst [vmem:[%s225 + $0x24] sm:$0xf] %v244
                %v246 = vld [vmem:[%s224 + $0x50] sm:$0xf]
                %247 = vst [vmem:[%s225 + $0x28] sm:$0xf] %v246
                %v248 = vld [vmem:[%s224 + $0x58] sm:$0xf]
                %249 = vst [vmem:[%s225 + $0x2c] sm:$0xf] %v248
                %v250 = vld [vmem:[%s224 + $0x60] sm:$0xf]
                %251 = vst [vmem:[%s225 + $0x30] sm:$0xf] %v250
                %v252 = vld [vmem:[%s224 + $0x68] sm:$0xf]
                %253 = vst [vmem:[%s225 + $0x34] sm:$0xf] %v252
                %v254 = vld [vmem:[%s224 + $0x70] sm:$0xf]
                %255 = vst [vmem:[%s225 + $0x38] sm:$0xf] %v254
                %v256 = vld [vmem:[%s224 + $0x78] sm:$0xf]
                %257 = vst [vmem:[%s225 + $0x3c] sm:$0xf] %v256
                %v258 = vld [vmem:[%s224 + $0x80] sm:$0xf]
                %259 = vst [vmem:[%s225 + $0x40] sm:$0xf] %v258
                %v260 = vld [vmem:[%s224 + $0x88] sm:$0xf]
                %261 = vst [vmem:[%s225 + $0x44] sm:$0xf] %v260
                %v262 = vld [vmem:[%s224 + $0x90] sm:$0xf]
                %263 = vst [vmem:[%s225 + $0x48] sm:$0xf] %v262
                %v264 = vld [vmem:[%s224 + $0x98] sm:$0xf]
                %265 = vst [vmem:[%s225 + $0x4c] sm:$0xf] %v264
                %v266 = vld [vmem:[%s224 + $0xa0] sm:$0xf]
                %267 = vst [vmem:[%s225 + $0x50] sm:$0xf] %v266
                %v268 = vld [vmem:[%s224 + $0xa8] sm:$0xf]
                %269 = vst [vmem:[%s225 + $0x54] sm:$0xf] %v268
                %v270 = vld [vmem:[%s224 + $0xb0] sm:$0xf]
                %271 = vst [vmem:[%s225 + $0x58] sm:$0xf] %v270
                %v272 = vld [vmem:[%s224 + $0xb8] sm:$0xf]
                %273 = vst [vmem:[%s225 + $0x5c] sm:$0xf] %v272
                %v274 = vld [vmem:[%s224 + $0xc0] sm:$0xf]
                %275 = vst [vmem:[%s225 + $0x60] sm:$0xf] %v274
                %v276 = vld [vmem:[%s224 + $0xc8] sm:$0xf]
                %277 = vst [vmem:[%s225 + $0x64] sm:$0xf] %v276
                %v278 = vld [vmem:[%s224 + $0xd0] sm:$0xf]
                %279 = vst [vmem:[%s225 + $0x68] sm:$0xf] %v278
                %v280 = vld [vmem:[%s224 + $0xd8] sm:$0xf]
                %281 = vst [vmem:[%s225 + $0x6c] sm:$0xf] %v280
                %v282 = vld [vmem:[%s224 + $0xe0] sm:$0xf]
                %283 = vst [vmem:[%s225 + $0x70] sm:$0xf] %v282
                %v284 = vld [vmem:[%s224 + $0xe8] sm:$0xf]
                %285 = vst [vmem:[%s225 + $0x74] sm:$0xf] %v284
                %v286 = vld [vmem:[%s224 + $0xf0] sm:$0xf]
                %287 = vst [vmem:[%s225 + $0x78] sm:$0xf] %v286
                %v288 = vld [vmem:[%s224 + $0xf8] sm:$0xf]
                %289 = vst [vmem:[%s225 + $0x7c] sm:$0xf] %v288
                %v290 = vld [vmem:[%s224 + $0x100] sm:$0xf]
                %291 = vst [vmem:[%s225 + $0x80] sm:$0xf] %v290
                %v292 = vld [vmem:[%s224 + $0x108] sm:$0xf]
                %293 = vst [vmem:[%s225 + $0x84] sm:$0xf] %v292
                %v294 = vld [vmem:[%s224 + $0x110] sm:$0xf]
                %295 = vst [vmem:[%s225 + $0x88] sm:$0xf] %v294
                %v296 = vld [vmem:[%s224 + $0x118] sm:$0xf]
                %297 = vst [vmem:[%s225 + $0x8c] sm:$0xf] %v296
                %v298 = vld [vmem:[%s224 + $0x120] sm:$0xf]
                %299 = vst [vmem:[%s225 + $0x90] sm:$0xf] %v298
                %v300 = vld [vmem:[%s224 + $0x128] sm:$0xf]
                %301 = vst [vmem:[%s225 + $0x94] sm:$0xf] %v300
                %v302 = vld [vmem:[%s224 + $0x130] sm:$0xf]
                %303 = vst [vmem:[%s225 + $0x98] sm:$0xf] %v302
                %v304 = vld [vmem:[%s224 + $0x138] sm:$0xf]
                %305 = vst [vmem:[%s225 + $0x9c] sm:$0xf] %v304
                %v306 = vld [vmem:[%s224 + $0x140] sm:$0xf]
                %307 = vst [vmem:[%s225 + $0xa0] sm:$0xf] %v306
                %v308 = vld [vmem:[%s224 + $0x148] sm:$0xf]
                %309 = vst [vmem:[%s225 + $0xa4] sm:$0xf] %v308
                %v310 = vld [vmem:[%s224 + $0x150] sm:$0xf]
                %311 = vst [vmem:[%s225 + $0xa8] sm:$0xf] %v310
                %v312 = vld [vmem:[%s224 + $0x158] sm:$0xf]
                %313 = vst [vmem:[%s225 + $0xac] sm:$0xf] %v312
                %v314 = vld [vmem:[%s224 + $0x160] sm:$0xf]
                %315 = vst [vmem:[%s225 + $0xb0] sm:$0xf] %v314
                %v316 = vld [vmem:[%s224 + $0x168] sm:$0xf]
                %317 = vst [vmem:[%s225 + $0xb4] sm:$0xf] %v316
                %v318 = vld [vmem:[%s224 + $0x170] sm:$0xf]
                %319 = vst [vmem:[%s225 + $0xb8] sm:$0xf] %v318
                %v320 = vld [vmem:[%s224 + $0x178] sm:$0xf]
                %321 = vst [vmem:[%s225 + $0xbc] sm:$0xf] %v320
                %v322 = vld [vmem:[%s224 + $0x180] sm:$0xf]
                %323 = vst [vmem:[%s225 + $0xc0] sm:$0xf] %v322
                %v324 = vld [vmem:[%s224 + $0x188] sm:$0xf]
                %325 = vst [vmem:[%s225 + $0xc4] sm:$0xf] %v324
                %v326 = vld [vmem:[%s224 + $0x190] sm:$0xf]
                %327 = vst [vmem:[%s225 + $0xc8] sm:$0xf] %v326
                %v328 = vld [vmem:[%s224 + $0x198] sm:$0xf]
                %329 = vst [vmem:[%s225 + $0xcc] sm:$0xf] %v328
                %v330 = vld [vmem:[%s224 + $0x1a0] sm:$0xf]
                %331 = vst [vmem:[%s225 + $0xd0] sm:$0xf] %v330
                %v332 = vld [vmem:[%s224 + $0x1a8] sm:$0xf]
                %333 = vst [vmem:[%s225 + $0xd4] sm:$0xf] %v332
                %v334 = vld [vmem:[%s224 + $0x1b0] sm:$0xf]
                %335 = vst [vmem:[%s225 + $0xd8] sm:$0xf] %v334
                %v336 = vld [vmem:[%s224 + $0x1b8] sm:$0xf]
                %337 = vst [vmem:[%s225 + $0xdc] sm:$0xf] %v336
                %v338 = vld [vmem:[%s224 + $0x1c0] sm:$0xf]
                %339 = vst [vmem:[%s225 + $0xe0] sm:$0xf] %v338
                %v340 = vld [vmem:[%s224 + $0x1c8] sm:$0xf]
                %341 = vst [vmem:[%s225 + $0xe4] sm:$0xf] %v340
                %v342 = vld [vmem:[%s224 + $0x1d0] sm:$0xf]
                %343 = vst [vmem:[%s225 + $0xe8] sm:$0xf] %v342
                %v344 = vld [vmem:[%s224 + $0x1d8] sm:$0xf]
                %345 = vst [vmem:[%s225 + $0xec] sm:$0xf] %v344
                %v346 = vld [vmem:[%s224 + $0x1e0] sm:$0xf]
                %347 = vst [vmem:[%s225 + $0xf0] sm:$0xf] %v346
                %v348 = vld [vmem:[%s224 + $0x1e8] sm:$0xf]
                %349 = vst [vmem:[%s225 + $0xf4] sm:$0xf] %v348
                %v350 = vld [vmem:[%s224 + $0x1f0] sm:$0xf]
                %351 = vst [vmem:[%s225 + $0xf8] sm:$0xf] %v350
                %v352 = vld [vmem:[%s224 + $0x1f8] sm:$0xf]
                %353 = vst [vmem:[%s225 + $0xfc] sm:$0xf] %v352
                %v354 = vld [vmem:[%s224 + $0x200] sm:$0xf]
                %355 = vst [vmem:[%s225 + $0x100] sm:$0xf] %v354
                %v356 = vld [vmem:[%s224 + $0x208] sm:$0xf]
                %357 = vst [vmem:[%s225 + $0x104] sm:$0xf] %v356
                %v358 = vld [vmem:[%s224 + $0x210] sm:$0xf]
                %359 = vst [vmem:[%s225 + $0x108] sm:$0xf] %v358
                %v360 = vld [vmem:[%s224 + $0x218] sm:$0xf]
                %361 = vst [vmem:[%s225 + $0x10c] sm:$0xf] %v360
                %v362 = vld [vmem:[%s224 + $0x220] sm:$0xf]
                %363 = vst [vmem:[%s225 + $0x110] sm:$0xf] %v362
                %v364 = vld [vmem:[%s224 + $0x228] sm:$0xf]
                %365 = vst [vmem:[%s225 + $0x114] sm:$0xf] %v364
                %v366 = vld [vmem:[%s224 + $0x230] sm:$0xf]
                %367 = vst [vmem:[%s225 + $0x118] sm:$0xf] %v366
                %v368 = vld [vmem:[%s224 + $0x238] sm:$0xf]
                %369 = vst [vmem:[%s225 + $0x11c] sm:$0xf] %v368
                %v370 = vld [vmem:[%s224 + $0x240] sm:$0xf]
                %371 = vst [vmem:[%s225 + $0x120] sm:$0xf] %v370
                %v372 = vld [vmem:[%s224 + $0x248] sm:$0xf]
                %373 = vst [vmem:[%s225 + $0x124] sm:$0xf] %v372
                %v374 = vld [vmem:[%s224 + $0x250] sm:$0xf]
                %375 = vst [vmem:[%s225 + $0x128] sm:$0xf] %v374
                %v376 = vld [vmem:[%s224 + $0x258] sm:$0xf]
                %377 = vst [vmem:[%s225 + $0x12c] sm:$0xf] %v376
                %v378 = vld [vmem:[%s224 + $0x260] sm:$0xf]
                %379 = vst [vmem:[%s225 + $0x130] sm:$0xf] %v378
                %v380 = vld [vmem:[%s224 + $0x268] sm:$0xf]
                %381 = vst [vmem:[%s225 + $0x134] sm:$0xf] %v380
                %v382 = vld [vmem:[%s224 + $0x270] sm:$0xf]
                %383 = vst [vmem:[%s225 + $0x138] sm:$0xf] %v382
                %v384 = vld [vmem:[%s224 + $0x278] sm:$0xf]
                %385 = vst [vmem:[%s225 + $0x13c] sm:$0xf] %v384
                %v386 = vld [vmem:[%s224 + $0x280] sm:$0xf]
                %387 = vst [vmem:[%s225 + $0x140] sm:$0xf] %v386
                %v388 = vld [vmem:[%s224 + $0x288] sm:$0xf]
                %389 = vst [vmem:[%s225 + $0x144] sm:$0xf] %v388
                %v390 = vld [vmem:[%s224 + $0x290] sm:$0xf]
                %391 = vst [vmem:[%s225 + $0x148] sm:$0xf] %v390
                %v392 = vld [vmem:[%s224 + $0x298] sm:$0xf]
                %393 = vst [vmem:[%s225 + $0x14c] sm:$0xf] %v392
                %v394 = vld [vmem:[%s224 + $0x2a0] sm:$0xf]
                %395 = vst [vmem:[%s225 + $0x150] sm:$0xf] %v394
                %v396 = vld [vmem:[%s224 + $0x2a8] sm:$0xf]
                %397 = vst [vmem:[%s225 + $0x154] sm:$0xf] %v396
                %v398 = vld [vmem:[%s224 + $0x2b0] sm:$0xf]
                %399 = vst [vmem:[%s225 + $0x158] sm:$0xf] %v398
                %v400 = vld [vmem:[%s224 + $0x2b8] sm:$0xf]
                %401 = vst [vmem:[%s225 + $0x15c] sm:$0xf] %v400
                %v402 = vld [vmem:[%s224 + $0x2c0] sm:$0xf]
                %403 = vst [vmem:[%s225 + $0x160] sm:$0xf] %v402
                %v404 = vld [vmem:[%s224 + $0x2c8] sm:$0xf]
                %405 = vst [vmem:[%s225 + $0x164] sm:$0xf] %v404
                %v406 = vld [vmem:[%s224 + $0x2d0] sm:$0xf]
                %407 = vst [vmem:[%s225 + $0x168] sm:$0xf] %v406
                %v408 = vld [vmem:[%s224 + $0x2d8] sm:$0xf]
                %409 = vst [vmem:[%s225 + $0x16c] sm:$0xf] %v408
                %v410 = vld [vmem:[%s224 + $0x2e0] sm:$0xf]
                %411 = vst [vmem:[%s225 + $0x170] sm:$0xf] %v410
                %v412 = vld [vmem:[%s224 + $0x2e8] sm:$0xf]
                %413 = vst [vmem:[%s225 + $0x174] sm:$0xf] %v412
                %v414 = vld [vmem:[%s224 + $0x2f0] sm:$0xf]
                %415 = vst [vmem:[%s225 + $0x178] sm:$0xf] %v414
                %v416 = vld [vmem:[%s224 + $0x2f8] sm:$0xf]
                %417 = vst [vmem:[%s225 + $0x17c] sm:$0xf] %v416
                %v418 = vld [vmem:[%s224 + $0x300] sm:$0xf]
                %419 = vst [vmem:[%s225 + $0x180] sm:$0xf] %v418
                %v420 = vld [vmem:[%s224 + $0x308] sm:$0xf]
                %421 = vst [vmem:[%s225 + $0x184] sm:$0xf] %v420
                %v422 = vld [vmem:[%s224 + $0x310] sm:$0xf]
                %423 = vst [vmem:[%s225 + $0x188] sm:$0xf] %v422
                %v424 = vld [vmem:[%s224 + $0x318] sm:$0xf]
                %425 = vst [vmem:[%s225 + $0x18c] sm:$0xf] %v424
                %v426 = vld [vmem:[%s224 + $0x320] sm:$0xf]
                %427 = vst [vmem:[%s225 + $0x190] sm:$0xf] %v426
                %v428 = vld [vmem:[%s224 + $0x328] sm:$0xf]
                %429 = vst [vmem:[%s225 + $0x194] sm:$0xf] %v428
                %v430 = vld [vmem:[%s224 + $0x330] sm:$0xf]
                %431 = vst [vmem:[%s225 + $0x198] sm:$0xf] %v430
                %v432 = vld [vmem:[%s224 + $0x338] sm:$0xf]
                %433 = vst [vmem:[%s225 + $0x19c] sm:$0xf] %v432
                %v434 = vld [vmem:[%s224 + $0x340] sm:$0xf]
                %435 = vst [vmem:[%s225 + $0x1a0] sm:$0xf] %v434
                %v436 = vld [vmem:[%s224 + $0x348] sm:$0xf]
                %437 = vst [vmem:[%s225 + $0x1a4] sm:$0xf] %v436
                %v438 = vld [vmem:[%s224 + $0x350] sm:$0xf]
                %439 = vst [vmem:[%s225 + $0x1a8] sm:$0xf] %v438
                %v440 = vld [vmem:[%s224 + $0x358] sm:$0xf]
                %441 = vst [vmem:[%s225 + $0x1ac] sm:$0xf] %v440
                %v442 = vld [vmem:[%s224 + $0x360] sm:$0xf]
                %443 = vst [vmem:[%s225 + $0x1b0] sm:$0xf] %v442
                %v444 = vld [vmem:[%s224 + $0x368] sm:$0xf]
                %445 = vst [vmem:[%s225 + $0x1b4] sm:$0xf] %v444
                %v446 = vld [vmem:[%s224 + $0x370] sm:$0xf]
                %447 = vst [vmem:[%s225 + $0x1b8] sm:$0xf] %v446
                %v448 = vld [vmem:[%s224 + $0x378] sm:$0xf]
                %449 = vst [vmem:[%s225 + $0x1bc] sm:$0xf] %v448
                %v450 = vld [vmem:[%s224 + $0x380] sm:$0xf]
                %451 = vst [vmem:[%s225 + $0x1c0] sm:$0xf] %v450
                %v452 = vld [vmem:[%s224 + $0x388] sm:$0xf]
                %453 = vst [vmem:[%s225 + $0x1c4] sm:$0xf] %v452
                %v454 = vld [vmem:[%s224 + $0x390] sm:$0xf]
                %455 = vst [vmem:[%s225 + $0x1c8] sm:$0xf] %v454
                %v456 = vld [vmem:[%s224 + $0x398] sm:$0xf]
                %457 = vst [vmem:[%s225 + $0x1cc] sm:$0xf] %v456
                %v458 = vld [vmem:[%s224 + $0x3a0] sm:$0xf]
                %459 = vst [vmem:[%s225 + $0x1d0] sm:$0xf] %v458
                %v460 = vld [vmem:[%s224 + $0x3a8] sm:$0xf]
                %461 = vst [vmem:[%s225 + $0x1d4] sm:$0xf] %v460
                %v462 = vld [vmem:[%s224 + $0x3b0] sm:$0xf]
                %463 = vst [vmem:[%s225 + $0x1d8] sm:$0xf] %v462
                %v464 = vld [vmem:[%s224 + $0x3b8] sm:$0xf]
                %465 = vst [vmem:[%s225 + $0x1dc] sm:$0xf] %v464
                %v466 = vld [vmem:[%s224 + $0x3c0] sm:$0xf]
                %467 = vst [vmem:[%s225 + $0x1e0] sm:$0xf] %v466
                %v468 = vld [vmem:[%s224 + $0x3c8] sm:$0xf]
                %469 = vst [vmem:[%s225 + $0x1e4] sm:$0xf] %v468
                %v470 = vld [vmem:[%s224 + $0x3d0] sm:$0xf]
                %471 = vst [vmem:[%s225 + $0x1e8] sm:$0xf] %v470
                %v472 = vld [vmem:[%s224 + $0x3d8] sm:$0xf]
                %473 = vst [vmem:[%s225 + $0x1ec] sm:$0xf] %v472
                %v474 = vld [vmem:[%s224 + $0x3e0] sm:$0xf]
                %475 = vst [vmem:[%s225 + $0x1f0] sm:$0xf] %v474
                %v476 = vld [vmem:[%s224 + $0x3e8] sm:$0xf]
                %477 = vst [vmem:[%s225 + $0x1f4] sm:$0xf] %v476
                %v478 = vld [vmem:[%s224 + $0x3f0] sm:$0xf]
                %479 = vst [vmem:[%s225 + $0x1f8] sm:$0xf] %v478
                %v480 = vld [vmem:[%s224 + $0x3f8] sm:$0xf]
                %481 = vst [vmem:[%s225 + $0x1fc] sm:$0xf] %v480
                %v482 = vld [vmem:[%s224 + $0x400] sm:$0xf]
                %483 = vst [vmem:[%s225 + $0x200] sm:$0xf] %v482
                %v484 = vld [vmem:[%s224 + $0x408] sm:$0xf]
                %485 = vst [vmem:[%s225 + $0x204] sm:$0xf] %v484
                %v486 = vld [vmem:[%s224 + $0x410] sm:$0xf]
                %487 = vst [vmem:[%s225 + $0x208] sm:$0xf] %v486
                %v488 = vld [vmem:[%s224 + $0x418] sm:$0xf]
                %489 = vst [vmem:[%s225 + $0x20c] sm:$0xf] %v488
                %v490 = vld [vmem:[%s224 + $0x420] sm:$0xf]
                %491 = vst [vmem:[%s225 + $0x210] sm:$0xf] %v490
                %v492 = vld [vmem:[%s224 + $0x428] sm:$0xf]
                %493 = vst [vmem:[%s225 + $0x214] sm:$0xf] %v492
                %v494 = vld [vmem:[%s224 + $0x430] sm:$0xf]
                %495 = vst [vmem:[%s225 + $0x218] sm:$0xf] %v494
                %v496 = vld [vmem:[%s224 + $0x438] sm:$0xf]
                %497 = vst [vmem:[%s225 + $0x21c] sm:$0xf] %v496
                %v498 = vld [vmem:[%s224 + $0x440] sm:$0xf]
                %499 = vst [vmem:[%s225 + $0x220] sm:$0xf] %v498
                %v500 = vld [vmem:[%s224 + $0x448] sm:$0xf]
                %501 = vst [vmem:[%s225 + $0x224] sm:$0xf] %v500
                %v502 = vld [vmem:[%s224 + $0x450] sm:$0xf]
                %503 = vst [vmem:[%s225 + $0x228] sm:$0xf] %v502
                %v504 = vld [vmem:[%s224 + $0x458] sm:$0xf]
                %505 = vst [vmem:[%s225 + $0x22c] sm:$0xf] %v504
                %v506 = vld [vmem:[%s224 + $0x460] sm:$0xf]
                %507 = vst [vmem:[%s225 + $0x230] sm:$0xf] %v506
                %v508 = vld [vmem:[%s224 + $0x468] sm:$0xf]
                %509 = vst [vmem:[%s225 + $0x234] sm:$0xf] %v508
                %v510 = vld [vmem:[%s224 + $0x470] sm:$0xf]
                %511 = vst [vmem:[%s225 + $0x238] sm:$0xf] %v510
                %v512 = vld [vmem:[%s224 + $0x478] sm:$0xf]
                %513 = vst [vmem:[%s225 + $0x23c] sm:$0xf] %v512
                %v514 = vld [vmem:[%s224 + $0x480] sm:$0xf]
                %515 = vst [vmem:[%s225 + $0x240] sm:$0xf] %v514
                %v516 = vld [vmem:[%s224 + $0x488] sm:$0xf]
                %517 = vst [vmem:[%s225 + $0x244] sm:$0xf] %v516
                %v518 = vld [vmem:[%s224 + $0x490] sm:$0xf]
                %519 = vst [vmem:[%s225 + $0x248] sm:$0xf] %v518
                %v520 = vld [vmem:[%s224 + $0x498] sm:$0xf]
                %521 = vst [vmem:[%s225 + $0x24c] sm:$0xf] %v520
                %v522 = vld [vmem:[%s224 + $0x4a0] sm:$0xf]
                %523 = vst [vmem:[%s225 + $0x250] sm:$0xf] %v522
                %v524 = vld [vmem:[%s224 + $0x4a8] sm:$0xf]
                %525 = vst [vmem:[%s225 + $0x254] sm:$0xf] %v524
                %v526 = vld [vmem:[%s224 + $0x4b0] sm:$0xf]
                %527 = vst [vmem:[%s225 + $0x258] sm:$0xf] %v526
                %v528 = vld [vmem:[%s224 + $0x4b8] sm:$0xf]
                %529 = vst [vmem:[%s225 + $0x25c] sm:$0xf] %v528
                %v530 = vld [vmem:[%s224 + $0x4c0] sm:$0xf]
                %531 = vst [vmem:[%s225 + $0x260] sm:$0xf] %v530
                %v532 = vld [vmem:[%s224 + $0x4c8] sm:$0xf]
                %533 = vst [vmem:[%s225 + $0x264] sm:$0xf] %v532
                %v534 = vld [vmem:[%s224 + $0x4d0] sm:$0xf]
                %535 = vst [vmem:[%s225 + $0x268] sm:$0xf] %v534
                %v536 = vld [vmem:[%s224 + $0x4d8] sm:$0xf]
                %537 = vst [vmem:[%s225 + $0x26c] sm:$0xf] %v536
                %v538 = vld [vmem:[%s224 + $0x4e0] sm:$0xf]
                %539 = vst [vmem:[%s225 + $0x270] sm:$0xf] %v538
                %v540 = vld [vmem:[%s224 + $0x4e8] sm:$0xf]
                %541 = vst [vmem:[%s225 + $0x274] sm:$0xf] %v540
                %v542 = vld [vmem:[%s224 + $0x4f0] sm:$0xf]
                %543 = vst [vmem:[%s225 + $0x278] sm:$0xf] %v542
                %v544 = vld [vmem:[%s224 + $0x4f8] sm:$0xf]
                %545 = vst [vmem:[%s225 + $0x27c] sm:$0xf] %v544
              $region41: #{_lambda_.12} parent=35 // loop_footer
                %s223 = sadd.s32 1, %s219
              $region42: #{_lambda_.12} parent=35 // loop_footer_branch
                %218 = sbr.rel target = $region38
              $region43: #{_lambda_.12} parent=35 // loop_exit
                _
            $region36: #{_lambda_.12} parent=27 // pred_fallthru
              _
          $region28: #{_lambda_.12} parent=23 // pred_fallthru
            _
          %885 = vnop
        $region24: #{_lambda_.12} parent=19 // pred_fallthru
          _
        // Predicated region
        $region62: #{_lambda_.12} parent=19 // pred_check
          %p886 = pneg %p105
        $region63: #{_lambda_.12} parent=19 // pred_check_branch
          %888 = sbr.rel (%p886) target = $region65
        $region64: #{_lambda_.12} parent=19 // pred_region
          %p889 = scmp.lt.s32.totalorder %s18, 1
          %s890 = scalar_select %p889, %s18, 1
          %s891 = scalar_lea.vmem %s2, %s890
        $region65: #{_lambda_.12} parent=19 // pred_fallthru
          _
        // Predicated region
        $region66: #{_lambda_.12} parent=19 // pred_check
          %p892 = pneg %p131
        $region67: #{_lambda_.12} parent=19 // pred_check_branch
          %894 = sbr.rel (%p892) target = $region69
        $region68: #{_lambda_.12} parent=19 // pred_region
          %p895 = scmp.lt.s32.totalorder %s18, 1
          %s896 = scalar_select %p895, %s18, 1
          %s897 = scalar_lea.vmem %s3, %s896
        $region69: #{_lambda_.12} parent=19 // pred_fallthru
          _
      $region20: #{_lambda_.12} parent=5 // pred_fallthru
        _
      %p898 = scmp.le.s32.totalorder 1, %s10
      %p899 = scmp.lt.s32.totalorder %s10, 3
      %p900 = pnand %p898, %p899
      %p901 = pneg %p900
      // Predicated region
      $region70: #{_lambda_.12} parent=5 // pred_check
        _
      $region71: #{_lambda_.12} parent=5 // pred_check_branch
        %903 = sbr.rel (%p900) target = $region73
      $region72: #{_lambda_.12} parent=5 // pred_region
        %s904 = ssub.s32 %s10, 1
        %s905 = sand.u32 %s72, 1
        %s906 = sand.u32 %s72, 1
        %s907 = smul.addr %s906, 640
        %s908 = scalar_lea.vmem [#allocation3], %s907
        // Predicated region
        $region74: #{_lambda_.12} parent=72 // pred_check
          %p909 = pneg %p85
        $region75: #{_lambda_.12} parent=72 // pred_check_branch
          %911 = sbr.rel (%p909) target = $region77
        $region76: #{_lambda_.12} parent=72 // pred_region
          _
        $region77: #{_lambda_.12} parent=72 // pred_fallthru
          _
        %s912 = smul.u32 4, %s20
        %s913 = smul.u32 10, %s22
        %p914 = scmp.lt.s32.totalorder %s912, 3
        %s915 = scalar_select %p914, %s912, 3
        %p916 = scmp.lt.s32.totalorder %s913, 9
        %s917 = scalar_select %p916, %s913, 9
        %s918 = smul.addr %s915, 10
        %s919 = sadd.s32 %s917, %s918
        %s920 = smul.addr %s919, 4
        %s921 = scalar_lea.vmem %s0, %s920
        %p922 = pneg %p57
        %p923 = pneg %p54
        %s924 = sand.u32 %s72, 1
        %s925 = sand.u32 %s72, 1
        %s926 = smul.addr %s925, 640
        %s927 = scalar_lea.vmem [#allocation3], %s926
        %p928 = pneg %p85
        %p929 = pneg %p82
        %p930 = scmp.lt.s32.totalorder %s21, 1
        %s931 = scalar_select %p930, %s21, 1
        %s932 = scalar_lea.vmem %s2, %s931
        %p933 = pneg %p111
        %p934 = pneg %p108
        %p935 = scmp.lt.s32.totalorder %s21, 1
        %s936 = scalar_select %p935, %s21, 1
        %s937 = scalar_lea.vmem %s3, %s936
        %p938 = pneg %p137
        %p939 = pneg %p134
        %p940 = pneg %p165
        %p941 = pneg %p162
        %s942 = sand.u32 %s152, 1
        %s943 = sand.u32 %s152, 1
        %s944 = smul.addr %s943, 16
        %s945 = scalar_lea.vmem [#allocation4], %s944
        %s946 = smul.u32 4, %s20
        %s947 = smul.u32 10, %s22
        %p948 = scmp.lt.s32.totalorder %s946, 3
        %s949 = scalar_select %p948, %s946, 3
        %p950 = scmp.lt.s32.totalorder %s947, 9
        %s951 = scalar_select %p950, %s947, 9
        %s952 = smul.addr %s949, 10
        %s953 = sadd.s32 %s951, %s952
        %s954 = smul.addr %s953, 4
        %s955 = scalar_lea.vmem %s0, %s954
        %s956 = smul.u32 4, %s20
        %s957 = smul.u32 10, %s22
        %s958 = smul.u32 160, %s22
        %p959 = scmp.lt.s32.totalorder %s21, 1
        %s960 = scalar_select %p959, %s21, 1
        %s961 = scalar_lea.vmem %s2, %s960
        %p962 = scmp.lt.s32.totalorder %s21, 1
        %s963 = scalar_select %p962, %s21, 1
        %s964 = scalar_lea.vmem %s3, %s963
        %s965 = smul.u32 4, %s20
        %p967 = scmp.eq.s32.totalorder %s22, 0
        // Predicated region
        $region78: #{_lambda_.12} parent=72 // pred_check
          %p968 = pneg %p967
        $region79: #{_lambda_.12} parent=72 // pred_check_branch
          %970 = sbr.rel (%p968) target = $region81
        $region80: #{_lambda_.12} parent=72 // pred_region
          %971 = vst [vmem:[#allocation2] sm:$0xff] 0.0
          %972 = vst [vmem:[#allocation2 + $0x8] sm:$0xff] 0.0
          %973 = vst [vmem:[#allocation2 + $0x10] sm:$0xff] 0.0
          %974 = vst [vmem:[#allocation2 + $0x18] sm:$0xff] 0.0
        $region81: #{_lambda_.12} parent=72 // pred_fallthru
          _
        %v975 = vld [vmem:[#allocation2] sm:$0xff]
        %v976 = vld [vmem:[#allocation2 + $0x8] sm:$0xff]
        %v977 = vld [vmem:[#allocation2 + $0x10] sm:$0xff]
        %v978 = vld [vmem:[#allocation2 + $0x18] sm:$0xff]
        %v979 = vld [vmem:[%s955] sm:$0xff]
        %v980 = vld [vmem:[%s955 + $0x8] sm:$0xff]
        %v981 = vld [vmem:[%s955 + $0x10] sm:$0xff]
        %v982 = vld [vmem:[%s955 + $0x18] sm:$0xff]
        %v983 = vld [vmem:[%s955 + $0x20] sm:$0xff]
        %v984 = vld [vmem:[%s955 + $0x28] sm:$0xff]
        %v985 = vld [vmem:[%s955 + $0x30] sm:$0xff]
        %v986 = vld [vmem:[%s955 + $0x38] sm:$0xff]
        %v987 = vld [vmem:[%s955 + $0x40] sm:$0xff]
        %v988 = vld [vmem:[%s955 + $0x48] sm:$0xff]
        %v989 = vld [vmem:[%s955 + $0x50] sm:$0xff]
        %v990 = vld [vmem:[%s955 + $0x58] sm:$0xff]
        %v991 = vld [vmem:[%s955 + $0x60] sm:$0xff]
        %v992 = vld [vmem:[%s955 + $0x68] sm:$0xff]
        %v993 = vld [vmem:[%s955 + $0x70] sm:$0xff]
        %v994 = vld [vmem:[%s955 + $0x78] sm:$0xff]
        %v995 = vld [vmem:[%s955 + $0x80] sm:$0xff]
        %v996 = vld [vmem:[%s955 + $0x88] sm:$0xff]
        %v997 = vld [vmem:[%s955 + $0x90] sm:$0xff]
        %v998 = vld [vmem:[%s955 + $0x98] sm:$0xff]
        %v999 = vld [vmem:[%s908] sm:$0xf]
        %v1000 = vld [vmem:[%s908 + $0x4] sm:$0xf]
        %v1001 = vld [vmem:[%s908 + $0x8] sm:$0xf]
        %v1002 = vld [vmem:[%s908 + $0xc] sm:$0xf]
        %v1003 = vld [vmem:[%s908 + $0x10] sm:$0xf]
        %v1004 = vld [vmem:[%s908 + $0x14] sm:$0xf]
        %v1005 = vld [vmem:[%s908 + $0x18] sm:$0xf]
        %v1006 = vld [vmem:[%s908 + $0x1c] sm:$0xf]
        %v1007 = vld [vmem:[%s908 + $0x20] sm:$0xf]
        %v1008 = vld [vmem:[%s908 + $0x24] sm:$0xf]
        %v1009 = vld [vmem:[%s908 + $0x28] sm:$0xf]
        %v1010 = vld [vmem:[%s908 + $0x2c] sm:$0xf]
        %v1011 = vld [vmem:[%s908 + $0x30] sm:$0xf]
        %v1012 = vld [vmem:[%s908 + $0x34] sm:$0xf]
        %v1013 = vld [vmem:[%s908 + $0x38] sm:$0xf]
        %v1014 = vld [vmem:[%s908 + $0x3c] sm:$0xf]
        %v1015 = vld [vmem:[%s908 + $0x40] sm:$0xf]
        %v1016 = vld [vmem:[%s908 + $0x44] sm:$0xf]
        %v1017 = vld [vmem:[%s908 + $0x48] sm:$0xf]
        %v1018 = vld [vmem:[%s908 + $0x4c] sm:$0xf]
        %v1019 = vld [vmem:[%s908 + $0x50] sm:$0xf]
        %v1020 = vld [vmem:[%s908 + $0x54] sm:$0xf]
        %v1021 = vld [vmem:[%s908 + $0x58] sm:$0xf]
        %v1022 = vld [vmem:[%s908 + $0x5c] sm:$0xf]
        %v1023 = vld [vmem:[%s908 + $0x60] sm:$0xf]
        %v1024 = vld [vmem:[%s908 + $0x64] sm:$0xf]
        %v1025 = vld [vmem:[%s908 + $0x68] sm:$0xf]
        %v1026 = vld [vmem:[%s908 + $0x6c] sm:$0xf]
        %v1027 = vld [vmem:[%s908 + $0x70] sm:$0xf]
        %v1028 = vld [vmem:[%s908 + $0x74] sm:$0xf]
        %v1029 = vld [vmem:[%s908 + $0x78] sm:$0xf]
        %v1030 = vld [vmem:[%s908 + $0x7c] sm:$0xf]
        %v1031 = vld [vmem:[%s908 + $0x80] sm:$0xf]
        %v1032 = vld [vmem:[%s908 + $0x84] sm:$0xf]
        %v1033 = vld [vmem:[%s908 + $0x88] sm:$0xf]
        %v1034 = vld [vmem:[%s908 + $0x8c] sm:$0xf]
        %v1035 = vld [vmem:[%s908 + $0x90] sm:$0xf]
        %v1036 = vld [vmem:[%s908 + $0x94] sm:$0xf]
        %v1037 = vld [vmem:[%s908 + $0x98] sm:$0xf]
        %v1038 = vld [vmem:[%s908 + $0x9c] sm:$0xf]
        %v1039 = vld [vmem:[%s908 + $0xa0] sm:$0xf]
        %v1040 = vld [vmem:[%s908 + $0xa4] sm:$0xf]
        %v1041 = vld [vmem:[%s908 + $0xa8] sm:$0xf]
        %v1042 = vld [vmem:[%s908 + $0xac] sm:$0xf]
        %v1043 = vld [vmem:[%s908 + $0xb0] sm:$0xf]
        %v1044 = vld [vmem:[%s908 + $0xb4] sm:$0xf]
        %v1045 = vld [vmem:[%s908 + $0xb8] sm:$0xf]
        %v1046 = vld [vmem:[%s908 + $0xbc] sm:$0xf]
        %v1047 = vld [vmem:[%s908 + $0xc0] sm:$0xf]
        %v1048 = vld [vmem:[%s908 + $0xc4] sm:$0xf]
        %v1049 = vld [vmem:[%s908 + $0xc8] sm:$0xf]
        %v1050 = vld [vmem:[%s908 + $0xcc] sm:$0xf]
        %v1051 = vld [vmem:[%s908 + $0xd0] sm:$0xf]
        %v1052 = vld [vmem:[%s908 + $0xd4] sm:$0xf]
        %v1053 = vld [vmem:[%s908 + $0xd8] sm:$0xf]
        %v1054 = vld [vmem:[%s908 + $0xdc] sm:$0xf]
        %v1055 = vld [vmem:[%s908 + $0xe0] sm:$0xf]
        %v1056 = vld [vmem:[%s908 + $0xe4] sm:$0xf]
        %v1057 = vld [vmem:[%s908 + $0xe8] sm:$0xf]
        %v1058 = vld [vmem:[%s908 + $0xec] sm:$0xf]
        %v1059 = vld [vmem:[%s908 + $0xf0] sm:$0xf]
        %v1060 = vld [vmem:[%s908 + $0xf4] sm:$0xf]
        %v1061 = vld [vmem:[%s908 + $0xf8] sm:$0xf]
        %v1062 = vld [vmem:[%s908 + $0xfc] sm:$0xf]
        %v1063 = vld [vmem:[%s908 + $0x100] sm:$0xf]
        %v1064 = vld [vmem:[%s908 + $0x104] sm:$0xf]
        %v1065 = vld [vmem:[%s908 + $0x108] sm:$0xf]
        %v1066 = vld [vmem:[%s908 + $0x10c] sm:$0xf]
        %v1067 = vld [vmem:[%s908 + $0x110] sm:$0xf]
        %v1068 = vld [vmem:[%s908 + $0x114] sm:$0xf]
        %v1069 = vld [vmem:[%s908 + $0x118] sm:$0xf]
        %v1070 = vld [vmem:[%s908 + $0x11c] sm:$0xf]
        %v1071 = vld [vmem:[%s908 + $0x120] sm:$0xf]
        %v1072 = vld [vmem:[%s908 + $0x124] sm:$0xf]
        %v1073 = vld [vmem:[%s908 + $0x128] sm:$0xf]
        %v1074 = vld [vmem:[%s908 + $0x12c] sm:$0xf]
        %v1075 = vld [vmem:[%s908 + $0x130] sm:$0xf]
        %v1076 = vld [vmem:[%s908 + $0x134] sm:$0xf]
        %v1077 = vld [vmem:[%s908 + $0x138] sm:$0xf]
        %v1078 = vld [vmem:[%s908 + $0x13c] sm:$0xf]
        %v1079 = vld [vmem:[%s908 + $0x140] sm:$0xf]
        %v1080 = vld [vmem:[%s908 + $0x144] sm:$0xf]
        %v1081 = vld [vmem:[%s908 + $0x148] sm:$0xf]
        %v1082 = vld [vmem:[%s908 + $0x14c] sm:$0xf]
        %v1083 = vld [vmem:[%s908 + $0x150] sm:$0xf]
        %v1084 = vld [vmem:[%s908 + $0x154] sm:$0xf]
        %v1085 = vld [vmem:[%s908 + $0x158] sm:$0xf]
        %v1086 = vld [vmem:[%s908 + $0x15c] sm:$0xf]
        %v1087 = vld [vmem:[%s908 + $0x160] sm:$0xf]
        %v1088 = vld [vmem:[%s908 + $0x164] sm:$0xf]
        %v1089 = vld [vmem:[%s908 + $0x168] sm:$0xf]
        %v1090 = vld [vmem:[%s908 + $0x16c] sm:$0xf]
        %v1091 = vld [vmem:[%s908 + $0x170] sm:$0xf]
        %v1092 = vld [vmem:[%s908 + $0x174] sm:$0xf]
        %v1093 = vld [vmem:[%s908 + $0x178] sm:$0xf]
        %v1094 = vld [vmem:[%s908 + $0x17c] sm:$0xf]
        %v1095 = vld [vmem:[%s908 + $0x180] sm:$0xf]
        %v1096 = vld [vmem:[%s908 + $0x184] sm:$0xf]
        %v1097 = vld [vmem:[%s908 + $0x188] sm:$0xf]
        %v1098 = vld [vmem:[%s908 + $0x18c] sm:$0xf]
        %v1099 = vld [vmem:[%s908 + $0x190] sm:$0xf]
        %v1100 = vld [vmem:[%s908 + $0x194] sm:$0xf]
        %v1101 = vld [vmem:[%s908 + $0x198] sm:$0xf]
        %v1102 = vld [vmem:[%s908 + $0x19c] sm:$0xf]
        %v1103 = vld [vmem:[%s908 + $0x1a0] sm:$0xf]
        %v1104 = vld [vmem:[%s908 + $0x1a4] sm:$0xf]
        %v1105 = vld [vmem:[%s908 + $0x1a8] sm:$0xf]
        %v1106 = vld [vmem:[%s908 + $0x1ac] sm:$0xf]
        %v1107 = vld [vmem:[%s908 + $0x1b0] sm:$0xf]
        %v1108 = vld [vmem:[%s908 + $0x1b4] sm:$0xf]
        %v1109 = vld [vmem:[%s908 + $0x1b8] sm:$0xf]
        %v1110 = vld [vmem:[%s908 + $0x1bc] sm:$0xf]
        %v1111 = vld [vmem:[%s908 + $0x1c0] sm:$0xf]
        %v1112 = vld [vmem:[%s908 + $0x1c4] sm:$0xf]
        %v1113 = vld [vmem:[%s908 + $0x1c8] sm:$0xf]
        %v1114 = vld [vmem:[%s908 + $0x1cc] sm:$0xf]
        %v1115 = vld [vmem:[%s908 + $0x1d0] sm:$0xf]
        %v1116 = vld [vmem:[%s908 + $0x1d4] sm:$0xf]
        %v1117 = vld [vmem:[%s908 + $0x1d8] sm:$0xf]
        %v1118 = vld [vmem:[%s908 + $0x1dc] sm:$0xf]
        %v1119 = vld [vmem:[%s908 + $0x1e0] sm:$0xf]
        %v1120 = vld [vmem:[%s908 + $0x1e4] sm:$0xf]
        %v1121 = vld [vmem:[%s908 + $0x1e8] sm:$0xf]
        %v1122 = vld [vmem:[%s908 + $0x1ec] sm:$0xf]
        %v1123 = vld [vmem:[%s908 + $0x1f0] sm:$0xf]
        %v1124 = vld [vmem:[%s908 + $0x1f4] sm:$0xf]
        %v1125 = vld [vmem:[%s908 + $0x1f8] sm:$0xf]
        %v1126 = vld [vmem:[%s908 + $0x1fc] sm:$0xf]
        %v1127 = vld [vmem:[%s908 + $0x200] sm:$0xf]
        %v1128 = vld [vmem:[%s908 + $0x204] sm:$0xf]
        %v1129 = vld [vmem:[%s908 + $0x208] sm:$0xf]
        %v1130 = vld [vmem:[%s908 + $0x20c] sm:$0xf]
        %v1131 = vld [vmem:[%s908 + $0x210] sm:$0xf]
        %v1132 = vld [vmem:[%s908 + $0x214] sm:$0xf]
        %v1133 = vld [vmem:[%s908 + $0x218] sm:$0xf]
        %v1134 = vld [vmem:[%s908 + $0x21c] sm:$0xf]
        %v1135 = vld [vmem:[%s908 + $0x220] sm:$0xf]
        %v1136 = vld [vmem:[%s908 + $0x224] sm:$0xf]
        %v1137 = vld [vmem:[%s908 + $0x228] sm:$0xf]
        %v1138 = vld [vmem:[%s908 + $0x22c] sm:$0xf]
        %v1139 = vld [vmem:[%s908 + $0x230] sm:$0xf]
        %v1140 = vld [vmem:[%s908 + $0x234] sm:$0xf]
        %v1141 = vld [vmem:[%s908 + $0x238] sm:$0xf]
        %v1142 = vld [vmem:[%s908 + $0x23c] sm:$0xf]
        %v1143 = vld [vmem:[%s908 + $0x240] sm:$0xf]
        %v1144 = vld [vmem:[%s908 + $0x244] sm:$0xf]
        %v1145 = vld [vmem:[%s908 + $0x248] sm:$0xf]
        %v1146 = vld [vmem:[%s908 + $0x24c] sm:$0xf]
        %v1147 = vld [vmem:[%s908 + $0x250] sm:$0xf]
        %v1148 = vld [vmem:[%s908 + $0x254] sm:$0xf]
        %v1149 = vld [vmem:[%s908 + $0x258] sm:$0xf]
        %v1150 = vld [vmem:[%s908 + $0x25c] sm:$0xf]
        %v1151 = vld [vmem:[%s908 + $0x260] sm:$0xf]
        %v1152 = vld [vmem:[%s908 + $0x264] sm:$0xf]
        %v1153 = vld [vmem:[%s908 + $0x268] sm:$0xf]
        %v1154 = vld [vmem:[%s908 + $0x26c] sm:$0xf]
        %v1155 = vld [vmem:[%s908 + $0x270] sm:$0xf]
        %v1156 = vld [vmem:[%s908 + $0x274] sm:$0xf]
        %v1157 = vld [vmem:[%s908 + $0x278] sm:$0xf]
        %v1158 = vld [vmem:[%s908 + $0x27c] sm:$0xf]
        %v1179 = vunpack.c.l.b16 %v979
        %v1180 = vunpack.c.h.b16 %v979
        %v1181 = vunpack.c.l.b16 %v980
        %v1182 = vunpack.c.h.b16 %v980
        %v1183 = vunpack.c.l.b16 %v981
        %v1184 = vunpack.c.h.b16 %v981
        %v1185 = vunpack.c.l.b16 %v982
        %v1186 = vunpack.c.h.b16 %v982
        %v1187 = vunpack.c.l.b16 %v983
        %v1188 = vunpack.c.h.b16 %v983
        %v1189 = vunpack.c.l.b16 %v984
        %v1190 = vunpack.c.h.b16 %v984
        %v1191 = vunpack.c.l.b16 %v985
        %v1192 = vunpack.c.h.b16 %v985
        %v1193 = vunpack.c.l.b16 %v986
        %v1194 = vunpack.c.h.b16 %v986
        %v1195 = vunpack.c.l.b16 %v987
        %v1196 = vunpack.c.h.b16 %v987
        %v1197 = vunpack.c.l.b16 %v988
        %v1198 = vunpack.c.h.b16 %v988
        %v1199 = vunpack.c.l.b16 %v989
        %v1200 = vunpack.c.h.b16 %v989
        %v1201 = vunpack.c.l.b16 %v990
        %v1202 = vunpack.c.h.b16 %v990
        %v1203 = vunpack.c.l.b16 %v991
        %v1204 = vunpack.c.h.b16 %v991
        %v1205 = vunpack.c.l.b16 %v992
        %v1206 = vunpack.c.h.b16 %v992
        %v1207 = vunpack.c.l.b16 %v993
        %v1208 = vunpack.c.h.b16 %v993
        %v1209 = vunpack.c.l.b16 %v994
        %v1210 = vunpack.c.h.b16 %v994
        %v1211 = vunpack.c.l.b16 %v995
        %v1212 = vunpack.c.h.b16 %v995
        %v1213 = vunpack.c.l.b16 %v996
        %v1214 = vunpack.c.h.b16 %v996
        %v1215 = vunpack.c.l.b16 %v997
        %v1216 = vunpack.c.h.b16 %v997
        %v1217 = vunpack.c.l.b16 %v998
        %v1218 = vunpack.c.h.b16 %v998
        %v1219 = vpack.c.b16 %v1189, %v1179
        %v1220 = vpack.c.b16 %v1190, %v1180
        %v1221 = vpack.c.b16 %v1191, %v1181
        %v1222 = vpack.c.b16 %v1192, %v1182
        %v1223 = vpack.c.b16 %v1193, %v1183
        %v1224 = vpack.c.b16 %v1194, %v1184
        %v1225 = vpack.c.b16 %v1195, %v1185
        %v1226 = vpack.c.b16 %v1196, %v1186
        %v1227 = vpack.c.b16 %v1197, %v1187
        %v1228 = vpack.c.b16 %v1198, %v1188
        %v1229 = vpack.c.b16 %v1209, %v1199
        %v1230 = vpack.c.b16 %v1210, %v1200
        %v1231 = vpack.c.b16 %v1211, %v1201
        %v1232 = vpack.c.b16 %v1212, %v1202
        %v1233 = vpack.c.b16 %v1213, %v1203
        %v1234 = vpack.c.b16 %v1214, %v1204
        %v1235 = vpack.c.b16 %v1215, %v1205
        %v1236 = vpack.c.b16 %v1216, %v1206
        %v1237 = vpack.c.b16 %v1217, %v1207
        %v1238 = vpack.c.b16 %v1218, %v1208
        %v1419 = vunpack.c.l.b16 %v999
        %v1420 = vunpack.c.l.b16 %v1000
        %v1421 = vunpack.c.l.b16 %v1001
        %v1422 = vunpack.c.l.b16 %v1002
        %v1423 = vunpack.c.l.b16 %v1003
        %v1424 = vunpack.c.l.b16 %v1004
        %v1425 = vunpack.c.l.b16 %v1005
        %v1426 = vunpack.c.l.b16 %v1006
        %v1427 = vunpack.c.l.b16 %v1007
        %v1428 = vunpack.c.l.b16 %v1008
        %v1429 = vunpack.c.l.b16 %v1009
        %v1430 = vunpack.c.l.b16 %v1010
        %v1431 = vunpack.c.l.b16 %v1011
        %v1432 = vunpack.c.l.b16 %v1012
        %v1433 = vunpack.c.l.b16 %v1013
        %v1434 = vunpack.c.l.b16 %v1014
        %v1435 = vunpack.c.l.b16 %v1015
        %v1436 = vunpack.c.l.b16 %v1016
        %v1437 = vunpack.c.l.b16 %v1017
        %v1438 = vunpack.c.l.b16 %v1018
        %v1439 = vunpack.c.l.b16 %v1019
        %v1440 = vunpack.c.l.b16 %v1020
        %v1441 = vunpack.c.l.b16 %v1021
        %v1442 = vunpack.c.l.b16 %v1022
        %v1443 = vunpack.c.l.b16 %v1023
        %v1444 = vunpack.c.l.b16 %v1024
        %v1445 = vunpack.c.l.b16 %v1025
        %v1446 = vunpack.c.l.b16 %v1026
        %v1447 = vunpack.c.l.b16 %v1027
        %v1448 = vunpack.c.l.b16 %v1028
        %v1449 = vunpack.c.l.b16 %v1029
        %v1450 = vunpack.c.l.b16 %v1030
        %v1451 = vunpack.c.l.b16 %v1031
        %v1452 = vunpack.c.l.b16 %v1032
        %v1453 = vunpack.c.l.b16 %v1033
        %v1454 = vunpack.c.l.b16 %v1034
        %v1455 = vunpack.c.l.b16 %v1035
        %v1456 = vunpack.c.l.b16 %v1036
        %v1457 = vunpack.c.l.b16 %v1037
        %v1458 = vunpack.c.l.b16 %v1038
        %v1459 = vunpack.c.l.b16 %v1039
        %v1460 = vunpack.c.l.b16 %v1040
        %v1461 = vunpack.c.l.b16 %v1041
        %v1462 = vunpack.c.l.b16 %v1042
        %v1463 = vunpack.c.l.b16 %v1043
        %v1464 = vunpack.c.l.b16 %v1044
        %v1465 = vunpack.c.l.b16 %v1045
        %v1466 = vunpack.c.l.b16 %v1046
        %v1467 = vunpack.c.l.b16 %v1047
        %v1468 = vunpack.c.l.b16 %v1048
        %v1469 = vunpack.c.l.b16 %v1049
        %v1470 = vunpack.c.l.b16 %v1050
        %v1471 = vunpack.c.l.b16 %v1051
        %v1472 = vunpack.c.l.b16 %v1052
        %v1473 = vunpack.c.l.b16 %v1053
        %v1474 = vunpack.c.l.b16 %v1054
        %v1475 = vunpack.c.l.b16 %v1055
        %v1476 = vunpack.c.l.b16 %v1056
        %v1477 = vunpack.c.l.b16 %v1057
        %v1478 = vunpack.c.l.b16 %v1058
        %v1479 = vunpack.c.l.b16 %v1059
        %v1480 = vunpack.c.l.b16 %v1060
        %v1481 = vunpack.c.l.b16 %v1061
        %v1482 = vunpack.c.l.b16 %v1062
        %v1483 = vunpack.c.l.b16 %v1063
        %v1484 = vunpack.c.l.b16 %v1064
        %v1485 = vunpack.c.l.b16 %v1065
        %v1486 = vunpack.c.l.b16 %v1066
        %v1487 = vunpack.c.l.b16 %v1067
        %v1488 = vunpack.c.l.b16 %v1068
        %v1489 = vunpack.c.l.b16 %v1069
        %v1490 = vunpack.c.l.b16 %v1070
        %v1491 = vunpack.c.l.b16 %v1071
        %v1492 = vunpack.c.l.b16 %v1072
        %v1493 = vunpack.c.l.b16 %v1073
        %v1494 = vunpack.c.l.b16 %v1074
        %v1495 = vunpack.c.l.b16 %v1075
        %v1496 = vunpack.c.l.b16 %v1076
        %v1497 = vunpack.c.l.b16 %v1077
        %v1498 = vunpack.c.l.b16 %v1078
        %v1499 = vunpack.c.l.b16 %v1079
        %v1500 = vunpack.c.l.b16 %v1080
        %v1501 = vunpack.c.l.b16 %v1081
        %v1502 = vunpack.c.l.b16 %v1082
        %v1503 = vunpack.c.l.b16 %v1083
        %v1504 = vunpack.c.l.b16 %v1084
        %v1505 = vunpack.c.l.b16 %v1085
        %v1506 = vunpack.c.l.b16 %v1086
        %v1507 = vunpack.c.l.b16 %v1087
        %v1508 = vunpack.c.l.b16 %v1088
        %v1509 = vunpack.c.l.b16 %v1089
        %v1510 = vunpack.c.l.b16 %v1090
        %v1511 = vunpack.c.l.b16 %v1091
        %v1512 = vunpack.c.l.b16 %v1092
        %v1513 = vunpack.c.l.b16 %v1093
        %v1514 = vunpack.c.l.b16 %v1094
        %v1515 = vunpack.c.l.b16 %v1095
        %v1516 = vunpack.c.l.b16 %v1096
        %v1517 = vunpack.c.l.b16 %v1097
        %v1518 = vunpack.c.l.b16 %v1098
        %v1519 = vunpack.c.l.b16 %v1099
        %v1520 = vunpack.c.l.b16 %v1100
        %v1521 = vunpack.c.l.b16 %v1101
        %v1522 = vunpack.c.l.b16 %v1102
        %v1523 = vunpack.c.l.b16 %v1103
        %v1524 = vunpack.c.l.b16 %v1104
        %v1525 = vunpack.c.l.b16 %v1105
        %v1526 = vunpack.c.l.b16 %v1106
        %v1527 = vunpack.c.l.b16 %v1107
        %v1528 = vunpack.c.l.b16 %v1108
        %v1529 = vunpack.c.l.b16 %v1109
        %v1530 = vunpack.c.l.b16 %v1110
        %v1531 = vunpack.c.l.b16 %v1111
        %v1532 = vunpack.c.l.b16 %v1112
        %v1533 = vunpack.c.l.b16 %v1113
        %v1534 = vunpack.c.l.b16 %v1114
        %v1535 = vunpack.c.l.b16 %v1115
        %v1536 = vunpack.c.l.b16 %v1116
        %v1537 = vunpack.c.l.b16 %v1117
        %v1538 = vunpack.c.l.b16 %v1118
        %v1539 = vunpack.c.l.b16 %v1119
        %v1540 = vunpack.c.l.b16 %v1120
        %v1541 = vunpack.c.l.b16 %v1121
        %v1542 = vunpack.c.l.b16 %v1122
        %v1543 = vunpack.c.l.b16 %v1123
        %v1544 = vunpack.c.l.b16 %v1124
        %v1545 = vunpack.c.l.b16 %v1125
        %v1546 = vunpack.c.l.b16 %v1126
        %v1547 = vunpack.c.l.b16 %v1127
        %v1548 = vunpack.c.l.b16 %v1128
        %v1549 = vunpack.c.l.b16 %v1129
        %v1550 = vunpack.c.l.b16 %v1130
        %v1551 = vunpack.c.l.b16 %v1131
        %v1552 = vunpack.c.l.b16 %v1132
        %v1553 = vunpack.c.l.b16 %v1133
        %v1554 = vunpack.c.l.b16 %v1134
        %v1555 = vunpack.c.l.b16 %v1135
        %v1556 = vunpack.c.l.b16 %v1136
        %v1557 = vunpack.c.l.b16 %v1137
        %v1558 = vunpack.c.l.b16 %v1138
        %v1559 = vunpack.c.l.b16 %v1139
        %v1560 = vunpack.c.l.b16 %v1140
        %v1561 = vunpack.c.l.b16 %v1141
        %v1562 = vunpack.c.l.b16 %v1142
        %v1563 = vunpack.c.l.b16 %v1143
        %v1564 = vunpack.c.l.b16 %v1144
        %v1565 = vunpack.c.l.b16 %v1145
        %v1566 = vunpack.c.l.b16 %v1146
        %v1567 = vunpack.c.l.b16 %v1147
        %v1568 = vunpack.c.l.b16 %v1148
        %v1569 = vunpack.c.l.b16 %v1149
        %v1570 = vunpack.c.l.b16 %v1150
        %v1571 = vunpack.c.l.b16 %v1151
        %v1572 = vunpack.c.l.b16 %v1152
        %v1573 = vunpack.c.l.b16 %v1153
        %v1574 = vunpack.c.l.b16 %v1154
        %v1575 = vunpack.c.l.b16 %v1155
        %v1576 = vunpack.c.l.b16 %v1156
        %v1577 = vunpack.c.l.b16 %v1157
        %v1578 = vunpack.c.l.b16 %v1158
        %v1579 = vpack.c.b16 %v1420, %v1419
        %v1580 = vpack.c.b16 %v1422, %v1421
        %v1581 = vpack.c.b16 %v1424, %v1423
        %v1582 = vpack.c.b16 %v1426, %v1425
        %v1583 = vpack.c.b16 %v1428, %v1427
        %v1584 = vpack.c.b16 %v1430, %v1429
        %v1585 = vpack.c.b16 %v1432, %v1431
        %v1586 = vpack.c.b16 %v1434, %v1433
        %v1587 = vpack.c.b16 %v1436, %v1435
        %v1588 = vpack.c.b16 %v1438, %v1437
        %v1589 = vpack.c.b16 %v1440, %v1439
        %v1590 = vpack.c.b16 %v1442, %v1441
        %v1591 = vpack.c.b16 %v1444, %v1443
        %v1592 = vpack.c.b16 %v1446, %v1445
        %v1593 = vpack.c.b16 %v1448, %v1447
        %v1594 = vpack.c.b16 %v1450, %v1449
        %v1595 = vpack.c.b16 %v1452, %v1451
        %v1596 = vpack.c.b16 %v1454, %v1453
        %v1597 = vpack.c.b16 %v1456, %v1455
        %v1598 = vpack.c.b16 %v1458, %v1457
        %v1599 = vpack.c.b16 %v1460, %v1459
        %v1600 = vpack.c.b16 %v1462, %v1461
        %v1601 = vpack.c.b16 %v1464, %v1463
        %v1602 = vpack.c.b16 %v1466, %v1465
        %v1603 = vpack.c.b16 %v1468, %v1467
        %v1604 = vpack.c.b16 %v1470, %v1469
        %v1605 = vpack.c.b16 %v1472, %v1471
        %v1606 = vpack.c.b16 %v1474, %v1473
        %v1607 = vpack.c.b16 %v1476, %v1475
        %v1608 = vpack.c.b16 %v1478, %v1477
        %v1609 = vpack.c.b16 %v1480, %v1479
        %v1610 = vpack.c.b16 %v1482, %v1481
        %v1611 = vpack.c.b16 %v1484, %v1483
        %v1612 = vpack.c.b16 %v1486, %v1485
        %v1613 = vpack.c.b16 %v1488, %v1487
        %v1614 = vpack.c.b16 %v1490, %v1489
        %v1615 = vpack.c.b16 %v1492, %v1491
        %v1616 = vpack.c.b16 %v1494, %v1493
        %v1617 = vpack.c.b16 %v1496, %v1495
        %v1618 = vpack.c.b16 %v1498, %v1497
        %v1619 = vpack.c.b16 %v1500, %v1499
        %v1620 = vpack.c.b16 %v1502, %v1501
        %v1621 = vpack.c.b16 %v1504, %v1503
        %v1622 = vpack.c.b16 %v1506, %v1505
        %v1623 = vpack.c.b16 %v1508, %v1507
        %v1624 = vpack.c.b16 %v1510, %v1509
        %v1625 = vpack.c.b16 %v1512, %v1511
        %v1626 = vpack.c.b16 %v1514, %v1513
        %v1627 = vpack.c.b16 %v1516, %v1515
        %v1628 = vpack.c.b16 %v1518, %v1517
        %v1629 = vpack.c.b16 %v1520, %v1519
        %v1630 = vpack.c.b16 %v1522, %v1521
        %v1631 = vpack.c.b16 %v1524, %v1523
        %v1632 = vpack.c.b16 %v1526, %v1525
        %v1633 = vpack.c.b16 %v1528, %v1527
        %v1634 = vpack.c.b16 %v1530, %v1529
        %v1635 = vpack.c.b16 %v1532, %v1531
        %v1636 = vpack.c.b16 %v1534, %v1533
        %v1637 = vpack.c.b16 %v1536, %v1535
        %v1638 = vpack.c.b16 %v1538, %v1537
        %v1639 = vpack.c.b16 %v1540, %v1539
        %v1640 = vpack.c.b16 %v1542, %v1541
        %v1641 = vpack.c.b16 %v1544, %v1543
        %v1642 = vpack.c.b16 %v1546, %v1545
        %v1643 = vpack.c.b16 %v1548, %v1547
        %v1644 = vpack.c.b16 %v1550, %v1549
        %v1645 = vpack.c.b16 %v1552, %v1551
        %v1646 = vpack.c.b16 %v1554, %v1553
        %v1647 = vpack.c.b16 %v1556, %v1555
        %v1648 = vpack.c.b16 %v1558, %v1557
        %v1649 = vpack.c.b16 %v1560, %v1559
        %v1650 = vpack.c.b16 %v1562, %v1561
        %v1651 = vpack.c.b16 %v1564, %v1563
        %v1652 = vpack.c.b16 %v1566, %v1565
        %v1653 = vpack.c.b16 %v1568, %v1567
        %v1654 = vpack.c.b16 %v1570, %v1569
        %v1655 = vpack.c.b16 %v1572, %v1571
        %v1656 = vpack.c.b16 %v1574, %v1573
        %v1657 = vpack.c.b16 %v1576, %v1575
        %v1658 = vpack.c.b16 %v1578, %v1577
        %1739 = vmatprep.subr.bf16.mxu0 0
        %1740 = vmatpush1.bf16.msra.mxu0 %v1579
        %1741 = vmatprep.subr.bf16.mxu0 0
        %1742 = vmatpush1.bf16.msra.mxu0 %v1580
        %1743 = vmatprep.subr.bf16.mxu0 0
        %1744 = vmatpush1.bf16.msra.mxu0 %v1581
        %1745 = vmatprep.subr.bf16.mxu0 0
        %1746 = vmatpush1.bf16.msra.mxu0 %v1582
        %1747 = vmatprep.subr.bf16.mxu0 0
        %1748 = vmatpush1.bf16.msra.mxu0 %v1583
        %1749 = vmatprep.subr.bf16.mxu0 0
        %1750 = vmatpush1.bf16.msra.mxu0 %v1584
        %1751 = vmatprep.subr.bf16.mxu0 0
        %1752 = vmatpush1.bf16.msra.mxu0 %v1585
        %1753 = vmatprep.subr.bf16.mxu0 0
        %1754 = vmatpush1.bf16.msra.mxu0 %v1586
        %1755 = vmatprep.subr.bf16.mxu0 0
        %1756 = vmatpush1.bf16.msra.mxu0 %v1587
        %1757 = vmatprep.subr.bf16.mxu0 0
        %1758 = vmatpush1.bf16.msra.mxu0 %v1588
        %1759 = vmatprep.subr.bf16.mxu0 0
        %1760 = vmatpush1.bf16.msra.mxu0 %v1589
        %1761 = vmatprep.subr.bf16.mxu0 0
        %1762 = vmatpush1.bf16.msra.mxu0 %v1590
        %1763 = vmatprep.subr.bf16.mxu0 0
        %1764 = vmatpush1.bf16.msra.mxu0 %v1591
        %1765 = vmatprep.subr.bf16.mxu0 0
        %1766 = vmatpush1.bf16.msra.mxu0 %v1592
        %1767 = vmatprep.subr.bf16.mxu0 0
        %1768 = vmatpush1.bf16.msra.mxu0 %v1593
        %1769 = vmatprep.subr.bf16.mxu0 0
        %1770 = vmatpush1.bf16.msra.mxu0 %v1594
        %1771 = vmatprep.mubr.bf16.mxu0 %v1220
        %1772 = vmatmul.mubr.bf16.gmra.mrb[0].mxu0 %v1219
        %v1773 = vpop.f32.mrb[0].mxu0
        %v1774 = vadd.f32 0.0, %v1773
        %v1775 = vpop.f32.mrb[0].mxu0
        %v1776 = vpop.f32.mrb[0].mxu0
        %v1777 = vadd.f32 0.0, %v1776
        %v1778 = vpop.f32.mrb[0].mxu0
        %1779 = vmatprep.mubr.bf16.mxu0 %v1230
        %1780 = vmatmul.mubr.bf16.gmra.mrb[0].mxu0 %v1229
        %v1781 = vpop.f32.mrb[0].mxu0
        %v1782 = vadd.f32 0.0, %v1781
        %v1783 = vpop.f32.mrb[0].mxu0
        %v1784 = vpop.f32.mrb[0].mxu0
        %v1785 = vadd.f32 0.0, %v1784
        %v1786 = vpop.f32.mrb[0].mxu0
        %1787 = vdwg.mxu0
        %1788 = vmatprep.subr.bf16.mxu0 0
        %1789 = vmatpush1.bf16.msra.mxu0 %v1595
        %1790 = vmatprep.subr.bf16.mxu0 0
        %1791 = vmatpush1.bf16.msra.mxu0 %v1596
        %1792 = vmatprep.subr.bf16.mxu0 0
        %1793 = vmatpush1.bf16.msra.mxu0 %v1597
        %1794 = vmatprep.subr.bf16.mxu0 0
        %1795 = vmatpush1.bf16.msra.mxu0 %v1598
        %1796 = vmatprep.subr.bf16.mxu0 0
        %1797 = vmatpush1.bf16.msra.mxu0 %v1599
        %1798 = vmatprep.subr.bf16.mxu0 0
        %1799 = vmatpush1.bf16.msra.mxu0 %v1600
        %1800 = vmatprep.subr.bf16.mxu0 0
        %1801 = vmatpush1.bf16.msra.mxu0 %v1601
        %1802 = vmatprep.subr.bf16.mxu0 0
        %1803 = vmatpush1.bf16.msra.mxu0 %v1602
        %1804 = vmatprep.subr.bf16.mxu0 0
        %1805 = vmatpush1.bf16.msra.mxu0 %v1603
        %1806 = vmatprep.subr.bf16.mxu0 0
        %1807 = vmatpush1.bf16.msra.mxu0 %v1604
        %1808 = vmatprep.subr.bf16.mxu0 0
        %1809 = vmatpush1.bf16.msra.mxu0 %v1605
        %1810 = vmatprep.subr.bf16.mxu0 0
        %1811 = vmatpush1.bf16.msra.mxu0 %v1606
        %1812 = vmatprep.subr.bf16.mxu0 0
        %1813 = vmatpush1.bf16.msra.mxu0 %v1607
        %1814 = vmatprep.subr.bf16.mxu0 0
        %1815 = vmatpush1.bf16.msra.mxu0 %v1608
        %1816 = vmatprep.subr.bf16.mxu0 0
        %1817 = vmatpush1.bf16.msra.mxu0 %v1609
        %1818 = vmatprep.subr.bf16.mxu0 0
        %1819 = vmatpush1.bf16.msra.mxu0 %v1610
        %1820 = vmatprep.mubr.bf16.mxu0 %v1222
        %1821 = vmatmul.mubr.bf16.gmra.mrb[0].mxu0 %v1221
        %v1822 = vpop.f32.mrb[0].mxu0
        %v1823 = vadd.f32 %v1774, %v1822
        %v1824 = vpop.f32.mrb[0].mxu0
        %v1825 = vpop.f32.mrb[0].mxu0
        %v1826 = vadd.f32 %v1777, %v1825
        %v1827 = vpop.f32.mrb[0].mxu0
        %1828 = vmatprep.mubr.bf16.mxu0 %v1232
        %1829 = vmatmul.mubr.bf16.gmra.mrb[0].mxu0 %v1231
        %v1830 = vpop.f32.mrb[0].mxu0
        %v1831 = vadd.f32 %v1782, %v1830
        %v1832 = vpop.f32.mrb[0].mxu0
        %v1833 = vpop.f32.mrb[0].mxu0
        %v1834 = vadd.f32 %v1785, %v1833
        %v1835 = vpop.f32.mrb[0].mxu0
        %1836 = vdwg.mxu0
        %1837 = vmatprep.subr.bf16.mxu0 0
        %1838 = vmatpush1.bf16.msra.mxu0 %v1611
        %1839 = vmatprep.subr.bf16.mxu0 0
        %1840 = vmatpush1.bf16.msra.mxu0 %v1612
        %1841 = vmatprep.subr.bf16.mxu0 0
        %1842 = vmatpush1.bf16.msra.mxu0 %v1613
        %1843 = vmatprep.subr.bf16.mxu0 0
        %1844 = vmatpush1.bf16.msra.mxu0 %v1614
        %1845 = vmatprep.subr.bf16.mxu0 0
        %1846 = vmatpush1.bf16.msra.mxu0 %v1615
        %1847 = vmatprep.subr.bf16.mxu0 0
        %1848 = vmatpush1.bf16.msra.mxu0 %v1616
        %1849 = vmatprep.subr.bf16.mxu0 0
        %1850 = vmatpush1.bf16.msra.mxu0 %v1617
        %1851 = vmatprep.subr.bf16.mxu0 0
        %1852 = vmatpush1.bf16.msra.mxu0 %v1618
        %1853 = vmatprep.subr.bf16.mxu0 0
        %1854 = vmatpush1.bf16.msra.mxu0 %v1619
        %1855 = vmatprep.subr.bf16.mxu0 0
        %1856 = vmatpush1.bf16.msra.mxu0 %v1620
        %1857 = vmatprep.subr.bf16.mxu0 0
        %1858 = vmatpush1.bf16.msra.mxu0 %v1621
        %1859 = vmatprep.subr.bf16.mxu0 0
        %1860 = vmatpush1.bf16.msra.mxu0 %v1622
        %1861 = vmatprep.subr.bf16.mxu0 0
        %1862 = vmatpush1.bf16.msra.mxu0 %v1623
        %1863 = vmatprep.subr.bf16.mxu0 0
        %1864 = vmatpush1.bf16.msra.mxu0 %v1624
        %1865 = vmatprep.subr.bf16.mxu0 0
        %1866 = vmatpush1.bf16.msra.mxu0 %v1625
        %1867 = vmatprep.subr.bf16.mxu0 0
        %1868 = vmatpush1.bf16.msra.mxu0 %v1626
        %1869 = vmatprep.mubr.bf16.mxu0 %v1224
        %1870 = vmatmul.mubr.bf16.gmra.mrb[0].mxu0 %v1223
        %v1871 = vpop.f32.mrb[0].mxu0
        %v1872 = vadd.f32 %v1823, %v1871
        %v1873 = vpop.f32.mrb[0].mxu0
        %v1874 = vpop.f32.mrb[0].mxu0
        %v1875 = vadd.f32 %v1826, %v1874
        %v1876 = vpop.f32.mrb[0].mxu0
        %1877 = vmatprep.mubr.bf16.mxu0 %v1234
        %1878 = vmatmul.mubr.bf16.gmra.mrb[0].mxu0 %v1233
        %v1879 = vpop.f32.mrb[0].mxu0
        %v1880 = vadd.f32 %v1831, %v1879
        %v1881 = vpop.f32.mrb[0].mxu0
        %v1882 = vpop.f32.mrb[0].mxu0
        %v1883 = vadd.f32 %v1834, %v1882
        %v1884 = vpop.f32.mrb[0].mxu0
        %1885 = vdwg.mxu0
        %1886 = vmatprep.subr.bf16.mxu0 0
        %1887 = vmatpush1.bf16.msra.mxu0 %v1627
        %1888 = vmatprep.subr.bf16.mxu0 0
        %1889 = vmatpush1.bf16.msra.mxu0 %v1628
        %1890 = vmatprep.subr.bf16.mxu0 0
        %1891 = vmatpush1.bf16.msra.mxu0 %v1629
        %1892 = vmatprep.subr.bf16.mxu0 0
        %1893 = vmatpush1.bf16.msra.mxu0 %v1630
        %1894 = vmatprep.subr.bf16.mxu0 0
        %1895 = vmatpush1.bf16.msra.mxu0 %v1631
        %1896 = vmatprep.subr.bf16.mxu0 0
        %1897 = vmatpush1.bf16.msra.mxu0 %v1632
        %1898 = vmatprep.subr.bf16.mxu0 0
        %1899 = vmatpush1.bf16.msra.mxu0 %v1633
        %1900 = vmatprep.subr.bf16.mxu0 0
        %1901 = vmatpush1.bf16.msra.mxu0 %v1634
        %1902 = vmatprep.subr.bf16.mxu0 0
        %1903 = vmatpush1.bf16.msra.mxu0 %v1635
        %1904 = vmatprep.subr.bf16.mxu0 0
        %1905 = vmatpush1.bf16.msra.mxu0 %v1636
        %1906 = vmatprep.subr.bf16.mxu0 0
        %1907 = vmatpush1.bf16.msra.mxu0 %v1637
        %1908 = vmatprep.subr.bf16.mxu0 0
        %1909 = vmatpush1.bf16.msra.mxu0 %v1638
        %1910 = vmatprep.subr.bf16.mxu0 0
        %1911 = vmatpush1.bf16.msra.mxu0 %v1639
        %1912 = vmatprep.subr.bf16.mxu0 0
        %1913 = vmatpush1.bf16.msra.mxu0 %v1640
        %1914 = vmatprep.subr.bf16.mxu0 0
        %1915 = vmatpush1.bf16.msra.mxu0 %v1641
        %1916 = vmatprep.subr.bf16.mxu0 0
        %1917 = vmatpush1.bf16.msra.mxu0 %v1642
        %1918 = vmatprep.mubr.bf16.mxu0 %v1226
        %1919 = vmatmul.mubr.bf16.gmra.mrb[0].mxu0 %v1225
        %v1920 = vpop.f32.mrb[0].mxu0
        %v1921 = vadd.f32 %v1872, %v1920
        %v1922 = vpop.f32.mrb[0].mxu0
        %v1923 = vpop.f32.mrb[0].mxu0
        %v1924 = vadd.f32 %v1875, %v1923
        %v1925 = vpop.f32.mrb[0].mxu0
        %1926 = vmatprep.mubr.bf16.mxu0 %v1236
        %1927 = vmatmul.mubr.bf16.gmra.mrb[0].mxu0 %v1235
        %v1928 = vpop.f32.mrb[0].mxu0
        %v1929 = vadd.f32 %v1880, %v1928
        %v1930 = vpop.f32.mrb[0].mxu0
        %v1931 = vpop.f32.mrb[0].mxu0
        %v1932 = vadd.f32 %v1883, %v1931
        %v1933 = vpop.f32.mrb[0].mxu0
        %1934 = vdwg.mxu0
        %1935 = vmatprep.subr.bf16.mxu0 0
        %1936 = vmatpush1.bf16.msra.mxu0 %v1643
        %1937 = vmatprep.subr.bf16.mxu0 0
        %1938 = vmatpush1.bf16.msra.mxu0 %v1644
        %1939 = vmatprep.subr.bf16.mxu0 0
        %1940 = vmatpush1.bf16.msra.mxu0 %v1645
        %1941 = vmatprep.subr.bf16.mxu0 0
        %1942 = vmatpush1.bf16.msra.mxu0 %v1646
        %1943 = vmatprep.subr.bf16.mxu0 0
        %1944 = vmatpush1.bf16.msra.mxu0 %v1647
        %1945 = vmatprep.subr.bf16.mxu0 0
        %1946 = vmatpush1.bf16.msra.mxu0 %v1648
        %1947 = vmatprep.subr.bf16.mxu0 0
        %1948 = vmatpush1.bf16.msra.mxu0 %v1649
        %1949 = vmatprep.subr.bf16.mxu0 0
        %1950 = vmatpush1.bf16.msra.mxu0 %v1650
        %1951 = vmatprep.subr.bf16.mxu0 0
        %1952 = vmatpush1.bf16.msra.mxu0 %v1651
        %1953 = vmatprep.subr.bf16.mxu0 0
        %1954 = vmatpush1.bf16.msra.mxu0 %v1652
        %1955 = vmatprep.subr.bf16.mxu0 0
        %1956 = vmatpush1.bf16.msra.mxu0 %v1653
        %1957 = vmatprep.subr.bf16.mxu0 0
        %1958 = vmatpush1.bf16.msra.mxu0 %v1654
        %1959 = vmatprep.subr.bf16.mxu0 0
        %1960 = vmatpush1.bf16.msra.mxu0 %v1655
        %1961 = vmatprep.subr.bf16.mxu0 0
        %1962 = vmatpush1.bf16.msra.mxu0 %v1656
        %1963 = vmatprep.subr.bf16.mxu0 0
        %1964 = vmatpush1.bf16.msra.mxu0 %v1657
        %1965 = vmatprep.subr.bf16.mxu0 0
        %1966 = vmatpush1.bf16.msra.mxu0 %v1658
        %1967 = vmatprep.mubr.bf16.mxu0 %v1228
        %1968 = vmatmul.mubr.bf16.gmra.mrb[0].mxu0 %v1227
        %v1969 = vpop.f32.mrb[0].mxu0
        %v1970 = vadd.f32 %v1921, %v1969
        %v1971 = vpop.f32.mrb[0].mxu0
        %v1972 = vpop.f32.mrb[0].mxu0
        %v1973 = vadd.f32 %v1924, %v1972
        %v1974 = vpop.f32.mrb[0].mxu0
        %1975 = vmatprep.mubr.bf16.mxu0 %v1238
        %1976 = vmatmul.mubr.bf16.gmra.mrb[0].mxu0 %v1237
        %v1977 = vpop.f32.mrb[0].mxu0
        %v1978 = vadd.f32 %v1929, %v1977
        %v1979 = vpop.f32.mrb[0].mxu0
        %v1980 = vpop.f32.mrb[0].mxu0
        %v1981 = vadd.f32 %v1932, %v1980
        %v1982 = vpop.f32.mrb[0].mxu0
        %1983 = vdwg.mxu0
        %v1984 = vadd.f32 %v975, %v1970
        %v1985 = vadd.f32 %v976, %v1973
        %v1986 = vadd.f32 %v977, %v1978
        %v1987 = vadd.f32 %v978, %v1981
        %1988 = vst [vmem:[#allocation2] sm:$0xff] %v1984
        %1989 = vst [vmem:[#allocation2 + $0x8] sm:$0xff] %v1985
        %1990 = vst [vmem:[#allocation2 + $0x10] sm:$0xff] %v1986
        %1991 = vst [vmem:[#allocation2 + $0x18] sm:$0xff] %v1987
        // Predicated region
        $region82: #{_lambda_.12} parent=72 // pred_check
          %p1992 = pneg %p967
        $region83: #{_lambda_.12} parent=72 // pred_check_branch
          %1994 = sbr.rel (%p1992) target = $region85
        $region84: #{_lambda_.12} parent=72 // pred_region
          %v1995 = vld [vmem:[#allocation2] sm:$0xff]
          %v1996 = vld [vmem:[#allocation2 + $0x8] sm:$0xff]
          %v1997 = vld [vmem:[#allocation2 + $0x10] sm:$0xff]
          %v1998 = vld [vmem:[#allocation2 + $0x18] sm:$0xff]
          %v1999 = vld [vmem:[%s961] sm:$0x1]
          %v2001 = vlaneseq
          %v2002 = vshrl.u32 %v2001, 7
          %v2003 = vsub.s32 0, %v2002
          %v2004 = vrot.slane %v1999, %v2003
          %v2006 = vmul.f32 %v1995, %v2004
          %v2007 = vmul.f32 %v1996, %v2004
          %v2008 = vmul.f32 %v1997, %v2004
          %v2009 = vmul.f32 %v1998, %v2004
          %v2010 = vld [vmem:[%s964] sm:$0x1]
          %v2012 = vlaneseq
          %v2013 = vshrl.u32 %v2012, 7
          %v2014 = vsub.s32 0, %v2013
          %v2015 = vrot.slane %v2010, %v2014
          %v2017 = vadd.f32 %v2006, %v2015
          %v2018 = vadd.f32 %v2007, %v2015
          %v2019 = vadd.f32 %v2008, %v2015
          %v2020 = vadd.f32 %v2009, %v2015
          %v2021 = vmax.f32 %v2017, 0.0
          %v2022 = vmax.f32 %v2018, 0.0
          %v2023 = vmax.f32 %v2019, 0.0
          %v2024 = vmax.f32 %v2020, 0.0
          %v2025 = vpack.c.bf16 %v2022, %v2021
          %v2026 = vpack.c.bf16 %v2024, %v2023
          %v2029 = vunpack.c.l.b16 %v2025
          %v2030 = vunpack.c.h.b16 %v2025
          %v2031 = vunpack.c.l.b16 %v2026
          %v2032 = vunpack.c.h.b16 %v2026
          %v2033 = vpack.c.b16 %v2029, %v2029
          %v2034 = vpack.c.b16 %v2030, %v2030
          %v2035 = vpack.c.b16 %v2031, %v2031
          %v2036 = vpack.c.b16 %v2032, %v2032
          %2041 = vst [vmem:[%s945] sm:$0xf] %v2033
          %2042 = vst [vmem:[%s945 + $0x4] sm:$0xf] %v2034
          %2043 = vst [vmem:[%s945 + $0x8] sm:$0xf] %v2035
          %2044 = vst [vmem:[%s945 + $0xc] sm:$0xf] %v2036
        $region85: #{_lambda_.12} parent=72 // pred_fallthru
          _
        %s2045 = sand.u32 %s152, 1
        %s2046 = sand.u32 %s152, 1
        %s2047 = smul.addr %s2046, 16
        %s2048 = scalar_lea.vmem [#allocation4], %s2047
        // Predicated region
        $region86: #{_lambda_.12} parent=72 // pred_check
          %p2049 = pneg %p162
        $region87: #{_lambda_.12} parent=72 // pred_check_branch
          %2051 = sbr.rel (%p2049) target = $region89
        $region88: #{_lambda_.12} parent=72 // pred_region
          %s2052 = smul.u32 4, %s20
          %s2053 = smul.addr %s2052, 2
          %s2054 = sadd.s32 %s21, %s2053
          %s2055 = smul.addr %s2054, 4
          %s2056 = scalar_lea.vmem %s4, %s2055
          // Predicated region
          $region90: #{_lambda_.12} parent=88 // pred_check
            _
          $region91: #{_lambda_.12} parent=88 // pred_check_branch
            %2058 = sbr.rel (0) target = $region93
          $region92: #{_lambda_.12} parent=88 // pred_region
            // Predicated region
            $region94: #{_lambda_.12} parent=92 // pred_check
              _
            $region95: #{_lambda_.12} parent=92 // pred_check_branch
              %2060 = sbr.rel target = $region97
            $region96: #{_lambda_.12} parent=92 // pred_region
              // Predicated region
              $region109: #{_lambda_.12} parent=96 // pred_check
                _
              $region110: #{_lambda_.12} parent=96 // pred_check_branch
                %2081 = sbr.rel (0) target = $region112
              $region111: #{_lambda_.12} parent=96 // pred_region
                loop: start=0, step=1, limit=1
                $region113: #{_lambda_.12} parent=111 // loop_pre_header
                  _
                $region114: #{_lambda_.12} parent=111 // loop_header
                  %s2083 = sphi 0, %s2087
                  %p2084 = scmp.ge.s32.totalorder %s2083, 1
                  %s2088 = sphi %s2048, %s2048
                  %s2089 = sphi %s2056, %s2056
                $region115: #{_lambda_.12} parent=111 // loop_header_branch
                  %2086 = sbr.rel (%p2084) target = $region119
                $region116: #{_lambda_.12} parent=111 // loop_body
                  _
                $region117: #{_lambda_.12} parent=111 // loop_footer
                  %s2087 = sadd.s32 1, %s2083
                $region118: #{_lambda_.12} parent=111 // loop_footer_branch
                  %2082 = sbr.rel target = $region114
                $region119: #{_lambda_.12} parent=111 // loop_exit
                  _
                loop: start=0, step=1, limit=1
                $region120: #{_lambda_.12} parent=111 // loop_pre_header
                  _
                $region121: #{_lambda_.12} parent=111 // loop_header
                  %s2092 = sphi 0, %s2096
                  %p2093 = scmp.ge.s32.totalorder %s2092, 1
                  %s2097 = sphi %s2048, %s2048
                  %s2098 = sphi %s2056, %s2056
                $region122: #{_lambda_.12} parent=111 // loop_header_branch
                  %2095 = sbr.rel (%p2093) target = $region126
                $region123: #{_lambda_.12} parent=111 // loop_body
                  %v2099 = vld [vmem:[%s2097] sm:$0xf]
                  %2100 = vst [vmem:[%s2098] sm:$0xf] %v2099
                  %v2101 = vld [vmem:[%s2097 + $0x4] sm:$0xf]
                  %2102 = vst [vmem:[%s2098 + $0x8] sm:$0xf] %v2101
                  %v2103 = vld [vmem:[%s2097 + $0x8] sm:$0xf]
                  %2104 = vst [vmem:[%s2098 + $0x10] sm:$0xf] %v2103
                  %v2105 = vld [vmem:[%s2097 + $0xc] sm:$0xf]
                  %2106 = vst [vmem:[%s2098 + $0x18] sm:$0xf] %v2105
                $region124: #{_lambda_.12} parent=111 // loop_footer
                  %s2096 = sadd.s32 1, %s2092
                $region125: #{_lambda_.12} parent=111 // loop_footer_branch
                  %2091 = sbr.rel target = $region121
                $region126: #{_lambda_.12} parent=111 // loop_exit
                  _
              $region112: #{_lambda_.12} parent=96 // pred_fallthru
                _
            $region97: #{_lambda_.12} parent=92 // pred_fallthru
              _
            // Predicated region
            $region98: #{_lambda_.12} parent=92 // pred_check
              _
            $region99: #{_lambda_.12} parent=92 // pred_check_branch
              %2062 = sbr.rel (0) target = $region101
            $region100: #{_lambda_.12} parent=92 // pred_region
              loop: start=0, step=1, limit=1
              $region102: #{_lambda_.12} parent=100 // loop_pre_header
                _
              $region103: #{_lambda_.12} parent=100 // loop_header
                %s2065 = sphi 0, %s2069
                %p2066 = scmp.ge.s32.totalorder %s2065, 1
                %s2070 = sphi %s2048, %s2048
                %s2071 = sphi %s2056, %s2056
              $region104: #{_lambda_.12} parent=100 // loop_header_branch
                %2068 = sbr.rel (%p2066) target = $region108
              $region105: #{_lambda_.12} parent=100 // loop_body
                %v2072 = vld [vmem:[%s2070] sm:$0xf]
                %2073 = vst [vmem:[%s2071] sm:$0xf] %v2072
                %v2074 = vld [vmem:[%s2070 + $0x4] sm:$0xf]
                %2075 = vst [vmem:[%s2071 + $0x8] sm:$0xf] %v2074
                %v2076 = vld [vmem:[%s2070 + $0x8] sm:$0xf]
                %2077 = vst [vmem:[%s2071 + $0x10] sm:$0xf] %v2076
                %v2078 = vld [vmem:[%s2070 + $0xc] sm:$0xf]
                %2079 = vst [vmem:[%s2071 + $0x18] sm:$0xf] %v2078
              $region106: #{_lambda_.12} parent=100 // loop_footer
                %s2069 = sadd.s32 1, %s2065
              $region107: #{_lambda_.12} parent=100 // loop_footer_branch
                %2064 = sbr.rel target = $region103
              $region108: #{_lambda_.12} parent=100 // loop_exit
                _
            $region101: #{_lambda_.12} parent=92 // pred_fallthru
              _
          $region93: #{_lambda_.12} parent=88 // pred_fallthru
            _
          %2107 = vnop
        $region89: #{_lambda_.12} parent=72 // pred_fallthru
          _
      $region73: #{_lambda_.12} parent=5 // pred_fallthru
        _
      %p2108 = scmp.le.s32.totalorder 2, %s10
      // Predicated region
      $region127: #{_lambda_.12} parent=5 // pred_check
        %p2109 = pneg %p2108
      $region128: #{_lambda_.12} parent=5 // pred_check_branch
        %2111 = sbr.rel (%p2109) target = $region130
      $region129: #{_lambda_.12} parent=5 // pred_region
        %s2112 = ssub.s32 %s10, 2
        // Predicated region
        $region131: #{_lambda_.12} parent=129 // pred_check
          %p2113 = pneg %p168
        $region132: #{_lambda_.12} parent=129 // pred_check_branch
          %2115 = sbr.rel (%p2113) target = $region134
        $region133: #{_lambda_.12} parent=129 // pred_region
          %s2116 = sand.u32 %s153, 1
          %s2117 = sand.u32 %s153, 1
          %s2118 = smul.addr %s2117, 16
          %s2119 = scalar_lea.vmem [#allocation4], %s2118
        $region134: #{_lambda_.12} parent=129 // pred_fallthru
          _
      $region130: #{_lambda_.12} parent=5 // pred_fallthru
        _
    $region6: #{_lambda_.12} parent=1 // loop_footer
      %s14 = sadd.s32 1, %s10
    $region7: #{_lambda_.12} parent=1 // loop_footer_branch
      %9 = sbr.rel target = $region3
    $region8: #{_lambda_.12} parent=1 // loop_exit
      _

// kernel: _lambda_.13
$region0: #{_lambda_.13}
  #allocation0 [shape = 'u32[]', space=smem, size = 0x4, offset = 0x4, fixed_abs, tag = 'smem constant byte address 0x4 - core index']
  #allocation1 [shape = 'u32[144,128]{1,0:T(1,128)}', space=vmem, size = 0x12000, scoped, tag = 'internal scratch']
  #allocation2 [shape = 'f32[32,128]{1,0:T(8,128)}', space=vmem, size = 0x4000, scoped, tag = 'scratch operand']
  %s0 = inlined_call_operand.vmem [shape: bf16[32,2304], index: 0, kind: input, shape index: {}]
  %s1 = inlined_call_operand.vmem [shape: bf16[2304,256], index: 1, kind: input, shape index: {}]
  %s2 = inlined_call_operand.vmem [shape: f32[1,256], index: 2, kind: input, shape index: {}]
  %s3 = inlined_call_operand.vmem [shape: f32[1,256], index: 3, kind: input, shape index: {}]
  %s4 = inlined_call_operand.vmem [shape: bf16[32,256], index: 4, kind: output, shape index: {}]
  %s5 = sld [smem:[#allocation0]]
  $region161: #{_lambda_.13} parent=0
    _
  %s7 = ssub.s32 1, %s5
  %s8 = scalar_select 0, %s7, %s5
  $region1: #{_lambda_.13} parent=0
    #allocation3 [shape = 'u8[147456]{0}', space=vmem, size = 0x24000, scoped, tag = 'input window, operand 0']
    #allocation4 [shape = 'u8[589824]{0}', space=vmem, size = 0x90000, scoped, tag = 'input window, operand 1']
    #allocation5 [shape = 'u8[16384]{0}', space=vmem, size = 0x4000, scoped, tag = 'output window, operand 0']
    loop: start=0, step=1, limit=6
    $region2: #{_lambda_.13} parent=1 // loop_pre_header
      _
    $region3: #{_lambda_.13} parent=1 // loop_header
      %s10 = sphi 0, %s14
      %p11 = scmp.ge.s32.totalorder %s10, 6
      %s17 = sphi 0, %s36
      %s18 = sphi 0, %s32
      %s19 = sphi 0, %s28
      %s20 = sphi 0, %s17
      %s21 = sphi 0, %s18
      %s22 = sphi 0, %s19
      %s23 = sphi 0, %s20
      %s24 = sphi 0, %s21
      %s25 = sphi 0, %s22
      %s41 = sphi 0, %s43
      %s44 = sphi 0, %s41
      %s45 = sphi 0, %s44
      %s61 = sphi 0, %s45
      %s69 = sphi 0, %s71
      %s72 = sphi 0, %s69
      %s73 = sphi 0, %s72
      %s89 = sphi 0, %s73
      %s95 = sphi 0, %s97
      %s98 = sphi 0, %s95
      %s99 = sphi 0, %s98
      %s115 = sphi 0, %s99
      %s121 = sphi 0, %s123
      %s124 = sphi 0, %s121
      %s125 = sphi 0, %s124
      %s141 = sphi 0, %s125
      %s149 = sphi 0, %s151
      %s152 = sphi 0, %s149
      %s153 = sphi 0, %s152
      %s169 = sphi 0, %s153
    $region4: #{_lambda_.13} parent=1 // loop_header_branch
      %13 = sbr.rel (%p11) target = $region8
    $region5: #{_lambda_.13} parent=1 // loop_body
      %s15 = ssub.s32 %s10, 1
      %s16 = ssub.s32 %s10, 2
      %s26 = sadd.s32 1, %s19
      %p27 = scmp.ge.s32.totalorder %s26, 2
      %s28 = scalar_select %p27, 0, %s26
      %s29 = sadd.s32 1, %s18
      %s30 = scalar_select %p27, %s29, %s18
      %p31 = scmp.ge.s32.totalorder %s30, 2
      %s32 = scalar_select %p31, 0, %s30
      %s33 = sadd.s32 1, %s17
      %s34 = scalar_select %p31, %s33, %s17
      %p35 = scmp.ge.s32.totalorder %s34, 1
      %s36 = scalar_select %p35, 0, %s34
      %s37 = ssub.s32 %s17, %s36
      %s38 = ssub.s32 %s19, %s28
      %s39 = sor.u32 %s37, %s38
      %p40 = scmp.eq.s32.totalorder %s39, 0
      %s42 = sadd.s32 %s41, 1
      %s43 = scalar_select %p40, %s41, %s42
      %p46 = pneg %p40
      %p47 = scmp.eq.s32.totalorder %s10, 3
      %p48 = por %p46, %p47
      %p49 = scmp.ne.s32.totalorder %s41, %s44
      %p50 = scmp.eq.s32.totalorder %s10, 0
      %p51 = por %p49, %p50
      %p52 = scmp.ne.s32.totalorder %s41, %s44
      %p53 = scmp.eq.s32.totalorder %s15, 3
      %p54 = por %p52, %p53
      %p55 = scmp.ne.s32.totalorder %s44, %s45
      %p56 = scmp.eq.s32.totalorder %s15, 0
      %p57 = por %p55, %p56
      %p58 = scmp.ne.s32.totalorder %s44, %s45
      %p59 = scmp.eq.s32.totalorder %s16, 3
      %p60 = por %p58, %p59
      %p62 = scmp.ne.s32.totalorder %s45, %s61
      %p63 = scmp.eq.s32.totalorder %s16, 0
      %p64 = por %p62, %p63
      %s65 = ssub.s32 %s19, %s28
      %s66 = ssub.s32 %s18, %s32
      %s67 = sor.u32 %s65, %s66
      %p68 = scmp.eq.s32.totalorder %s67, 0
      %s70 = sadd.s32 %s69, 1
      %s71 = scalar_select %p68, %s69, %s70
      %p74 = pneg %p68
      %p75 = scmp.eq.s32.totalorder %s10, 3
      %p76 = por %p74, %p75
      %p77 = scmp.ne.s32.totalorder %s69, %s72
      %p78 = scmp.eq.s32.totalorder %s10, 0
      %p79 = por %p77, %p78
      %p80 = scmp.ne.s32.totalorder %s69, %s72
      %p81 = scmp.eq.s32.totalorder %s15, 3
      %p82 = por %p80, %p81
      %p83 = scmp.ne.s32.totalorder %s72, %s73
      %p84 = scmp.eq.s32.totalorder %s15, 0
      %p85 = por %p83, %p84
      %p86 = scmp.ne.s32.totalorder %s72, %s73
      %p87 = scmp.eq.s32.totalorder %s16, 3
      %p88 = por %p86, %p87
      %p90 = scmp.ne.s32.totalorder %s73, %s89
      %p91 = scmp.eq.s32.totalorder %s16, 0
      %p92 = por %p90, %p91
      %s93 = ssub.s32 %s18, %s32
      %p94 = scmp.eq.s32.totalorder %s93, 0
      %s96 = sadd.s32 %s95, 1
      %s97 = scalar_select %p94, %s95, %s96
      %p100 = pneg %p94
      %p101 = scmp.eq.s32.totalorder %s10, 3
      %p102 = por %p100, %p101
      %p103 = scmp.ne.s32.totalorder %s95, %s98
      %p104 = scmp.eq.s32.totalorder %s10, 0
      %p105 = por %p103, %p104
      %p106 = scmp.ne.s32.totalorder %s95, %s98
      %p107 = scmp.eq.s32.totalorder %s15, 3
      %p108 = por %p106, %p107
      %p109 = scmp.ne.s32.totalorder %s98, %s99
      %p110 = scmp.eq.s32.totalorder %s15, 0
      %p111 = por %p109, %p110
      %p112 = scmp.ne.s32.totalorder %s98, %s99
      %p113 = scmp.eq.s32.totalorder %s16, 3
      %p114 = por %p112, %p113
      %p116 = scmp.ne.s32.totalorder %s99, %s115
      %p117 = scmp.eq.s32.totalorder %s16, 0
      %p118 = por %p116, %p117
      %s119 = ssub.s32 %s18, %s32
      %p120 = scmp.eq.s32.totalorder %s119, 0
      %s122 = sadd.s32 %s121, 1
      %s123 = scalar_select %p120, %s121, %s122
      %p126 = pneg %p120
      %p127 = scmp.eq.s32.totalorder %s10, 3
      %p128 = por %p126, %p127
      %p129 = scmp.ne.s32.totalorder %s121, %s124
      %p130 = scmp.eq.s32.totalorder %s10, 0
      %p131 = por %p129, %p130
      %p132 = scmp.ne.s32.totalorder %s121, %s124
      %p133 = scmp.eq.s32.totalorder %s15, 3
      %p134 = por %p132, %p133
      %p135 = scmp.ne.s32.totalorder %s124, %s125
      %p136 = scmp.eq.s32.totalorder %s15, 0
      %p137 = por %p135, %p136
      %p138 = scmp.ne.s32.totalorder %s124, %s125
      %p139 = scmp.eq.s32.totalorder %s16, 3
      %p140 = por %p138, %p139
      %p142 = scmp.ne.s32.totalorder %s125, %s141
      %p143 = scmp.eq.s32.totalorder %s16, 0
      %p144 = por %p142, %p143
      %s145 = ssub.s32 %s17, %s36
      %s146 = ssub.s32 %s18, %s32
      %s147 = sor.u32 %s145, %s146
      %p148 = scmp.eq.s32.totalorder %s147, 0
      %s150 = sadd.s32 %s149, 1
      %s151 = scalar_select %p148, %s149, %s150
      %p154 = pneg %p148
      %p155 = scmp.eq.s32.totalorder %s10, 3
      %p156 = por %p154, %p155
      %p157 = scmp.ne.s32.totalorder %s149, %s152
      %p158 = scmp.eq.s32.totalorder %s10, 0
      %p159 = por %p157, %p158
      %p160 = scmp.ne.s32.totalorder %s149, %s152
      %p161 = scmp.eq.s32.totalorder %s15, 3
      %p162 = por %p160, %p161
      %p163 = scmp.ne.s32.totalorder %s152, %s153
      %p164 = scmp.eq.s32.totalorder %s15, 0
      %p165 = por %p163, %p164
      %p166 = scmp.ne.s32.totalorder %s152, %s153
      %p167 = scmp.eq.s32.totalorder %s16, 3
      %p168 = por %p166, %p167
      %p170 = scmp.ne.s32.totalorder %s153, %s169
      %p171 = scmp.eq.s32.totalorder %s16, 0
      %p172 = por %p170, %p171
      %p173 = scmp.le.s32.totalorder 1, %s10
      %p174 = scmp.lt.s32.totalorder %s10, 5
      %p175 = pnand %p173, %p174
      %p176 = pneg %p175
      // Predicated region
      $region9: #{_lambda_.13} parent=5 // pred_check
        _
      $region10: #{_lambda_.13} parent=5 // pred_check_branch
        %178 = sbr.rel (%p175) target = $region12
      $region11: #{_lambda_.13} parent=5 // pred_region
        %s179 = ssub.s32 %s10, 1
      $region12: #{_lambda_.13} parent=5 // pred_fallthru
        _
      %p180 = scmp.lt.s32.totalorder %s10, 4
      // Predicated region
      $region13: #{_lambda_.13} parent=5 // pred_check
        %p181 = pneg %p180
      $region14: #{_lambda_.13} parent=5 // pred_check_branch
        %183 = sbr.rel (%p181) target = $region16
      $region15: #{_lambda_.13} parent=5 // pred_region
        // Predicated region
        $region17: #{_lambda_.13} parent=15 // pred_check
          %p184 = pneg %p51
        $region18: #{_lambda_.13} parent=15 // pred_check_branch
          %186 = sbr.rel (%p184) target = $region20
        $region19: #{_lambda_.13} parent=15 // pred_region
          %s187 = sand.u32 %s41, 1
          %s188 = sand.u32 %s41, 1
          %s189 = smul.addr %s188, 144
          %s190 = scalar_lea.vmem [#allocation3], %s189
          %s191 = smul.u32 4, %s17
          %s192 = smul.u32 9, %s19
          %s193 = smul.addr %s191, 18
          %s194 = sadd.s32 %s192, %s193
          %s195 = smul.addr %s194, 4
          %s196 = scalar_lea.vmem %s0, %s195
          // Predicated region
          $region21: #{_lambda_.13} parent=19 // pred_check
            _
          $region22: #{_lambda_.13} parent=19 // pred_check_branch
            %198 = sbr.rel (0) target = $region24
          $region23: #{_lambda_.13} parent=19 // pred_region
            // Predicated region
            $region25: #{_lambda_.13} parent=23 // pred_check
              _
            $region26: #{_lambda_.13} parent=23 // pred_check_branch
              %200 = sbr.rel (0) target = $region28
            $region27: #{_lambda_.13} parent=23 // pred_region
              %s201 = scalar_lea.vmem %s196, 32
              %s202 = scalar_lea.vmem %s190, 32 [#allocation3]
              loop: start=0, step=1, limit=1
              $region29: #{_lambda_.13} parent=27 // loop_pre_header
                _
              $region30: #{_lambda_.13} parent=27 // loop_header
                %s204 = sphi 0, %s208
                %p205 = scmp.ge.s32.totalorder %s204, 1
                %s209 = sphi %s196, %s196
                %s210 = sphi %s190, %s190
              $region31: #{_lambda_.13} parent=27 // loop_header_branch
                %207 = sbr.rel (%p205) target = $region35
              $region32: #{_lambda_.13} parent=27 // loop_body
                %v211 = vld [vmem:[%s209] sm:$0xff]
                %212 = vst [vmem:[%s210] sm:$0xff] %v211
                %v213 = vld [vmem:[%s209 + $0x8] sm:$0xff]
                %214 = vst [vmem:[%s210 + $0x8] sm:$0xff] %v213
                %v215 = vld [vmem:[%s209 + $0x10] sm:$0xff]
                %216 = vst [vmem:[%s210 + $0x10] sm:$0xff] %v215
                %v217 = vld [vmem:[%s209 + $0x18] sm:$0xff]
                %218 = vst [vmem:[%s210 + $0x18] sm:$0xff] %v217
                %v219 = vld [vmem:[%s209 + $0x48] sm:$0xff]
                %220 = vst [vmem:[%s210 + $0x24] sm:$0xff] %v219
                %v221 = vld [vmem:[%s209 + $0x50] sm:$0xff]
                %222 = vst [vmem:[%s210 + $0x2c] sm:$0xff] %v221
                %v223 = vld [vmem:[%s209 + $0x58] sm:$0xff]
                %224 = vst [vmem:[%s210 + $0x34] sm:$0xff] %v223
                %v225 = vld [vmem:[%s209 + $0x60] sm:$0xff]
                %226 = vst [vmem:[%s210 + $0x3c] sm:$0xff] %v225
                %v227 = vld [vmem:[%s209 + $0x90] sm:$0xff]
                %228 = vst [vmem:[%s210 + $0x48] sm:$0xff] %v227
                %v229 = vld [vmem:[%s209 + $0x98] sm:$0xff]
                %230 = vst [vmem:[%s210 + $0x50] sm:$0xff] %v229
                %v231 = vld [vmem:[%s209 + $0xa0] sm:$0xff]
                %232 = vst [vmem:[%s210 + $0x58] sm:$0xff] %v231
                %v233 = vld [vmem:[%s209 + $0xa8] sm:$0xff]
                %234 = vst [vmem:[%s210 + $0x60] sm:$0xff] %v233
                %v235 = vld [vmem:[%s209 + $0xd8] sm:$0xff]
                %236 = vst [vmem:[%s210 + $0x6c] sm:$0xff] %v235
                %v237 = vld [vmem:[%s209 + $0xe0] sm:$0xff]
                %238 = vst [vmem:[%s210 + $0x74] sm:$0xff] %v237
                %v239 = vld [vmem:[%s209 + $0xe8] sm:$0xff]
                %240 = vst [vmem:[%s210 + $0x7c] sm:$0xff] %v239
                %v241 = vld [vmem:[%s209 + $0xf0] sm:$0xff]
                %242 = vst [vmem:[%s210 + $0x84] sm:$0xff] %v241
              $region33: #{_lambda_.13} parent=27 // loop_footer
                %s208 = sadd.s32 1, %s204
              $region34: #{_lambda_.13} parent=27 // loop_footer_branch
                %203 = sbr.rel target = $region30
              $region35: #{_lambda_.13} parent=27 // loop_exit
                _
              loop: start=0, step=1, limit=1
              $region36: #{_lambda_.13} parent=27 // loop_pre_header
                _
              $region37: #{_lambda_.13} parent=27 // loop_header
                %s245 = sphi 0, %s249
                %p246 = scmp.ge.s32.totalorder %s245, 1
                %s250 = sphi %s201, %s201
                %s251 = sphi %s202, %s202
              $region38: #{_lambda_.13} parent=27 // loop_header_branch
                %248 = sbr.rel (%p246) target = $region42
              $region39: #{_lambda_.13} parent=27 // loop_body
                %v252 = vld [vmem:[%s250] sm:$0xf]
                %253 = vst [vmem:[%s251] sm:$0xf] %v252
                %v254 = vld [vmem:[%s250 + $0x48] sm:$0xf]
                %255 = vst [vmem:[%s251 + $0x24] sm:$0xf] %v254
                %v256 = vld [vmem:[%s250 + $0x90] sm:$0xf]
                %257 = vst [vmem:[%s251 + $0x48] sm:$0xf] %v256
                %v258 = vld [vmem:[%s250 + $0xd8] sm:$0xf]
                %259 = vst [vmem:[%s251 + $0x6c] sm:$0xf] %v258
              $region40: #{_lambda_.13} parent=27 // loop_footer
                %s249 = sadd.s32 1, %s245
              $region41: #{_lambda_.13} parent=27 // loop_footer_branch
                %244 = sbr.rel target = $region37
              $region42: #{_lambda_.13} parent=27 // loop_exit
                _
            $region28: #{_lambda_.13} parent=23 // pred_fallthru
              _
          $region24: #{_lambda_.13} parent=19 // pred_fallthru
            _
          %260 = vnop
        $region20: #{_lambda_.13} parent=15 // pred_fallthru
          _
        // Predicated region
        $region43: #{_lambda_.13} parent=15 // pred_check
          %p261 = pneg %p79
        $region44: #{_lambda_.13} parent=15 // pred_check_branch
          %263 = sbr.rel (%p261) target = $region46
        $region45: #{_lambda_.13} parent=15 // pred_region
          %s264 = sand.u32 %s69, 1
          %s265 = sand.u32 %s69, 1
          %s266 = smul.addr %s265, 576
          %s267 = scalar_lea.vmem [#allocation4], %s266
          %s268 = smul.u32 144, %s19
          %s269 = smul.addr %s268, 2
          %s270 = sadd.s32 %s18, %s269
          %s271 = smul.addr %s270, 4
          %s272 = scalar_lea.vmem %s1, %s271
          // Predicated region
          $region47: #{_lambda_.13} parent=45 // pred_check
            _
          $region48: #{_lambda_.13} parent=45 // pred_check_branch
            %274 = sbr.rel (0) target = $region50
          $region49: #{_lambda_.13} parent=45 // pred_region
            // Predicated region
            $region51: #{_lambda_.13} parent=49 // pred_check
              _
            $region52: #{_lambda_.13} parent=49 // pred_check_branch
              %276 = sbr.rel target = $region54
            $region53: #{_lambda_.13} parent=49 // pred_region
              // Predicated region
              $region66: #{_lambda_.13} parent=53 // pred_check
                _
              $region67: #{_lambda_.13} parent=53 // pred_check_branch
                %577 = sbr.rel (0) target = $region69
              $region68: #{_lambda_.13} parent=53 // pred_region
                loop: start=0, step=1, limit=1
                $region70: #{_lambda_.13} parent=68 // loop_pre_header
                  _
                $region71: #{_lambda_.13} parent=68 // loop_header
                  %s579 = sphi 0, %s583
                  %p580 = scmp.ge.s32.totalorder %s579, 1
                  %s584 = sphi %s272, %s272
                  %s585 = sphi %s267, %s267
                $region72: #{_lambda_.13} parent=68 // loop_header_branch
                  %582 = sbr.rel (%p580) target = $region76
                $region73: #{_lambda_.13} parent=68 // loop_body
                  _
                $region74: #{_lambda_.13} parent=68 // loop_footer
                  %s583 = sadd.s32 1, %s579
                $region75: #{_lambda_.13} parent=68 // loop_footer_branch
                  %578 = sbr.rel target = $region71
                $region76: #{_lambda_.13} parent=68 // loop_exit
                  _
                loop: start=0, step=1, limit=1
                $region77: #{_lambda_.13} parent=68 // loop_pre_header
                  _
                $region78: #{_lambda_.13} parent=68 // loop_header
                  %s588 = sphi 0, %s592
                  %p589 = scmp.ge.s32.totalorder %s588, 1
                  %s593 = sphi %s272, %s272
                  %s594 = sphi %s267, %s267
                $region79: #{_lambda_.13} parent=68 // loop_header_branch
                  %591 = sbr.rel (%p589) target = $region83
                $region80: #{_lambda_.13} parent=68 // loop_body
                  %v595 = vld [vmem:[%s593] sm:$0xf]
                  %596 = vst [vmem:[%s594] sm:$0xf] %v595
                  %v597 = vld [vmem:[%s593 + $0x8] sm:$0xf]
                  %598 = vst [vmem:[%s594 + $0x4] sm:$0xf] %v597
                  %v599 = vld [vmem:[%s593 + $0x10] sm:$0xf]
                  %600 = vst [vmem:[%s594 + $0x8] sm:$0xf] %v599
                  %v601 = vld [vmem:[%s593 + $0x18] sm:$0xf]
                  %602 = vst [vmem:[%s594 + $0xc] sm:$0xf] %v601
                  %v603 = vld [vmem:[%s593 + $0x20] sm:$0xf]
                  %604 = vst [vmem:[%s594 + $0x10] sm:$0xf] %v603
                  %v605 = vld [vmem:[%s593 + $0x28] sm:$0xf]
                  %606 = vst [vmem:[%s594 + $0x14] sm:$0xf] %v605
                  %v607 = vld [vmem:[%s593 + $0x30] sm:$0xf]
                  %608 = vst [vmem:[%s594 + $0x18] sm:$0xf] %v607
                  %v609 = vld [vmem:[%s593 + $0x38] sm:$0xf]
                  %610 = vst [vmem:[%s594 + $0x1c] sm:$0xf] %v609
                  %v611 = vld [vmem:[%s593 + $0x40] sm:$0xf]
                  %612 = vst [vmem:[%s594 + $0x20] sm:$0xf] %v611
                  %v613 = vld [vmem:[%s593 + $0x48] sm:$0xf]
                  %614 = vst [vmem:[%s594 + $0x24] sm:$0xf] %v613
                  %v615 = vld [vmem:[%s593 + $0x50] sm:$0xf]
                  %616 = vst [vmem:[%s594 + $0x28] sm:$0xf] %v615
                  %v617 = vld [vmem:[%s593 + $0x58] sm:$0xf]
                  %618 = vst [vmem:[%s594 + $0x2c] sm:$0xf] %v617
                  %v619 = vld [vmem:[%s593 + $0x60] sm:$0xf]
                  %620 = vst [vmem:[%s594 + $0x30] sm:$0xf] %v619
                  %v621 = vld [vmem:[%s593 + $0x68] sm:$0xf]
                  %622 = vst [vmem:[%s594 + $0x34] sm:$0xf] %v621
                  %v623 = vld [vmem:[%s593 + $0x70] sm:$0xf]
                  %624 = vst [vmem:[%s594 + $0x38] sm:$0xf] %v623
                  %v625 = vld [vmem:[%s593 + $0x78] sm:$0xf]
                  %626 = vst [vmem:[%s594 + $0x3c] sm:$0xf] %v625
                  %v627 = vld [vmem:[%s593 + $0x80] sm:$0xf]
                  %628 = vst [vmem:[%s594 + $0x40] sm:$0xf] %v627
                  %v629 = vld [vmem:[%s593 + $0x88] sm:$0xf]
                  %630 = vst [vmem:[%s594 + $0x44] sm:$0xf] %v629
                  %v631 = vld [vmem:[%s593 + $0x90] sm:$0xf]
                  %632 = vst [vmem:[%s594 + $0x48] sm:$0xf] %v631
                  %v633 = vld [vmem:[%s593 + $0x98] sm:$0xf]
                  %634 = vst [vmem:[%s594 + $0x4c] sm:$0xf] %v633
                  %v635 = vld [vmem:[%s593 + $0xa0] sm:$0xf]
                  %636 = vst [vmem:[%s594 + $0x50] sm:$0xf] %v635
                  %v637 = vld [vmem:[%s593 + $0xa8] sm:$0xf]
                  %638 = vst [vmem:[%s594 + $0x54] sm:$0xf] %v637
                  %v639 = vld [vmem:[%s593 + $0xb0] sm:$0xf]
                  %640 = vst [vmem:[%s594 + $0x58] sm:$0xf] %v639
                  %v641 = vld [vmem:[%s593 + $0xb8] sm:$0xf]
                  %642 = vst [vmem:[%s594 + $0x5c] sm:$0xf] %v641
                  %v643 = vld [vmem:[%s593 + $0xc0] sm:$0xf]
                  %644 = vst [vmem:[%s594 + $0x60] sm:$0xf] %v643
                  %v645 = vld [vmem:[%s593 + $0xc8] sm:$0xf]
                  %646 = vst [vmem:[%s594 + $0x64] sm:$0xf] %v645
                  %v647 = vld [vmem:[%s593 + $0xd0] sm:$0xf]
                  %648 = vst [vmem:[%s594 + $0x68] sm:$0xf] %v647
                  %v649 = vld [vmem:[%s593 + $0xd8] sm:$0xf]
                  %650 = vst [vmem:[%s594 + $0x6c] sm:$0xf] %v649
                  %v651 = vld [vmem:[%s593 + $0xe0] sm:$0xf]
                  %652 = vst [vmem:[%s594 + $0x70] sm:$0xf] %v651
                  %v653 = vld [vmem:[%s593 + $0xe8] sm:$0xf]
                  %654 = vst [vmem:[%s594 + $0x74] sm:$0xf] %v653
                  %v655 = vld [vmem:[%s593 + $0xf0] sm:$0xf]
                  %656 = vst [vmem:[%s594 + $0x78] sm:$0xf] %v655
                  %v657 = vld [vmem:[%s593 + $0xf8] sm:$0xf]
                  %658 = vst [vmem:[%s594 + $0x7c] sm:$0xf] %v657
                  %v659 = vld [vmem:[%s593 + $0x100] sm:$0xf]
                  %660 = vst [vmem:[%s594 + $0x80] sm:$0xf] %v659
                  %v661 = vld [vmem:[%s593 + $0x108] sm:$0xf]
                  %662 = vst [vmem:[%s594 + $0x84] sm:$0xf] %v661
                  %v663 = vld [vmem:[%s593 + $0x110] sm:$0xf]
                  %664 = vst [vmem:[%s594 + $0x88] sm:$0xf] %v663
                  %v665 = vld [vmem:[%s593 + $0x118] sm:$0xf]
                  %666 = vst [vmem:[%s594 + $0x8c] sm:$0xf] %v665
                  %v667 = vld [vmem:[%s593 + $0x120] sm:$0xf]
                  %668 = vst [vmem:[%s594 + $0x90] sm:$0xf] %v667
                  %v669 = vld [vmem:[%s593 + $0x128] sm:$0xf]
                  %670 = vst [vmem:[%s594 + $0x94] sm:$0xf] %v669
                  %v671 = vld [vmem:[%s593 + $0x130] sm:$0xf]
                  %672 = vst [vmem:[%s594 + $0x98] sm:$0xf] %v671
                  %v673 = vld [vmem:[%s593 + $0x138] sm:$0xf]
                  %674 = vst [vmem:[%s594 + $0x9c] sm:$0xf] %v673
                  %v675 = vld [vmem:[%s593 + $0x140] sm:$0xf]
                  %676 = vst [vmem:[%s594 + $0xa0] sm:$0xf] %v675
                  %v677 = vld [vmem:[%s593 + $0x148] sm:$0xf]
                  %678 = vst [vmem:[%s594 + $0xa4] sm:$0xf] %v677
                  %v679 = vld [vmem:[%s593 + $0x150] sm:$0xf]
                  %680 = vst [vmem:[%s594 + $0xa8] sm:$0xf] %v679
                  %v681 = vld [vmem:[%s593 + $0x158] sm:$0xf]
                  %682 = vst [vmem:[%s594 + $0xac] sm:$0xf] %v681
                  %v683 = vld [vmem:[%s593 + $0x160] sm:$0xf]
                  %684 = vst [vmem:[%s594 + $0xb0] sm:$0xf] %v683
                  %v685 = vld [vmem:[%s593 + $0x168] sm:$0xf]
                  %686 = vst [vmem:[%s594 + $0xb4] sm:$0xf] %v685
                  %v687 = vld [vmem:[%s593 + $0x170] sm:$0xf]
                  %688 = vst [vmem:[%s594 + $0xb8] sm:$0xf] %v687
                  %v689 = vld [vmem:[%s593 + $0x178] sm:$0xf]
                  %690 = vst [vmem:[%s594 + $0xbc] sm:$0xf] %v689
                  %v691 = vld [vmem:[%s593 + $0x180] sm:$0xf]
                  %692 = vst [vmem:[%s594 + $0xc0] sm:$0xf] %v691
                  %v693 = vld [vmem:[%s593 + $0x188] sm:$0xf]
                  %694 = vst [vmem:[%s594 + $0xc4] sm:$0xf] %v693
                  %v695 = vld [vmem:[%s593 + $0x190] sm:$0xf]
                  %696 = vst [vmem:[%s594 + $0xc8] sm:$0xf] %v695
                  %v697 = vld [vmem:[%s593 + $0x198] sm:$0xf]
                  %698 = vst [vmem:[%s594 + $0xcc] sm:$0xf] %v697
                  %v699 = vld [vmem:[%s593 + $0x1a0] sm:$0xf]
                  %700 = vst [vmem:[%s594 + $0xd0] sm:$0xf] %v699
                  %v701 = vld [vmem:[%s593 + $0x1a8] sm:$0xf]
                  %702 = vst [vmem:[%s594 + $0xd4] sm:$0xf] %v701
                  %v703 = vld [vmem:[%s593 + $0x1b0] sm:$0xf]
                  %704 = vst [vmem:[%s594 + $0xd8] sm:$0xf] %v703
                  %v705 = vld [vmem:[%s593 + $0x1b8] sm:$0xf]
                  %706 = vst [vmem:[%s594 + $0xdc] sm:$0xf] %v705
                  %v707 = vld [vmem:[%s593 + $0x1c0] sm:$0xf]
                  %708 = vst [vmem:[%s594 + $0xe0] sm:$0xf] %v707
                  %v709 = vld [vmem:[%s593 + $0x1c8] sm:$0xf]
                  %710 = vst [vmem:[%s594 + $0xe4] sm:$0xf] %v709
                  %v711 = vld [vmem:[%s593 + $0x1d0] sm:$0xf]
                  %712 = vst [vmem:[%s594 + $0xe8] sm:$0xf] %v711
                  %v713 = vld [vmem:[%s593 + $0x1d8] sm:$0xf]
                  %714 = vst [vmem:[%s594 + $0xec] sm:$0xf] %v713
                  %v715 = vld [vmem:[%s593 + $0x1e0] sm:$0xf]
                  %716 = vst [vmem:[%s594 + $0xf0] sm:$0xf] %v715
                  %v717 = vld [vmem:[%s593 + $0x1e8] sm:$0xf]
                  %718 = vst [vmem:[%s594 + $0xf4] sm:$0xf] %v717
                  %v719 = vld [vmem:[%s593 + $0x1f0] sm:$0xf]
                  %720 = vst [vmem:[%s594 + $0xf8] sm:$0xf] %v719
                  %v721 = vld [vmem:[%s593 + $0x1f8] sm:$0xf]
                  %722 = vst [vmem:[%s594 + $0xfc] sm:$0xf] %v721
                  %v723 = vld [vmem:[%s593 + $0x200] sm:$0xf]
                  %724 = vst [vmem:[%s594 + $0x100] sm:$0xf] %v723
                  %v725 = vld [vmem:[%s593 + $0x208] sm:$0xf]
                  %726 = vst [vmem:[%s594 + $0x104] sm:$0xf] %v725
                  %v727 = vld [vmem:[%s593 + $0x210] sm:$0xf]
                  %728 = vst [vmem:[%s594 + $0x108] sm:$0xf] %v727
                  %v729 = vld [vmem:[%s593 + $0x218] sm:$0xf]
                  %730 = vst [vmem:[%s594 + $0x10c] sm:$0xf] %v729
                  %v731 = vld [vmem:[%s593 + $0x220] sm:$0xf]
                  %732 = vst [vmem:[%s594 + $0x110] sm:$0xf] %v731
                  %v733 = vld [vmem:[%s593 + $0x228] sm:$0xf]
                  %734 = vst [vmem:[%s594 + $0x114] sm:$0xf] %v733
                  %v735 = vld [vmem:[%s593 + $0x230] sm:$0xf]
                  %736 = vst [vmem:[%s594 + $0x118] sm:$0xf] %v735
                  %v737 = vld [vmem:[%s593 + $0x238] sm:$0xf]
                  %738 = vst [vmem:[%s594 + $0x11c] sm:$0xf] %v737
                  %v739 = vld [vmem:[%s593 + $0x240] sm:$0xf]
                  %740 = vst [vmem:[%s594 + $0x120] sm:$0xf] %v739
                  %v741 = vld [vmem:[%s593 + $0x248] sm:$0xf]
                  %742 = vst [vmem:[%s594 + $0x124] sm:$0xf] %v741
                  %v743 = vld [vmem:[%s593 + $0x250] sm:$0xf]
                  %744 = vst [vmem:[%s594 + $0x128] sm:$0xf] %v743
                  %v745 = vld [vmem:[%s593 + $0x258] sm:$0xf]
                  %746 = vst [vmem:[%s594 + $0x12c] sm:$0xf] %v745
                  %v747 = vld [vmem:[%s593 + $0x260] sm:$0xf]
                  %748 = vst [vmem:[%s594 + $0x130] sm:$0xf] %v747
                  %v749 = vld [vmem:[%s593 + $0x268] sm:$0xf]
                  %750 = vst [vmem:[%s594 + $0x134] sm:$0xf] %v749
                  %v751 = vld [vmem:[%s593 + $0x270] sm:$0xf]
                  %752 = vst [vmem:[%s594 + $0x138] sm:$0xf] %v751
                  %v753 = vld [vmem:[%s593 + $0x278] sm:$0xf]
                  %754 = vst [vmem:[%s594 + $0x13c] sm:$0xf] %v753
                  %v755 = vld [vmem:[%s593 + $0x280] sm:$0xf]
                  %756 = vst [vmem:[%s594 + $0x140] sm:$0xf] %v755
                  %v757 = vld [vmem:[%s593 + $0x288] sm:$0xf]
                  %758 = vst [vmem:[%s594 + $0x144] sm:$0xf] %v757
                  %v759 = vld [vmem:[%s593 + $0x290] sm:$0xf]
                  %760 = vst [vmem:[%s594 + $0x148] sm:$0xf] %v759
                  %v761 = vld [vmem:[%s593 + $0x298] sm:$0xf]
                  %762 = vst [vmem:[%s594 + $0x14c] sm:$0xf] %v761
                  %v763 = vld [vmem:[%s593 + $0x2a0] sm:$0xf]
                  %764 = vst [vmem:[%s594 + $0x150] sm:$0xf] %v763
                  %v765 = vld [vmem:[%s593 + $0x2a8] sm:$0xf]
                  %766 = vst [vmem:[%s594 + $0x154] sm:$0xf] %v765
                  %v767 = vld [vmem:[%s593 + $0x2b0] sm:$0xf]
                  %768 = vst [vmem:[%s594 + $0x158] sm:$0xf] %v767
                  %v769 = vld [vmem:[%s593 + $0x2b8] sm:$0xf]
                  %770 = vst [vmem:[%s594 + $0x15c] sm:$0xf] %v769
                  %v771 = vld [vmem:[%s593 + $0x2c0] sm:$0xf]
                  %772 = vst [vmem:[%s594 + $0x160] sm:$0xf] %v771
                  %v773 = vld [vmem:[%s593 + $0x2c8] sm:$0xf]
                  %774 = vst [vmem:[%s594 + $0x164] sm:$0xf] %v773
                  %v775 = vld [vmem:[%s593 + $0x2d0] sm:$0xf]
                  %776 = vst [vmem:[%s594 + $0x168] sm:$0xf] %v775
                  %v777 = vld [vmem:[%s593 + $0x2d8] sm:$0xf]
                  %778 = vst [vmem:[%s594 + $0x16c] sm:$0xf] %v777
                  %v779 = vld [vmem:[%s593 + $0x2e0] sm:$0xf]
                  %780 = vst [vmem:[%s594 + $0x170] sm:$0xf] %v779
                  %v781 = vld [vmem:[%s593 + $0x2e8] sm:$0xf]
                  %782 = vst [vmem:[%s594 + $0x174] sm:$0xf] %v781
                  %v783 = vld [vmem:[%s593 + $0x2f0] sm:$0xf]
                  %784 = vst [vmem:[%s594 + $0x178] sm:$0xf] %v783
                  %v785 = vld [vmem:[%s593 + $0x2f8] sm:$0xf]
                  %786 = vst [vmem:[%s594 + $0x17c] sm:$0xf] %v785
                  %v787 = vld [vmem:[%s593 + $0x300] sm:$0xf]
                  %788 = vst [vmem:[%s594 + $0x180] sm:$0xf] %v787
                  %v789 = vld [vmem:[%s593 + $0x308] sm:$0xf]
                  %790 = vst [vmem:[%s594 + $0x184] sm:$0xf] %v789
                  %v791 = vld [vmem:[%s593 + $0x310] sm:$0xf]
                  %792 = vst [vmem:[%s594 + $0x188] sm:$0xf] %v791
                  %v793 = vld [vmem:[%s593 + $0x318] sm:$0xf]
                  %794 = vst [vmem:[%s594 + $0x18c] sm:$0xf] %v793
                  %v795 = vld [vmem:[%s593 + $0x320] sm:$0xf]
                  %796 = vst [vmem:[%s594 + $0x190] sm:$0xf] %v795
                  %v797 = vld [vmem:[%s593 + $0x328] sm:$0xf]
                  %798 = vst [vmem:[%s594 + $0x194] sm:$0xf] %v797
                  %v799 = vld [vmem:[%s593 + $0x330] sm:$0xf]
                  %800 = vst [vmem:[%s594 + $0x198] sm:$0xf] %v799
                  %v801 = vld [vmem:[%s593 + $0x338] sm:$0xf]
                  %802 = vst [vmem:[%s594 + $0x19c] sm:$0xf] %v801
                  %v803 = vld [vmem:[%s593 + $0x340] sm:$0xf]
                  %804 = vst [vmem:[%s594 + $0x1a0] sm:$0xf] %v803
                  %v805 = vld [vmem:[%s593 + $0x348] sm:$0xf]
                  %806 = vst [vmem:[%s594 + $0x1a4] sm:$0xf] %v805
                  %v807 = vld [vmem:[%s593 + $0x350] sm:$0xf]
                  %808 = vst [vmem:[%s594 + $0x1a8] sm:$0xf] %v807
                  %v809 = vld [vmem:[%s593 + $0x358] sm:$0xf]
                  %810 = vst [vmem:[%s594 + $0x1ac] sm:$0xf] %v809
                  %v811 = vld [vmem:[%s593 + $0x360] sm:$0xf]
                  %812 = vst [vmem:[%s594 + $0x1b0] sm:$0xf] %v811
                  %v813 = vld [vmem:[%s593 + $0x368] sm:$0xf]
                  %814 = vst [vmem:[%s594 + $0x1b4] sm:$0xf] %v813
                  %v815 = vld [vmem:[%s593 + $0x370] sm:$0xf]
                  %816 = vst [vmem:[%s594 + $0x1b8] sm:$0xf] %v815
                  %v817 = vld [vmem:[%s593 + $0x378] sm:$0xf]
                  %818 = vst [vmem:[%s594 + $0x1bc] sm:$0xf] %v817
                  %v819 = vld [vmem:[%s593 + $0x380] sm:$0xf]
                  %820 = vst [vmem:[%s594 + $0x1c0] sm:$0xf] %v819
                  %v821 = vld [vmem:[%s593 + $0x388] sm:$0xf]
                  %822 = vst [vmem:[%s594 + $0x1c4] sm:$0xf] %v821
                  %v823 = vld [vmem:[%s593 + $0x390] sm:$0xf]
                  %824 = vst [vmem:[%s594 + $0x1c8] sm:$0xf] %v823
                  %v825 = vld [vmem:[%s593 + $0x398] sm:$0xf]
                  %826 = vst [vmem:[%s594 + $0x1cc] sm:$0xf] %v825
                  %v827 = vld [vmem:[%s593 + $0x3a0] sm:$0xf]
                  %828 = vst [vmem:[%s594 + $0x1d0] sm:$0xf] %v827
                  %v829 = vld [vmem:[%s593 + $0x3a8] sm:$0xf]
                  %830 = vst [vmem:[%s594 + $0x1d4] sm:$0xf] %v829
                  %v831 = vld [vmem:[%s593 + $0x3b0] sm:$0xf]
                  %832 = vst [vmem:[%s594 + $0x1d8] sm:$0xf] %v831
                  %v833 = vld [vmem:[%s593 + $0x3b8] sm:$0xf]
                  %834 = vst [vmem:[%s594 + $0x1dc] sm:$0xf] %v833
                  %v835 = vld [vmem:[%s593 + $0x3c0] sm:$0xf]
                  %836 = vst [vmem:[%s594 + $0x1e0] sm:$0xf] %v835
                  %v837 = vld [vmem:[%s593 + $0x3c8] sm:$0xf]
                  %838 = vst [vmem:[%s594 + $0x1e4] sm:$0xf] %v837
                  %v839 = vld [vmem:[%s593 + $0x3d0] sm:$0xf]
                  %840 = vst [vmem:[%s594 + $0x1e8] sm:$0xf] %v839
                  %v841 = vld [vmem:[%s593 + $0x3d8] sm:$0xf]
                  %842 = vst [vmem:[%s594 + $0x1ec] sm:$0xf] %v841
                  %v843 = vld [vmem:[%s593 + $0x3e0] sm:$0xf]
                  %844 = vst [vmem:[%s594 + $0x1f0] sm:$0xf] %v843
                  %v845 = vld [vmem:[%s593 + $0x3e8] sm:$0xf]
                  %846 = vst [vmem:[%s594 + $0x1f4] sm:$0xf] %v845
                  %v847 = vld [vmem:[%s593 + $0x3f0] sm:$0xf]
                  %848 = vst [vmem:[%s594 + $0x1f8] sm:$0xf] %v847
                  %v849 = vld [vmem:[%s593 + $0x3f8] sm:$0xf]
                  %850 = vst [vmem:[%s594 + $0x1fc] sm:$0xf] %v849
                  %v851 = vld [vmem:[%s593 + $0x400] sm:$0xf]
                  %852 = vst [vmem:[%s594 + $0x200] sm:$0xf] %v851
                  %v853 = vld [vmem:[%s593 + $0x408] sm:$0xf]
                  %854 = vst [vmem:[%s594 + $0x204] sm:$0xf] %v853
                  %v855 = vld [vmem:[%s593 + $0x410] sm:$0xf]
                  %856 = vst [vmem:[%s594 + $0x208] sm:$0xf] %v855
                  %v857 = vld [vmem:[%s593 + $0x418] sm:$0xf]
                  %858 = vst [vmem:[%s594 + $0x20c] sm:$0xf] %v857
                  %v859 = vld [vmem:[%s593 + $0x420] sm:$0xf]
                  %860 = vst [vmem:[%s594 + $0x210] sm:$0xf] %v859
                  %v861 = vld [vmem:[%s593 + $0x428] sm:$0xf]
                  %862 = vst [vmem:[%s594 + $0x214] sm:$0xf] %v861
                  %v863 = vld [vmem:[%s593 + $0x430] sm:$0xf]
                  %864 = vst [vmem:[%s594 + $0x218] sm:$0xf] %v863
                  %v865 = vld [vmem:[%s593 + $0x438] sm:$0xf]
                  %866 = vst [vmem:[%s594 + $0x21c] sm:$0xf] %v865
                  %v867 = vld [vmem:[%s593 + $0x440] sm:$0xf]
                  %868 = vst [vmem:[%s594 + $0x220] sm:$0xf] %v867
                  %v869 = vld [vmem:[%s593 + $0x448] sm:$0xf]
                  %870 = vst [vmem:[%s594 + $0x224] sm:$0xf] %v869
                  %v871 = vld [vmem:[%s593 + $0x450] sm:$0xf]
                  %872 = vst [vmem:[%s594 + $0x228] sm:$0xf] %v871
                  %v873 = vld [vmem:[%s593 + $0x458] sm:$0xf]
                  %874 = vst [vmem:[%s594 + $0x22c] sm:$0xf] %v873
                  %v875 = vld [vmem:[%s593 + $0x460] sm:$0xf]
                  %876 = vst [vmem:[%s594 + $0x230] sm:$0xf] %v875
                  %v877 = vld [vmem:[%s593 + $0x468] sm:$0xf]
                  %878 = vst [vmem:[%s594 + $0x234] sm:$0xf] %v877
                  %v879 = vld [vmem:[%s593 + $0x470] sm:$0xf]
                  %880 = vst [vmem:[%s594 + $0x238] sm:$0xf] %v879
                  %v881 = vld [vmem:[%s593 + $0x478] sm:$0xf]
                  %882 = vst [vmem:[%s594 + $0x23c] sm:$0xf] %v881
                $region81: #{_lambda_.13} parent=68 // loop_footer
                  %s592 = sadd.s32 1, %s588
                $region82: #{_lambda_.13} parent=68 // loop_footer_branch
                  %587 = sbr.rel target = $region78
                $region83: #{_lambda_.13} parent=68 // loop_exit
                  _
              $region69: #{_lambda_.13} parent=53 // pred_fallthru
                _
            $region54: #{_lambda_.13} parent=49 // pred_fallthru
              _
            // Predicated region
            $region55: #{_lambda_.13} parent=49 // pred_check
              _
            $region56: #{_lambda_.13} parent=49 // pred_check_branch
              %278 = sbr.rel (0) target = $region58
            $region57: #{_lambda_.13} parent=49 // pred_region
              loop: start=0, step=1, limit=1
              $region59: #{_lambda_.13} parent=57 // loop_pre_header
                _
              $region60: #{_lambda_.13} parent=57 // loop_header
                %s281 = sphi 0, %s285
                %p282 = scmp.ge.s32.totalorder %s281, 1
                %s286 = sphi %s272, %s272
                %s287 = sphi %s267, %s267
              $region61: #{_lambda_.13} parent=57 // loop_header_branch
                %284 = sbr.rel (%p282) target = $region65
              $region62: #{_lambda_.13} parent=57 // loop_body
                %v288 = vld [vmem:[%s286] sm:$0xf]
                %289 = vst [vmem:[%s287] sm:$0xf] %v288
                %v290 = vld [vmem:[%s286 + $0x8] sm:$0xf]
                %291 = vst [vmem:[%s287 + $0x4] sm:$0xf] %v290
                %v292 = vld [vmem:[%s286 + $0x10] sm:$0xf]
                %293 = vst [vmem:[%s287 + $0x8] sm:$0xf] %v292
                %v294 = vld [vmem:[%s286 + $0x18] sm:$0xf]
                %295 = vst [vmem:[%s287 + $0xc] sm:$0xf] %v294
                %v296 = vld [vmem:[%s286 + $0x20] sm:$0xf]
                %297 = vst [vmem:[%s287 + $0x10] sm:$0xf] %v296
                %v298 = vld [vmem:[%s286 + $0x28] sm:$0xf]
                %299 = vst [vmem:[%s287 + $0x14] sm:$0xf] %v298
                %v300 = vld [vmem:[%s286 + $0x30] sm:$0xf]
                %301 = vst [vmem:[%s287 + $0x18] sm:$0xf] %v300
                %v302 = vld [vmem:[%s286 + $0x38] sm:$0xf]
                %303 = vst [vmem:[%s287 + $0x1c] sm:$0xf] %v302
                %v304 = vld [vmem:[%s286 + $0x40] sm:$0xf]
                %305 = vst [vmem:[%s287 + $0x20] sm:$0xf] %v304
                %v306 = vld [vmem:[%s286 + $0x48] sm:$0xf]
                %307 = vst [vmem:[%s287 + $0x24] sm:$0xf] %v306
                %v308 = vld [vmem:[%s286 + $0x50] sm:$0xf]
                %309 = vst [vmem:[%s287 + $0x28] sm:$0xf] %v308
                %v310 = vld [vmem:[%s286 + $0x58] sm:$0xf]
                %311 = vst [vmem:[%s287 + $0x2c] sm:$0xf] %v310
                %v312 = vld [vmem:[%s286 + $0x60] sm:$0xf]
                %313 = vst [vmem:[%s287 + $0x30] sm:$0xf] %v312
                %v314 = vld [vmem:[%s286 + $0x68] sm:$0xf]
                %315 = vst [vmem:[%s287 + $0x34] sm:$0xf] %v314
                %v316 = vld [vmem:[%s286 + $0x70] sm:$0xf]
                %317 = vst [vmem:[%s287 + $0x38] sm:$0xf] %v316
                %v318 = vld [vmem:[%s286 + $0x78] sm:$0xf]
                %319 = vst [vmem:[%s287 + $0x3c] sm:$0xf] %v318
                %v320 = vld [vmem:[%s286 + $0x80] sm:$0xf]
                %321 = vst [vmem:[%s287 + $0x40] sm:$0xf] %v320
                %v322 = vld [vmem:[%s286 + $0x88] sm:$0xf]
                %323 = vst [vmem:[%s287 + $0x44] sm:$0xf] %v322
                %v324 = vld [vmem:[%s286 + $0x90] sm:$0xf]
                %325 = vst [vmem:[%s287 + $0x48] sm:$0xf] %v324
                %v326 = vld [vmem:[%s286 + $0x98] sm:$0xf]
                %327 = vst [vmem:[%s287 + $0x4c] sm:$0xf] %v326
                %v328 = vld [vmem:[%s286 + $0xa0] sm:$0xf]
                %329 = vst [vmem:[%s287 + $0x50] sm:$0xf] %v328
                %v330 = vld [vmem:[%s286 + $0xa8] sm:$0xf]
                %331 = vst [vmem:[%s287 + $0x54] sm:$0xf] %v330
                %v332 = vld [vmem:[%s286 + $0xb0] sm:$0xf]
                %333 = vst [vmem:[%s287 + $0x58] sm:$0xf] %v332
                %v334 = vld [vmem:[%s286 + $0xb8] sm:$0xf]
                %335 = vst [vmem:[%s287 + $0x5c] sm:$0xf] %v334
                %v336 = vld [vmem:[%s286 + $0xc0] sm:$0xf]
                %337 = vst [vmem:[%s287 + $0x60] sm:$0xf] %v336
                %v338 = vld [vmem:[%s286 + $0xc8] sm:$0xf]
                %339 = vst [vmem:[%s287 + $0x64] sm:$0xf] %v338
                %v340 = vld [vmem:[%s286 + $0xd0] sm:$0xf]
                %341 = vst [vmem:[%s287 + $0x68] sm:$0xf] %v340
                %v342 = vld [vmem:[%s286 + $0xd8] sm:$0xf]
                %343 = vst [vmem:[%s287 + $0x6c] sm:$0xf] %v342
                %v344 = vld [vmem:[%s286 + $0xe0] sm:$0xf]
                %345 = vst [vmem:[%s287 + $0x70] sm:$0xf] %v344
                %v346 = vld [vmem:[%s286 + $0xe8] sm:$0xf]
                %347 = vst [vmem:[%s287 + $0x74] sm:$0xf] %v346
                %v348 = vld [vmem:[%s286 + $0xf0] sm:$0xf]
                %349 = vst [vmem:[%s287 + $0x78] sm:$0xf] %v348
                %v350 = vld [vmem:[%s286 + $0xf8] sm:$0xf]
                %351 = vst [vmem:[%s287 + $0x7c] sm:$0xf] %v350
                %v352 = vld [vmem:[%s286 + $0x100] sm:$0xf]
                %353 = vst [vmem:[%s287 + $0x80] sm:$0xf] %v352
                %v354 = vld [vmem:[%s286 + $0x108] sm:$0xf]
                %355 = vst [vmem:[%s287 + $0x84] sm:$0xf] %v354
                %v356 = vld [vmem:[%s286 + $0x110] sm:$0xf]
                %357 = vst [vmem:[%s287 + $0x88] sm:$0xf] %v356
                %v358 = vld [vmem:[%s286 + $0x118] sm:$0xf]
                %359 = vst [vmem:[%s287 + $0x8c] sm:$0xf] %v358
                %v360 = vld [vmem:[%s286 + $0x120] sm:$0xf]
                %361 = vst [vmem:[%s287 + $0x90] sm:$0xf] %v360
                %v362 = vld [vmem:[%s286 + $0x128] sm:$0xf]
                %363 = vst [vmem:[%s287 + $0x94] sm:$0xf] %v362
                %v364 = vld [vmem:[%s286 + $0x130] sm:$0xf]
                %365 = vst [vmem:[%s287 + $0x98] sm:$0xf] %v364
                %v366 = vld [vmem:[%s286 + $0x138] sm:$0xf]
                %367 = vst [vmem:[%s287 + $0x9c] sm:$0xf] %v366
                %v368 = vld [vmem:[%s286 + $0x140] sm:$0xf]
                %369 = vst [vmem:[%s287 + $0xa0] sm:$0xf] %v368
                %v370 = vld [vmem:[%s286 + $0x148] sm:$0xf]
                %371 = vst [vmem:[%s287 + $0xa4] sm:$0xf] %v370
                %v372 = vld [vmem:[%s286 + $0x150] sm:$0xf]
                %373 = vst [vmem:[%s287 + $0xa8] sm:$0xf] %v372
                %v374 = vld [vmem:[%s286 + $0x158] sm:$0xf]
                %375 = vst [vmem:[%s287 + $0xac] sm:$0xf] %v374
                %v376 = vld [vmem:[%s286 + $0x160] sm:$0xf]
                %377 = vst [vmem:[%s287 + $0xb0] sm:$0xf] %v376
                %v378 = vld [vmem:[%s286 + $0x168] sm:$0xf]
                %379 = vst [vmem:[%s287 + $0xb4] sm:$0xf] %v378
                %v380 = vld [vmem:[%s286 + $0x170] sm:$0xf]
                %381 = vst [vmem:[%s287 + $0xb8] sm:$0xf] %v380
                %v382 = vld [vmem:[%s286 + $0x178] sm:$0xf]
                %383 = vst [vmem:[%s287 + $0xbc] sm:$0xf] %v382
                %v384 = vld [vmem:[%s286 + $0x180] sm:$0xf]
                %385 = vst [vmem:[%s287 + $0xc0] sm:$0xf] %v384
                %v386 = vld [vmem:[%s286 + $0x188] sm:$0xf]
                %387 = vst [vmem:[%s287 + $0xc4] sm:$0xf] %v386
                %v388 = vld [vmem:[%s286 + $0x190] sm:$0xf]
                %389 = vst [vmem:[%s287 + $0xc8] sm:$0xf] %v388
                %v390 = vld [vmem:[%s286 + $0x198] sm:$0xf]
                %391 = vst [vmem:[%s287 + $0xcc] sm:$0xf] %v390
                %v392 = vld [vmem:[%s286 + $0x1a0] sm:$0xf]
                %393 = vst [vmem:[%s287 + $0xd0] sm:$0xf] %v392
                %v394 = vld [vmem:[%s286 + $0x1a8] sm:$0xf]
                %395 = vst [vmem:[%s287 + $0xd4] sm:$0xf] %v394
                %v396 = vld [vmem:[%s286 + $0x1b0] sm:$0xf]
                %397 = vst [vmem:[%s287 + $0xd8] sm:$0xf] %v396
                %v398 = vld [vmem:[%s286 + $0x1b8] sm:$0xf]
                %399 = vst [vmem:[%s287 + $0xdc] sm:$0xf] %v398
                %v400 = vld [vmem:[%s286 + $0x1c0] sm:$0xf]
                %401 = vst [vmem:[%s287 + $0xe0] sm:$0xf] %v400
                %v402 = vld [vmem:[%s286 + $0x1c8] sm:$0xf]
                %403 = vst [vmem:[%s287 + $0xe4] sm:$0xf] %v402
                %v404 = vld [vmem:[%s286 + $0x1d0] sm:$0xf]
                %405 = vst [vmem:[%s287 + $0xe8] sm:$0xf] %v404
                %v406 = vld [vmem:[%s286 + $0x1d8] sm:$0xf]
                %407 = vst [vmem:[%s287 + $0xec] sm:$0xf] %v406
                %v408 = vld [vmem:[%s286 + $0x1e0] sm:$0xf]
                %409 = vst [vmem:[%s287 + $0xf0] sm:$0xf] %v408
                %v410 = vld [vmem:[%s286 + $0x1e8] sm:$0xf]
                %411 = vst [vmem:[%s287 + $0xf4] sm:$0xf] %v410
                %v412 = vld [vmem:[%s286 + $0x1f0] sm:$0xf]
                %413 = vst [vmem:[%s287 + $0xf8] sm:$0xf] %v412
                %v414 = vld [vmem:[%s286 + $0x1f8] sm:$0xf]
                %415 = vst [vmem:[%s287 + $0xfc] sm:$0xf] %v414
                %v416 = vld [vmem:[%s286 + $0x200] sm:$0xf]
                %417 = vst [vmem:[%s287 + $0x100] sm:$0xf] %v416
                %v418 = vld [vmem:[%s286 + $0x208] sm:$0xf]
                %419 = vst [vmem:[%s287 + $0x104] sm:$0xf] %v418
                %v420 = vld [vmem:[%s286 + $0x210] sm:$0xf]
                %421 = vst [vmem:[%s287 + $0x108] sm:$0xf] %v420
                %v422 = vld [vmem:[%s286 + $0x218] sm:$0xf]
                %423 = vst [vmem:[%s287 + $0x10c] sm:$0xf] %v422
                %v424 = vld [vmem:[%s286 + $0x220] sm:$0xf]
                %425 = vst [vmem:[%s287 + $0x110] sm:$0xf] %v424
                %v426 = vld [vmem:[%s286 + $0x228] sm:$0xf]
                %427 = vst [vmem:[%s287 + $0x114] sm:$0xf] %v426
                %v428 = vld [vmem:[%s286 + $0x230] sm:$0xf]
                %429 = vst [vmem:[%s287 + $0x118] sm:$0xf] %v428
                %v430 = vld [vmem:[%s286 + $0x238] sm:$0xf]
                %431 = vst [vmem:[%s287 + $0x11c] sm:$0xf] %v430
                %v432 = vld [vmem:[%s286 + $0x240] sm:$0xf]
                %433 = vst [vmem:[%s287 + $0x120] sm:$0xf] %v432
                %v434 = vld [vmem:[%s286 + $0x248] sm:$0xf]
                %435 = vst [vmem:[%s287 + $0x124] sm:$0xf] %v434
                %v436 = vld [vmem:[%s286 + $0x250] sm:$0xf]
                %437 = vst [vmem:[%s287 + $0x128] sm:$0xf] %v436
                %v438 = vld [vmem:[%s286 + $0x258] sm:$0xf]
                %439 = vst [vmem:[%s287 + $0x12c] sm:$0xf] %v438
                %v440 = vld [vmem:[%s286 + $0x260] sm:$0xf]
                %441 = vst [vmem:[%s287 + $0x130] sm:$0xf] %v440
                %v442 = vld [vmem:[%s286 + $0x268] sm:$0xf]
                %443 = vst [vmem:[%s287 + $0x134] sm:$0xf] %v442
                %v444 = vld [vmem:[%s286 + $0x270] sm:$0xf]
                %445 = vst [vmem:[%s287 + $0x138] sm:$0xf] %v444
                %v446 = vld [vmem:[%s286 + $0x278] sm:$0xf]
                %447 = vst [vmem:[%s287 + $0x13c] sm:$0xf] %v446
                %v448 = vld [vmem:[%s286 + $0x280] sm:$0xf]
                %449 = vst [vmem:[%s287 + $0x140] sm:$0xf] %v448
                %v450 = vld [vmem:[%s286 + $0x288] sm:$0xf]
                %451 = vst [vmem:[%s287 + $0x144] sm:$0xf] %v450
                %v452 = vld [vmem:[%s286 + $0x290] sm:$0xf]
                %453 = vst [vmem:[%s287 + $0x148] sm:$0xf] %v452
                %v454 = vld [vmem:[%s286 + $0x298] sm:$0xf]
                %455 = vst [vmem:[%s287 + $0x14c] sm:$0xf] %v454
                %v456 = vld [vmem:[%s286 + $0x2a0] sm:$0xf]
                %457 = vst [vmem:[%s287 + $0x150] sm:$0xf] %v456
                %v458 = vld [vmem:[%s286 + $0x2a8] sm:$0xf]
                %459 = vst [vmem:[%s287 + $0x154] sm:$0xf] %v458
                %v460 = vld [vmem:[%s286 + $0x2b0] sm:$0xf]
                %461 = vst [vmem:[%s287 + $0x158] sm:$0xf] %v460
                %v462 = vld [vmem:[%s286 + $0x2b8] sm:$0xf]
                %463 = vst [vmem:[%s287 + $0x15c] sm:$0xf] %v462
                %v464 = vld [vmem:[%s286 + $0x2c0] sm:$0xf]
                %465 = vst [vmem:[%s287 + $0x160] sm:$0xf] %v464
                %v466 = vld [vmem:[%s286 + $0x2c8] sm:$0xf]
                %467 = vst [vmem:[%s287 + $0x164] sm:$0xf] %v466
                %v468 = vld [vmem:[%s286 + $0x2d0] sm:$0xf]
                %469 = vst [vmem:[%s287 + $0x168] sm:$0xf] %v468
                %v470 = vld [vmem:[%s286 + $0x2d8] sm:$0xf]
                %471 = vst [vmem:[%s287 + $0x16c] sm:$0xf] %v470
                %v472 = vld [vmem:[%s286 + $0x2e0] sm:$0xf]
                %473 = vst [vmem:[%s287 + $0x170] sm:$0xf] %v472
                %v474 = vld [vmem:[%s286 + $0x2e8] sm:$0xf]
                %475 = vst [vmem:[%s287 + $0x174] sm:$0xf] %v474
                %v476 = vld [vmem:[%s286 + $0x2f0] sm:$0xf]
                %477 = vst [vmem:[%s287 + $0x178] sm:$0xf] %v476
                %v478 = vld [vmem:[%s286 + $0x2f8] sm:$0xf]
                %479 = vst [vmem:[%s287 + $0x17c] sm:$0xf] %v478
                %v480 = vld [vmem:[%s286 + $0x300] sm:$0xf]
                %481 = vst [vmem:[%s287 + $0x180] sm:$0xf] %v480
                %v482 = vld [vmem:[%s286 + $0x308] sm:$0xf]
                %483 = vst [vmem:[%s287 + $0x184] sm:$0xf] %v482
                %v484 = vld [vmem:[%s286 + $0x310] sm:$0xf]
                %485 = vst [vmem:[%s287 + $0x188] sm:$0xf] %v484
                %v486 = vld [vmem:[%s286 + $0x318] sm:$0xf]
                %487 = vst [vmem:[%s287 + $0x18c] sm:$0xf] %v486
                %v488 = vld [vmem:[%s286 + $0x320] sm:$0xf]
                %489 = vst [vmem:[%s287 + $0x190] sm:$0xf] %v488
                %v490 = vld [vmem:[%s286 + $0x328] sm:$0xf]
                %491 = vst [vmem:[%s287 + $0x194] sm:$0xf] %v490
                %v492 = vld [vmem:[%s286 + $0x330] sm:$0xf]
                %493 = vst [vmem:[%s287 + $0x198] sm:$0xf] %v492
                %v494 = vld [vmem:[%s286 + $0x338] sm:$0xf]
                %495 = vst [vmem:[%s287 + $0x19c] sm:$0xf] %v494
                %v496 = vld [vmem:[%s286 + $0x340] sm:$0xf]
                %497 = vst [vmem:[%s287 + $0x1a0] sm:$0xf] %v496
                %v498 = vld [vmem:[%s286 + $0x348] sm:$0xf]
                %499 = vst [vmem:[%s287 + $0x1a4] sm:$0xf] %v498
                %v500 = vld [vmem:[%s286 + $0x350] sm:$0xf]
                %501 = vst [vmem:[%s287 + $0x1a8] sm:$0xf] %v500
                %v502 = vld [vmem:[%s286 + $0x358] sm:$0xf]
                %503 = vst [vmem:[%s287 + $0x1ac] sm:$0xf] %v502
                %v504 = vld [vmem:[%s286 + $0x360] sm:$0xf]
                %505 = vst [vmem:[%s287 + $0x1b0] sm:$0xf] %v504
                %v506 = vld [vmem:[%s286 + $0x368] sm:$0xf]
                %507 = vst [vmem:[%s287 + $0x1b4] sm:$0xf] %v506
                %v508 = vld [vmem:[%s286 + $0x370] sm:$0xf]
                %509 = vst [vmem:[%s287 + $0x1b8] sm:$0xf] %v508
                %v510 = vld [vmem:[%s286 + $0x378] sm:$0xf]
                %511 = vst [vmem:[%s287 + $0x1bc] sm:$0xf] %v510
                %v512 = vld [vmem:[%s286 + $0x380] sm:$0xf]
                %513 = vst [vmem:[%s287 + $0x1c0] sm:$0xf] %v512
                %v514 = vld [vmem:[%s286 + $0x388] sm:$0xf]
                %515 = vst [vmem:[%s287 + $0x1c4] sm:$0xf] %v514
                %v516 = vld [vmem:[%s286 + $0x390] sm:$0xf]
                %517 = vst [vmem:[%s287 + $0x1c8] sm:$0xf] %v516
                %v518 = vld [vmem:[%s286 + $0x398] sm:$0xf]
                %519 = vst [vmem:[%s287 + $0x1cc] sm:$0xf] %v518
                %v520 = vld [vmem:[%s286 + $0x3a0] sm:$0xf]
                %521 = vst [vmem:[%s287 + $0x1d0] sm:$0xf] %v520
                %v522 = vld [vmem:[%s286 + $0x3a8] sm:$0xf]
                %523 = vst [vmem:[%s287 + $0x1d4] sm:$0xf] %v522
                %v524 = vld [vmem:[%s286 + $0x3b0] sm:$0xf]
                %525 = vst [vmem:[%s287 + $0x1d8] sm:$0xf] %v524
                %v526 = vld [vmem:[%s286 + $0x3b8] sm:$0xf]
                %527 = vst [vmem:[%s287 + $0x1dc] sm:$0xf] %v526
                %v528 = vld [vmem:[%s286 + $0x3c0] sm:$0xf]
                %529 = vst [vmem:[%s287 + $0x1e0] sm:$0xf] %v528
                %v530 = vld [vmem:[%s286 + $0x3c8] sm:$0xf]
                %531 = vst [vmem:[%s287 + $0x1e4] sm:$0xf] %v530
                %v532 = vld [vmem:[%s286 + $0x3d0] sm:$0xf]
                %533 = vst [vmem:[%s287 + $0x1e8] sm:$0xf] %v532
                %v534 = vld [vmem:[%s286 + $0x3d8] sm:$0xf]
                %535 = vst [vmem:[%s287 + $0x1ec] sm:$0xf] %v534
                %v536 = vld [vmem:[%s286 + $0x3e0] sm:$0xf]
                %537 = vst [vmem:[%s287 + $0x1f0] sm:$0xf] %v536
                %v538 = vld [vmem:[%s286 + $0x3e8] sm:$0xf]
                %539 = vst [vmem:[%s287 + $0x1f4] sm:$0xf] %v538
                %v540 = vld [vmem:[%s286 + $0x3f0] sm:$0xf]
                %541 = vst [vmem:[%s287 + $0x1f8] sm:$0xf] %v540
                %v542 = vld [vmem:[%s286 + $0x3f8] sm:$0xf]
                %543 = vst [vmem:[%s287 + $0x1fc] sm:$0xf] %v542
                %v544 = vld [vmem:[%s286 + $0x400] sm:$0xf]
                %545 = vst [vmem:[%s287 + $0x200] sm:$0xf] %v544
                %v546 = vld [vmem:[%s286 + $0x408] sm:$0xf]
                %547 = vst [vmem:[%s287 + $0x204] sm:$0xf] %v546
                %v548 = vld [vmem:[%s286 + $0x410] sm:$0xf]
                %549 = vst [vmem:[%s287 + $0x208] sm:$0xf] %v548
                %v550 = vld [vmem:[%s286 + $0x418] sm:$0xf]
                %551 = vst [vmem:[%s287 + $0x20c] sm:$0xf] %v550
                %v552 = vld [vmem:[%s286 + $0x420] sm:$0xf]
                %553 = vst [vmem:[%s287 + $0x210] sm:$0xf] %v552
                %v554 = vld [vmem:[%s286 + $0x428] sm:$0xf]
                %555 = vst [vmem:[%s287 + $0x214] sm:$0xf] %v554
                %v556 = vld [vmem:[%s286 + $0x430] sm:$0xf]
                %557 = vst [vmem:[%s287 + $0x218] sm:$0xf] %v556
                %v558 = vld [vmem:[%s286 + $0x438] sm:$0xf]
                %559 = vst [vmem:[%s287 + $0x21c] sm:$0xf] %v558
                %v560 = vld [vmem:[%s286 + $0x440] sm:$0xf]
                %561 = vst [vmem:[%s287 + $0x220] sm:$0xf] %v560
                %v562 = vld [vmem:[%s286 + $0x448] sm:$0xf]
                %563 = vst [vmem:[%s287 + $0x224] sm:$0xf] %v562
                %v564 = vld [vmem:[%s286 + $0x450] sm:$0xf]
                %565 = vst [vmem:[%s287 + $0x228] sm:$0xf] %v564
                %v566 = vld [vmem:[%s286 + $0x458] sm:$0xf]
                %567 = vst [vmem:[%s287 + $0x22c] sm:$0xf] %v566
                %v568 = vld [vmem:[%s286 + $0x460] sm:$0xf]
                %569 = vst [vmem:[%s287 + $0x230] sm:$0xf] %v568
                %v570 = vld [vmem:[%s286 + $0x468] sm:$0xf]
                %571 = vst [vmem:[%s287 + $0x234] sm:$0xf] %v570
                %v572 = vld [vmem:[%s286 + $0x470] sm:$0xf]
                %573 = vst [vmem:[%s287 + $0x238] sm:$0xf] %v572
                %v574 = vld [vmem:[%s286 + $0x478] sm:$0xf]
                %575 = vst [vmem:[%s287 + $0x23c] sm:$0xf] %v574
              $region63: #{_lambda_.13} parent=57 // loop_footer
                %s285 = sadd.s32 1, %s281
              $region64: #{_lambda_.13} parent=57 // loop_footer_branch
                %280 = sbr.rel target = $region60
              $region65: #{_lambda_.13} parent=57 // loop_exit
                _
            $region58: #{_lambda_.13} parent=49 // pred_fallthru
              _
          $region50: #{_lambda_.13} parent=45 // pred_fallthru
            _
          %883 = vnop
        $region46: #{_lambda_.13} parent=15 // pred_fallthru
          _
        // Predicated region
        $region84: #{_lambda_.13} parent=15 // pred_check
          %p884 = pneg %p105
        $region85: #{_lambda_.13} parent=15 // pred_check_branch
          %886 = sbr.rel (%p884) target = $region87
        $region86: #{_lambda_.13} parent=15 // pred_region
          %p887 = scmp.lt.s32.totalorder %s18, 1
          %s888 = scalar_select %p887, %s18, 1
          %s889 = scalar_lea.vmem %s2, %s888
        $region87: #{_lambda_.13} parent=15 // pred_fallthru
          _
        // Predicated region
        $region88: #{_lambda_.13} parent=15 // pred_check
          %p890 = pneg %p131
        $region89: #{_lambda_.13} parent=15 // pred_check_branch
          %892 = sbr.rel (%p890) target = $region91
        $region90: #{_lambda_.13} parent=15 // pred_region
          %p893 = scmp.lt.s32.totalorder %s18, 1
          %s894 = scalar_select %p893, %s18, 1
          %s895 = scalar_lea.vmem %s3, %s894
        $region91: #{_lambda_.13} parent=15 // pred_fallthru
          _
      $region16: #{_lambda_.13} parent=5 // pred_fallthru
        _
      %p896 = scmp.le.s32.totalorder 1, %s10
      %p897 = scmp.lt.s32.totalorder %s10, 5
      %p898 = pnand %p896, %p897
      %p899 = pneg %p898
      // Predicated region
      $region92: #{_lambda_.13} parent=5 // pred_check
        _
      $region93: #{_lambda_.13} parent=5 // pred_check_branch
        %901 = sbr.rel (%p898) target = $region95
      $region94: #{_lambda_.13} parent=5 // pred_region
        %s902 = ssub.s32 %s10, 1
        %s903 = sand.u32 %s44, 1
        %s904 = sand.u32 %s44, 1
        %s905 = smul.addr %s904, 144
        %s906 = scalar_lea.vmem [#allocation3], %s905
        // Predicated region
        $region96: #{_lambda_.13} parent=94 // pred_check
          %p907 = pneg %p57
        $region97: #{_lambda_.13} parent=94 // pred_check_branch
          %909 = sbr.rel (%p907) target = $region99
        $region98: #{_lambda_.13} parent=94 // pred_region
          _
        $region99: #{_lambda_.13} parent=94 // pred_fallthru
          _
        %s910 = sand.u32 %s72, 1
        %s911 = sand.u32 %s72, 1
        %s912 = smul.addr %s911, 576
        %s913 = scalar_lea.vmem [#allocation4], %s912
        // Predicated region
        $region100: #{_lambda_.13} parent=94 // pred_check
          %p914 = pneg %p85
        $region101: #{_lambda_.13} parent=94 // pred_check_branch
          %916 = sbr.rel (%p914) target = $region103
        $region102: #{_lambda_.13} parent=94 // pred_region
          _
        $region103: #{_lambda_.13} parent=94 // pred_fallthru
          _
        %s917 = sand.u32 %s44, 1
        %s918 = sand.u32 %s44, 1
        %s919 = smul.addr %s918, 144
        %s920 = scalar_lea.vmem [#allocation3], %s919
        %p921 = pneg %p57
        %p922 = pneg %p54
        %s923 = sand.u32 %s72, 1
        %s924 = sand.u32 %s72, 1
        %s925 = smul.addr %s924, 576
        %s926 = scalar_lea.vmem [#allocation4], %s925
        %p927 = pneg %p85
        %p928 = pneg %p82
        %p929 = scmp.lt.s32.totalorder %s21, 1
        %s930 = scalar_select %p929, %s21, 1
        %s931 = scalar_lea.vmem %s2, %s930
        %p932 = pneg %p111
        %p933 = pneg %p108
        %p934 = scmp.lt.s32.totalorder %s21, 1
        %s935 = scalar_select %p934, %s21, 1
        %s936 = scalar_lea.vmem %s3, %s935
        %p937 = pneg %p137
        %p938 = pneg %p134
        %p939 = pneg %p165
        %p940 = pneg %p162
        %s941 = sand.u32 %s152, 1
        %s942 = sand.u32 %s152, 1
        %s943 = smul.addr %s942, 16
        %s944 = scalar_lea.vmem [#allocation5], %s943
        %s945 = smul.u32 4, %s20
        %s946 = smul.u32 9, %s22
        %s947 = smul.u32 144, %s22
        %p948 = scmp.lt.s32.totalorder %s21, 1
        %s949 = scalar_select %p948, %s21, 1
        %s950 = scalar_lea.vmem %s2, %s949
        %p951 = scmp.lt.s32.totalorder %s21, 1
        %s952 = scalar_select %p951, %s21, 1
        %s953 = scalar_lea.vmem %s3, %s952
        %s954 = smul.u32 4, %s20
        %p956 = scmp.eq.s32.totalorder %s22, 0
        // Predicated region
        $region104: #{_lambda_.13} parent=94 // pred_check
          %p957 = pneg %p956
        $region105: #{_lambda_.13} parent=94 // pred_check_branch
          %959 = sbr.rel (%p957) target = $region107
        $region106: #{_lambda_.13} parent=94 // pred_region
          %960 = vst [vmem:[#allocation2] sm:$0xff] 0.0
          %961 = vst [vmem:[#allocation2 + $0x8] sm:$0xff] 0.0
          %962 = vst [vmem:[#allocation2 + $0x10] sm:$0xff] 0.0
          %963 = vst [vmem:[#allocation2 + $0x18] sm:$0xff] 0.0
        $region107: #{_lambda_.13} parent=94 // pred_fallthru
          _
        %v964 = vld [vmem:[#allocation2] sm:$0xff]
        %v965 = vld [vmem:[#allocation2 + $0x8] sm:$0xff]
        %v966 = vld [vmem:[#allocation2 + $0x10] sm:$0xff]
        %v967 = vld [vmem:[#allocation2 + $0x18] sm:$0xff]
        %v968 = vld [vmem:[%s906] sm:$0xff]
        %v969 = vld [vmem:[%s906 + $0x8] sm:$0xff]
        %v970 = vld [vmem:[%s906 + $0x10] sm:$0xff]
        %v971 = vld [vmem:[%s906 + $0x18] sm:$0xff]
        %v972 = vld [vmem:[%s906 + $0x20] sm:$0xf]
        %v973 = vld [vmem:[%s906 + $0x24] sm:$0xff]
        %v974 = vld [vmem:[%s906 + $0x2c] sm:$0xff]
        %v975 = vld [vmem:[%s906 + $0x34] sm:$0xff]
        %v976 = vld [vmem:[%s906 + $0x3c] sm:$0xff]
        %v977 = vld [vmem:[%s906 + $0x44] sm:$0xf]
        %v978 = vld [vmem:[%s906 + $0x48] sm:$0xff]
        %v979 = vld [vmem:[%s906 + $0x50] sm:$0xff]
        %v980 = vld [vmem:[%s906 + $0x58] sm:$0xff]
        %v981 = vld [vmem:[%s906 + $0x60] sm:$0xff]
        %v982 = vld [vmem:[%s906 + $0x68] sm:$0xf]
        %v983 = vld [vmem:[%s906 + $0x6c] sm:$0xff]
        %v984 = vld [vmem:[%s906 + $0x74] sm:$0xff]
        %v985 = vld [vmem:[%s906 + $0x7c] sm:$0xff]
        %v986 = vld [vmem:[%s906 + $0x84] sm:$0xff]
        %v987 = vld [vmem:[%s906 + $0x8c] sm:$0xf]
        %v988 = vld [vmem:[%s913] sm:$0xf]
        %v989 = vld [vmem:[%s913 + $0x4] sm:$0xf]
        %v990 = vld [vmem:[%s913 + $0x8] sm:$0xf]
        %v991 = vld [vmem:[%s913 + $0xc] sm:$0xf]
        %v992 = vld [vmem:[%s913 + $0x10] sm:$0xf]
        %v993 = vld [vmem:[%s913 + $0x14] sm:$0xf]
        %v994 = vld [vmem:[%s913 + $0x18] sm:$0xf]
        %v995 = vld [vmem:[%s913 + $0x1c] sm:$0xf]
        %v996 = vld [vmem:[%s913 + $0x20] sm:$0xf]
        %v997 = vld [vmem:[%s913 + $0x24] sm:$0xf]
        %v998 = vld [vmem:[%s913 + $0x28] sm:$0xf]
        %v999 = vld [vmem:[%s913 + $0x2c] sm:$0xf]
        %v1000 = vld [vmem:[%s913 + $0x30] sm:$0xf]
        %v1001 = vld [vmem:[%s913 + $0x34] sm:$0xf]
        %v1002 = vld [vmem:[%s913 + $0x38] sm:$0xf]
        %v1003 = vld [vmem:[%s913 + $0x3c] sm:$0xf]
        %v1004 = vld [vmem:[%s913 + $0x40] sm:$0xf]
        %v1005 = vld [vmem:[%s913 + $0x44] sm:$0xf]
        %v1006 = vld [vmem:[%s913 + $0x48] sm:$0xf]
        %v1007 = vld [vmem:[%s913 + $0x4c] sm:$0xf]
        %v1008 = vld [vmem:[%s913 + $0x50] sm:$0xf]
        %v1009 = vld [vmem:[%s913 + $0x54] sm:$0xf]
        %v1010 = vld [vmem:[%s913 + $0x58] sm:$0xf]
        %v1011 = vld [vmem:[%s913 + $0x5c] sm:$0xf]
        %v1012 = vld [vmem:[%s913 + $0x60] sm:$0xf]
        %v1013 = vld [vmem:[%s913 + $0x64] sm:$0xf]
        %v1014 = vld [vmem:[%s913 + $0x68] sm:$0xf]
        %v1015 = vld [vmem:[%s913 + $0x6c] sm:$0xf]
        %v1016 = vld [vmem:[%s913 + $0x70] sm:$0xf]
        %v1017 = vld [vmem:[%s913 + $0x74] sm:$0xf]
        %v1018 = vld [vmem:[%s913 + $0x78] sm:$0xf]
        %v1019 = vld [vmem:[%s913 + $0x7c] sm:$0xf]
        %v1020 = vld [vmem:[%s913 + $0x80] sm:$0xf]
        %v1021 = vld [vmem:[%s913 + $0x84] sm:$0xf]
        %v1022 = vld [vmem:[%s913 + $0x88] sm:$0xf]
        %v1023 = vld [vmem:[%s913 + $0x8c] sm:$0xf]
        %v1024 = vld [vmem:[%s913 + $0x90] sm:$0xf]
        %v1025 = vld [vmem:[%s913 + $0x94] sm:$0xf]
        %v1026 = vld [vmem:[%s913 + $0x98] sm:$0xf]
        %v1027 = vld [vmem:[%s913 + $0x9c] sm:$0xf]
        %v1028 = vld [vmem:[%s913 + $0xa0] sm:$0xf]
        %v1029 = vld [vmem:[%s913 + $0xa4] sm:$0xf]
        %v1030 = vld [vmem:[%s913 + $0xa8] sm:$0xf]
        %v1031 = vld [vmem:[%s913 + $0xac] sm:$0xf]
        %v1032 = vld [vmem:[%s913 + $0xb0] sm:$0xf]
        %v1033 = vld [vmem:[%s913 + $0xb4] sm:$0xf]
        %v1034 = vld [vmem:[%s913 + $0xb8] sm:$0xf]
        %v1035 = vld [vmem:[%s913 + $0xbc] sm:$0xf]
        %v1036 = vld [vmem:[%s913 + $0xc0] sm:$0xf]
        %v1037 = vld [vmem:[%s913 + $0xc4] sm:$0xf]
        %v1038 = vld [vmem:[%s913 + $0xc8] sm:$0xf]
        %v1039 = vld [vmem:[%s913 + $0xcc] sm:$0xf]
        %v1040 = vld [vmem:[%s913 + $0xd0] sm:$0xf]
        %v1041 = vld [vmem:[%s913 + $0xd4] sm:$0xf]
        %v1042 = vld [vmem:[%s913 + $0xd8] sm:$0xf]
        %v1043 = vld [vmem:[%s913 + $0xdc] sm:$0xf]
        %v1044 = vld [vmem:[%s913 + $0xe0] sm:$0xf]
        %v1045 = vld [vmem:[%s913 + $0xe4] sm:$0xf]
        %v1046 = vld [vmem:[%s913 + $0xe8] sm:$0xf]
        %v1047 = vld [vmem:[%s913 + $0xec] sm:$0xf]
        %v1048 = vld [vmem:[%s913 + $0xf0] sm:$0xf]
        %v1049 = vld [vmem:[%s913 + $0xf4] sm:$0xf]
        %v1050 = vld [vmem:[%s913 + $0xf8] sm:$0xf]
        %v1051 = vld [vmem:[%s913 + $0xfc] sm:$0xf]
        %v1052 = vld [vmem:[%s913 + $0x100] sm:$0xf]
        %v1053 = vld [vmem:[%s913 + $0x104] sm:$0xf]
        %v1054 = vld [vmem:[%s913 + $0x108] sm:$0xf]
        %v1055 = vld [vmem:[%s913 + $0x10c] sm:$0xf]
        %v1056 = vld [vmem:[%s913 + $0x110] sm:$0xf]
        %v1057 = vld [vmem:[%s913 + $0x114] sm:$0xf]
        %v1058 = vld [vmem:[%s913 + $0x118] sm:$0xf]
        %v1059 = vld [vmem:[%s913 + $0x11c] sm:$0xf]
        %v1060 = vld [vmem:[%s913 + $0x120] sm:$0xf]
        %v1061 = vld [vmem:[%s913 + $0x124] sm:$0xf]
        %v1062 = vld [vmem:[%s913 + $0x128] sm:$0xf]
        %v1063 = vld [vmem:[%s913 + $0x12c] sm:$0xf]
        %v1064 = vld [vmem:[%s913 + $0x130] sm:$0xf]
        %v1065 = vld [vmem:[%s913 + $0x134] sm:$0xf]
        %v1066 = vld [vmem:[%s913 + $0x138] sm:$0xf]
        %v1067 = vld [vmem:[%s913 + $0x13c] sm:$0xf]
        %v1068 = vld [vmem:[%s913 + $0x140] sm:$0xf]
        %v1069 = vld [vmem:[%s913 + $0x144] sm:$0xf]
        %v1070 = vld [vmem:[%s913 + $0x148] sm:$0xf]
        %v1071 = vld [vmem:[%s913 + $0x14c] sm:$0xf]
        %v1072 = vld [vmem:[%s913 + $0x150] sm:$0xf]
        %v1073 = vld [vmem:[%s913 + $0x154] sm:$0xf]
        %v1074 = vld [vmem:[%s913 + $0x158] sm:$0xf]
        %v1075 = vld [vmem:[%s913 + $0x15c] sm:$0xf]
        %v1076 = vld [vmem:[%s913 + $0x160] sm:$0xf]
        %v1077 = vld [vmem:[%s913 + $0x164] sm:$0xf]
        %v1078 = vld [vmem:[%s913 + $0x168] sm:$0xf]
        %v1079 = vld [vmem:[%s913 + $0x16c] sm:$0xf]
        %v1080 = vld [vmem:[%s913 + $0x170] sm:$0xf]
        %v1081 = vld [vmem:[%s913 + $0x174] sm:$0xf]
        %v1082 = vld [vmem:[%s913 + $0x178] sm:$0xf]
        %v1083 = vld [vmem:[%s913 + $0x17c] sm:$0xf]
        %v1084 = vld [vmem:[%s913 + $0x180] sm:$0xf]
        %v1085 = vld [vmem:[%s913 + $0x184] sm:$0xf]
        %v1086 = vld [vmem:[%s913 + $0x188] sm:$0xf]
        %v1087 = vld [vmem:[%s913 + $0x18c] sm:$0xf]
        %v1088 = vld [vmem:[%s913 + $0x190] sm:$0xf]
        %v1089 = vld [vmem:[%s913 + $0x194] sm:$0xf]
        %v1090 = vld [vmem:[%s913 + $0x198] sm:$0xf]
        %v1091 = vld [vmem:[%s913 + $0x19c] sm:$0xf]
        %v1092 = vld [vmem:[%s913 + $0x1a0] sm:$0xf]
        %v1093 = vld [vmem:[%s913 + $0x1a4] sm:$0xf]
        %v1094 = vld [vmem:[%s913 + $0x1a8] sm:$0xf]
        %v1095 = vld [vmem:[%s913 + $0x1ac] sm:$0xf]
        %v1096 = vld [vmem:[%s913 + $0x1b0] sm:$0xf]
        %v1097 = vld [vmem:[%s913 + $0x1b4] sm:$0xf]
        %v1098 = vld [vmem:[%s913 + $0x1b8] sm:$0xf]
        %v1099 = vld [vmem:[%s913 + $0x1bc] sm:$0xf]
        %v1100 = vld [vmem:[%s913 + $0x1c0] sm:$0xf]
        %v1101 = vld [vmem:[%s913 + $0x1c4] sm:$0xf]
        %v1102 = vld [vmem:[%s913 + $0x1c8] sm:$0xf]
        %v1103 = vld [vmem:[%s913 + $0x1cc] sm:$0xf]
        %v1104 = vld [vmem:[%s913 + $0x1d0] sm:$0xf]
        %v1105 = vld [vmem:[%s913 + $0x1d4] sm:$0xf]
        %v1106 = vld [vmem:[%s913 + $0x1d8] sm:$0xf]
        %v1107 = vld [vmem:[%s913 + $0x1dc] sm:$0xf]
        %v1108 = vld [vmem:[%s913 + $0x1e0] sm:$0xf]
        %v1109 = vld [vmem:[%s913 + $0x1e4] sm:$0xf]
        %v1110 = vld [vmem:[%s913 + $0x1e8] sm:$0xf]
        %v1111 = vld [vmem:[%s913 + $0x1ec] sm:$0xf]
        %v1112 = vld [vmem:[%s913 + $0x1f0] sm:$0xf]
        %v1113 = vld [vmem:[%s913 + $0x1f4] sm:$0xf]
        %v1114 = vld [vmem:[%s913 + $0x1f8] sm:$0xf]
        %v1115 = vld [vmem:[%s913 + $0x1fc] sm:$0xf]
        %v1116 = vld [vmem:[%s913 + $0x200] sm:$0xf]
        %v1117 = vld [vmem:[%s913 + $0x204] sm:$0xf]
        %v1118 = vld [vmem:[%s913 + $0x208] sm:$0xf]
        %v1119 = vld [vmem:[%s913 + $0x20c] sm:$0xf]
        %v1120 = vld [vmem:[%s913 + $0x210] sm:$0xf]
        %v1121 = vld [vmem:[%s913 + $0x214] sm:$0xf]
        %v1122 = vld [vmem:[%s913 + $0x218] sm:$0xf]
        %v1123 = vld [vmem:[%s913 + $0x21c] sm:$0xf]
        %v1124 = vld [vmem:[%s913 + $0x220] sm:$0xf]
        %v1125 = vld [vmem:[%s913 + $0x224] sm:$0xf]
        %v1126 = vld [vmem:[%s913 + $0x228] sm:$0xf]
        %v1127 = vld [vmem:[%s913 + $0x22c] sm:$0xf]
        %v1128 = vld [vmem:[%s913 + $0x230] sm:$0xf]
        %v1129 = vld [vmem:[%s913 + $0x234] sm:$0xf]
        %v1130 = vld [vmem:[%s913 + $0x238] sm:$0xf]
        %v1131 = vld [vmem:[%s913 + $0x23c] sm:$0xf]
        %v1152 = vunpack.c.l.b16 %v968
        %v1153 = vunpack.c.h.b16 %v968
        %v1154 = vunpack.c.l.b16 %v969
        %v1155 = vunpack.c.h.b16 %v969
        %v1156 = vunpack.c.l.b16 %v970
        %v1157 = vunpack.c.h.b16 %v970
        %v1158 = vunpack.c.l.b16 %v971
        %v1159 = vunpack.c.h.b16 %v971
        %v1160 = vunpack.c.l.b16 %v972
        %v1161 = vunpack.c.l.b16 %v973
        %v1162 = vunpack.c.h.b16 %v973
        %v1163 = vunpack.c.l.b16 %v974
        %v1164 = vunpack.c.h.b16 %v974
        %v1165 = vunpack.c.l.b16 %v975
        %v1166 = vunpack.c.h.b16 %v975
        %v1167 = vunpack.c.l.b16 %v976
        %v1168 = vunpack.c.h.b16 %v976
        %v1169 = vunpack.c.l.b16 %v977
        %v1170 = vunpack.c.l.b16 %v978
        %v1171 = vunpack.c.h.b16 %v978
        %v1172 = vunpack.c.l.b16 %v979
        %v1173 = vunpack.c.h.b16 %v979
        %v1174 = vunpack.c.l.b16 %v980
        %v1175 = vunpack.c.h.b16 %v980
        %v1176 = vunpack.c.l.b16 %v981
        %v1177 = vunpack.c.h.b16 %v981
        %v1178 = vunpack.c.l.b16 %v982
        %v1179 = vunpack.c.l.b16 %v983
        %v1180 = vunpack.c.h.b16 %v983
        %v1181 = vunpack.c.l.b16 %v984
        %v1182 = vunpack.c.h.b16 %v984
        %v1183 = vunpack.c.l.b16 %v985
        %v1184 = vunpack.c.h.b16 %v985
        %v1185 = vunpack.c.l.b16 %v986
        %v1186 = vunpack.c.h.b16 %v986
        %v1187 = vunpack.c.l.b16 %v987
        %v1188 = vpack.c.b16 %v1161, %v1152
        %v1189 = vpack.c.b16 %v1162, %v1153
        %v1190 = vpack.c.b16 %v1163, %v1154
        %v1191 = vpack.c.b16 %v1164, %v1155
        %v1192 = vpack.c.b16 %v1165, %v1156
        %v1193 = vpack.c.b16 %v1166, %v1157
        %v1194 = vpack.c.b16 %v1167, %v1158
        %v1195 = vpack.c.b16 %v1168, %v1159
        %v1196 = vpack.c.b16 %v1169, %v1160
        %v1197 = vpack.c.b16 %v1179, %v1170
        %v1198 = vpack.c.b16 %v1180, %v1171
        %v1199 = vpack.c.b16 %v1181, %v1172
        %v1200 = vpack.c.b16 %v1182, %v1173
        %v1201 = vpack.c.b16 %v1183, %v1174
        %v1202 = vpack.c.b16 %v1184, %v1175
        %v1203 = vpack.c.b16 %v1185, %v1176
        %v1204 = vpack.c.b16 %v1186, %v1177
        %v1205 = vpack.c.b16 %v1187, %v1178
        %v1368 = vunpack.c.l.b16 %v988
        %v1369 = vunpack.c.l.b16 %v989
        %v1370 = vunpack.c.l.b16 %v990
        %v1371 = vunpack.c.l.b16 %v991
        %v1372 = vunpack.c.l.b16 %v992
        %v1373 = vunpack.c.l.b16 %v993
        %v1374 = vunpack.c.l.b16 %v994
        %v1375 = vunpack.c.l.b16 %v995
        %v1376 = vunpack.c.l.b16 %v996
        %v1377 = vunpack.c.l.b16 %v997
        %v1378 = vunpack.c.l.b16 %v998
        %v1379 = vunpack.c.l.b16 %v999
        %v1380 = vunpack.c.l.b16 %v1000
        %v1381 = vunpack.c.l.b16 %v1001
        %v1382 = vunpack.c.l.b16 %v1002
        %v1383 = vunpack.c.l.b16 %v1003
        %v1384 = vunpack.c.l.b16 %v1004
        %v1385 = vunpack.c.l.b16 %v1005
        %v1386 = vunpack.c.l.b16 %v1006
        %v1387 = vunpack.c.l.b16 %v1007
        %v1388 = vunpack.c.l.b16 %v1008
        %v1389 = vunpack.c.l.b16 %v1009
        %v1390 = vunpack.c.l.b16 %v1010
        %v1391 = vunpack.c.l.b16 %v1011
        %v1392 = vunpack.c.l.b16 %v1012
        %v1393 = vunpack.c.l.b16 %v1013
        %v1394 = vunpack.c.l.b16 %v1014
        %v1395 = vunpack.c.l.b16 %v1015
        %v1396 = vunpack.c.l.b16 %v1016
        %v1397 = vunpack.c.l.b16 %v1017
        %v1398 = vunpack.c.l.b16 %v1018
        %v1399 = vunpack.c.l.b16 %v1019
        %v1400 = vunpack.c.l.b16 %v1020
        %v1401 = vunpack.c.l.b16 %v1021
        %v1402 = vunpack.c.l.b16 %v1022
        %v1403 = vunpack.c.l.b16 %v1023
        %v1404 = vunpack.c.l.b16 %v1024
        %v1405 = vunpack.c.l.b16 %v1025
        %v1406 = vunpack.c.l.b16 %v1026
        %v1407 = vunpack.c.l.b16 %v1027
        %v1408 = vunpack.c.l.b16 %v1028
        %v1409 = vunpack.c.l.b16 %v1029
        %v1410 = vunpack.c.l.b16 %v1030
        %v1411 = vunpack.c.l.b16 %v1031
        %v1412 = vunpack.c.l.b16 %v1032
        %v1413 = vunpack.c.l.b16 %v1033
        %v1414 = vunpack.c.l.b16 %v1034
        %v1415 = vunpack.c.l.b16 %v1035
        %v1416 = vunpack.c.l.b16 %v1036
        %v1417 = vunpack.c.l.b16 %v1037
        %v1418 = vunpack.c.l.b16 %v1038
        %v1419 = vunpack.c.l.b16 %v1039
        %v1420 = vunpack.c.l.b16 %v1040
        %v1421 = vunpack.c.l.b16 %v1041
        %v1422 = vunpack.c.l.b16 %v1042
        %v1423 = vunpack.c.l.b16 %v1043
        %v1424 = vunpack.c.l.b16 %v1044
        %v1425 = vunpack.c.l.b16 %v1045
        %v1426 = vunpack.c.l.b16 %v1046
        %v1427 = vunpack.c.l.b16 %v1047
        %v1428 = vunpack.c.l.b16 %v1048
        %v1429 = vunpack.c.l.b16 %v1049
        %v1430 = vunpack.c.l.b16 %v1050
        %v1431 = vunpack.c.l.b16 %v1051
        %v1432 = vunpack.c.l.b16 %v1052
        %v1433 = vunpack.c.l.b16 %v1053
        %v1434 = vunpack.c.l.b16 %v1054
        %v1435 = vunpack.c.l.b16 %v1055
        %v1436 = vunpack.c.l.b16 %v1056
        %v1437 = vunpack.c.l.b16 %v1057
        %v1438 = vunpack.c.l.b16 %v1058
        %v1439 = vunpack.c.l.b16 %v1059
        %v1440 = vunpack.c.l.b16 %v1060
        %v1441 = vunpack.c.l.b16 %v1061
        %v1442 = vunpack.c.l.b16 %v1062
        %v1443 = vunpack.c.l.b16 %v1063
        %v1444 = vunpack.c.l.b16 %v1064
        %v1445 = vunpack.c.l.b16 %v1065
        %v1446 = vunpack.c.l.b16 %v1066
        %v1447 = vunpack.c.l.b16 %v1067
        %v1448 = vunpack.c.l.b16 %v1068
        %v1449 = vunpack.c.l.b16 %v1069
        %v1450 = vunpack.c.l.b16 %v1070
        %v1451 = vunpack.c.l.b16 %v1071
        %v1452 = vunpack.c.l.b16 %v1072
        %v1453 = vunpack.c.l.b16 %v1073
        %v1454 = vunpack.c.l.b16 %v1074
        %v1455 = vunpack.c.l.b16 %v1075
        %v1456 = vunpack.c.l.b16 %v1076
        %v1457 = vunpack.c.l.b16 %v1077
        %v1458 = vunpack.c.l.b16 %v1078
        %v1459 = vunpack.c.l.b16 %v1079
        %v1460 = vunpack.c.l.b16 %v1080
        %v1461 = vunpack.c.l.b16 %v1081
        %v1462 = vunpack.c.l.b16 %v1082
        %v1463 = vunpack.c.l.b16 %v1083
        %v1464 = vunpack.c.l.b16 %v1084
        %v1465 = vunpack.c.l.b16 %v1085
        %v1466 = vunpack.c.l.b16 %v1086
        %v1467 = vunpack.c.l.b16 %v1087
        %v1468 = vunpack.c.l.b16 %v1088
        %v1469 = vunpack.c.l.b16 %v1089
        %v1470 = vunpack.c.l.b16 %v1090
        %v1471 = vunpack.c.l.b16 %v1091
        %v1472 = vunpack.c.l.b16 %v1092
        %v1473 = vunpack.c.l.b16 %v1093
        %v1474 = vunpack.c.l.b16 %v1094
        %v1475 = vunpack.c.l.b16 %v1095
        %v1476 = vunpack.c.l.b16 %v1096
        %v1477 = vunpack.c.l.b16 %v1097
        %v1478 = vunpack.c.l.b16 %v1098
        %v1479 = vunpack.c.l.b16 %v1099
        %v1480 = vunpack.c.l.b16 %v1100
        %v1481 = vunpack.c.l.b16 %v1101
        %v1482 = vunpack.c.l.b16 %v1102
        %v1483 = vunpack.c.l.b16 %v1103
        %v1484 = vunpack.c.l.b16 %v1104
        %v1485 = vunpack.c.l.b16 %v1105
        %v1486 = vunpack.c.l.b16 %v1106
        %v1487 = vunpack.c.l.b16 %v1107
        %v1488 = vunpack.c.l.b16 %v1108
        %v1489 = vunpack.c.l.b16 %v1109
        %v1490 = vunpack.c.l.b16 %v1110
        %v1491 = vunpack.c.l.b16 %v1111
        %v1492 = vunpack.c.l.b16 %v1112
        %v1493 = vunpack.c.l.b16 %v1113
        %v1494 = vunpack.c.l.b16 %v1114
        %v1495 = vunpack.c.l.b16 %v1115
        %v1496 = vunpack.c.l.b16 %v1116
        %v1497 = vunpack.c.l.b16 %v1117
        %v1498 = vunpack.c.l.b16 %v1118
        %v1499 = vunpack.c.l.b16 %v1119
        %v1500 = vunpack.c.l.b16 %v1120
        %v1501 = vunpack.c.l.b16 %v1121
        %v1502 = vunpack.c.l.b16 %v1122
        %v1503 = vunpack.c.l.b16 %v1123
        %v1504 = vunpack.c.l.b16 %v1124
        %v1505 = vunpack.c.l.b16 %v1125
        %v1506 = vunpack.c.l.b16 %v1126
        %v1507 = vunpack.c.l.b16 %v1127
        %v1508 = vunpack.c.l.b16 %v1128
        %v1509 = vunpack.c.l.b16 %v1129
        %v1510 = vunpack.c.l.b16 %v1130
        %v1511 = vunpack.c.l.b16 %v1131
        %v1512 = vpack.c.b16 %v1369, %v1368
        %v1513 = vpack.c.b16 %v1371, %v1370
        %v1514 = vpack.c.b16 %v1373, %v1372
        %v1515 = vpack.c.b16 %v1375, %v1374
        %v1516 = vpack.c.b16 %v1377, %v1376
        %v1517 = vpack.c.b16 %v1379, %v1378
        %v1518 = vpack.c.b16 %v1381, %v1380
        %v1519 = vpack.c.b16 %v1383, %v1382
        %v1520 = vpack.c.b16 %v1385, %v1384
        %v1521 = vpack.c.b16 %v1387, %v1386
        %v1522 = vpack.c.b16 %v1389, %v1388
        %v1523 = vpack.c.b16 %v1391, %v1390
        %v1524 = vpack.c.b16 %v1393, %v1392
        %v1525 = vpack.c.b16 %v1395, %v1394
        %v1526 = vpack.c.b16 %v1397, %v1396
        %v1527 = vpack.c.b16 %v1399, %v1398
        %v1528 = vpack.c.b16 %v1401, %v1400
        %v1529 = vpack.c.b16 %v1403, %v1402
        %v1530 = vpack.c.b16 %v1405, %v1404
        %v1531 = vpack.c.b16 %v1407, %v1406
        %v1532 = vpack.c.b16 %v1409, %v1408
        %v1533 = vpack.c.b16 %v1411, %v1410
        %v1534 = vpack.c.b16 %v1413, %v1412
        %v1535 = vpack.c.b16 %v1415, %v1414
        %v1536 = vpack.c.b16 %v1417, %v1416
        %v1537 = vpack.c.b16 %v1419, %v1418
        %v1538 = vpack.c.b16 %v1421, %v1420
        %v1539 = vpack.c.b16 %v1423, %v1422
        %v1540 = vpack.c.b16 %v1425, %v1424
        %v1541 = vpack.c.b16 %v1427, %v1426
        %v1542 = vpack.c.b16 %v1429, %v1428
        %v1543 = vpack.c.b16 %v1431, %v1430
        %v1544 = vpack.c.b16 %v1433, %v1432
        %v1545 = vpack.c.b16 %v1435, %v1434
        %v1546 = vpack.c.b16 %v1437, %v1436
        %v1547 = vpack.c.b16 %v1439, %v1438
        %v1548 = vpack.c.b16 %v1441, %v1440
        %v1549 = vpack.c.b16 %v1443, %v1442
        %v1550 = vpack.c.b16 %v1445, %v1444
        %v1551 = vpack.c.b16 %v1447, %v1446
        %v1552 = vpack.c.b16 %v1449, %v1448
        %v1553 = vpack.c.b16 %v1451, %v1450
        %v1554 = vpack.c.b16 %v1453, %v1452
        %v1555 = vpack.c.b16 %v1455, %v1454
        %v1556 = vpack.c.b16 %v1457, %v1456
        %v1557 = vpack.c.b16 %v1459, %v1458
        %v1558 = vpack.c.b16 %v1461, %v1460
        %v1559 = vpack.c.b16 %v1463, %v1462
        %v1560 = vpack.c.b16 %v1465, %v1464
        %v1561 = vpack.c.b16 %v1467, %v1466
        %v1562 = vpack.c.b16 %v1469, %v1468
        %v1563 = vpack.c.b16 %v1471, %v1470
        %v1564 = vpack.c.b16 %v1473, %v1472
        %v1565 = vpack.c.b16 %v1475, %v1474
        %v1566 = vpack.c.b16 %v1477, %v1476
        %v1567 = vpack.c.b16 %v1479, %v1478
        %v1568 = vpack.c.b16 %v1481, %v1480
        %v1569 = vpack.c.b16 %v1483, %v1482
        %v1570 = vpack.c.b16 %v1485, %v1484
        %v1571 = vpack.c.b16 %v1487, %v1486
        %v1572 = vpack.c.b16 %v1489, %v1488
        %v1573 = vpack.c.b16 %v1491, %v1490
        %v1574 = vpack.c.b16 %v1493, %v1492
        %v1575 = vpack.c.b16 %v1495, %v1494
        %v1576 = vpack.c.b16 %v1497, %v1496
        %v1577 = vpack.c.b16 %v1499, %v1498
        %v1578 = vpack.c.b16 %v1501, %v1500
        %v1579 = vpack.c.b16 %v1503, %v1502
        %v1580 = vpack.c.b16 %v1505, %v1504
        %v1581 = vpack.c.b16 %v1507, %v1506
        %v1582 = vpack.c.b16 %v1509, %v1508
        %v1583 = vpack.c.b16 %v1511, %v1510
        %1656 = vmatprep.subr.bf16.mxu0 0
        %1657 = vmatpush1.bf16.msra.mxu0 %v1512
        %1658 = vmatprep.subr.bf16.mxu0 0
        %1659 = vmatpush1.bf16.msra.mxu0 %v1513
        %1660 = vmatprep.subr.bf16.mxu0 0
        %1661 = vmatpush1.bf16.msra.mxu0 %v1514
        %1662 = vmatprep.subr.bf16.mxu0 0
        %1663 = vmatpush1.bf16.msra.mxu0 %v1515
        %1664 = vmatprep.subr.bf16.mxu0 0
        %1665 = vmatpush1.bf16.msra.mxu0 %v1516
        %1666 = vmatprep.subr.bf16.mxu0 0
        %1667 = vmatpush1.bf16.msra.mxu0 %v1517
        %1668 = vmatprep.subr.bf16.mxu0 0
        %1669 = vmatpush1.bf16.msra.mxu0 %v1518
        %1670 = vmatprep.subr.bf16.mxu0 0
        %1671 = vmatpush1.bf16.msra.mxu0 %v1519
        %1672 = vmatprep.subr.bf16.mxu0 0
        %1673 = vmatpush1.bf16.msra.mxu0 %v1520
        %1674 = vmatprep.subr.bf16.mxu0 0
        %1675 = vmatpush1.bf16.msra.mxu0 %v1521
        %1676 = vmatprep.subr.bf16.mxu0 0
        %1677 = vmatpush1.bf16.msra.mxu0 %v1522
        %1678 = vmatprep.subr.bf16.mxu0 0
        %1679 = vmatpush1.bf16.msra.mxu0 %v1523
        %1680 = vmatprep.subr.bf16.mxu0 0
        %1681 = vmatpush1.bf16.msra.mxu0 %v1524
        %1682 = vmatprep.subr.bf16.mxu0 0
        %1683 = vmatpush1.bf16.msra.mxu0 %v1525
        %1684 = vmatprep.subr.bf16.mxu0 0
        %1685 = vmatpush1.bf16.msra.mxu0 %v1526
        %1686 = vmatprep.subr.bf16.mxu0 0
        %1687 = vmatpush1.bf16.msra.mxu0 %v1527
        %1688 = vmatprep.mubr.bf16.mxu0 %v1189
        %1689 = vmatmul.mubr.bf16.gmra.mrb[0].mxu0 %v1188
        %v1690 = vpop.f32.mrb[0].mxu0
        %v1691 = vadd.f32 0.0, %v1690
        %v1692 = vpop.f32.mrb[0].mxu0
        %v1693 = vpop.f32.mrb[0].mxu0
        %v1694 = vadd.f32 0.0, %v1693
        %v1695 = vpop.f32.mrb[0].mxu0
        %1696 = vmatprep.mubr.bf16.mxu0 %v1198
        %1697 = vmatmul.mubr.bf16.gmra.mrb[0].mxu0 %v1197
        %v1698 = vpop.f32.mrb[0].mxu0
        %v1699 = vadd.f32 0.0, %v1698
        %v1700 = vpop.f32.mrb[0].mxu0
        %v1701 = vpop.f32.mrb[0].mxu0
        %v1702 = vadd.f32 0.0, %v1701
        %v1703 = vpop.f32.mrb[0].mxu0
        %1704 = vdwg.mxu0
        %1705 = vmatprep.subr.bf16.mxu0 0
        %1706 = vmatpush1.bf16.msra.mxu0 %v1528
        %1707 = vmatprep.subr.bf16.mxu0 0
        %1708 = vmatpush1.bf16.msra.mxu0 %v1529
        %1709 = vmatprep.subr.bf16.mxu0 0
        %1710 = vmatpush1.bf16.msra.mxu0 %v1530
        %1711 = vmatprep.subr.bf16.mxu0 0
        %1712 = vmatpush1.bf16.msra.mxu0 %v1531
        %1713 = vmatprep.subr.bf16.mxu0 0
        %1714 = vmatpush1.bf16.msra.mxu0 %v1532
        %1715 = vmatprep.subr.bf16.mxu0 0
        %1716 = vmatpush1.bf16.msra.mxu0 %v1533
        %1717 = vmatprep.subr.bf16.mxu0 0
        %1718 = vmatpush1.bf16.msra.mxu0 %v1534
        %1719 = vmatprep.subr.bf16.mxu0 0
        %1720 = vmatpush1.bf16.msra.mxu0 %v1535
        %1721 = vmatprep.subr.bf16.mxu0 0
        %1722 = vmatpush1.bf16.msra.mxu0 %v1536
        %1723 = vmatprep.subr.bf16.mxu0 0
        %1724 = vmatpush1.bf16.msra.mxu0 %v1537
        %1725 = vmatprep.subr.bf16.mxu0 0
        %1726 = vmatpush1.bf16.msra.mxu0 %v1538
        %1727 = vmatprep.subr.bf16.mxu0 0
        %1728 = vmatpush1.bf16.msra.mxu0 %v1539
        %1729 = vmatprep.subr.bf16.mxu0 0
        %1730 = vmatpush1.bf16.msra.mxu0 %v1540
        %1731 = vmatprep.subr.bf16.mxu0 0
        %1732 = vmatpush1.bf16.msra.mxu0 %v1541
        %1733 = vmatprep.subr.bf16.mxu0 0
        %1734 = vmatpush1.bf16.msra.mxu0 %v1542
        %1735 = vmatprep.subr.bf16.mxu0 0
        %1736 = vmatpush1.bf16.msra.mxu0 %v1543
        %1737 = vmatprep.mubr.bf16.mxu0 %v1191
        %1738 = vmatmul.mubr.bf16.gmra.mrb[0].mxu0 %v1190
        %v1739 = vpop.f32.mrb[0].mxu0
        %v1740 = vadd.f32 %v1691, %v1739
        %v1741 = vpop.f32.mrb[0].mxu0
        %v1742 = vpop.f32.mrb[0].mxu0
        %v1743 = vadd.f32 %v1694, %v1742
        %v1744 = vpop.f32.mrb[0].mxu0
        %1745 = vmatprep.mubr.bf16.mxu0 %v1200
        %1746 = vmatmul.mubr.bf16.gmra.mrb[0].mxu0 %v1199
        %v1747 = vpop.f32.mrb[0].mxu0
        %v1748 = vadd.f32 %v1699, %v1747
        %v1749 = vpop.f32.mrb[0].mxu0
        %v1750 = vpop.f32.mrb[0].mxu0
        %v1751 = vadd.f32 %v1702, %v1750
        %v1752 = vpop.f32.mrb[0].mxu0
        %1753 = vdwg.mxu0
        %1754 = vmatprep.subr.bf16.mxu0 0
        %1755 = vmatpush1.bf16.msra.mxu0 %v1544
        %1756 = vmatprep.subr.bf16.mxu0 0
        %1757 = vmatpush1.bf16.msra.mxu0 %v1545
        %1758 = vmatprep.subr.bf16.mxu0 0
        %1759 = vmatpush1.bf16.msra.mxu0 %v1546
        %1760 = vmatprep.subr.bf16.mxu0 0
        %1761 = vmatpush1.bf16.msra.mxu0 %v1547
        %1762 = vmatprep.subr.bf16.mxu0 0
        %1763 = vmatpush1.bf16.msra.mxu0 %v1548
        %1764 = vmatprep.subr.bf16.mxu0 0
        %1765 = vmatpush1.bf16.msra.mxu0 %v1549
        %1766 = vmatprep.subr.bf16.mxu0 0
        %1767 = vmatpush1.bf16.msra.mxu0 %v1550
        %1768 = vmatprep.subr.bf16.mxu0 0
        %1769 = vmatpush1.bf16.msra.mxu0 %v1551
        %1770 = vmatprep.subr.bf16.mxu0 0
        %1771 = vmatpush1.bf16.msra.mxu0 %v1552
        %1772 = vmatprep.subr.bf16.mxu0 0
        %1773 = vmatpush1.bf16.msra.mxu0 %v1553
        %1774 = vmatprep.subr.bf16.mxu0 0
        %1775 = vmatpush1.bf16.msra.mxu0 %v1554
        %1776 = vmatprep.subr.bf16.mxu0 0
        %1777 = vmatpush1.bf16.msra.mxu0 %v1555
        %1778 = vmatprep.subr.bf16.mxu0 0
        %1779 = vmatpush1.bf16.msra.mxu0 %v1556
        %1780 = vmatprep.subr.bf16.mxu0 0
        %1781 = vmatpush1.bf16.msra.mxu0 %v1557
        %1782 = vmatprep.subr.bf16.mxu0 0
        %1783 = vmatpush1.bf16.msra.mxu0 %v1558
        %1784 = vmatprep.subr.bf16.mxu0 0
        %1785 = vmatpush1.bf16.msra.mxu0 %v1559
        %1786 = vmatprep.mubr.bf16.mxu0 %v1193
        %1787 = vmatmul.mubr.bf16.gmra.mrb[0].mxu0 %v1192
        %v1788 = vpop.f32.mrb[0].mxu0
        %v1789 = vadd.f32 %v1740, %v1788
        %v1790 = vpop.f32.mrb[0].mxu0
        %v1791 = vpop.f32.mrb[0].mxu0
        %v1792 = vadd.f32 %v1743, %v1791
        %v1793 = vpop.f32.mrb[0].mxu0
        %1794 = vmatprep.mubr.bf16.mxu0 %v1202
        %1795 = vmatmul.mubr.bf16.gmra.mrb[0].mxu0 %v1201
        %v1796 = vpop.f32.mrb[0].mxu0
        %v1797 = vadd.f32 %v1748, %v1796
        %v1798 = vpop.f32.mrb[0].mxu0
        %v1799 = vpop.f32.mrb[0].mxu0
        %v1800 = vadd.f32 %v1751, %v1799
        %v1801 = vpop.f32.mrb[0].mxu0
        %1802 = vdwg.mxu0
        %1803 = vmatprep.subr.bf16.mxu0 0
        %1804 = vmatpush1.bf16.msra.mxu0 %v1560
        %1805 = vmatprep.subr.bf16.mxu0 0
        %1806 = vmatpush1.bf16.msra.mxu0 %v1561
        %1807 = vmatprep.subr.bf16.mxu0 0
        %1808 = vmatpush1.bf16.msra.mxu0 %v1562
        %1809 = vmatprep.subr.bf16.mxu0 0
        %1810 = vmatpush1.bf16.msra.mxu0 %v1563
        %1811 = vmatprep.subr.bf16.mxu0 0
        %1812 = vmatpush1.bf16.msra.mxu0 %v1564
        %1813 = vmatprep.subr.bf16.mxu0 0
        %1814 = vmatpush1.bf16.msra.mxu0 %v1565
        %1815 = vmatprep.subr.bf16.mxu0 0
        %1816 = vmatpush1.bf16.msra.mxu0 %v1566
        %1817 = vmatprep.subr.bf16.mxu0 0
        %1818 = vmatpush1.bf16.msra.mxu0 %v1567
        %1819 = vmatprep.subr.bf16.mxu0 0
        %1820 = vmatpush1.bf16.msra.mxu0 %v1568
        %1821 = vmatprep.subr.bf16.mxu0 0
        %1822 = vmatpush1.bf16.msra.mxu0 %v1569
        %1823 = vmatprep.subr.bf16.mxu0 0
        %1824 = vmatpush1.bf16.msra.mxu0 %v1570
        %1825 = vmatprep.subr.bf16.mxu0 0
        %1826 = vmatpush1.bf16.msra.mxu0 %v1571
        %1827 = vmatprep.subr.bf16.mxu0 0
        %1828 = vmatpush1.bf16.msra.mxu0 %v1572
        %1829 = vmatprep.subr.bf16.mxu0 0
        %1830 = vmatpush1.bf16.msra.mxu0 %v1573
        %1831 = vmatprep.subr.bf16.mxu0 0
        %1832 = vmatpush1.bf16.msra.mxu0 %v1574
        %1833 = vmatprep.subr.bf16.mxu0 0
        %1834 = vmatpush1.bf16.msra.mxu0 %v1575
        %1835 = vmatprep.mubr.bf16.mxu0 %v1195
        %1836 = vmatmul.mubr.bf16.gmra.mrb[0].mxu0 %v1194
        %v1837 = vpop.f32.mrb[0].mxu0
        %v1838 = vadd.f32 %v1789, %v1837
        %v1839 = vpop.f32.mrb[0].mxu0
        %v1840 = vpop.f32.mrb[0].mxu0
        %v1841 = vadd.f32 %v1792, %v1840
        %v1842 = vpop.f32.mrb[0].mxu0
        %1843 = vmatprep.mubr.bf16.mxu0 %v1204
        %1844 = vmatmul.mubr.bf16.gmra.mrb[0].mxu0 %v1203
        %v1845 = vpop.f32.mrb[0].mxu0
        %v1846 = vadd.f32 %v1797, %v1845
        %v1847 = vpop.f32.mrb[0].mxu0
        %v1848 = vpop.f32.mrb[0].mxu0
        %v1849 = vadd.f32 %v1800, %v1848
        %v1850 = vpop.f32.mrb[0].mxu0
        %1851 = vdwg.mxu0
        %1852 = vmatprep.subr.bf16.mxu0 0
        %1853 = vmatpush1.bf16.msra.mxu0 %v1576
        %1854 = vmatprep.subr.bf16.mxu0 0
        %1855 = vmatpush1.bf16.msra.mxu0 %v1577
        %1856 = vmatprep.subr.bf16.mxu0 0
        %1857 = vmatpush1.bf16.msra.mxu0 %v1578
        %1858 = vmatprep.subr.bf16.mxu0 0
        %1859 = vmatpush1.bf16.msra.mxu0 %v1579
        %1860 = vmatprep.subr.bf16.mxu0 0
        %1861 = vmatpush1.bf16.msra.mxu0 %v1580
        %1862 = vmatprep.subr.bf16.mxu0 0
        %1863 = vmatpush1.bf16.msra.mxu0 %v1581
        %1864 = vmatprep.subr.bf16.mxu0 0
        %1865 = vmatpush1.bf16.msra.mxu0 %v1582
        %1866 = vmatprep.subr.bf16.mxu0 0
        %1867 = vmatpush1.bf16.msra.mxu0 %v1583
        %1868 = vmatprep.subr.bf16.mxu0 0
        %1869 = vmatpush1.bf16.msra.mxu0 0
        %1870 = vmatprep.subr.bf16.mxu0 0
        %1871 = vmatpush1.bf16.msra.mxu0 0
        %1872 = vmatprep.subr.bf16.mxu0 0
        %1873 = vmatpush1.bf16.msra.mxu0 0
        %1874 = vmatprep.subr.bf16.mxu0 0
        %1875 = vmatpush1.bf16.msra.mxu0 0
        %1876 = vmatprep.subr.bf16.mxu0 0
        %1877 = vmatpush1.bf16.msra.mxu0 0
        %1878 = vmatprep.subr.bf16.mxu0 0
        %1879 = vmatpush1.bf16.msra.mxu0 0
        %1880 = vmatprep.subr.bf16.mxu0 0
        %1881 = vmatpush1.bf16.msra.mxu0 0
        %1882 = vmatprep.subr.bf16.mxu0 0
        %1883 = vmatpush1.bf16.msra.mxu0 0
        %1884 = vmatprep.mubr.bf16.mxu0 0
        %1885 = vmatmul.mubr.bf16.gmra.mrb[0].mxu0 %v1196
        %v1886 = vpop.f32.mrb[0].mxu0
        %v1887 = vadd.f32 %v1838, %v1886
        %v1888 = vpop.f32.mrb[0].mxu0
        %v1889 = vpop.f32.mrb[0].mxu0
        %v1890 = vadd.f32 %v1841, %v1889
        %v1891 = vpop.f32.mrb[0].mxu0
        %1892 = vmatprep.mubr.bf16.mxu0 0
        %1893 = vmatmul.mubr.bf16.gmra.mrb[0].mxu0 %v1205
        %v1894 = vpop.f32.mrb[0].mxu0
        %v1895 = vadd.f32 %v1846, %v1894
        %v1896 = vpop.f32.mrb[0].mxu0
        %v1897 = vpop.f32.mrb[0].mxu0
        %v1898 = vadd.f32 %v1849, %v1897
        %v1899 = vpop.f32.mrb[0].mxu0
        %1900 = vdwg.mxu0
        %v1901 = vadd.f32 %v964, %v1887
        %v1902 = vadd.f32 %v965, %v1890
        %v1903 = vadd.f32 %v966, %v1895
        %v1904 = vadd.f32 %v967, %v1898
        %1905 = vst [vmem:[#allocation2] sm:$0xff] %v1901
        %1906 = vst [vmem:[#allocation2 + $0x8] sm:$0xff] %v1902
        %1907 = vst [vmem:[#allocation2 + $0x10] sm:$0xff] %v1903
        %1908 = vst [vmem:[#allocation2 + $0x18] sm:$0xff] %v1904
        %p1909 = scmp.eq.s32.totalorder %s22, 1
        // Predicated region
        $region108: #{_lambda_.13} parent=94 // pred_check
          %p1910 = pneg %p1909
        $region109: #{_lambda_.13} parent=94 // pred_check_branch
          %1912 = sbr.rel (%p1910) target = $region111
        $region110: #{_lambda_.13} parent=94 // pred_region
          %v1913 = vld [vmem:[#allocation2] sm:$0xff]
          %v1914 = vld [vmem:[#allocation2 + $0x8] sm:$0xff]
          %v1915 = vld [vmem:[#allocation2 + $0x10] sm:$0xff]
          %v1916 = vld [vmem:[#allocation2 + $0x18] sm:$0xff]
          %v1917 = vld [vmem:[%s950] sm:$0x1]
          %v1919 = vlaneseq
          %v1920 = vshrl.u32 %v1919, 7
          %v1921 = vsub.s32 0, %v1920
          %v1922 = vrot.slane %v1917, %v1921
          %v1924 = vmul.f32 %v1913, %v1922
          %v1925 = vmul.f32 %v1914, %v1922
          %v1926 = vmul.f32 %v1915, %v1922
          %v1927 = vmul.f32 %v1916, %v1922
          %v1928 = vld [vmem:[%s953] sm:$0x1]
          %v1930 = vlaneseq
          %v1931 = vshrl.u32 %v1930, 7
          %v1932 = vsub.s32 0, %v1931
          %v1933 = vrot.slane %v1928, %v1932
          %v1935 = vadd.f32 %v1924, %v1933
          %v1936 = vadd.f32 %v1925, %v1933
          %v1937 = vadd.f32 %v1926, %v1933
          %v1938 = vadd.f32 %v1927, %v1933
          %v1939 = vmax.f32 %v1935, 0.0
          %v1940 = vmax.f32 %v1936, 0.0
          %v1941 = vmax.f32 %v1937, 0.0
          %v1942 = vmax.f32 %v1938, 0.0
          %v1943 = vpack.c.bf16 %v1940, %v1939
          %v1944 = vpack.c.bf16 %v1942, %v1941
          %v1947 = vunpack.c.l.b16 %v1943
          %v1948 = vunpack.c.h.b16 %v1943
          %v1949 = vunpack.c.l.b16 %v1944
          %v1950 = vunpack.c.h.b16 %v1944
          %v1951 = vpack.c.b16 %v1947, %v1947
          %v1952 = vpack.c.b16 %v1948, %v1948
          %v1953 = vpack.c.b16 %v1949, %v1949
          %v1954 = vpack.c.b16 %v1950, %v1950
          %1959 = vst [vmem:[%s944] sm:$0xf] %v1951
          %1960 = vst [vmem:[%s944 + $0x4] sm:$0xf] %v1952
          %1961 = vst [vmem:[%s944 + $0x8] sm:$0xf] %v1953
          %1962 = vst [vmem:[%s944 + $0xc] sm:$0xf] %v1954
        $region111: #{_lambda_.13} parent=94 // pred_fallthru
          _
        %s1963 = sand.u32 %s152, 1
        %s1964 = sand.u32 %s152, 1
        %s1965 = smul.addr %s1964, 16
        %s1966 = scalar_lea.vmem [#allocation5], %s1965
        // Predicated region
        $region112: #{_lambda_.13} parent=94 // pred_check
          %p1967 = pneg %p162
        $region113: #{_lambda_.13} parent=94 // pred_check_branch
          %1969 = sbr.rel (%p1967) target = $region115
        $region114: #{_lambda_.13} parent=94 // pred_region
          %s1970 = smul.u32 4, %s20
          %s1971 = smul.addr %s1970, 2
          %s1972 = sadd.s32 %s21, %s1971
          %s1973 = smul.addr %s1972, 4
          %s1974 = scalar_lea.vmem %s4, %s1973
          // Predicated region
          $region116: #{_lambda_.13} parent=114 // pred_check
            _
          $region117: #{_lambda_.13} parent=114 // pred_check_branch
            %1976 = sbr.rel (0) target = $region119
          $region118: #{_lambda_.13} parent=114 // pred_region
            // Predicated region
            $region120: #{_lambda_.13} parent=118 // pred_check
              _
            $region121: #{_lambda_.13} parent=118 // pred_check_branch
              %1978 = sbr.rel target = $region123
            $region122: #{_lambda_.13} parent=118 // pred_region
              // Predicated region
              $region135: #{_lambda_.13} parent=122 // pred_check
                _
              $region136: #{_lambda_.13} parent=122 // pred_check_branch
                %1999 = sbr.rel (0) target = $region138
              $region137: #{_lambda_.13} parent=122 // pred_region
                loop: start=0, step=1, limit=1
                $region139: #{_lambda_.13} parent=137 // loop_pre_header
                  _
                $region140: #{_lambda_.13} parent=137 // loop_header
                  %s2001 = sphi 0, %s2005
                  %p2002 = scmp.ge.s32.totalorder %s2001, 1
                  %s2006 = sphi %s1966, %s1966
                  %s2007 = sphi %s1974, %s1974
                $region141: #{_lambda_.13} parent=137 // loop_header_branch
                  %2004 = sbr.rel (%p2002) target = $region145
                $region142: #{_lambda_.13} parent=137 // loop_body
                  _
                $region143: #{_lambda_.13} parent=137 // loop_footer
                  %s2005 = sadd.s32 1, %s2001
                $region144: #{_lambda_.13} parent=137 // loop_footer_branch
                  %2000 = sbr.rel target = $region140
                $region145: #{_lambda_.13} parent=137 // loop_exit
                  _
                loop: start=0, step=1, limit=1
                $region146: #{_lambda_.13} parent=137 // loop_pre_header
                  _
                $region147: #{_lambda_.13} parent=137 // loop_header
                  %s2010 = sphi 0, %s2014
                  %p2011 = scmp.ge.s32.totalorder %s2010, 1
                  %s2015 = sphi %s1966, %s1966
                  %s2016 = sphi %s1974, %s1974
                $region148: #{_lambda_.13} parent=137 // loop_header_branch
                  %2013 = sbr.rel (%p2011) target = $region152
                $region149: #{_lambda_.13} parent=137 // loop_body
                  %v2017 = vld [vmem:[%s2015] sm:$0xf]
                  %2018 = vst [vmem:[%s2016] sm:$0xf] %v2017
                  %v2019 = vld [vmem:[%s2015 + $0x4] sm:$0xf]
                  %2020 = vst [vmem:[%s2016 + $0x8] sm:$0xf] %v2019
                  %v2021 = vld [vmem:[%s2015 + $0x8] sm:$0xf]
                  %2022 = vst [vmem:[%s2016 + $0x10] sm:$0xf] %v2021
                  %v2023 = vld [vmem:[%s2015 + $0xc] sm:$0xf]
                  %2024 = vst [vmem:[%s2016 + $0x18] sm:$0xf] %v2023
                $region150: #{_lambda_.13} parent=137 // loop_footer
                  %s2014 = sadd.s32 1, %s2010
                $region151: #{_lambda_.13} parent=137 // loop_footer_branch
                  %2009 = sbr.rel target = $region147
                $region152: #{_lambda_.13} parent=137 // loop_exit
                  _
              $region138: #{_lambda_.13} parent=122 // pred_fallthru
                _
            $region123: #{_lambda_.13} parent=118 // pred_fallthru
              _
            // Predicated region
            $region124: #{_lambda_.13} parent=118 // pred_check
              _
            $region125: #{_lambda_.13} parent=118 // pred_check_branch
              %1980 = sbr.rel (0) target = $region127
            $region126: #{_lambda_.13} parent=118 // pred_region
              loop: start=0, step=1, limit=1
              $region128: #{_lambda_.13} parent=126 // loop_pre_header
                _
              $region129: #{_lambda_.13} parent=126 // loop_header
                %s1983 = sphi 0, %s1987
                %p1984 = scmp.ge.s32.totalorder %s1983, 1
                %s1988 = sphi %s1966, %s1966
                %s1989 = sphi %s1974, %s1974
              $region130: #{_lambda_.13} parent=126 // loop_header_branch
                %1986 = sbr.rel (%p1984) target = $region134
              $region131: #{_lambda_.13} parent=126 // loop_body
                %v1990 = vld [vmem:[%s1988] sm:$0xf]
                %1991 = vst [vmem:[%s1989] sm:$0xf] %v1990
                %v1992 = vld [vmem:[%s1988 + $0x4] sm:$0xf]
                %1993 = vst [vmem:[%s1989 + $0x8] sm:$0xf] %v1992
                %v1994 = vld [vmem:[%s1988 + $0x8] sm:$0xf]
                %1995 = vst [vmem:[%s1989 + $0x10] sm:$0xf] %v1994
                %v1996 = vld [vmem:[%s1988 + $0xc] sm:$0xf]
                %1997 = vst [vmem:[%s1989 + $0x18] sm:$0xf] %v1996
              $region132: #{_lambda_.13} parent=126 // loop_footer
                %s1987 = sadd.s32 1, %s1983
              $region133: #{_lambda_.13} parent=126 // loop_footer_branch
                %1982 = sbr.rel target = $region129
              $region134: #{_lambda_.13} parent=126 // loop_exit
                _
            $region127: #{_lambda_.13} parent=118 // pred_fallthru
              _
          $region119: #{_lambda_.13} parent=114 // pred_fallthru
            _
          %2025 = vnop
        $region115: #{_lambda_.13} parent=94 // pred_fallthru
          _
      $region95: #{_lambda_.13} parent=5 // pred_fallthru
        _
      %p2026 = scmp.le.s32.totalorder 2, %s10
      // Predicated region
      $region153: #{_lambda_.13} parent=5 // pred_check
        %p2027 = pneg %p2026
      $region154: #{_lambda_.13} parent=5 // pred_check_branch
        %2029 = sbr.rel (%p2027) target = $region156
      $region155: #{_lambda_.13} parent=5 // pred_region
        %s2030 = ssub.s32 %s10, 2
        // Predicated region
        $region157: #{_lambda_.13} parent=155 // pred_check
          %p2031 = pneg %p168
        $region158: #{_lambda_.13} parent=155 // pred_check_branch
          %2033 = sbr.rel (%p2031) target = $region160
        $region159: #{_lambda_.13} parent=155 // pred_region
          %s2034 = sand.u32 %s153, 1
          %s2035 = sand.u32 %s153, 1
          %s2036 = smul.addr %s2035, 16
          %s2037 = scalar_lea.vmem [#allocation5], %s2036
        $region160: #{_lambda_.13} parent=155 // pred_fallthru
          _
      $region156: #{_lambda_.13} parent=5 // pred_fallthru
        _
    $region6: #{_lambda_.13} parent=1 // loop_footer
      %s14 = sadd.s32 1, %s10
    $region7: #{_lambda_.13} parent=1 // loop_footer_branch
      %9 = sbr.rel target = $region3
    $region8: #{_lambda_.13} parent=1 // loop_exit
      _

</llo_original>
